<compile_context>
chip_gen: v7x
topology: tpu7x:2x2x1
jax: 0.10.0
libtpu: 0.0.40
codegen_flags: <defaults>
</compile_context>

<pallas_src>
import functools
import math

import jax
import jax.numpy as jnp
from jax.experimental import pallas as pl
from jax.experimental.pallas import tpu as pltpu


def _round_up(x, m):
    return ((x + m - 1) // m) * m


def _leaky(x, neg_slope):
    # Single vmax on the VPU when 0 <= slope <= 1 (the usual case).
    if 0.0 <= neg_slope <= 1.0:
        return jnp.maximum(x, neg_slope * x)
    return jnp.where(x >= 0.0, x, neg_slope * x)


def _full_spec(shape):
    zeros = (0,) * len(shape)
    return pl.BlockSpec(tuple(shape), lambda i: zeros)


# ---------------------------------------------------------------------------
# Fused whole-network kernel (implicit GEMM, activations resident in VMEM)
# ---------------------------------------------------------------------------
def _make_fused_kernel(cfg):
    nl = cfg["num_layers"]
    c_pad = cfg["c_pad"]
    n = cfg["batch"]
    layers = cfg["layers"]

    def kernel(*refs):
        x_ref = refs[0]
        w_refs = refs[1:1 + nl]
        b_refs = refs[1 + nl:1 + 2 * nl]
        out_ref = refs[1 + 2 * nl]
        scratch = refs[1 + 2 * nl + 1:]

        # Deterministic zeros in the lane-padding columns of the output.
        out_ref[...] = jnp.zeros_like(out_ref)

        src = x_ref
        for li in range(nl):
            lc = layers[li]
            kh, kw, dil = lc["kh"], lc["kw"], lc["dil"]
            hp, wp, ho, wo = lc["hp"], lc["wp"], lc["ho"], lc["wo"]
            m_grid = n * hp * wp

            # Implicit GEMM: conv evaluated at every position of the padded
            # grid (stride 1).  Columns whose window wraps across rows/images
            # are garbage and are dropped by the repack below; the flat buffer
            # has a zeroed tail >= max tap offset so reads stay in-bounds.
            acc = jnp.zeros((c_pad, m_grid), jnp.float32)
            for i in range(kh):
                for j in range(kw):
                    off = i * dil * wp + j * dil
                    w_tap = w_refs[li][i * kw + j]          # (c_pad, c_pad)
                    xs = src[:, off:off + m_grid]           # (c_pad, m_grid)
                    acc = acc + jnp.dot(w_tap, xs,
                                        preferred_element_type=jnp.float32)
            acc = acc + b_refs[li][...]
            y = _leaky(acc, lc["neg_slope"])

            if li == nl - 1:
                dst, pad2, hp2, wp2 = out_ref, 0, ho, wo      # dense pack
            else:
                nxt = layers[li + 1]
                dst = scratch[li % len(scratch)]
                pad2, hp2, wp2 = nxt["pad"], nxt["hp"], nxt["wp"]
                dst[...] = jnp.zeros_like(dst)                # padding + tail
            y = y.astype(dst.dtype)

            # Repack the valid (ho, wo) window of every image into the next
            # layer's zero-padded flattened layout (all offsets are static,
            # this loop is fully unrolled; stride-1 only in the fused path).
            for img in range(n):
                for oh in range(ho):
                    sb = img * hp * wp + oh * wp
                    db = img * hp2 * wp2 + (oh + pad2) * wp2 + pad2
                    dst[:, db:db + wo] = y[:, sb:sb + wo]
            src = dst

    return kernel


# ---------------------------------------------------------------------------
# Fallback per-layer path: explicit im2col + fused GEMM/bias/LeakyReLU kernel
# (used for stride > 1 or when the fused network does not fit VMEM).
# ---------------------------------------------------------------------------
def _gemm_bias_lrelu_kernel(w_ref, b_ref, p_ref, o_ref, *, neg_slope):
    # w_ref: (Cout_pad, K_pad), b_ref: (Cout_pad, 1), p_ref: (K_pad, TM)
    acc = jnp.dot(w_ref[...], p_ref[...], preferred_element_type=jnp.float32)
    acc = acc + b_ref[...]
    o_ref[...] = _leaky(acc, neg_slope).astype(o_ref.dtype)


def _pick_tm(m_pad, k_pad, cout_pad, in_itemsize, max_tm=4096,
             vmem_budget=12 * 1024 * 1024):
    """Largest 128-multiple tile under a v5e-safe VMEM budget; shrink to keep
    >= 4 grid steps (2 per TensorCore on v7x) when the problem allows it."""
    def est(tm):
        return (2 * tm * (k_pad * in_itemsize + cout_pad * 4)
                + 2 * cout_pad * (k_pad * in_itemsize + 4))

    best = 128
    tm = 128
    cap = min(max_tm, _round_up(m_pad, 128))
    while tm <= cap:
        if est(tm) <= vmem_budget:
            best = tm
        tm += 128
    while best > 128 and pl.cdiv(m_pad, best) < 4:
        best -= 128
    return best, est(best)


def _gemm_bias_leakyrelu(w_mat, b_col, patches, neg_slope, *, max_tm=4096):
    cout_pad, k_pad = w_mat.shape
    m_pad = patches.shape[1]
    tm, est = _pick_tm(m_pad, k_pad, cout_pad, patches.dtype.itemsize,
                       max_tm=max_tm)
    vmem_limit = int(min(48 * 2 ** 20, max(16 * 2 ** 20, 2 * est)))
    kernel = functools.partial(_gemm_bias_lrelu_kernel, neg_slope=neg_slope)
    return pl.pallas_call(
        kernel,
        out_shape=jax.ShapeDtypeStruct((cout_pad, m_pad), jnp.float32),
        grid_spec=pltpu.PrefetchScalarGridSpec(
            num_scalar_prefetch=0,
            grid=(pl.cdiv(m_pad, tm),),
            in_specs=[
                pl.BlockSpec((cout_pad, k_pad), lambda i: (0, 0)),  # weights
                pl.BlockSpec((cout_pad, 1), lambda i: (0, 0)),      # bias
                pl.BlockSpec((k_pad, tm), lambda i: (0, i)),        # patches
            ],
            out_specs=pl.BlockSpec((cout_pad, tm), lambda i: (0, i)),
        ),
        compiler_params=pltpu.CompilerParams(
            dimension_semantics=("parallel",),
            vmem_limit_bytes=vmem_limit,
        ),
    )(w_mat, b_col, patches)


def _im2col_cnhw(x_cnhw, kh, kw, stride, padding, dilation):
    """x: (C, N, H, W) -> patches (C*kh*kw, N*Ho*Wo), K ordered (C, kh, kw)."""
    C, N, H, W = x_cnhw.shape
    xp = jnp.pad(x_cnhw, ((0, 0), (0, 0), (padding, padding),
                          (padding, padding)))
    Ho = (H + 2 * padding - dilation * (kh - 1) - 1) // stride + 1
    Wo = (W + 2 * padding - dilation * (kw - 1) - 1) // stride + 1
    cols = []
    for i in range(kh):
        for j in range(kw):
            di, dj = i * dilation, j * dilation
            cols.append(xp[:, :, di:di + stride * Ho:stride,
                              dj:dj + stride * Wo:stride])
    patches = jnp.stack(cols, axis=1).reshape(C * kh * kw, N * Ho * Wo)
    return patches, (N, Ho, Wo)


def _conv2d_leakyrelu(x_cnhw, weight_oihw, bias, stride, padding, dilation,
                      neg_slope, compute_dtype=jnp.float32, max_tm=4096):
    """One Conv2d(groups=1, 'zeros') + LeakyReLU in channel-major layout."""
    c_out, c_in, kh, kw = weight_oihw.shape
    c_store = x_cnhw.shape[0]
    if c_store > c_in:  # carry-over zero channels from previous layer padding
        weight_oihw = jnp.pad(weight_oihw,
                              ((0, 0), (0, c_store - c_in), (0, 0), (0, 0)))

    patches, (n, ho, wo) = _im2col_cnhw(x_cnhw, kh, kw, stride, padding,
                                        dilation)
    k = c_store * kh * kw
    m = n * ho * wo
    k_pad = _round_up(k, 8)
    m_pad = _round_up(m, 128)
    cout_pad = _round_up(c_out, 8)

    patches = jnp.pad(patches, ((0, k_pad - k), (0, m_pad - m)))
    w_mat = jnp.pad(weight_oihw.reshape(c_out, k),
                    ((0, cout_pad - c_out), (0, k_pad - k)))
    b_col = jnp.pad(bias, (0, cout_pad - c_out)).reshape(cout_pad, 1)

    if jnp.dtype(compute_dtype) != jnp.dtype(jnp.float32):
        patches = patches.astype(compute_dtype)
        w_mat = w_mat.astype(compute_dtype)

    out = _gemm_bias_leakyrelu(w_mat, b_col, patches, neg_slope,
                               max_tm=max_tm)
    if m_pad != m:
        out = out[:, :m]
    return out.reshape(cout_pad, n, ho, wo)


# ---------------------------------------------------------------------------
# DCNN in JAX
# ---------------------------------------------------------------------------
class DCNNPallas:
    def __init__(self, input_channel, output_channel, hidden_channels,
                 kernel_sizes, conv_transpose=False, strides=1, paddings=0,
                 dilations=1, groups=1, biases=True, padding_modes='zeros',
                 leaky_relu_negative_slopes=0.01, compute_dtype=jnp.float32,
                 max_tm=4096, key=None):
        if hidden_channels is not None and not isinstance(hidden_channels, list):
            raise ValueError(
                f"hidden_channels must be a list of int or None. "
                f"Found: {type(hidden_channels)}.")
        if conv_transpose:
            # TODO(synk): ConvTranspose2d path.
            raise NotImplementedError("conv_transpose=True is not supported.")
        hidden_channels = hidden_channels or []
        self.num_cnns = len(hidden_channels) + 1
        self.input_channel = input_channel
        self.output_channel = output_channel
        self.compute_dtype = compute_dtype
        self.max_tm = max_tm
        chans = [input_channel] + list(hidden_channels) + [output_channel]

        def _expand(p, name):
            if isinstance(p, list):
                if len(p) == 1:
                    return p * self.num_cnns
                if len(p) < self.num_cnns:
                    raise ValueError(
                        f"Not enough specification in {name}: expected length "
                        f"{self.num_cnns} (or 1), found {len(p)}.")
                return list(p[:self.num_cnns])
            return [p] * self.num_cnns

        def _expand_ks(p):
            if isinstance(p, tuple):
                return [p] * self.num_cnns
            return _expand(p, "kernel_sizes")

        self.kernel_sizes = _expand_ks(kernel_sizes)
        self.strides = _expand(strides, "strides")
        self.paddings = _expand(paddings, "paddings")
        self.dilations = _expand(dilations, "dilations")
        self.groups = _expand(groups, "groups")
        self.use_bias = _expand(biases, "biases")
        self.pad_modes = _expand(padding_modes, "padding_modes")
        self.neg_slopes = [float(s) for s in
                           _expand(leaky_relu_negative_slopes,
                                   "leaky_relu_negative_slopes")]
        if any(g != 1 for g in self.groups):
            # TODO(synk): grouped convolutions.
            raise NotImplementedError("Only groups=1 is supported.")
        if any(pm != 'zeros' for pm in self.pad_modes):
            # TODO(synk): reflect / replicate / circular padding modes.
            raise NotImplementedError("Only padding_mode='zeros' is supported.")

        key = key if key is not None else jax.random.PRNGKey(0)
        self.params = []
        for li in range(self.num_cnns):
            c_in, c_out = chans[li], chans[li + 1]
            k = self.kernel_sizes[li]
            kh, kw = (k, k) if isinstance(k, int) else (int(k[0]), int(k[1]))
            key, wk, bk = jax.random.split(key, 3)
            fan_in = c_in * kh * kw
            bound = 1.0 / math.sqrt(fan_in)
            w = jax.random.uniform(wk, (c_out, c_in, kh, kw),
                                   minval=-bound, maxval=bound,
                                   dtype=jnp.float32)
            if self.use_bias[li]:
                b = jax.random.uniform(bk, (c_out,), minval=-bound,
                                       maxval=bound, dtype=jnp.float32)
            else:
                b = jnp.zeros((c_out,), jnp.float32)
            self.params.append((w, b))

        # Pre-packed per-tap weights for the fused path: one common channel
        # padding for every layer (padded channels are exact zeros).
        c_quant = 16 if jnp.dtype(compute_dtype) == jnp.dtype(jnp.bfloat16) else 8
        self.c_pad = _round_up(max(chans), c_quant)
        self.packed = []
        for (w, b) in self.params:
            c_out, c_in, kh, kw = w.shape
            wp_ = jnp.pad(w, ((0, self.c_pad - c_out), (0, self.c_pad - c_in),
                              (0, 0), (0, 0)))
            w_taps = jnp.transpose(wp_, (2, 3, 0, 1)).reshape(
                kh * kw, self.c_pad, self.c_pad).astype(compute_dtype)
            b_col = jnp.pad(b, (0, self.c_pad - c_out)).reshape(
                self.c_pad, 1).astype(jnp.float32)
            self.packed.append((w_taps, b_col))

    # -- planning -----------------------------------------------------------
    def _plan(self, n, h, w):
        layers = []
        hh, ww = h, w
        for li in range(self.num_cnns):
            k = self.kernel_sizes[li]
            kh, kw = (k, k) if isinstance(k, int) else (int(k[0]), int(k[1]))
            s, p, d = self.strides[li], self.paddings[li], self.dilations[li]
            hp, wp = hh + 2 * p, ww + 2 * p
            ho = (hp - d * (kh - 1) - 1) // s + 1
            wo = (wp - d * (kw - 1) - 1) // s + 1
            layers.append(dict(kh=kh, kw=kw, stride=s, pad=p, dil=d,
                               hp=hp, wp=wp, ho=ho, wo=wo,
                               neg_slope=self.neg_slopes[li]))
            hh, ww = ho, wo

        l_need = max(n * lc["hp"] * lc["wp"]
                     + (lc["kh"] - 1) * lc["dil"] * lc["wp"]
                     + (lc["kw"] - 1) * lc["dil"] for lc in layers)
        l_max = _round_up(l_need, 128)
        m_out = n * layers[-1]["ho"] * layers[-1]["wo"]
        m_out_pad = _round_up(max(m_out, 128), 128)
        nl = self.num_cnns
        num_scratch = 0 if nl == 1 else (1 if nl == 2 else 2)

        act_it = jnp.dtype(self.compute_dtype).itemsize
        c_pad = self.c_pad
        act = c_pad * l_max * act_it
        weights = sum(lc["kh"] * lc["kw"] for lc in layers) * c_pad * c_pad * act_it
        bias_b = nl * c_pad * 4
        out_b = c_pad * m_out_pad * 4
        m_grid_max = max(n * lc["hp"] * lc["wp"] for lc in layers)
        temps = 4 * c_pad * m_grid_max * 4
        est = 2 * (act + weights + bias_b + out_b) + num_scratch * act + temps

        fused_ok = (
            all(lc["stride"] == 1 for lc in layers)
            and all(lc["ho"] > 0 and lc["wo"] > 0 for lc in layers)
            and n * sum(lc["ho"] for lc in layers) <= 1024   # unroll bound
            and sum(lc["kh"] * lc["kw"] for lc in layers) <= 256
            and est <= 40 * 2 ** 20                           # v7x-safe budget
        )
        return dict(layers=layers, l_max=l_max, m_out=m_out,
                    m_out_pad=m_out_pad, num_scratch=num_scratch,
                    vmem_est=est, fused_ok=fused_ok)

    # -- fused whole-network forward ----------------------------------------
    def _forward_fused(self, x_nchw, plan):
        n, c_in, _, _ = x_nchw.shape
        nl = self.num_cnns
        c_pad = self.c_pad
        act_dt = jnp.dtype(self.compute_dtype)
        layers = plan["layers"]
        l_max = plan["l_max"]
        m_out, m_out_pad = plan["m_out"], plan["m_out_pad"]
        last = layers[-1]

        # NCHW -> CNHW, zero-extend channels, spatial zero-pad, flatten.
        p0 = layers[0]["pad"]
        xc = jnp.transpose(x_nchw.astype(jnp.float32), (1, 0, 2, 3))
        xc = jnp.pad(xc, ((0, c_pad - c_in), (0, 0), (p0, p0), (p0, p0)))
        x_flat = xc.reshape(c_pad, n * layers[0]["hp"] * layers[0]["wp"])
        x_flat = jnp.pad(x_flat, ((0, 0), (0, l_max - x_flat.shape[1])))
        x_flat = x_flat.astype(act_dt)

        w_list = [wt for wt, _ in self.packed]
        b_list = [bc for _, bc in self.packed]

        cfg = dict(num_layers=nl, c_pad=c_pad, batch=n, layers=layers)
        kernel = _make_fused_kernel(cfg)

        in_specs = [_full_spec(x_flat.shape)]
        in_specs += [_full_spec(wt.shape) for wt in w_list]
        in_specs += [_full_spec(bc.shape) for bc in b_list]
        out_spec = _full_spec((c_pad, m_out_pad))
        scratch_shapes = [pltpu.VMEM((c_pad, l_max), act_dt)
                          for _ in range(plan["num_scratch"])]

        vmem_limit = int(min(48 * 2 ** 20,
                             max(32 * 2 ** 20, 2 * plan["vmem_est"])))

        out = pl.pallas_call(
            kernel,
            out_shape=jax.ShapeDtypeStruct((c_pad, m_out_pad), jnp.float32),
            grid_spec=pltpu.PrefetchScalarGridSpec(
                num_scalar_prefetch=0,
                grid=(1,),
                in_specs=in_specs,
                out_specs=out_spec,
                scratch_shapes=scratch_shapes,
            ),
            compiler_params=pltpu.CompilerParams(
                dimension_semantics=("arbitrary",),
                vmem_limit_bytes=vmem_limit,
            ),
        )(x_flat, *w_list, *b_list)

        y = out[:self.output_channel, :m_out]
        y = y.reshape(self.output_channel, n, last["ho"], last["wo"])
        return jnp.transpose(y, (1, 0, 2, 3))

    # -- per-layer fallback ---------------------------------------------------
    def _forward_layerwise(self, x_nchw):
        x = jnp.transpose(x_nchw, (1, 0, 2, 3))   # CNHW, kept across layers
        for li, (w, b) in enumerate(self.params):
            x = _conv2d_leakyrelu(
                x, w, b,
                stride=self.strides[li],
                padding=self.paddings[li],
                dilation=self.dilations[li],
                neg_slope=self.neg_slopes[li],
                compute_dtype=self.compute_dtype,
                max_tm=self.max_tm,
            )
        x = x[:self.output_channel]
        return jnp.transpose(x, (1, 0, 2, 3))

    def __call__(self, x):
        # x: (N, C, H, W) NCHW like PyTorch, or (N, H, W) with 1 channel.
        if x.ndim == 3:
            if self.input_channel != 1:
                raise ValueError("3-D input implies a single channel.")
            x = x[:, None, :, :]
        if x.ndim != 4:
            raise ValueError(f"Input must be 3- or 4-D, got ndim={x.ndim}")
        n, c, h, w = x.shape
        plan = self._plan(n, h, w)
        if plan["fused_ok"]:
            return self._forward_fused(x, plan)
        return self._forward_layerwise(x)


if __name__ == "__main__":
    key = jax.random.PRNGKey(0)
    xkey, pkey = jax.random.split(key)

    # Small config: input_channel=4, hidden_channels=[8, 16], output_channel=4,
    # kernel_size=3, stride=1, padding=1 (spatial size preserved).
    model = DCNNPallas(
        input_channel=4,
        output_channel=4,
        hidden_channels=[8, 16],
        kernel_sizes=3,
        strides=1,
        paddings=1,
        dilations=1,
        leaky_relu_negative_slopes=0.01,
        compute_dtype=jnp.float32,   # jnp.bfloat16 halves DMA on v6e/v7x
        key=pkey,
    )

    x = jax.random.normal(xkey, (2, 4, 16, 16), dtype=jnp.float32)
    fwd = jax.jit(model.__call__)
    y = jax.block_until_ready(fwd(x))
    assert y.shape == (2, 4, 16, 16), y.shape
    assert bool(jnp.all(jnp.isfinite(y)))

    # Cross-check against a pure-JAX (XLA conv) reference of the same module.
    def ref_forward(inp):
        out = inp
        for li, (w, b) in enumerate(model.params):
            out = jax.lax.conv_general_dilated(
                out, w,
                window_strides=(model.strides[li],) * 2,
                padding=[(model.paddings[li],) * 2] * 2,
                rhs_dilation=(model.dilations[li],) * 2,
                dimension_numbers=("NCHW", "OIHW", "NCHW"),
                precision=jax.lax.Precision.HIGHEST)
            out = out + b[None, :, None, None]
            ns = model.neg_slopes[li]
            out = jnp.where(out >= 0, out, ns * out)
        return out

    y_ref = jax.block_until_ready(jax.jit(ref_forward)(x))
    err = float(jnp.max(jnp.abs(y - y_ref)))
    # Typical error is < 1e-4 (f32 accumulation); loose bound still catches
    # any structural (tap/offset/bias) bug.
    assert err < 3e-2, f"max abs error vs reference: {err}"
    print("KERNEL_OK")
</pallas_src>

<mosaic_0001>
module attributes {stable_mosaic.version = 11 : i64} {
  func.func @kernel(%arg0: i32, %arg1: memref<16x768xf32, #tpu.memory_space<vmem>>, %arg2: memref<9x16x16xf32, #tpu.memory_space<vmem>>, %arg3: memref<9x16x16xf32, #tpu.memory_space<vmem>>, %arg4: memref<9x16x16xf32, #tpu.memory_space<vmem>>, %arg5: memref<16x1xf32, #tpu.memory_space<vmem>>, %arg6: memref<16x1xf32, #tpu.memory_space<vmem>>, %arg7: memref<16x1xf32, #tpu.memory_space<vmem>>, %arg8: memref<16x512xf32, #tpu.memory_space<vmem>>, %arg9: memref<16x768xf32, #tpu.memory_space<vmem>>, %arg10: memref<16x768xf32, #tpu.memory_space<vmem>>) attributes {dimension_semantics = [#tpu.dimension_semantics<arbitrary>], iteration_bounds = array<i64: 1>, scalar_prefetch = 0 : i64, scratch_operands = 2 : i64, tpu.core_type = #tpu.core_type<tc>, window_params = [{pipeline_mode = #tpu.pipeline_mode<synchronous>, transform_indices = @transform_0, window_bounds = array<i64: 16, 768>}, {pipeline_mode = #tpu.pipeline_mode<synchronous>, transform_indices = @transform_1, window_bounds = array<i64: 9, 16, 16>}, {pipeline_mode = #tpu.pipeline_mode<synchronous>, transform_indices = @transform_2, window_bounds = array<i64: 9, 16, 16>}, {pipeline_mode = #tpu.pipeline_mode<synchronous>, transform_indices = @transform_3, window_bounds = array<i64: 9, 16, 16>}, {pipeline_mode = #tpu.pipeline_mode<synchronous>, transform_indices = @transform_4, window_bounds = array<i64: 16, 1>}, {pipeline_mode = #tpu.pipeline_mode<synchronous>, transform_indices = @transform_5, window_bounds = array<i64: 16, 1>}, {pipeline_mode = #tpu.pipeline_mode<synchronous>, transform_indices = @transform_6, window_bounds = array<i64: 16, 1>}, {pipeline_mode = #tpu.pipeline_mode<synchronous>, transform_indices = @transform_7, window_bounds = array<i64: 16, 512>}]} {
    %cst = arith.constant 0.000000e+00 : f32
    %0 = vector.broadcast %cst : f32 to vector<16x512xf32>
    %c0 = arith.constant 0 : index
    %c0_0 = arith.constant 0 : index
    %1 = vector.load %arg8[%c0, %c0_0] : memref<16x512xf32, #tpu.memory_space<vmem>>, vector<16x512xf32>
    tpu.vector_store %arg8[%c0, %c0_0], %0 {strides = array<i32>} : memref<16x512xf32, #tpu.memory_space<vmem>>, vector<16x512xf32>,
    %cst_1 = arith.constant 0.000000e+00 : f32
    %2 = vector.broadcast %cst_1 : f32 to vector<16x648xf32>
    %c0_2 = arith.constant 0 : index
    %c0_3 = arith.constant 0 : index
    %c0_4 = arith.constant 0 : index
    %3 = vector.load %arg2[%c0_2, %c0_3, %c0_4] : memref<9x16x16xf32, #tpu.memory_space<vmem>>, vector<1x16x16xf32>
    %4 = vector.shape_cast %3 : vector<1x16x16xf32> to vector<16x16xf32>
    %c0_5 = arith.constant 0 : index
    %c0_6 = arith.constant 0 : index
    %5 = vector.load %arg1[%c0_5, %c0_6] : memref<16x768xf32, #tpu.memory_space<vmem>>, vector<16x648xf32>
    %cst_7 = arith.constant dense<0.000000e+00> : vector<16x648xf32>
    %6 = tpu.matmul %4, %5, %cst_7 {dimension_numbers = #tpu.dot_dimension_numbers<[1], [0], [0], [1], [0, 0, 1, 1], [], []>} : vector<16x16xf32>, vector<16x648xf32>, vector<16x648xf32> -> vector<16x648xf32>
    %7 = arith.addf %2, %6 : vector<16x648xf32>
    %c1 = arith.constant 1 : index
    %c0_8 = arith.constant 0 : index
    %c0_9 = arith.constant 0 : index
    %8 = vector.load %arg2[%c1, %c0_8, %c0_9] : memref<9x16x16xf32, #tpu.memory_space<vmem>>, vector<1x16x16xf32>
    %9 = vector.shape_cast %8 : vector<1x16x16xf32> to vector<16x16xf32>
    %c0_10 = arith.constant 0 : index
    %c1_11 = arith.constant 1 : index
    %10 = vector.load %arg1[%c0_10, %c1_11] : memref<16x768xf32, #tpu.memory_space<vmem>>, vector<16x648xf32>
    %cst_12 = arith.constant dense<0.000000e+00> : vector<16x648xf32>
    %11 = tpu.matmul %9, %10, %cst_12 {dimension_numbers = #tpu.dot_dimension_numbers<[1], [0], [0], [1], [0, 0, 1, 1], [], []>} : vector<16x16xf32>, vector<16x648xf32>, vector<16x648xf32> -> vector<16x648xf32>
    %12 = arith.addf %7, %11 : vector<16x648xf32>
    %c2 = arith.constant 2 : index
    %c0_13 = arith.constant 0 : index
    %c0_14 = arith.constant 0 : index
    %13 = vector.load %arg2[%c2, %c0_13, %c0_14] : memref<9x16x16xf32, #tpu.memory_space<vmem>>, vector<1x16x16xf32>
    %14 = vector.shape_cast %13 : vector<1x16x16xf32> to vector<16x16xf32>
    %c0_15 = arith.constant 0 : index
    %c2_16 = arith.constant 2 : index
    %15 = vector.load %arg1[%c0_15, %c2_16] : memref<16x768xf32, #tpu.memory_space<vmem>>, vector<16x648xf32>
    %cst_17 = arith.constant dense<0.000000e+00> : vector<16x648xf32>
    %16 = tpu.matmul %14, %15, %cst_17 {dimension_numbers = #tpu.dot_dimension_numbers<[1], [0], [0], [1], [0, 0, 1, 1], [], []>} : vector<16x16xf32>, vector<16x648xf32>, vector<16x648xf32> -> vector<16x648xf32>
    %17 = arith.addf %12, %16 : vector<16x648xf32>
    %c3 = arith.constant 3 : index
    %c0_18 = arith.constant 0 : index
    %c0_19 = arith.constant 0 : index
    %18 = vector.load %arg2[%c3, %c0_18, %c0_19] : memref<9x16x16xf32, #tpu.memory_space<vmem>>, vector<1x16x16xf32>
    %19 = vector.shape_cast %18 : vector<1x16x16xf32> to vector<16x16xf32>
    %c0_20 = arith.constant 0 : index
    %c18 = arith.constant 18 : index
    %20 = vector.load %arg1[%c0_20, %c18] : memref<16x768xf32, #tpu.memory_space<vmem>>, vector<16x648xf32>
    %cst_21 = arith.constant dense<0.000000e+00> : vector<16x648xf32>
    %21 = tpu.matmul %19, %20, %cst_21 {dimension_numbers = #tpu.dot_dimension_numbers<[1], [0], [0], [1], [0, 0, 1, 1], [], []>} : vector<16x16xf32>, vector<16x648xf32>, vector<16x648xf32> -> vector<16x648xf32>
    %22 = arith.addf %17, %21 : vector<16x648xf32>
    %c4 = arith.constant 4 : index
    %c0_22 = arith.constant 0 : index
    %c0_23 = arith.constant 0 : index
    %23 = vector.load %arg2[%c4, %c0_22, %c0_23] : memref<9x16x16xf32, #tpu.memory_space<vmem>>, vector<1x16x16xf32>
    %24 = vector.shape_cast %23 : vector<1x16x16xf32> to vector<16x16xf32>
    %c0_24 = arith.constant 0 : index
    %c19 = arith.constant 19 : index
    %25 = vector.load %arg1[%c0_24, %c19] : memref<16x768xf32, #tpu.memory_space<vmem>>, vector<16x648xf32>
    %cst_25 = arith.constant dense<0.000000e+00> : vector<16x648xf32>
    %26 = tpu.matmul %24, %25, %cst_25 {dimension_numbers = #tpu.dot_dimension_numbers<[1], [0], [0], [1], [0, 0, 1, 1], [], []>} : vector<16x16xf32>, vector<16x648xf32>, vector<16x648xf32> -> vector<16x648xf32>
    %27 = arith.addf %22, %26 : vector<16x648xf32>
    %c5 = arith.constant 5 : index
    %c0_26 = arith.constant 0 : index
    %c0_27 = arith.constant 0 : index
    %28 = vector.load %arg2[%c5, %c0_26, %c0_27] : memref<9x16x16xf32, #tpu.memory_space<vmem>>, vector<1x16x16xf32>
    %29 = vector.shape_cast %28 : vector<1x16x16xf32> to vector<16x16xf32>
    %c0_28 = arith.constant 0 : index
    %c20 = arith.constant 20 : index
    %30 = vector.load %arg1[%c0_28, %c20] : memref<16x768xf32, #tpu.memory_space<vmem>>, vector<16x648xf32>
    %cst_29 = arith.constant dense<0.000000e+00> : vector<16x648xf32>
    %31 = tpu.matmul %29, %30, %cst_29 {dimension_numbers = #tpu.dot_dimension_numbers<[1], [0], [0], [1], [0, 0, 1, 1], [], []>} : vector<16x16xf32>, vector<16x648xf32>, vector<16x648xf32> -> vector<16x648xf32>
    %32 = arith.addf %27, %31 : vector<16x648xf32>
    %c6 = arith.constant 6 : index
    %c0_30 = arith.constant 0 : index
    %c0_31 = arith.constant 0 : index
    %33 = vector.load %arg2[%c6, %c0_30, %c0_31] : memref<9x16x16xf32, #tpu.memory_space<vmem>>, vector<1x16x16xf32>
    %34 = vector.shape_cast %33 : vector<1x16x16xf32> to vector<16x16xf32>
    %c0_32 = arith.constant 0 : index
    %c36 = arith.constant 36 : index
    %35 = vector.load %arg1[%c0_32, %c36] : memref<16x768xf32, #tpu.memory_space<vmem>>, vector<16x648xf32>
    %cst_33 = arith.constant dense<0.000000e+00> : vector<16x648xf32>
    %36 = tpu.matmul %34, %35, %cst_33 {dimension_numbers = #tpu.dot_dimension_numbers<[1], [0], [0], [1], [0, 0, 1, 1], [], []>} : vector<16x16xf32>, vector<16x648xf32>, vector<16x648xf32> -> vector<16x648xf32>
    %37 = arith.addf %32, %36 : vector<16x648xf32>
    %c7 = arith.constant 7 : index
    %c0_34 = arith.constant 0 : index
    %c0_35 = arith.constant 0 : index
    %38 = vector.load %arg2[%c7, %c0_34, %c0_35] : memref<9x16x16xf32, #tpu.memory_space<vmem>>, vector<1x16x16xf32>
    %39 = vector.shape_cast %38 : vector<1x16x16xf32> to vector<16x16xf32>
    %c0_36 = arith.constant 0 : index
    %c37 = arith.constant 37 : index
    %40 = vector.load %arg1[%c0_36, %c37] : memref<16x768xf32, #tpu.memory_space<vmem>>, vector<16x648xf32>
    %cst_37 = arith.constant dense<0.000000e+00> : vector<16x648xf32>
    %41 = tpu.matmul %39, %40, %cst_37 {dimension_numbers = #tpu.dot_dimension_numbers<[1], [0], [0], [1], [0, 0, 1, 1], [], []>} : vector<16x16xf32>, vector<16x648xf32>, vector<16x648xf32> -> vector<16x648xf32>
    %42 = arith.addf %37, %41 : vector<16x648xf32>
    %c8 = arith.constant 8 : index
    %c0_38 = arith.constant 0 : index
    %c0_39 = arith.constant 0 : index
    %43 = vector.load %arg2[%c8, %c0_38, %c0_39] : memref<9x16x16xf32, #tpu.memory_space<vmem>>, vector<1x16x16xf32>
    %44 = vector.shape_cast %43 : vector<1x16x16xf32> to vector<16x16xf32>
    %c0_40 = arith.constant 0 : index
    %c38 = arith.constant 38 : index
    %45 = vector.load %arg1[%c0_40, %c38] : memref<16x768xf32, #tpu.memory_space<vmem>>, vector<16x648xf32>
    %cst_41 = arith.constant dense<0.000000e+00> : vector<16x648xf32>
    %46 = tpu.matmul %44, %45, %cst_41 {dimension_numbers = #tpu.dot_dimension_numbers<[1], [0], [0], [1], [0, 0, 1, 1], [], []>} : vector<16x16xf32>, vector<16x648xf32>, vector<16x648xf32> -> vector<16x648xf32>
    %47 = arith.addf %42, %46 : vector<16x648xf32>
    %c0_42 = arith.constant 0 : index
    %c0_43 = arith.constant 0 : index
    %48 = vector.load %arg5[%c0_42, %c0_43] : memref<16x1xf32, #tpu.memory_space<vmem>>, vector<16x1xf32>
    %49 = vector.broadcast %48 : vector<16x1xf32> to vector<16x648xf32>
    %50 = arith.addf %47, %49 : vector<16x648xf32>
    %cst_44 = arith.constant 0.00999999977 : f32
    %51 = vector.broadcast %cst_44 : f32 to vector<16x648xf32>
    %52 = arith.mulf %51, %50 : vector<16x648xf32>
    %53 = arith.maximumf %50, %52 : vector<16x648xf32>
    %cst_45 = arith.constant 0.000000e+00 : f32
    %54 = vector.broadcast %cst_45 : f32 to vector<16x768xf32>
    %c0_46 = arith.constant 0 : index
    %c0_47 = arith.constant 0 : index
    %55 = vector.load %arg9[%c0_46, %c0_47] : memref<16x768xf32, #tpu.memory_space<vmem>>, vector<16x768xf32>
    tpu.vector_store %arg9[%c0_46, %c0_47], %54 {strides = array<i32>} : memref<16x768xf32, #tpu.memory_space<vmem>>, vector<16x768xf32>,
    %56 = vector.extract_strided_slice %53 {offsets = [0, 0], sizes = [16, 16], strides = [1, 1]} : vector<16x648xf32> to vector<16x16xf32>
    %c0_48 = arith.constant 0 : index
    %c19_49 = arith.constant 19 : index
    %57 = vector.load %arg9[%c0_48, %c19_49] : memref<16x768xf32, #tpu.memory_space<vmem>>, vector<16x16xf32>
    tpu.vector_store %arg9[%c0_48, %c19_49], %56 {strides = array<i32>} : memref<16x768xf32, #tpu.memory_space<vmem>>, vector<16x16xf32>,
    %58 = vector.extract_strided_slice %53 {offsets = [0, 18], sizes = [16, 16], strides = [1, 1]} : vector<16x648xf32> to vector<16x16xf32>
    %c0_50 = arith.constant 0 : index
    %c37_51 = arith.constant 37 : index
    %59 = vector.load %arg9[%c0_50, %c37_51] : memref<16x768xf32, #tpu.memory_space<vmem>>, vector<16x16xf32>
    tpu.vector_store %arg9[%c0_50, %c37_51], %58 {strides = array<i32>} : memref<16x768xf32, #tpu.memory_space<vmem>>, vector<16x16xf32>,
    %60 = vector.extract_strided_slice %53 {offsets = [0, 36], sizes = [16, 16], strides = [1, 1]} : vector<16x648xf32> to vector<16x16xf32>
    %c0_52 = arith.constant 0 : index
    %c55 = arith.constant 55 : index
    %61 = vector.load %arg9[%c0_52, %c55] : memref<16x768xf32, #tpu.memory_space<vmem>>, vector<16x16xf32>
    tpu.vector_store %arg9[%c0_52, %c55], %60 {strides = array<i32>} : memref<16x768xf32, #tpu.memory_space<vmem>>, vector<16x16xf32>,
    %62 = vector.extract_strided_slice %53 {offsets = [0, 54], sizes = [16, 16], strides = [1, 1]} : vector<16x648xf32> to vector<16x16xf32>
    %c0_53 = arith.constant 0 : index
    %c73 = arith.constant 73 : index
    %63 = vector.load %arg9[%c0_53, %c73] : memref<16x768xf32, #tpu.memory_space<vmem>>, vector<16x16xf32>
    tpu.vector_store %arg9[%c0_53, %c73], %62 {strides = array<i32>} : memref<16x768xf32, #tpu.memory_space<vmem>>, vector<16x16xf32>,
    %64 = vector.extract_strided_slice %53 {offsets = [0, 72], sizes = [16, 16], strides = [1, 1]} : vector<16x648xf32> to vector<16x16xf32>
    %c0_54 = arith.constant 0 : index
    %c91 = arith.constant 91 : index
    %65 = vector.load %arg9[%c0_54, %c91] : memref<16x768xf32, #tpu.memory_space<vmem>>, vector<16x16xf32>
    tpu.vector_store %arg9[%c0_54, %c91], %64 {strides = array<i32>} : memref<16x768xf32, #tpu.memory_space<vmem>>, vector<16x16xf32>,
    %66 = vector.extract_strided_slice %53 {offsets = [0, 90], sizes = [16, 16], strides = [1, 1]} : vector<16x648xf32> to vector<16x16xf32>
    %c0_55 = arith.constant 0 : index
    %c109 = arith.constant 109 : index
    %67 = vector.load %arg9[%c0_55, %c109] : memref<16x768xf32, #tpu.memory_space<vmem>>, vector<16x16xf32>
    tpu.vector_store %arg9[%c0_55, %c109], %66 {strides = array<i32>} : memref<16x768xf32, #tpu.memory_space<vmem>>, vector<16x16xf32>,
    %68 = vector.extract_strided_slice %53 {offsets = [0, 108], sizes = [16, 16], strides = [1, 1]} : vector<16x648xf32> to vector<16x16xf32>
    %c0_56 = arith.constant 0 : index
    %c127 = arith.constant 127 : index
    %69 = vector.load %arg9[%c0_56, %c127] : memref<16x768xf32, #tpu.memory_space<vmem>>, vector<16x16xf32>
    tpu.vector_store %arg9[%c0_56, %c127], %68 {strides = array<i32>} : memref<16x768xf32, #tpu.memory_space<vmem>>, vector<16x16xf32>,
    %70 = vector.extract_strided_slice %53 {offsets = [0, 126], sizes = [16, 16], strides = [1, 1]} : vector<16x648xf32> to vector<16x16xf32>
    %c0_57 = arith.constant 0 : index
    %c145 = arith.constant 145 : index
    %71 = vector.load %arg9[%c0_57, %c145] : memref<16x768xf32, #tpu.memory_space<vmem>>, vector<16x16xf32>
    tpu.vector_store %arg9[%c0_57, %c145], %70 {strides = array<i32>} : memref<16x768xf32, #tpu.memory_space<vmem>>, vector<16x16xf32>,
    %72 = vector.extract_strided_slice %53 {offsets = [0, 144], sizes = [16, 16], strides = [1, 1]} : vector<16x648xf32> to vector<16x16xf32>
    %c0_58 = arith.constant 0 : index
    %c163 = arith.constant 163 : index
    %73 = vector.load %arg9[%c0_58, %c163] : memref<16x768xf32, #tpu.memory_space<vmem>>, vector<16x16xf32>
    tpu.vector_store %arg9[%c0_58, %c163], %72 {strides = array<i32>} : memref<16x768xf32, #tpu.memory_space<vmem>>, vector<16x16xf32>,
    %74 = vector.extract_strided_slice %53 {offsets = [0, 162], sizes = [16, 16], strides = [1, 1]} : vector<16x648xf32> to vector<16x16xf32>
    %c0_59 = arith.constant 0 : index
    %c181 = arith.constant 181 : index
    %75 = vector.load %arg9[%c0_59, %c181] : memref<16x768xf32, #tpu.memory_space<vmem>>, vector<16x16xf32>
    tpu.vector_store %arg9[%c0_59, %c181], %74 {strides = array<i32>} : memref<16x768xf32, #tpu.memory_space<vmem>>, vector<16x16xf32>,
    %76 = vector.extract_strided_slice %53 {offsets = [0, 180], sizes = [16, 16], strides = [1, 1]} : vector<16x648xf32> to vector<16x16xf32>
    %c0_60 = arith.constant 0 : index
    %c199 = arith.constant 199 : index
    %77 = vector.load %arg9[%c0_60, %c199] : memref<16x768xf32, #tpu.memory_space<vmem>>, vector<16x16xf32>
    tpu.vector_store %arg9[%c0_60, %c199], %76 {strides = array<i32>} : memref<16x768xf32, #tpu.memory_space<vmem>>, vector<16x16xf32>,
    %78 = vector.extract_strided_slice %53 {offsets = [0, 198], sizes = [16, 16], strides = [1, 1]} : vector<16x648xf32> to vector<16x16xf32>
    %c0_61 = arith.constant 0 : index
    %c217 = arith.constant 217 : index
    %79 = vector.load %arg9[%c0_61, %c217] : memref<16x768xf32, #tpu.memory_space<vmem>>, vector<16x16xf32>
    tpu.vector_store %arg9[%c0_61, %c217], %78 {strides = array<i32>} : memref<16x768xf32, #tpu.memory_space<vmem>>, vector<16x16xf32>,
    %80 = vector.extract_strided_slice %53 {offsets = [0, 216], sizes = [16, 16], strides = [1, 1]} : vector<16x648xf32> to vector<16x16xf32>
    %c0_62 = arith.constant 0 : index
    %c235 = arith.constant 235 : index
    %81 = vector.load %arg9[%c0_62, %c235] : memref<16x768xf32, #tpu.memory_space<vmem>>, vector<16x16xf32>
    tpu.vector_store %arg9[%c0_62, %c235], %80 {strides = array<i32>} : memref<16x768xf32, #tpu.memory_space<vmem>>, vector<16x16xf32>,
    %82 = vector.extract_strided_slice %53 {offsets = [0, 234], sizes = [16, 16], strides = [1, 1]} : vector<16x648xf32> to vector<16x16xf32>
    %c0_63 = arith.constant 0 : index
    %c253 = arith.constant 253 : index
    %83 = vector.load %arg9[%c0_63, %c253] : memref<16x768xf32, #tpu.memory_space<vmem>>, vector<16x16xf32>
    tpu.vector_store %arg9[%c0_63, %c253], %82 {strides = array<i32>} : memref<16x768xf32, #tpu.memory_space<vmem>>, vector<16x16xf32>,
    %84 = vector.extract_strided_slice %53 {offsets = [0, 252], sizes = [16, 16], strides = [1, 1]} : vector<16x648xf32> to vector<16x16xf32>
    %c0_64 = arith.constant 0 : index
    %c271 = arith.constant 271 : index
    %85 = vector.load %arg9[%c0_64, %c271] : memref<16x768xf32, #tpu.memory_space<vmem>>, vector<16x16xf32>
    tpu.vector_store %arg9[%c0_64, %c271], %84 {strides = array<i32>} : memref<16x768xf32, #tpu.memory_space<vmem>>, vector<16x16xf32>,
    %86 = vector.extract_strided_slice %53 {offsets = [0, 270], sizes = [16, 16], strides = [1, 1]} : vector<16x648xf32> to vector<16x16xf32>
    %c0_65 = arith.constant 0 : index
    %c289 = arith.constant 289 : index
    %87 = vector.load %arg9[%c0_65, %c289] : memref<16x768xf32, #tpu.memory_space<vmem>>, vector<16x16xf32>
    tpu.vector_store %arg9[%c0_65, %c289], %86 {strides = array<i32>} : memref<16x768xf32, #tpu.memory_space<vmem>>, vector<16x16xf32>,
    %88 = vector.extract_strided_slice %53 {offsets = [0, 324], sizes = [16, 16], strides = [1, 1]} : vector<16x648xf32> to vector<16x16xf32>
    %c0_66 = arith.constant 0 : index
    %c343 = arith.constant 343 : index
    %89 = vector.load %arg9[%c0_66, %c343] : memref<16x768xf32, #tpu.memory_space<vmem>>, vector<16x16xf32>
    tpu.vector_store %arg9[%c0_66, %c343], %88 {strides = array<i32>} : memref<16x768xf32, #tpu.memory_space<vmem>>, vector<16x16xf32>,
    %90 = vector.extract_strided_slice %53 {offsets = [0, 342], sizes = [16, 16], strides = [1, 1]} : vector<16x648xf32> to vector<16x16xf32>
    %c0_67 = arith.constant 0 : index
    %c361 = arith.constant 361 : index
    %91 = vector.load %arg9[%c0_67, %c361] : memref<16x768xf32, #tpu.memory_space<vmem>>, vector<16x16xf32>
    tpu.vector_store %arg9[%c0_67, %c361], %90 {strides = array<i32>} : memref<16x768xf32, #tpu.memory_space<vmem>>, vector<16x16xf32>,
    %92 = vector.extract_strided_slice %53 {offsets = [0, 360], sizes = [16, 16], strides = [1, 1]} : vector<16x648xf32> to vector<16x16xf32>
    %c0_68 = arith.constant 0 : index
    %c379 = arith.constant 379 : index
    %93 = vector.load %arg9[%c0_68, %c379] : memref<16x768xf32, #tpu.memory_space<vmem>>, vector<16x16xf32>
    tpu.vector_store %arg9[%c0_68, %c379], %92 {strides = array<i32>} : memref<16x768xf32, #tpu.memory_space<vmem>>, vector<16x16xf32>,
    %94 = vector.extract_strided_slice %53 {offsets = [0, 378], sizes = [16, 16], strides = [1, 1]} : vector<16x648xf32> to vector<16x16xf32>
    %c0_69 = arith.constant 0 : index
    %c397 = arith.constant 397 : index
    %95 = vector.load %arg9[%c0_69, %c397] : memref<16x768xf32, #tpu.memory_space<vmem>>, vector<16x16xf32>
    tpu.vector_store %arg9[%c0_69, %c397], %94 {strides = array<i32>} : memref<16x768xf32, #tpu.memory_space<vmem>>, vector<16x16xf32>,
    %96 = vector.extract_strided_slice %53 {offsets = [0, 396], sizes = [16, 16], strides = [1, 1]} : vector<16x648xf32> to vector<16x16xf32>
    %c0_70 = arith.constant 0 : index
    %c415 = arith.constant 415 : index
    %97 = vector.load %arg9[%c0_70, %c415] : memref<16x768xf32, #tpu.memory_space<vmem>>, vector<16x16xf32>
    tpu.vector_store %arg9[%c0_70, %c415], %96 {strides = array<i32>} : memref<16x768xf32, #tpu.memory_space<vmem>>, vector<16x16xf32>,
    %98 = vector.extract_strided_slice %53 {offsets = [0, 414], sizes = [16, 16], strides = [1, 1]} : vector<16x648xf32> to vector<16x16xf32>
    %c0_71 = arith.constant 0 : index
    %c433 = arith.constant 433 : index
    %99 = vector.load %arg9[%c0_71, %c433] : memref<16x768xf32, #tpu.memory_space<vmem>>, vector<16x16xf32>
    tpu.vector_store %arg9[%c0_71, %c433], %98 {strides = array<i32>} : memref<16x768xf32, #tpu.memory_space<vmem>>, vector<16x16xf32>,
    %100 = vector.extract_strided_slice %53 {offsets = [0, 432], sizes = [16, 16], strides = [1, 1]} : vector<16x648xf32> to vector<16x16xf32>
    %c0_72 = arith.constant 0 : index
    %c451 = arith.constant 451 : index
    %101 = vector.load %arg9[%c0_72, %c451] : memref<16x768xf32, #tpu.memory_space<vmem>>, vector<16x16xf32>
    tpu.vector_store %arg9[%c0_72, %c451], %100 {strides = array<i32>} : memref<16x768xf32, #tpu.memory_space<vmem>>, vector<16x16xf32>,
    %102 = vector.extract_strided_slice %53 {offsets = [0, 450], sizes = [16, 16], strides = [1, 1]} : vector<16x648xf32> to vector<16x16xf32>
    %c0_73 = arith.constant 0 : index
    %c469 = arith.constant 469 : index
    %103 = vector.load %arg9[%c0_73, %c469] : memref<16x768xf32, #tpu.memory_space<vmem>>, vector<16x16xf32>
    tpu.vector_store %arg9[%c0_73, %c469], %102 {strides = array<i32>} : memref<16x768xf32, #tpu.memory_space<vmem>>, vector<16x16xf32>,
    %104 = vector.extract_strided_slice %53 {offsets = [0, 468], sizes = [16, 16], strides = [1, 1]} : vector<16x648xf32> to vector<16x16xf32>
    %c0_74 = arith.constant 0 : index
    %c487 = arith.constant 487 : index
    %105 = vector.load %arg9[%c0_74, %c487] : memref<16x768xf32, #tpu.memory_space<vmem>>, vector<16x16xf32>
    tpu.vector_store %arg9[%c0_74, %c487], %104 {strides = array<i32>} : memref<16x768xf32, #tpu.memory_space<vmem>>, vector<16x16xf32>,
    %106 = vector.extract_strided_slice %53 {offsets = [0, 486], sizes = [16, 16], strides = [1, 1]} : vector<16x648xf32> to vector<16x16xf32>
    %c0_75 = arith.constant 0 : index
    %c505 = arith.constant 505 : index
    %107 = vector.load %arg9[%c0_75, %c505] : memref<16x768xf32, #tpu.memory_space<vmem>>, vector<16x16xf32>
    tpu.vector_store %arg9[%c0_75, %c505], %106 {strides = array<i32>} : memref<16x768xf32, #tpu.memory_space<vmem>>, vector<16x16xf32>,
    %108 = vector.extract_strided_slice %53 {offsets = [0, 504], sizes = [16, 16], strides = [1, 1]} : vector<16x648xf32> to vector<16x16xf32>
    %c0_76 = arith.constant 0 : index
    %c523 = arith.constant 523 : index
    %109 = vector.load %arg9[%c0_76, %c523] : memref<16x768xf32, #tpu.memory_space<vmem>>, vector<16x16xf32>
    tpu.vector_store %arg9[%c0_76, %c523], %108 {strides = array<i32>} : memref<16x768xf32, #tpu.memory_space<vmem>>, vector<16x16xf32>,
    %110 = vector.extract_strided_slice %53 {offsets = [0, 522], sizes = [16, 16], strides = [1, 1]} : vector<16x648xf32> to vector<16x16xf32>
    %c0_77 = arith.constant 0 : index
    %c541 = arith.constant 541 : index
    %111 = vector.load %arg9[%c0_77, %c541] : memref<16x768xf32, #tpu.memory_space<vmem>>, vector<16x16xf32>
    tpu.vector_store %arg9[%c0_77, %c541], %110 {strides = array<i32>} : memref<16x768xf32, #tpu.memory_space<vmem>>, vector<16x16xf32>,
    %112 = vector.extract_strided_slice %53 {offsets = [0, 540], sizes = [16, 16], strides = [1, 1]} : vector<16x648xf32> to vector<16x16xf32>
    %c0_78 = arith.constant 0 : index
    %c559 = arith.constant 559 : index
    %113 = vector.load %arg9[%c0_78, %c559] : memref<16x768xf32, #tpu.memory_space<vmem>>, vector<16x16xf32>
    tpu.vector_store %arg9[%c0_78, %c559], %112 {strides = array<i32>} : memref<16x768xf32, #tpu.memory_space<vmem>>, vector<16x16xf32>,
    %114 = vector.extract_strided_slice %53 {offsets = [0, 558], sizes = [16, 16], strides = [1, 1]} : vector<16x648xf32> to vector<16x16xf32>
    %c0_79 = arith.constant 0 : index
    %c577 = arith.constant 577 : index
    %115 = vector.load %arg9[%c0_79, %c577] : memref<16x768xf32, #tpu.memory_space<vmem>>, vector<16x16xf32>
    tpu.vector_store %arg9[%c0_79, %c577], %114 {strides = array<i32>} : memref<16x768xf32, #tpu.memory_space<vmem>>, vector<16x16xf32>,
    %116 = vector.extract_strided_slice %53 {offsets = [0, 576], sizes = [16, 16], strides = [1, 1]} : vector<16x648xf32> to vector<16x16xf32>
    %c0_80 = arith.constant 0 : index
    %c595 = arith.constant 595 : index
    %117 = vector.load %arg9[%c0_80, %c595] : memref<16x768xf32, #tpu.memory_space<vmem>>, vector<16x16xf32>
    tpu.vector_store %arg9[%c0_80, %c595], %116 {strides = array<i32>} : memref<16x768xf32, #tpu.memory_space<vmem>>, vector<16x16xf32>,
    %118 = vector.extract_strided_slice %53 {offsets = [0, 594], sizes = [16, 16], strides = [1, 1]} : vector<16x648xf32> to vector<16x16xf32>
    %c0_81 = arith.constant 0 : index
    %c613 = arith.constant 613 : index
    %119 = vector.load %arg9[%c0_81, %c613] : memref<16x768xf32, #tpu.memory_space<vmem>>, vector<16x16xf32>
    tpu.vector_store %arg9[%c0_81, %c613], %118 {strides = array<i32>} : memref<16x768xf32, #tpu.memory_space<vmem>>, vector<16x16xf32>,
    %cst_82 = arith.constant 0.000000e+00 : f32
    %120 = vector.broadcast %cst_82 : f32 to vector<16x648xf32>
    %c0_83 = arith.constant 0 : index
    %c0_84 = arith.constant 0 : index
    %c0_85 = arith.constant 0 : index
    %121 = vector.load %arg3[%c0_83, %c0_84, %c0_85] : memref<9x16x16xf32, #tpu.memory_space<vmem>>, vector<1x16x16xf32>
    %122 = vector.shape_cast %121 : vector<1x16x16xf32> to vector<16x16xf32>
    %c0_86 = arith.constant 0 : index
    %c0_87 = arith.constant 0 : index
    %123 = vector.load %arg9[%c0_86, %c0_87] : memref<16x768xf32, #tpu.memory_space<vmem>>, vector<16x648xf32>
    %cst_88 = arith.constant dense<0.000000e+00> : vector<16x648xf32>
    %124 = tpu.matmul %122, %123, %cst_88 {dimension_numbers = #tpu.dot_dimension_numbers<[1], [0], [0], [1], [0, 0, 1, 1], [], []>} : vector<16x16xf32>, vector<16x648xf32>, vector<16x648xf32> -> vector<16x648xf32>
    %125 = arith.addf %120, %124 : vector<16x648xf32>
    %c1_89 = arith.constant 1 : index
    %c0_90 = arith.constant 0 : index
    %c0_91 = arith.constant 0 : index
    %126 = vector.load %arg3[%c1_89, %c0_90, %c0_91] : memref<9x16x16xf32, #tpu.memory_space<vmem>>, vector<1x16x16xf32>
    %127 = vector.shape_cast %126 : vector<1x16x16xf32> to vector<16x16xf32>
    %c0_92 = arith.constant 0 : index
    %c1_93 = arith.constant 1 : index
    %128 = vector.load %arg9[%c0_92, %c1_93] : memref<16x768xf32, #tpu.memory_space<vmem>>, vector<16x648xf32>
    %cst_94 = arith.constant dense<0.000000e+00> : vector<16x648xf32>
    %129 = tpu.matmul %127, %128, %cst_94 {dimension_numbers = #tpu.dot_dimension_numbers<[1], [0], [0], [1], [0, 0, 1, 1], [], []>} : vector<16x16xf32>, vector<16x648xf32>, vector<16x648xf32> -> vector<16x648xf32>
    %130 = arith.addf %125, %129 : vector<16x648xf32>
    %c2_95 = arith.constant 2 : index
    %c0_96 = arith.constant 0 : index
    %c0_97 = arith.constant 0 : index
    %131 = vector.load %arg3[%c2_95, %c0_96, %c0_97] : memref<9x16x16xf32, #tpu.memory_space<vmem>>, vector<1x16x16xf32>
    %132 = vector.shape_cast %131 : vector<1x16x16xf32> to vector<16x16xf32>
    %c0_98 = arith.constant 0 : index
    %c2_99 = arith.constant 2 : index
    %133 = vector.load %arg9[%c0_98, %c2_99] : memref<16x768xf32, #tpu.memory_space<vmem>>, vector<16x648xf32>
    %cst_100 = arith.constant dense<0.000000e+00> : vector<16x648xf32>
    %134 = tpu.matmul %132, %133, %cst_100 {dimension_numbers = #tpu.dot_dimension_numbers<[1], [0], [0], [1], [0, 0, 1, 1], [], []>} : vector<16x16xf32>, vector<16x648xf32>, vector<16x648xf32> -> vector<16x648xf32>
    %135 = arith.addf %130, %134 : vector<16x648xf32>
    %c3_101 = arith.constant 3 : index
    %c0_102 = arith.constant 0 : index
    %c0_103 = arith.constant 0 : index
    %136 = vector.load %arg3[%c3_101, %c0_102, %c0_103] : memref<9x16x16xf32, #tpu.memory_space<vmem>>, vector<1x16x16xf32>
    %137 = vector.shape_cast %136 : vector<1x16x16xf32> to vector<16x16xf32>
    %c0_104 = arith.constant 0 : index
    %c18_105 = arith.constant 18 : index
    %138 = vector.load %arg9[%c0_104, %c18_105] : memref<16x768xf32, #tpu.memory_space<vmem>>, vector<16x648xf32>
    %cst_106 = arith.constant dense<0.000000e+00> : vector<16x648xf32>
    %139 = tpu.matmul %137, %138, %cst_106 {dimension_numbers = #tpu.dot_dimension_numbers<[1], [0], [0], [1], [0, 0, 1, 1], [], []>} : vector<16x16xf32>, vector<16x648xf32>, vector<16x648xf32> -> vector<16x648xf32>
    %140 = arith.addf %135, %139 : vector<16x648xf32>
    %c4_107 = arith.constant 4 : index
    %c0_108 = arith.constant 0 : index
    %c0_109 = arith.constant 0 : index
    %141 = vector.load %arg3[%c4_107, %c0_108, %c0_109] : memref<9x16x16xf32, #tpu.memory_space<vmem>>, vector<1x16x16xf32>
    %142 = vector.shape_cast %141 : vector<1x16x16xf32> to vector<16x16xf32>
    %c0_110 = arith.constant 0 : index
    %c19_111 = arith.constant 19 : index
    %143 = vector.load %arg9[%c0_110, %c19_111] : memref<16x768xf32, #tpu.memory_space<vmem>>, vector<16x648xf32>
    %cst_112 = arith.constant dense<0.000000e+00> : vector<16x648xf32>
    %144 = tpu.matmul %142, %143, %cst_112 {dimension_numbers = #tpu.dot_dimension_numbers<[1], [0], [0], [1], [0, 0, 1, 1], [], []>} : vector<16x16xf32>, vector<16x648xf32>, vector<16x648xf32> -> vector<16x648xf32>
    %145 = arith.addf %140, %144 : vector<16x648xf32>
    %c5_113 = arith.constant 5 : index
    %c0_114 = arith.constant 0 : index
    %c0_115 = arith.constant 0 : index
    %146 = vector.load %arg3[%c5_113, %c0_114, %c0_115] : memref<9x16x16xf32, #tpu.memory_space<vmem>>, vector<1x16x16xf32>
    %147 = vector.shape_cast %146 : vector<1x16x16xf32> to vector<16x16xf32>
    %c0_116 = arith.constant 0 : index
    %c20_117 = arith.constant 20 : index
    %148 = vector.load %arg9[%c0_116, %c20_117] : memref<16x768xf32, #tpu.memory_space<vmem>>, vector<16x648xf32>
    %cst_118 = arith.constant dense<0.000000e+00> : vector<16x648xf32>
    %149 = tpu.matmul %147, %148, %cst_118 {dimension_numbers = #tpu.dot_dimension_numbers<[1], [0], [0], [1], [0, 0, 1, 1], [], []>} : vector<16x16xf32>, vector<16x648xf32>, vector<16x648xf32> -> vector<16x648xf32>
    %150 = arith.addf %145, %149 : vector<16x648xf32>
    %c6_119 = arith.constant 6 : index
    %c0_120 = arith.constant 0 : index
    %c0_121 = arith.constant 0 : index
    %151 = vector.load %arg3[%c6_119, %c0_120, %c0_121] : memref<9x16x16xf32, #tpu.memory_space<vmem>>, vector<1x16x16xf32>
    %152 = vector.shape_cast %151 : vector<1x16x16xf32> to vector<16x16xf32>
    %c0_122 = arith.constant 0 : index
    %c36_123 = arith.constant 36 : index
    %153 = vector.load %arg9[%c0_122, %c36_123] : memref<16x768xf32, #tpu.memory_space<vmem>>, vector<16x648xf32>
    %cst_124 = arith.constant dense<0.000000e+00> : vector<16x648xf32>
    %154 = tpu.matmul %152, %153, %cst_124 {dimension_numbers = #tpu.dot_dimension_numbers<[1], [0], [0], [1], [0, 0, 1, 1], [], []>} : vector<16x16xf32>, vector<16x648xf32>, vector<16x648xf32> -> vector<16x648xf32>
    %155 = arith.addf %150, %154 : vector<16x648xf32>
    %c7_125 = arith.constant 7 : index
    %c0_126 = arith.constant 0 : index
    %c0_127 = arith.constant 0 : index
    %156 = vector.load %arg3[%c7_125, %c0_126, %c0_127] : memref<9x16x16xf32, #tpu.memory_space<vmem>>, vector<1x16x16xf32>
    %157 = vector.shape_cast %156 : vector<1x16x16xf32> to vector<16x16xf32>
    %c0_128 = arith.constant 0 : index
    %c37_129 = arith.constant 37 : index
    %158 = vector.load %arg9[%c0_128, %c37_129] : memref<16x768xf32, #tpu.memory_space<vmem>>, vector<16x648xf32>
    %cst_130 = arith.constant dense<0.000000e+00> : vector<16x648xf32>
    %159 = tpu.matmul %157, %158, %cst_130 {dimension_numbers = #tpu.dot_dimension_numbers<[1], [0], [0], [1], [0, 0, 1, 1], [], []>} : vector<16x16xf32>, vector<16x648xf32>, vector<16x648xf32> -> vector<16x648xf32>
    %160 = arith.addf %155, %159 : vector<16x648xf32>
    %c8_131 = arith.constant 8 : index
    %c0_132 = arith.constant 0 : index
    %c0_133 = arith.constant 0 : index
    %161 = vector.load %arg3[%c8_131, %c0_132, %c0_133] : memref<9x16x16xf32, #tpu.memory_space<vmem>>, vector<1x16x16xf32>
    %162 = vector.shape_cast %161 : vector<1x16x16xf32> to vector<16x16xf32>
    %c0_134 = arith.constant 0 : index
    %c38_135 = arith.constant 38 : index
    %163 = vector.load %arg9[%c0_134, %c38_135] : memref<16x768xf32, #tpu.memory_space<vmem>>, vector<16x648xf32>
    %cst_136 = arith.constant dense<0.000000e+00> : vector<16x648xf32>
    %164 = tpu.matmul %162, %163, %cst_136 {dimension_numbers = #tpu.dot_dimension_numbers<[1], [0], [0], [1], [0, 0, 1, 1], [], []>} : vector<16x16xf32>, vector<16x648xf32>, vector<16x648xf32> -> vector<16x648xf32>
    %165 = arith.addf %160, %164 : vector<16x648xf32>
    %c0_137 = arith.constant 0 : index
    %c0_138 = arith.constant 0 : index
    %166 = vector.load %arg6[%c0_137, %c0_138] : memref<16x1xf32, #tpu.memory_space<vmem>>, vector<16x1xf32>
    %167 = vector.broadcast %166 : vector<16x1xf32> to vector<16x648xf32>
    %168 = arith.addf %165, %167 : vector<16x648xf32>
    %cst_139 = arith.constant 0.00999999977 : f32
    %169 = vector.broadcast %cst_139 : f32 to vector<16x648xf32>
    %170 = arith.mulf %169, %168 : vector<16x648xf32>
    %171 = arith.maximumf %168, %170 : vector<16x648xf32>
    %cst_140 = arith.constant 0.000000e+00 : f32
    %172 = vector.broadcast %cst_140 : f32 to vector<16x768xf32>
    %c0_141 = arith.constant 0 : index
    %c0_142 = arith.constant 0 : index
    %173 = vector.load %arg10[%c0_141, %c0_142] : memref<16x768xf32, #tpu.memory_space<vmem>>, vector<16x768xf32>
    tpu.vector_store %arg10[%c0_141, %c0_142], %172 {strides = array<i32>} : memref<16x768xf32, #tpu.memory_space<vmem>>, vector<16x768xf32>,
    %174 = vector.extract_strided_slice %171 {offsets = [0, 0], sizes = [16, 16], strides = [1, 1]} : vector<16x648xf32> to vector<16x16xf32>
    %c0_143 = arith.constant 0 : index
    %c19_144 = arith.constant 19 : index
    %175 = vector.load %arg10[%c0_143, %c19_144] : memref<16x768xf32, #tpu.memory_space<vmem>>, vector<16x16xf32>
    tpu.vector_store %arg10[%c0_143, %c19_144], %174 {strides = array<i32>} : memref<16x768xf32, #tpu.memory_space<vmem>>, vector<16x16xf32>,
    %176 = vector.extract_strided_slice %171 {offsets = [0, 18], sizes = [16, 16], strides = [1, 1]} : vector<16x648xf32> to vector<16x16xf32>
    %c0_145 = arith.constant 0 : index
    %c37_146 = arith.constant 37 : index
    %177 = vector.load %arg10[%c0_145, %c37_146] : memref<16x768xf32, #tpu.memory_space<vmem>>, vector<16x16xf32>
    tpu.vector_store %arg10[%c0_145, %c37_146], %176 {strides = array<i32>} : memref<16x768xf32, #tpu.memory_space<vmem>>, vector<16x16xf32>,
    %178 = vector.extract_strided_slice %171 {offsets = [0, 36], sizes = [16, 16], strides = [1, 1]} : vector<16x648xf32> to vector<16x16xf32>
    %c0_147 = arith.constant 0 : index
    %c55_148 = arith.constant 55 : index
    %179 = vector.load %arg10[%c0_147, %c55_148] : memref<16x768xf32, #tpu.memory_space<vmem>>, vector<16x16xf32>
    tpu.vector_store %arg10[%c0_147, %c55_148], %178 {strides = array<i32>} : memref<16x768xf32, #tpu.memory_space<vmem>>, vector<16x16xf32>,
    %180 = vector.extract_strided_slice %171 {offsets = [0, 54], sizes = [16, 16], strides = [1, 1]} : vector<16x648xf32> to vector<16x16xf32>
    %c0_149 = arith.constant 0 : index
    %c73_150 = arith.constant 73 : index
    %181 = vector.load %arg10[%c0_149, %c73_150] : memref<16x768xf32, #tpu.memory_space<vmem>>, vector<16x16xf32>
    tpu.vector_store %arg10[%c0_149, %c73_150], %180 {strides = array<i32>} : memref<16x768xf32, #tpu.memory_space<vmem>>, vector<16x16xf32>,
    %182 = vector.extract_strided_slice %171 {offsets = [0, 72], sizes = [16, 16], strides = [1, 1]} : vector<16x648xf32> to vector<16x16xf32>
    %c0_151 = arith.constant 0 : index
    %c91_152 = arith.constant 91 : index
    %183 = vector.load %arg10[%c0_151, %c91_152] : memref<16x768xf32, #tpu.memory_space<vmem>>, vector<16x16xf32>
    tpu.vector_store %arg10[%c0_151, %c91_152], %182 {strides = array<i32>} : memref<16x768xf32, #tpu.memory_space<vmem>>, vector<16x16xf32>,
    %184 = vector.extract_strided_slice %171 {offsets = [0, 90], sizes = [16, 16], strides = [1, 1]} : vector<16x648xf32> to vector<16x16xf32>
    %c0_153 = arith.constant 0 : index
    %c109_154 = arith.constant 109 : index
    %185 = vector.load %arg10[%c0_153, %c109_154] : memref<16x768xf32, #tpu.memory_space<vmem>>, vector<16x16xf32>
    tpu.vector_store %arg10[%c0_153, %c109_154], %184 {strides = array<i32>} : memref<16x768xf32, #tpu.memory_space<vmem>>, vector<16x16xf32>,
    %186 = vector.extract_strided_slice %171 {offsets = [0, 108], sizes = [16, 16], strides = [1, 1]} : vector<16x648xf32> to vector<16x16xf32>
    %c0_155 = arith.constant 0 : index
    %c127_156 = arith.constant 127 : index
    %187 = vector.load %arg10[%c0_155, %c127_156] : memref<16x768xf32, #tpu.memory_space<vmem>>, vector<16x16xf32>
    tpu.vector_store %arg10[%c0_155, %c127_156], %186 {strides = array<i32>} : memref<16x768xf32, #tpu.memory_space<vmem>>, vector<16x16xf32>,
    %188 = vector.extract_strided_slice %171 {offsets = [0, 126], sizes = [16, 16], strides = [1, 1]} : vector<16x648xf32> to vector<16x16xf32>
    %c0_157 = arith.constant 0 : index
    %c145_158 = arith.constant 145 : index
    %189 = vector.load %arg10[%c0_157, %c145_158] : memref<16x768xf32, #tpu.memory_space<vmem>>, vector<16x16xf32>
    tpu.vector_store %arg10[%c0_157, %c145_158], %188 {strides = array<i32>} : memref<16x768xf32, #tpu.memory_space<vmem>>, vector<16x16xf32>,
    %190 = vector.extract_strided_slice %171 {offsets = [0, 144], sizes = [16, 16], strides = [1, 1]} : vector<16x648xf32> to vector<16x16xf32>
    %c0_159 = arith.constant 0 : index
    %c163_160 = arith.constant 163 : index
    %191 = vector.load %arg10[%c0_159, %c163_160] : memref<16x768xf32, #tpu.memory_space<vmem>>, vector<16x16xf32>
    tpu.vector_store %arg10[%c0_159, %c163_160], %190 {strides = array<i32>} : memref<16x768xf32, #tpu.memory_space<vmem>>, vector<16x16xf32>,
    %192 = vector.extract_strided_slice %171 {offsets = [0, 162], sizes = [16, 16], strides = [1, 1]} : vector<16x648xf32> to vector<16x16xf32>
    %c0_161 = arith.constant 0 : index
    %c181_162 = arith.constant 181 : index
    %193 = vector.load %arg10[%c0_161, %c181_162] : memref<16x768xf32, #tpu.memory_space<vmem>>, vector<16x16xf32>
    tpu.vector_store %arg10[%c0_161, %c181_162], %192 {strides = array<i32>} : memref<16x768xf32, #tpu.memory_space<vmem>>, vector<16x16xf32>,
    %194 = vector.extract_strided_slice %171 {offsets = [0, 180], sizes = [16, 16], strides = [1, 1]} : vector<16x648xf32> to vector<16x16xf32>
    %c0_163 = arith.constant 0 : index
    %c199_164 = arith.constant 199 : index
    %195 = vector.load %arg10[%c0_163, %c199_164] : memref<16x768xf32, #tpu.memory_space<vmem>>, vector<16x16xf32>
    tpu.vector_store %arg10[%c0_163, %c199_164], %194 {strides = array<i32>} : memref<16x768xf32, #tpu.memory_space<vmem>>, vector<16x16xf32>,
    %196 = vector.extract_strided_slice %171 {offsets = [0, 198], sizes = [16, 16], strides = [1, 1]} : vector<16x648xf32> to vector<16x16xf32>
    %c0_165 = arith.constant 0 : index
    %c217_166 = arith.constant 217 : index
    %197 = vector.load %arg10[%c0_165, %c217_166] : memref<16x768xf32, #tpu.memory_space<vmem>>, vector<16x16xf32>
    tpu.vector_store %arg10[%c0_165, %c217_166], %196 {strides = array<i32>} : memref<16x768xf32, #tpu.memory_space<vmem>>, vector<16x16xf32>,
    %198 = vector.extract_strided_slice %171 {offsets = [0, 216], sizes = [16, 16], strides = [1, 1]} : vector<16x648xf32> to vector<16x16xf32>
    %c0_167 = arith.constant 0 : index
    %c235_168 = arith.constant 235 : index
    %199 = vector.load %arg10[%c0_167, %c235_168] : memref<16x768xf32, #tpu.memory_space<vmem>>, vector<16x16xf32>
    tpu.vector_store %arg10[%c0_167, %c235_168], %198 {strides = array<i32>} : memref<16x768xf32, #tpu.memory_space<vmem>>, vector<16x16xf32>,
    %200 = vector.extract_strided_slice %171 {offsets = [0, 234], sizes = [16, 16], strides = [1, 1]} : vector<16x648xf32> to vector<16x16xf32>
    %c0_169 = arith.constant 0 : index
    %c253_170 = arith.constant 253 : index
    %201 = vector.load %arg10[%c0_169, %c253_170] : memref<16x768xf32, #tpu.memory_space<vmem>>, vector<16x16xf32>
    tpu.vector_store %arg10[%c0_169, %c253_170], %200 {strides = array<i32>} : memref<16x768xf32, #tpu.memory_space<vmem>>, vector<16x16xf32>,
    %202 = vector.extract_strided_slice %171 {offsets = [0, 252], sizes = [16, 16], strides = [1, 1]} : vector<16x648xf32> to vector<16x16xf32>
    %c0_171 = arith.constant 0 : index
    %c271_172 = arith.constant 271 : index
    %203 = vector.load %arg10[%c0_171, %c271_172] : memref<16x768xf32, #tpu.memory_space<vmem>>, vector<16x16xf32>
    tpu.vector_store %arg10[%c0_171, %c271_172], %202 {strides = array<i32>} : memref<16x768xf32, #tpu.memory_space<vmem>>, vector<16x16xf32>,
    %204 = vector.extract_strided_slice %171 {offsets = [0, 270], sizes = [16, 16], strides = [1, 1]} : vector<16x648xf32> to vector<16x16xf32>
    %c0_173 = arith.constant 0 : index
    %c289_174 = arith.constant 289 : index
    %205 = vector.load %arg10[%c0_173, %c289_174] : memref<16x768xf32, #tpu.memory_space<vmem>>, vector<16x16xf32>
    tpu.vector_store %arg10[%c0_173, %c289_174], %204 {strides = array<i32>} : memref<16x768xf32, #tpu.memory_space<vmem>>, vector<16x16xf32>,
    %206 = vector.extract_strided_slice %171 {offsets = [0, 324], sizes = [16, 16], strides = [1, 1]} : vector<16x648xf32> to vector<16x16xf32>
    %c0_175 = arith.constant 0 : index
    %c343_176 = arith.constant 343 : index
    %207 = vector.load %arg10[%c0_175, %c343_176] : memref<16x768xf32, #tpu.memory_space<vmem>>, vector<16x16xf32>
    tpu.vector_store %arg10[%c0_175, %c343_176], %206 {strides = array<i32>} : memref<16x768xf32, #tpu.memory_space<vmem>>, vector<16x16xf32>,
    %208 = vector.extract_strided_slice %171 {offsets = [0, 342], sizes = [16, 16], strides = [1, 1]} : vector<16x648xf32> to vector<16x16xf32>
    %c0_177 = arith.constant 0 : index
    %c361_178 = arith.constant 361 : index
    %209 = vector.load %arg10[%c0_177, %c361_178] : memref<16x768xf32, #tpu.memory_space<vmem>>, vector<16x16xf32>
    tpu.vector_store %arg10[%c0_177, %c361_178], %208 {strides = array<i32>} : memref<16x768xf32, #tpu.memory_space<vmem>>, vector<16x16xf32>,
    %210 = vector.extract_strided_slice %171 {offsets = [0, 360], sizes = [16, 16], strides = [1, 1]} : vector<16x648xf32> to vector<16x16xf32>
    %c0_179 = arith.constant 0 : index
    %c379_180 = arith.constant 379 : index
    %211 = vector.load %arg10[%c0_179, %c379_180] : memref<16x768xf32, #tpu.memory_space<vmem>>, vector<16x16xf32>
    tpu.vector_store %arg10[%c0_179, %c379_180], %210 {strides = array<i32>} : memref<16x768xf32, #tpu.memory_space<vmem>>, vector<16x16xf32>,
    %212 = vector.extract_strided_slice %171 {offsets = [0, 378], sizes = [16, 16], strides = [1, 1]} : vector<16x648xf32> to vector<16x16xf32>
    %c0_181 = arith.constant 0 : index
    %c397_182 = arith.constant 397 : index
    %213 = vector.load %arg10[%c0_181, %c397_182] : memref<16x768xf32, #tpu.memory_space<vmem>>, vector<16x16xf32>
    tpu.vector_store %arg10[%c0_181, %c397_182], %212 {strides = array<i32>} : memref<16x768xf32, #tpu.memory_space<vmem>>, vector<16x16xf32>,
    %214 = vector.extract_strided_slice %171 {offsets = [0, 396], sizes = [16, 16], strides = [1, 1]} : vector<16x648xf32> to vector<16x16xf32>
    %c0_183 = arith.constant 0 : index
    %c415_184 = arith.constant 415 : index
    %215 = vector.load %arg10[%c0_183, %c415_184] : memref<16x768xf32, #tpu.memory_space<vmem>>, vector<16x16xf32>
    tpu.vector_store %arg10[%c0_183, %c415_184], %214 {strides = array<i32>} : memref<16x768xf32, #tpu.memory_space<vmem>>, vector<16x16xf32>,
    %216 = vector.extract_strided_slice %171 {offsets = [0, 414], sizes = [16, 16], strides = [1, 1]} : vector<16x648xf32> to vector<16x16xf32>
    %c0_185 = arith.constant 0 : index
    %c433_186 = arith.constant 433 : index
    %217 = vector.load %arg10[%c0_185, %c433_186] : memref<16x768xf32, #tpu.memory_space<vmem>>, vector<16x16xf32>
    tpu.vector_store %arg10[%c0_185, %c433_186], %216 {strides = array<i32>} : memref<16x768xf32, #tpu.memory_space<vmem>>, vector<16x16xf32>,
    %218 = vector.extract_strided_slice %171 {offsets = [0, 432], sizes = [16, 16], strides = [1, 1]} : vector<16x648xf32> to vector<16x16xf32>
    %c0_187 = arith.constant 0 : index
    %c451_188 = arith.constant 451 : index
    %219 = vector.load %arg10[%c0_187, %c451_188] : memref<16x768xf32, #tpu.memory_space<vmem>>, vector<16x16xf32>
    tpu.vector_store %arg10[%c0_187, %c451_188], %218 {strides = array<i32>} : memref<16x768xf32, #tpu.memory_space<vmem>>, vector<16x16xf32>,
    %220 = vector.extract_strided_slice %171 {offsets = [0, 450], sizes = [16, 16], strides = [1, 1]} : vector<16x648xf32> to vector<16x16xf32>
    %c0_189 = arith.constant 0 : index
    %c469_190 = arith.constant 469 : index
    %221 = vector.load %arg10[%c0_189, %c469_190] : memref<16x768xf32, #tpu.memory_space<vmem>>, vector<16x16xf32>
    tpu.vector_store %arg10[%c0_189, %c469_190], %220 {strides = array<i32>} : memref<16x768xf32, #tpu.memory_space<vmem>>, vector<16x16xf32>,
    %222 = vector.extract_strided_slice %171 {offsets = [0, 468], sizes = [16, 16], strides = [1, 1]} : vector<16x648xf32> to vector<16x16xf32>
    %c0_191 = arith.constant 0 : index
    %c487_192 = arith.constant 487 : index
    %223 = vector.load %arg10[%c0_191, %c487_192] : memref<16x768xf32, #tpu.memory_space<vmem>>, vector<16x16xf32>
    tpu.vector_store %arg10[%c0_191, %c487_192], %222 {strides = array<i32>} : memref<16x768xf32, #tpu.memory_space<vmem>>, vector<16x16xf32>,
    %224 = vector.extract_strided_slice %171 {offsets = [0, 486], sizes = [16, 16], strides = [1, 1]} : vector<16x648xf32> to vector<16x16xf32>
    %c0_193 = arith.constant 0 : index
    %c505_194 = arith.constant 505 : index
    %225 = vector.load %arg10[%c0_193, %c505_194] : memref<16x768xf32, #tpu.memory_space<vmem>>, vector<16x16xf32>
    tpu.vector_store %arg10[%c0_193, %c505_194], %224 {strides = array<i32>} : memref<16x768xf32, #tpu.memory_space<vmem>>, vector<16x16xf32>,
    %226 = vector.extract_strided_slice %171 {offsets = [0, 504], sizes = [16, 16], strides = [1, 1]} : vector<16x648xf32> to vector<16x16xf32>
    %c0_195 = arith.constant 0 : index
    %c523_196 = arith.constant 523 : index
    %227 = vector.load %arg10[%c0_195, %c523_196] : memref<16x768xf32, #tpu.memory_space<vmem>>, vector<16x16xf32>
    tpu.vector_store %arg10[%c0_195, %c523_196], %226 {strides = array<i32>} : memref<16x768xf32, #tpu.memory_space<vmem>>, vector<16x16xf32>,
    %228 = vector.extract_strided_slice %171 {offsets = [0, 522], sizes = [16, 16], strides = [1, 1]} : vector<16x648xf32> to vector<16x16xf32>
    %c0_197 = arith.constant 0 : index
    %c541_198 = arith.constant 541 : index
    %229 = vector.load %arg10[%c0_197, %c541_198] : memref<16x768xf32, #tpu.memory_space<vmem>>, vector<16x16xf32>
    tpu.vector_store %arg10[%c0_197, %c541_198], %228 {strides = array<i32>} : memref<16x768xf32, #tpu.memory_space<vmem>>, vector<16x16xf32>,
    %230 = vector.extract_strided_slice %171 {offsets = [0, 540], sizes = [16, 16], strides = [1, 1]} : vector<16x648xf32> to vector<16x16xf32>
    %c0_199 = arith.constant 0 : index
    %c559_200 = arith.constant 559 : index
    %231 = vector.load %arg10[%c0_199, %c559_200] : memref<16x768xf32, #tpu.memory_space<vmem>>, vector<16x16xf32>
    tpu.vector_store %arg10[%c0_199, %c559_200], %230 {strides = array<i32>} : memref<16x768xf32, #tpu.memory_space<vmem>>, vector<16x16xf32>,
    %232 = vector.extract_strided_slice %171 {offsets = [0, 558], sizes = [16, 16], strides = [1, 1]} : vector<16x648xf32> to vector<16x16xf32>
    %c0_201 = arith.constant 0 : index
    %c577_202 = arith.constant 577 : index
    %233 = vector.load %arg10[%c0_201, %c577_202] : memref<16x768xf32, #tpu.memory_space<vmem>>, vector<16x16xf32>
    tpu.vector_store %arg10[%c0_201, %c577_202], %232 {strides = array<i32>} : memref<16x768xf32, #tpu.memory_space<vmem>>, vector<16x16xf32>,
    %234 = vector.extract_strided_slice %171 {offsets = [0, 576], sizes = [16, 16], strides = [1, 1]} : vector<16x648xf32> to vector<16x16xf32>
    %c0_203 = arith.constant 0 : index
    %c595_204 = arith.constant 595 : index
    %235 = vector.load %arg10[%c0_203, %c595_204] : memref<16x768xf32, #tpu.memory_space<vmem>>, vector<16x16xf32>
    tpu.vector_store %arg10[%c0_203, %c595_204], %234 {strides = array<i32>} : memref<16x768xf32, #tpu.memory_space<vmem>>, vector<16x16xf32>,
    %236 = vector.extract_strided_slice %171 {offsets = [0, 594], sizes = [16, 16], strides = [1, 1]} : vector<16x648xf32> to vector<16x16xf32>
    %c0_205 = arith.constant 0 : index
    %c613_206 = arith.constant 613 : index
    %237 = vector.load %arg10[%c0_205, %c613_206] : memref<16x768xf32, #tpu.memory_space<vmem>>, vector<16x16xf32>
    tpu.vector_store %arg10[%c0_205, %c613_206], %236 {strides = array<i32>} : memref<16x768xf32, #tpu.memory_space<vmem>>, vector<16x16xf32>,
    %cst_207 = arith.constant 0.000000e+00 : f32
    %238 = vector.broadcast %cst_207 : f32 to vector<16x648xf32>
    %c0_208 = arith.constant 0 : index
    %c0_209 = arith.constant 0 : index
    %c0_210 = arith.constant 0 : index
    %239 = vector.load %arg4[%c0_208, %c0_209, %c0_210] : memref<9x16x16xf32, #tpu.memory_space<vmem>>, vector<1x16x16xf32>
    %240 = vector.shape_cast %239 : vector<1x16x16xf32> to vector<16x16xf32>
    %c0_211 = arith.constant 0 : index
    %c0_212 = arith.constant 0 : index
    %241 = vector.load %arg10[%c0_211, %c0_212] : memref<16x768xf32, #tpu.memory_space<vmem>>, vector<16x648xf32>
    %cst_213 = arith.constant dense<0.000000e+00> : vector<16x648xf32>
    %242 = tpu.matmul %240, %241, %cst_213 {dimension_numbers = #tpu.dot_dimension_numbers<[1], [0], [0], [1], [0, 0, 1, 1], [], []>} : vector<16x16xf32>, vector<16x648xf32>, vector<16x648xf32> -> vector<16x648xf32>
    %243 = arith.addf %238, %242 : vector<16x648xf32>
    %c1_214 = arith.constant 1 : index
    %c0_215 = arith.constant 0 : index
    %c0_216 = arith.constant 0 : index
    %244 = vector.load %arg4[%c1_214, %c0_215, %c0_216] : memref<9x16x16xf32, #tpu.memory_space<vmem>>, vector<1x16x16xf32>
    %245 = vector.shape_cast %244 : vector<1x16x16xf32> to vector<16x16xf32>
    %c0_217 = arith.constant 0 : index
    %c1_218 = arith.constant 1 : index
    %246 = vector.load %arg10[%c0_217, %c1_218] : memref<16x768xf32, #tpu.memory_space<vmem>>, vector<16x648xf32>
    %cst_219 = arith.constant dense<0.000000e+00> : vector<16x648xf32>
    %247 = tpu.matmul %245, %246, %cst_219 {dimension_numbers = #tpu.dot_dimension_numbers<[1], [0], [0], [1], [0, 0, 1, 1], [], []>} : vector<16x16xf32>, vector<16x648xf32>, vector<16x648xf32> -> vector<16x648xf32>
    %248 = arith.addf %243, %247 : vector<16x648xf32>
    %c2_220 = arith.constant 2 : index
    %c0_221 = arith.constant 0 : index
    %c0_222 = arith.constant 0 : index
    %249 = vector.load %arg4[%c2_220, %c0_221, %c0_222] : memref<9x16x16xf32, #tpu.memory_space<vmem>>, vector<1x16x16xf32>
    %250 = vector.shape_cast %249 : vector<1x16x16xf32> to vector<16x16xf32>
    %c0_223 = arith.constant 0 : index
    %c2_224 = arith.constant 2 : index
    %251 = vector.load %arg10[%c0_223, %c2_224] : memref<16x768xf32, #tpu.memory_space<vmem>>, vector<16x648xf32>
    %cst_225 = arith.constant dense<0.000000e+00> : vector<16x648xf32>
    %252 = tpu.matmul %250, %251, %cst_225 {dimension_numbers = #tpu.dot_dimension_numbers<[1], [0], [0], [1], [0, 0, 1, 1], [], []>} : vector<16x16xf32>, vector<16x648xf32>, vector<16x648xf32> -> vector<16x648xf32>
    %253 = arith.addf %248, %252 : vector<16x648xf32>
    %c3_226 = arith.constant 3 : index
    %c0_227 = arith.constant 0 : index
    %c0_228 = arith.constant 0 : index
    %254 = vector.load %arg4[%c3_226, %c0_227, %c0_228] : memref<9x16x16xf32, #tpu.memory_space<vmem>>, vector<1x16x16xf32>
    %255 = vector.shape_cast %254 : vector<1x16x16xf32> to vector<16x16xf32>
    %c0_229 = arith.constant 0 : index
    %c18_230 = arith.constant 18 : index
    %256 = vector.load %arg10[%c0_229, %c18_230] : memref<16x768xf32, #tpu.memory_space<vmem>>, vector<16x648xf32>
    %cst_231 = arith.constant dense<0.000000e+00> : vector<16x648xf32>
    %257 = tpu.matmul %255, %256, %cst_231 {dimension_numbers = #tpu.dot_dimension_numbers<[1], [0], [0], [1], [0, 0, 1, 1], [], []>} : vector<16x16xf32>, vector<16x648xf32>, vector<16x648xf32> -> vector<16x648xf32>
    %258 = arith.addf %253, %257 : vector<16x648xf32>
    %c4_232 = arith.constant 4 : index
    %c0_233 = arith.constant 0 : index
    %c0_234 = arith.constant 0 : index
    %259 = vector.load %arg4[%c4_232, %c0_233, %c0_234] : memref<9x16x16xf32, #tpu.memory_space<vmem>>, vector<1x16x16xf32>
    %260 = vector.shape_cast %259 : vector<1x16x16xf32> to vector<16x16xf32>
    %c0_235 = arith.constant 0 : index
    %c19_236 = arith.constant 19 : index
    %261 = vector.load %arg10[%c0_235, %c19_236] : memref<16x768xf32, #tpu.memory_space<vmem>>, vector<16x648xf32>
    %cst_237 = arith.constant dense<0.000000e+00> : vector<16x648xf32>
    %262 = tpu.matmul %260, %261, %cst_237 {dimension_numbers = #tpu.dot_dimension_numbers<[1], [0], [0], [1], [0, 0, 1, 1], [], []>} : vector<16x16xf32>, vector<16x648xf32>, vector<16x648xf32> -> vector<16x648xf32>
    %263 = arith.addf %258, %262 : vector<16x648xf32>
    %c5_238 = arith.constant 5 : index
    %c0_239 = arith.constant 0 : index
    %c0_240 = arith.constant 0 : index
    %264 = vector.load %arg4[%c5_238, %c0_239, %c0_240] : memref<9x16x16xf32, #tpu.memory_space<vmem>>, vector<1x16x16xf32>
    %265 = vector.shape_cast %264 : vector<1x16x16xf32> to vector<16x16xf32>
    %c0_241 = arith.constant 0 : index
    %c20_242 = arith.constant 20 : index
    %266 = vector.load %arg10[%c0_241, %c20_242] : memref<16x768xf32, #tpu.memory_space<vmem>>, vector<16x648xf32>
    %cst_243 = arith.constant dense<0.000000e+00> : vector<16x648xf32>
    %267 = tpu.matmul %265, %266, %cst_243 {dimension_numbers = #tpu.dot_dimension_numbers<[1], [0], [0], [1], [0, 0, 1, 1], [], []>} : vector<16x16xf32>, vector<16x648xf32>, vector<16x648xf32> -> vector<16x648xf32>
    %268 = arith.addf %263, %267 : vector<16x648xf32>
    %c6_244 = arith.constant 6 : index
    %c0_245 = arith.constant 0 : index
    %c0_246 = arith.constant 0 : index
    %269 = vector.load %arg4[%c6_244, %c0_245, %c0_246] : memref<9x16x16xf32, #tpu.memory_space<vmem>>, vector<1x16x16xf32>
    %270 = vector.shape_cast %269 : vector<1x16x16xf32> to vector<16x16xf32>
    %c0_247 = arith.constant 0 : index
    %c36_248 = arith.constant 36 : index
    %271 = vector.load %arg10[%c0_247, %c36_248] : memref<16x768xf32, #tpu.memory_space<vmem>>, vector<16x648xf32>
    %cst_249 = arith.constant dense<0.000000e+00> : vector<16x648xf32>
    %272 = tpu.matmul %270, %271, %cst_249 {dimension_numbers = #tpu.dot_dimension_numbers<[1], [0], [0], [1], [0, 0, 1, 1], [], []>} : vector<16x16xf32>, vector<16x648xf32>, vector<16x648xf32> -> vector<16x648xf32>
    %273 = arith.addf %268, %272 : vector<16x648xf32>
    %c7_250 = arith.constant 7 : index
    %c0_251 = arith.constant 0 : index
    %c0_252 = arith.constant 0 : index
    %274 = vector.load %arg4[%c7_250, %c0_251, %c0_252] : memref<9x16x16xf32, #tpu.memory_space<vmem>>, vector<1x16x16xf32>
    %275 = vector.shape_cast %274 : vector<1x16x16xf32> to vector<16x16xf32>
    %c0_253 = arith.constant 0 : index
    %c37_254 = arith.constant 37 : index
    %276 = vector.load %arg10[%c0_253, %c37_254] : memref<16x768xf32, #tpu.memory_space<vmem>>, vector<16x648xf32>
    %cst_255 = arith.constant dense<0.000000e+00> : vector<16x648xf32>
    %277 = tpu.matmul %275, %276, %cst_255 {dimension_numbers = #tpu.dot_dimension_numbers<[1], [0], [0], [1], [0, 0, 1, 1], [], []>} : vector<16x16xf32>, vector<16x648xf32>, vector<16x648xf32> -> vector<16x648xf32>
    %278 = arith.addf %273, %277 : vector<16x648xf32>
    %c8_256 = arith.constant 8 : index
    %c0_257 = arith.constant 0 : index
    %c0_258 = arith.constant 0 : index
    %279 = vector.load %arg4[%c8_256, %c0_257, %c0_258] : memref<9x16x16xf32, #tpu.memory_space<vmem>>, vector<1x16x16xf32>
    %280 = vector.shape_cast %279 : vector<1x16x16xf32> to vector<16x16xf32>
    %c0_259 = arith.constant 0 : index
    %c38_260 = arith.constant 38 : index
    %281 = vector.load %arg10[%c0_259, %c38_260] : memref<16x768xf32, #tpu.memory_space<vmem>>, vector<16x648xf32>
    %cst_261 = arith.constant dense<0.000000e+00> : vector<16x648xf32>
    %282 = tpu.matmul %280, %281, %cst_261 {dimension_numbers = #tpu.dot_dimension_numbers<[1], [0], [0], [1], [0, 0, 1, 1], [], []>} : vector<16x16xf32>, vector<16x648xf32>, vector<16x648xf32> -> vector<16x648xf32>
    %283 = arith.addf %278, %282 : vector<16x648xf32>
    %c0_262 = arith.constant 0 : index
    %c0_263 = arith.constant 0 : index
    %284 = vector.load %arg7[%c0_262, %c0_263] : memref<16x1xf32, #tpu.memory_space<vmem>>, vector<16x1xf32>
    %285 = vector.broadcast %284 : vector<16x1xf32> to vector<16x648xf32>
    %286 = arith.addf %283, %285 : vector<16x648xf32>
    %cst_264 = arith.constant 0.00999999977 : f32
    %287 = vector.broadcast %cst_264 : f32 to vector<16x648xf32>
    %288 = arith.mulf %287, %286 : vector<16x648xf32>
    %289 = arith.maximumf %286, %288 : vector<16x648xf32>
    %290 = vector.extract_strided_slice %289 {offsets = [0, 0], sizes = [16, 16], strides = [1, 1]} : vector<16x648xf32> to vector<16x16xf32>
    %c0_265 = arith.constant 0 : index
    %c0_266 = arith.constant 0 : index
    %291 = vector.load %arg8[%c0_265, %c0_266] : memref<16x512xf32, #tpu.memory_space<vmem>>, vector<16x16xf32>
    tpu.vector_store %arg8[%c0_265, %c0_266], %290 {strides = array<i32>} : memref<16x512xf32, #tpu.memory_space<vmem>>, vector<16x16xf32>,
    %292 = vector.extract_strided_slice %289 {offsets = [0, 18], sizes = [16, 16], strides = [1, 1]} : vector<16x648xf32> to vector<16x16xf32>
    %c0_267 = arith.constant 0 : index
    %c16 = arith.constant 16 : index
    %293 = vector.load %arg8[%c0_267, %c16] : memref<16x512xf32, #tpu.memory_space<vmem>>, vector<16x16xf32>
    tpu.vector_store %arg8[%c0_267, %c16], %292 {strides = array<i32>} : memref<16x512xf32, #tpu.memory_space<vmem>>, vector<16x16xf32>,
    %294 = vector.extract_strided_slice %289 {offsets = [0, 36], sizes = [16, 16], strides = [1, 1]} : vector<16x648xf32> to vector<16x16xf32>
    %c0_268 = arith.constant 0 : index
    %c32 = arith.constant 32 : index
    %295 = vector.load %arg8[%c0_268, %c32] : memref<16x512xf32, #tpu.memory_space<vmem>>, vector<16x16xf32>
    tpu.vector_store %arg8[%c0_268, %c32], %294 {strides = array<i32>} : memref<16x512xf32, #tpu.memory_space<vmem>>, vector<16x16xf32>,
    %296 = vector.extract_strided_slice %289 {offsets = [0, 54], sizes = [16, 16], strides = [1, 1]} : vector<16x648xf32> to vector<16x16xf32>
    %c0_269 = arith.constant 0 : index
    %c48 = arith.constant 48 : index
    %297 = vector.load %arg8[%c0_269, %c48] : memref<16x512xf32, #tpu.memory_space<vmem>>, vector<16x16xf32>
    tpu.vector_store %arg8[%c0_269, %c48], %296 {strides = array<i32>} : memref<16x512xf32, #tpu.memory_space<vmem>>, vector<16x16xf32>,
    %298 = vector.extract_strided_slice %289 {offsets = [0, 72], sizes = [16, 16], strides = [1, 1]} : vector<16x648xf32> to vector<16x16xf32>
    %c0_270 = arith.constant 0 : index
    %c64 = arith.constant 64 : index
    %299 = vector.load %arg8[%c0_270, %c64] : memref<16x512xf32, #tpu.memory_space<vmem>>, vector<16x16xf32>
    tpu.vector_store %arg8[%c0_270, %c64], %298 {strides = array<i32>} : memref<16x512xf32, #tpu.memory_space<vmem>>, vector<16x16xf32>,
    %300 = vector.extract_strided_slice %289 {offsets = [0, 90], sizes = [16, 16], strides = [1, 1]} : vector<16x648xf32> to vector<16x16xf32>
    %c0_271 = arith.constant 0 : index
    %c80 = arith.constant 80 : index
    %301 = vector.load %arg8[%c0_271, %c80] : memref<16x512xf32, #tpu.memory_space<vmem>>, vector<16x16xf32>
    tpu.vector_store %arg8[%c0_271, %c80], %300 {strides = array<i32>} : memref<16x512xf32, #tpu.memory_space<vmem>>, vector<16x16xf32>,
    %302 = vector.extract_strided_slice %289 {offsets = [0, 108], sizes = [16, 16], strides = [1, 1]} : vector<16x648xf32> to vector<16x16xf32>
    %c0_272 = arith.constant 0 : index
    %c96 = arith.constant 96 : index
    %303 = vector.load %arg8[%c0_272, %c96] : memref<16x512xf32, #tpu.memory_space<vmem>>, vector<16x16xf32>
    tpu.vector_store %arg8[%c0_272, %c96], %302 {strides = array<i32>} : memref<16x512xf32, #tpu.memory_space<vmem>>, vector<16x16xf32>,
    %304 = vector.extract_strided_slice %289 {offsets = [0, 126], sizes = [16, 16], strides = [1, 1]} : vector<16x648xf32> to vector<16x16xf32>
    %c0_273 = arith.constant 0 : index
    %c112 = arith.constant 112 : index
    %305 = vector.load %arg8[%c0_273, %c112] : memref<16x512xf32, #tpu.memory_space<vmem>>, vector<16x16xf32>
    tpu.vector_store %arg8[%c0_273, %c112], %304 {strides = array<i32>} : memref<16x512xf32, #tpu.memory_space<vmem>>, vector<16x16xf32>,
    %306 = vector.extract_strided_slice %289 {offsets = [0, 144], sizes = [16, 16], strides = [1, 1]} : vector<16x648xf32> to vector<16x16xf32>
    %c0_274 = arith.constant 0 : index
    %c128 = arith.constant 128 : index
    %307 = vector.load %arg8[%c0_274, %c128] : memref<16x512xf32, #tpu.memory_space<vmem>>, vector<16x16xf32>
    tpu.vector_store %arg8[%c0_274, %c128], %306 {strides = array<i32>} : memref<16x512xf32, #tpu.memory_space<vmem>>, vector<16x16xf32>,
    %308 = vector.extract_strided_slice %289 {offsets = [0, 162], sizes = [16, 16], strides = [1, 1]} : vector<16x648xf32> to vector<16x16xf32>
    %c0_275 = arith.constant 0 : index
    %c144 = arith.constant 144 : index
    %309 = vector.load %arg8[%c0_275, %c144] : memref<16x512xf32, #tpu.memory_space<vmem>>, vector<16x16xf32>
    tpu.vector_store %arg8[%c0_275, %c144], %308 {strides = array<i32>} : memref<16x512xf32, #tpu.memory_space<vmem>>, vector<16x16xf32>,
    %310 = vector.extract_strided_slice %289 {offsets = [0, 180], sizes = [16, 16], strides = [1, 1]} : vector<16x648xf32> to vector<16x16xf32>
    %c0_276 = arith.constant 0 : index
    %c160 = arith.constant 160 : index
    %311 = vector.load %arg8[%c0_276, %c160] : memref<16x512xf32, #tpu.memory_space<vmem>>, vector<16x16xf32>
    tpu.vector_store %arg8[%c0_276, %c160], %310 {strides = array<i32>} : memref<16x512xf32, #tpu.memory_space<vmem>>, vector<16x16xf32>,
    %312 = vector.extract_strided_slice %289 {offsets = [0, 198], sizes = [16, 16], strides = [1, 1]} : vector<16x648xf32> to vector<16x16xf32>
    %c0_277 = arith.constant 0 : index
    %c176 = arith.constant 176 : index
    %313 = vector.load %arg8[%c0_277, %c176] : memref<16x512xf32, #tpu.memory_space<vmem>>, vector<16x16xf32>
    tpu.vector_store %arg8[%c0_277, %c176], %312 {strides = array<i32>} : memref<16x512xf32, #tpu.memory_space<vmem>>, vector<16x16xf32>,
    %314 = vector.extract_strided_slice %289 {offsets = [0, 216], sizes = [16, 16], strides = [1, 1]} : vector<16x648xf32> to vector<16x16xf32>
    %c0_278 = arith.constant 0 : index
    %c192 = arith.constant 192 : index
    %315 = vector.load %arg8[%c0_278, %c192] : memref<16x512xf32, #tpu.memory_space<vmem>>, vector<16x16xf32>
    tpu.vector_store %arg8[%c0_278, %c192], %314 {strides = array<i32>} : memref<16x512xf32, #tpu.memory_space<vmem>>, vector<16x16xf32>,
    %316 = vector.extract_strided_slice %289 {offsets = [0, 234], sizes = [16, 16], strides = [1, 1]} : vector<16x648xf32> to vector<16x16xf32>
    %c0_279 = arith.constant 0 : index
    %c208 = arith.constant 208 : index
    %317 = vector.load %arg8[%c0_279, %c208] : memref<16x512xf32, #tpu.memory_space<vmem>>, vector<16x16xf32>
    tpu.vector_store %arg8[%c0_279, %c208], %316 {strides = array<i32>} : memref<16x512xf32, #tpu.memory_space<vmem>>, vector<16x16xf32>,
    %318 = vector.extract_strided_slice %289 {offsets = [0, 252], sizes = [16, 16], strides = [1, 1]} : vector<16x648xf32> to vector<16x16xf32>
    %c0_280 = arith.constant 0 : index
    %c224 = arith.constant 224 : index
    %319 = vector.load %arg8[%c0_280, %c224] : memref<16x512xf32, #tpu.memory_space<vmem>>, vector<16x16xf32>
    tpu.vector_store %arg8[%c0_280, %c224], %318 {strides = array<i32>} : memref<16x512xf32, #tpu.memory_space<vmem>>, vector<16x16xf32>,
    %320 = vector.extract_strided_slice %289 {offsets = [0, 270], sizes = [16, 16], strides = [1, 1]} : vector<16x648xf32> to vector<16x16xf32>
    %c0_281 = arith.constant 0 : index
    %c240 = arith.constant 240 : index
    %321 = vector.load %arg8[%c0_281, %c240] : memref<16x512xf32, #tpu.memory_space<vmem>>, vector<16x16xf32>
    tpu.vector_store %arg8[%c0_281, %c240], %320 {strides = array<i32>} : memref<16x512xf32, #tpu.memory_space<vmem>>, vector<16x16xf32>,
    %322 = vector.extract_strided_slice %289 {offsets = [0, 324], sizes = [16, 16], strides = [1, 1]} : vector<16x648xf32> to vector<16x16xf32>
    %c0_282 = arith.constant 0 : index
    %c256 = arith.constant 256 : index
    %323 = vector.load %arg8[%c0_282, %c256] : memref<16x512xf32, #tpu.memory_space<vmem>>, vector<16x16xf32>
    tpu.vector_store %arg8[%c0_282, %c256], %322 {strides = array<i32>} : memref<16x512xf32, #tpu.memory_space<vmem>>, vector<16x16xf32>,
    %324 = vector.extract_strided_slice %289 {offsets = [0, 342], sizes = [16, 16], strides = [1, 1]} : vector<16x648xf32> to vector<16x16xf32>
    %c0_283 = arith.constant 0 : index
    %c272 = arith.constant 272 : index
    %325 = vector.load %arg8[%c0_283, %c272] : memref<16x512xf32, #tpu.memory_space<vmem>>, vector<16x16xf32>
    tpu.vector_store %arg8[%c0_283, %c272], %324 {strides = array<i32>} : memref<16x512xf32, #tpu.memory_space<vmem>>, vector<16x16xf32>,
    %326 = vector.extract_strided_slice %289 {offsets = [0, 360], sizes = [16, 16], strides = [1, 1]} : vector<16x648xf32> to vector<16x16xf32>
    %c0_284 = arith.constant 0 : index
    %c288 = arith.constant 288 : index
    %327 = vector.load %arg8[%c0_284, %c288] : memref<16x512xf32, #tpu.memory_space<vmem>>, vector<16x16xf32>
    tpu.vector_store %arg8[%c0_284, %c288], %326 {strides = array<i32>} : memref<16x512xf32, #tpu.memory_space<vmem>>, vector<16x16xf32>,
    %328 = vector.extract_strided_slice %289 {offsets = [0, 378], sizes = [16, 16], strides = [1, 1]} : vector<16x648xf32> to vector<16x16xf32>
    %c0_285 = arith.constant 0 : index
    %c304 = arith.constant 304 : index
    %329 = vector.load %arg8[%c0_285, %c304] : memref<16x512xf32, #tpu.memory_space<vmem>>, vector<16x16xf32>
    tpu.vector_store %arg8[%c0_285, %c304], %328 {strides = array<i32>} : memref<16x512xf32, #tpu.memory_space<vmem>>, vector<16x16xf32>,
    %330 = vector.extract_strided_slice %289 {offsets = [0, 396], sizes = [16, 16], strides = [1, 1]} : vector<16x648xf32> to vector<16x16xf32>
    %c0_286 = arith.constant 0 : index
    %c320 = arith.constant 320 : index
    %331 = vector.load %arg8[%c0_286, %c320] : memref<16x512xf32, #tpu.memory_space<vmem>>, vector<16x16xf32>
    tpu.vector_store %arg8[%c0_286, %c320], %330 {strides = array<i32>} : memref<16x512xf32, #tpu.memory_space<vmem>>, vector<16x16xf32>,
    %332 = vector.extract_strided_slice %289 {offsets = [0, 414], sizes = [16, 16], strides = [1, 1]} : vector<16x648xf32> to vector<16x16xf32>
    %c0_287 = arith.constant 0 : index
    %c336 = arith.constant 336 : index
    %333 = vector.load %arg8[%c0_287, %c336] : memref<16x512xf32, #tpu.memory_space<vmem>>, vector<16x16xf32>
    tpu.vector_store %arg8[%c0_287, %c336], %332 {strides = array<i32>} : memref<16x512xf32, #tpu.memory_space<vmem>>, vector<16x16xf32>,
    %334 = vector.extract_strided_slice %289 {offsets = [0, 432], sizes = [16, 16], strides = [1, 1]} : vector<16x648xf32> to vector<16x16xf32>
    %c0_288 = arith.constant 0 : index
    %c352 = arith.constant 352 : index
    %335 = vector.load %arg8[%c0_288, %c352] : memref<16x512xf32, #tpu.memory_space<vmem>>, vector<16x16xf32>
    tpu.vector_store %arg8[%c0_288, %c352], %334 {strides = array<i32>} : memref<16x512xf32, #tpu.memory_space<vmem>>, vector<16x16xf32>,
    %336 = vector.extract_strided_slice %289 {offsets = [0, 450], sizes = [16, 16], strides = [1, 1]} : vector<16x648xf32> to vector<16x16xf32>
    %c0_289 = arith.constant 0 : index
    %c368 = arith.constant 368 : index
    %337 = vector.load %arg8[%c0_289, %c368] : memref<16x512xf32, #tpu.memory_space<vmem>>, vector<16x16xf32>
    tpu.vector_store %arg8[%c0_289, %c368], %336 {strides = array<i32>} : memref<16x512xf32, #tpu.memory_space<vmem>>, vector<16x16xf32>,
    %338 = vector.extract_strided_slice %289 {offsets = [0, 468], sizes = [16, 16], strides = [1, 1]} : vector<16x648xf32> to vector<16x16xf32>
    %c0_290 = arith.constant 0 : index
    %c384 = arith.constant 384 : index
    %339 = vector.load %arg8[%c0_290, %c384] : memref<16x512xf32, #tpu.memory_space<vmem>>, vector<16x16xf32>
    tpu.vector_store %arg8[%c0_290, %c384], %338 {strides = array<i32>} : memref<16x512xf32, #tpu.memory_space<vmem>>, vector<16x16xf32>,
    %340 = vector.extract_strided_slice %289 {offsets = [0, 486], sizes = [16, 16], strides = [1, 1]} : vector<16x648xf32> to vector<16x16xf32>
    %c0_291 = arith.constant 0 : index
    %c400 = arith.constant 400 : index
    %341 = vector.load %arg8[%c0_291, %c400] : memref<16x512xf32, #tpu.memory_space<vmem>>, vector<16x16xf32>
    tpu.vector_store %arg8[%c0_291, %c400], %340 {strides = array<i32>} : memref<16x512xf32, #tpu.memory_space<vmem>>, vector<16x16xf32>,
    %342 = vector.extract_strided_slice %289 {offsets = [0, 504], sizes = [16, 16], strides = [1, 1]} : vector<16x648xf32> to vector<16x16xf32>
    %c0_292 = arith.constant 0 : index
    %c416 = arith.constant 416 : index
    %343 = vector.load %arg8[%c0_292, %c416] : memref<16x512xf32, #tpu.memory_space<vmem>>, vector<16x16xf32>
    tpu.vector_store %arg8[%c0_292, %c416], %342 {strides = array<i32>} : memref<16x512xf32, #tpu.memory_space<vmem>>, vector<16x16xf32>,
    %344 = vector.extract_strided_slice %289 {offsets = [0, 522], sizes = [16, 16], strides = [1, 1]} : vector<16x648xf32> to vector<16x16xf32>
    %c0_293 = arith.constant 0 : index
    %c432 = arith.constant 432 : index
    %345 = vector.load %arg8[%c0_293, %c432] : memref<16x512xf32, #tpu.memory_space<vmem>>, vector<16x16xf32>
    tpu.vector_store %arg8[%c0_293, %c432], %344 {strides = array<i32>} : memref<16x512xf32, #tpu.memory_space<vmem>>, vector<16x16xf32>,
    %346 = vector.extract_strided_slice %289 {offsets = [0, 540], sizes = [16, 16], strides = [1, 1]} : vector<16x648xf32> to vector<16x16xf32>
    %c0_294 = arith.constant 0 : index
    %c448 = arith.constant 448 : index
    %347 = vector.load %arg8[%c0_294, %c448] : memref<16x512xf32, #tpu.memory_space<vmem>>, vector<16x16xf32>
    tpu.vector_store %arg8[%c0_294, %c448], %346 {strides = array<i32>} : memref<16x512xf32, #tpu.memory_space<vmem>>, vector<16x16xf32>,
    %348 = vector.extract_strided_slice %289 {offsets = [0, 558], sizes = [16, 16], strides = [1, 1]} : vector<16x648xf32> to vector<16x16xf32>
    %c0_295 = arith.constant 0 : index
    %c464 = arith.constant 464 : index
    %349 = vector.load %arg8[%c0_295, %c464] : memref<16x512xf32, #tpu.memory_space<vmem>>, vector<16x16xf32>
    tpu.vector_store %arg8[%c0_295, %c464], %348 {strides = array<i32>} : memref<16x512xf32, #tpu.memory_space<vmem>>, vector<16x16xf32>,
    %350 = vector.extract_strided_slice %289 {offsets = [0, 576], sizes = [16, 16], strides = [1, 1]} : vector<16x648xf32> to vector<16x16xf32>
    %c0_296 = arith.constant 0 : index
    %c480 = arith.constant 480 : index
    %351 = vector.load %arg8[%c0_296, %c480] : memref<16x512xf32, #tpu.memory_space<vmem>>, vector<16x16xf32>
    tpu.vector_store %arg8[%c0_296, %c480], %350 {strides = array<i32>} : memref<16x512xf32, #tpu.memory_space<vmem>>, vector<16x16xf32>,
    %352 = vector.extract_strided_slice %289 {offsets = [0, 594], sizes = [16, 16], strides = [1, 1]} : vector<16x648xf32> to vector<16x16xf32>
    %c0_297 = arith.constant 0 : index
    %c496 = arith.constant 496 : index
    %353 = vector.load %arg8[%c0_297, %c496] : memref<16x512xf32, #tpu.memory_space<vmem>>, vector<16x16xf32>
    tpu.vector_store %arg8[%c0_297, %c496], %352 {strides = array<i32>} : memref<16x512xf32, #tpu.memory_space<vmem>>, vector<16x16xf32>,
    return
  }
  func.func @transform_0(%arg0: i32) -> (i32, i32) {
    %c0_i32 = arith.constant 0 : i32
    %c0_i32_0 = arith.constant 0 : i32
    %c0_i32_1 = arith.constant 0 : i32
    return %c0_i32, %c0_i32_0 : i32, i32
  }
  func.func @transform_1(%arg0: i32) -> (i32, i32, i32) {
    %c0_i32 = arith.constant 0 : i32
    %c0_i32_0 = arith.constant 0 : i32
    %c0_i32_1 = arith.constant 0 : i32
    %c0_i32_2 = arith.constant 0 : i32
    return %c0_i32, %c0_i32_0, %c0_i32_1 : i32, i32, i32
  }
  func.func @transform_2(%arg0: i32) -> (i32, i32, i32) {
    %c0_i32 = arith.constant 0 : i32
    %c0_i32_0 = arith.constant 0 : i32
    %c0_i32_1 = arith.constant 0 : i32
    %c0_i32_2 = arith.constant 0 : i32
    return %c0_i32, %c0_i32_0, %c0_i32_1 : i32, i32, i32
  }
  func.func @transform_3(%arg0: i32) -> (i32, i32, i32) {
    %c0_i32 = arith.constant 0 : i32
    %c0_i32_0 = arith.constant 0 : i32
    %c0_i32_1 = arith.constant 0 : i32
    %c0_i32_2 = arith.constant 0 : i32
    return %c0_i32, %c0_i32_0, %c0_i32_1 : i32, i32, i32
  }
  func.func @transform_4(%arg0: i32) -> (i32, i32) {
    %c0_i32 = arith.constant 0 : i32
    %c0_i32_0 = arith.constant 0 : i32
    %c0_i32_1 = arith.constant 0 : i32
    return %c0_i32, %c0_i32_0 : i32, i32
  }
  func.func @transform_5(%arg0: i32) -> (i32, i32) {
    %c0_i32 = arith.constant 0 : i32
    %c0_i32_0 = arith.constant 0 : i32
    %c0_i32_1 = arith.constant 0 : i32
    return %c0_i32, %c0_i32_0 : i32, i32
  }
  func.func @transform_6(%arg0: i32) -> (i32, i32) {
    %c0_i32 = arith.constant 0 : i32
    %c0_i32_0 = arith.constant 0 : i32
    %c0_i32_1 = arith.constant 0 : i32
    return %c0_i32, %c0_i32_0 : i32, i32
  }
  func.func @transform_7(%arg0: i32) -> (i32, i32) {
    %c0_i32 = arith.constant 0 : i32
    %c0_i32_0 = arith.constant 0 : i32
    %c0_i32_1 = arith.constant 0 : i32
    return %c0_i32, %c0_i32_0 : i32, i32
  }
}

</mosaic_0001>

<llo_original>
// kernel: a_call__.1
$region0: #{a_call__.1}
  #allocation0 [shape = 'u32[]', space=smem, size = 0x4, offset = 0x4, fixed_abs, tag = 'smem constant byte address 0x4 - core index']
  #allocation1 [shape = 'u32[144,128]{1,0:T(1,128)}', space=vmem, size = 0x12000, scoped, tag = 'internal scratch']
  #allocation2 [shape = 'f32[16,768]{1,0:T(8,128)}', space=vmem, size = 0xc000, scoped, tag = 'scratch operand']
  #allocation3 [shape = 'f32[16,768]{1,0:T(8,128)}', space=vmem, size = 0xc000, scoped, tag = 'scratch operand']
  %s0 = inlined_call_operand.vmem [shape: f32[16,768], index: 0, kind: input, shape index: {}]
  %s1 = inlined_call_operand.vmem [shape: f32[9,16,16], index: 1, kind: input, shape index: {}]
  %s2 = inlined_call_operand.vmem [shape: f32[9,16,16], index: 2, kind: input, shape index: {}]
  %s3 = inlined_call_operand.vmem [shape: f32[9,16,16], index: 3, kind: input, shape index: {}]
  %s4 = inlined_call_operand.vmem [shape: f32[16,1], index: 4, kind: input, shape index: {}]
  %s5 = inlined_call_operand.vmem [shape: f32[16,1], index: 5, kind: input, shape index: {}]
  %s6 = inlined_call_operand.vmem [shape: f32[16,1], index: 6, kind: input, shape index: {}]
  %s7 = inlined_call_operand.vmem [shape: f32[16,512], index: 7, kind: output, shape index: {}]
  %s8 = sld [smem:[#allocation0]]
  $region38: #{a_call__.1} parent=0
    _
  %s10 = ssub.s32 1, %s8
  %s11 = scalar_select 0, %s10, %s8
  // Predicated region
  $region2: #{a_call__.1} parent=0 // pred_check
    _
  $region3: #{a_call__.1} parent=0 // pred_check_branch
    %13 = sbr.rel (0) target = $region5
  $region4: #{a_call__.1} parent=0 // pred_region
    _
  $region5: #{a_call__.1} parent=0 // pred_fallthru
    _
  // Predicated region
  $region6: #{a_call__.1} parent=0 // pred_check
    _
  $region7: #{a_call__.1} parent=0 // pred_check_branch
    %15 = sbr.rel (0) target = $region9
  $region8: #{a_call__.1} parent=0 // pred_region
    _
  $region9: #{a_call__.1} parent=0 // pred_fallthru
    _
  // Predicated region
  $region10: #{a_call__.1} parent=0 // pred_check
    _
  $region11: #{a_call__.1} parent=0 // pred_check_branch
    %17 = sbr.rel (0) target = $region13
  $region12: #{a_call__.1} parent=0 // pred_region
    _
  $region13: #{a_call__.1} parent=0 // pred_fallthru
    _
  // Predicated region
  $region14: #{a_call__.1} parent=0 // pred_check
    _
  $region15: #{a_call__.1} parent=0 // pred_check_branch
    %19 = sbr.rel (0) target = $region17
  $region16: #{a_call__.1} parent=0 // pred_region
    _
  $region17: #{a_call__.1} parent=0 // pred_fallthru
    _
  // Predicated region
  $region18: #{a_call__.1} parent=0 // pred_check
    _
  $region19: #{a_call__.1} parent=0 // pred_check_branch
    %21 = sbr.rel (0) target = $region21
  $region20: #{a_call__.1} parent=0 // pred_region
    _
  $region21: #{a_call__.1} parent=0 // pred_fallthru
    _
  // Predicated region
  $region22: #{a_call__.1} parent=0 // pred_check
    _
  $region23: #{a_call__.1} parent=0 // pred_check_branch
    %23 = sbr.rel (0) target = $region25
  $region24: #{a_call__.1} parent=0 // pred_region
    _
  $region25: #{a_call__.1} parent=0 // pred_fallthru
    _
  // Predicated region
  $region26: #{a_call__.1} parent=0 // pred_check
    _
  $region27: #{a_call__.1} parent=0 // pred_check_branch
    %25 = sbr.rel (0) target = $region29
  $region28: #{a_call__.1} parent=0 // pred_region
    _
  $region29: #{a_call__.1} parent=0 // pred_fallthru
    _
  %26 = vst [vmem:[%s7] sm:$0xff] 0.0
  %27 = vst [vmem:[%s7 + $0x8] sm:$0xff] 0.0
  %28 = vst [vmem:[%s7 + $0x10] sm:$0xff] 0.0
  %29 = vst [vmem:[%s7 + $0x18] sm:$0xff] 0.0
  %30 = vst [vmem:[%s7 + $0x20] sm:$0xff] 0.0
  %31 = vst [vmem:[%s7 + $0x28] sm:$0xff] 0.0
  %32 = vst [vmem:[%s7 + $0x30] sm:$0xff] 0.0
  %33 = vst [vmem:[%s7 + $0x38] sm:$0xff] 0.0
  %v34 = vld [vmem:[%s1] sm:$0xff]
  %v35 = vld [vmem:[%s1 + $0x8] sm:$0xff]
  %v36 = vld [vmem:[%s0] sm:$0xff]
  %v37 = vld [vmem:[%s0 + $0x8] sm:$0xff]
  %v38 = vld [vmem:[%s0 + $0x10] sm:$0xff]
  %v39 = vld [vmem:[%s0 + $0x18] sm:$0xff]
  %v40 = vld [vmem:[%s0 + $0x20] sm:$0xff]
  %v41 = vld [vmem:[%s0 + $0x28] sm:$0xff]
  %v42 = vld [vmem:[%s0 + $0x30] sm:$0xff]
  %v43 = vld [vmem:[%s0 + $0x38] sm:$0xff]
  %v44 = vld [vmem:[%s0 + $0x40] sm:$0xff]
  %v45 = vld [vmem:[%s0 + $0x48] sm:$0xff]
  %v46 = vld [vmem:[%s0 + $0x50] sm:$0xff]
  %v47 = vld [vmem:[%s0 + $0x58] sm:$0xff]
  %s48 = scalar_lea.vmem %s1, 16
  %v49 = vld [vmem:[%s48] sm:$0xff]
  %v50 = vld [vmem:[%s48 + $0x8] sm:$0xff]
  %63 = vrot.lane.b32.xlu0 %v36, 127
  %v64 = vpop.permute.xlu0 %63
  %65 = vrot.lane.b32.xlu0 %v37, 127
  %v66 = vpop.permute.xlu0 %65
  %67 = vrot.lane.b32.xlu0 %v38, 127
  %v68 = vpop.permute.xlu0 %67
  %69 = vrot.lane.b32.xlu0 %v39, 127
  %v70 = vpop.permute.xlu0 %69
  %71 = vrot.lane.b32.xlu0 %v40, 127
  %v72 = vpop.permute.xlu0 %71
  %73 = vrot.lane.b32.xlu0 %v41, 127
  %v74 = vpop.permute.xlu0 %73
  %75 = vrot.lane.b32.xlu0 %v42, 127
  %v76 = vpop.permute.xlu0 %75
  %77 = vrot.lane.b32.xlu0 %v43, 127
  %v78 = vpop.permute.xlu0 %77
  %79 = vrot.lane.b32.xlu0 %v44, 127
  %v80 = vpop.permute.xlu0 %79
  %81 = vrot.lane.b32.xlu0 %v45, 127
  %v82 = vpop.permute.xlu0 %81
  %83 = vrot.lane.b32.xlu0 %v46, 127
  %v84 = vpop.permute.xlu0 %83
  %85 = vrot.lane.b32.xlu0 %v47, 127
  %v86 = vpop.permute.xlu0 %85
  %vm87 = vcmask 1039360
  %v88 = vsel %vm87, %v64, %v66
  %v89 = vsel %vm87, %v66, %v68
  %v90 = vsel %vm87, %v68, %v70
  %v91 = vsel %vm87, %v70, %v72
  %v92 = vsel %vm87, %v72, %v74
  %v93 = vsel %vm87, %v76, %v78
  %v94 = vsel %vm87, %v78, %v80
  %v95 = vsel %vm87, %v80, %v82
  %v96 = vsel %vm87, %v82, %v84
  %v97 = vsel %vm87, %v84, %v86
  %vm110 = vcmask 130048
  %v112 = vsel %vm110, %v49, 0
  %v115 = vsel %vm110, %v50, 0
  %117 = vmatprep.subr.mxu0 %v89
  %118 = vmatpush1.msra.mxu0 %v88
  %119 = vmatprep.subr.mxu0 %v94
  %120 = vmatpush1.msra.mxu0 %v93
  %121 = vmatprep.subr.mxu0 0.0
  %122 = vmatpush1.msra.mxu0 0.0
  %123 = vmatprep.subr.mxu0 0.0
  %124 = vmatpush1.msra.mxu0 0.0
  %125 = vmatprep.subr.mxu0 0.0
  %126 = vmatpush1.msra.mxu0 0.0
  %127 = vmatprep.subr.mxu0 0.0
  %128 = vmatpush1.msra.mxu0 0.0
  %129 = vmatprep.subr.mxu0 0.0
  %130 = vmatpush1.msra.mxu0 0.0
  %131 = vmatprep.subr.mxu0 0.0
  %132 = vmatpush1.msra.mxu0 0.0
  %133 = vmatprep.subr.mxu0 0.0
  %134 = vmatpush1.msra.mxu0 0.0
  %135 = vmatprep.subr.mxu0 0.0
  %136 = vmatpush1.msra.mxu0 0.0
  %137 = vmatprep.subr.mxu0 0.0
  %138 = vmatpush1.msra.mxu0 0.0
  %139 = vmatprep.subr.mxu0 0.0
  %140 = vmatpush1.msra.mxu0 0.0
  %141 = vmatprep.subr.mxu0 0.0
  %142 = vmatpush1.msra.mxu0 0.0
  %143 = vmatprep.subr.mxu0 0.0
  %144 = vmatpush1.msra.mxu0 0.0
  %145 = vmatprep.subr.mxu0 0.0
  %146 = vmatpush1.msra.mxu0 0.0
  %147 = vmatprep.subr.mxu0 0.0
  %148 = vmatpush1.msra.mxu0 0.0
  %149 = vmatprep.subr.mxu0 0.0
  %150 = vmatpush1.msra.mxu0 0.0
  %151 = vmatprep.subr.mxu0 0.0
  %152 = vmatpush1.msra.mxu0 0.0
  %153 = vmatprep.subr.mxu0 0.0
  %154 = vmatpush1.msra.mxu0 0.0
  %155 = vmatprep.subr.mxu0 0.0
  %156 = vmatpush1.msra.mxu0 0.0
  %157 = vmatprep.subr.mxu0 0.0
  %158 = vmatpush1.msra.mxu0 0.0
  %159 = vmatprep.subr.mxu0 0.0
  %160 = vmatpush1.msra.mxu0 0.0
  %161 = vmatprep.subr.mxu0 0.0
  %162 = vmatpush1.msra.mxu0 0.0
  %163 = vmatprep.subr.mxu0 0.0
  %164 = vmatpush1.msra.mxu0 0.0
  %165 = vmatprep.subr.mxu0 0.0
  %166 = vmatpush1.msra.mxu0 0.0
  %167 = vmatprep.subr.mxu0 0.0
  %168 = vmatpush1.msra.mxu0 0.0
  %169 = vmatprep.subr.mxu0 0.0
  %170 = vmatpush1.msra.mxu0 0.0
  %171 = vmatprep.subr.mxu0 0.0
  %172 = vmatpush1.msra.mxu0 0.0
  %173 = vmatprep.subr.mxu0 0.0
  %174 = vmatpush1.msra.mxu0 0.0
  %175 = vmatprep.subr.mxu0 0.0
  %176 = vmatpush1.msra.mxu0 0.0
  %177 = vmatprep.subr.mxu0 0.0
  %178 = vmatpush1.msra.mxu0 0.0
  %179 = vmatprep.subr.mxu0 0.0
  %180 = vmatpush1.msra.mxu0 0.0
  %181 = vmatprep.mubr.f32.mxu0 0.0
  %182 = vmatmul.mubr.f32.gmra.mrb[0].mxu0 %v112
  %v183 = vpop.f32.mrb[0].mxu0
  %v184 = vadd.f32 0.0, %v183
  %v185 = vpop.f32.mrb[0].mxu0
  %v186 = vadd.f32 0.0, %v185
  %187 = vmatprep.mubr.f32.mxu0 0.0
  %188 = vmatmul.mubr.f32.gmra.mrb[0].mxu0 %v115
  %v189 = vpop.f32.mrb[0].mxu0
  %v190 = vadd.f32 0.0, %v189
  %v191 = vpop.f32.mrb[0].mxu0
  %v192 = vadd.f32 0.0, %v191
  %193 = vdwg.mxu0
  %194 = vmatprep.subr.mxu0 %v91
  %195 = vmatpush1.msra.mxu0 %v90
  %196 = vmatprep.subr.mxu0 %v96
  %197 = vmatpush1.msra.mxu0 %v95
  %198 = vmatprep.subr.mxu0 0.0
  %199 = vmatpush1.msra.mxu0 0.0
  %200 = vmatprep.subr.mxu0 0.0
  %201 = vmatpush1.msra.mxu0 0.0
  %202 = vmatprep.subr.mxu0 0.0
  %203 = vmatpush1.msra.mxu0 0.0
  %204 = vmatprep.subr.mxu0 0.0
  %205 = vmatpush1.msra.mxu0 0.0
  %206 = vmatprep.subr.mxu0 0.0
  %207 = vmatpush1.msra.mxu0 0.0
  %208 = vmatprep.subr.mxu0 0.0
  %209 = vmatpush1.msra.mxu0 0.0
  %210 = vmatprep.subr.mxu0 0.0
  %211 = vmatpush1.msra.mxu0 0.0
  %212 = vmatprep.subr.mxu0 0.0
  %213 = vmatpush1.msra.mxu0 0.0
  %214 = vmatprep.subr.mxu0 0.0
  %215 = vmatpush1.msra.mxu0 0.0
  %216 = vmatprep.subr.mxu0 0.0
  %217 = vmatpush1.msra.mxu0 0.0
  %218 = vmatprep.subr.mxu0 0.0
  %219 = vmatpush1.msra.mxu0 0.0
  %220 = vmatprep.subr.mxu0 0.0
  %221 = vmatpush1.msra.mxu0 0.0
  %222 = vmatprep.subr.mxu0 0.0
  %223 = vmatpush1.msra.mxu0 0.0
  %224 = vmatprep.subr.mxu0 0.0
  %225 = vmatpush1.msra.mxu0 0.0
  %226 = vmatprep.subr.mxu0 0.0
  %227 = vmatpush1.msra.mxu0 0.0
  %228 = vmatprep.subr.mxu0 0.0
  %229 = vmatpush1.msra.mxu0 0.0
  %230 = vmatprep.subr.mxu0 0.0
  %231 = vmatpush1.msra.mxu0 0.0
  %232 = vmatprep.subr.mxu0 0.0
  %233 = vmatpush1.msra.mxu0 0.0
  %234 = vmatprep.subr.mxu0 0.0
  %235 = vmatpush1.msra.mxu0 0.0
  %236 = vmatprep.subr.mxu0 0.0
  %237 = vmatpush1.msra.mxu0 0.0
  %238 = vmatprep.subr.mxu0 0.0
  %239 = vmatpush1.msra.mxu0 0.0
  %240 = vmatprep.subr.mxu0 0.0
  %241 = vmatpush1.msra.mxu0 0.0
  %242 = vmatprep.subr.mxu0 0.0
  %243 = vmatpush1.msra.mxu0 0.0
  %244 = vmatprep.subr.mxu0 0.0
  %245 = vmatpush1.msra.mxu0 0.0
  %246 = vmatprep.subr.mxu0 0.0
  %247 = vmatpush1.msra.mxu0 0.0
  %248 = vmatprep.subr.mxu0 0.0
  %249 = vmatpush1.msra.mxu0 0.0
  %250 = vmatprep.subr.mxu0 0.0
  %251 = vmatpush1.msra.mxu0 0.0
  %252 = vmatprep.subr.mxu0 0.0
  %253 = vmatpush1.msra.mxu0 0.0
  %254 = vmatprep.subr.mxu0 0.0
  %255 = vmatpush1.msra.mxu0 0.0
  %256 = vmatprep.subr.mxu0 0.0
  %257 = vmatpush1.msra.mxu0 0.0
  %258 = vmatprep.mubr.f32.mxu0 0.0
  %259 = vmatmul.mubr.f32.gmra.mrb[0].mxu0 %v112
  %v260 = vpop.f32.mrb[0].mxu0
  %v261 = vadd.f32 0.0, %v260
  %v262 = vpop.f32.mrb[0].mxu0
  %v263 = vadd.f32 0.0, %v262
  %264 = vmatprep.mubr.f32.mxu0 0.0
  %265 = vmatmul.mubr.f32.gmra.mrb[0].mxu0 %v115
  %v266 = vpop.f32.mrb[0].mxu0
  %v267 = vadd.f32 0.0, %v266
  %v268 = vpop.f32.mrb[0].mxu0
  %v269 = vadd.f32 0.0, %v268
  %270 = vdwg.mxu0
  %271 = vmatprep.subr.mxu0 %v74
  %272 = vmatpush1.msra.mxu0 %v92
  %273 = vmatprep.subr.mxu0 %v86
  %274 = vmatpush1.msra.mxu0 %v97
  %275 = vmatprep.subr.mxu0 0.0
  %276 = vmatpush1.msra.mxu0 0.0
  %277 = vmatprep.subr.mxu0 0.0
  %278 = vmatpush1.msra.mxu0 0.0
  %279 = vmatprep.subr.mxu0 0.0
  %280 = vmatpush1.msra.mxu0 0.0
  %281 = vmatprep.subr.mxu0 0.0
  %282 = vmatpush1.msra.mxu0 0.0
  %283 = vmatprep.subr.mxu0 0.0
  %284 = vmatpush1.msra.mxu0 0.0
  %285 = vmatprep.subr.mxu0 0.0
  %286 = vmatpush1.msra.mxu0 0.0
  %287 = vmatprep.subr.mxu0 0.0
  %288 = vmatpush1.msra.mxu0 0.0
  %289 = vmatprep.subr.mxu0 0.0
  %290 = vmatpush1.msra.mxu0 0.0
  %291 = vmatprep.subr.mxu0 0.0
  %292 = vmatpush1.msra.mxu0 0.0
  %293 = vmatprep.subr.mxu0 0.0
  %294 = vmatpush1.msra.mxu0 0.0
  %295 = vmatprep.subr.mxu0 0.0
  %296 = vmatpush1.msra.mxu0 0.0
  %297 = vmatprep.subr.mxu0 0.0
  %298 = vmatpush1.msra.mxu0 0.0
  %299 = vmatprep.subr.mxu0 0.0
  %300 = vmatpush1.msra.mxu0 0.0
  %301 = vmatprep.subr.mxu0 0.0
  %302 = vmatpush1.msra.mxu0 0.0
  %303 = vmatprep.subr.mxu0 0.0
  %304 = vmatpush1.msra.mxu0 0.0
  %305 = vmatprep.subr.mxu0 0.0
  %306 = vmatpush1.msra.mxu0 0.0
  %307 = vmatprep.subr.mxu0 0.0
  %308 = vmatpush1.msra.mxu0 0.0
  %309 = vmatprep.subr.mxu0 0.0
  %310 = vmatpush1.msra.mxu0 0.0
  %311 = vmatprep.subr.mxu0 0.0
  %312 = vmatpush1.msra.mxu0 0.0
  %313 = vmatprep.subr.mxu0 0.0
  %314 = vmatpush1.msra.mxu0 0.0
  %315 = vmatprep.subr.mxu0 0.0
  %316 = vmatpush1.msra.mxu0 0.0
  %317 = vmatprep.subr.mxu0 0.0
  %318 = vmatpush1.msra.mxu0 0.0
  %319 = vmatprep.subr.mxu0 0.0
  %320 = vmatpush1.msra.mxu0 0.0
  %321 = vmatprep.subr.mxu0 0.0
  %322 = vmatpush1.msra.mxu0 0.0
  %323 = vmatprep.subr.mxu0 0.0
  %324 = vmatpush1.msra.mxu0 0.0
  %325 = vmatprep.subr.mxu0 0.0
  %326 = vmatpush1.msra.mxu0 0.0
  %327 = vmatprep.subr.mxu0 0.0
  %328 = vmatpush1.msra.mxu0 0.0
  %329 = vmatprep.subr.mxu0 0.0
  %330 = vmatpush1.msra.mxu0 0.0
  %331 = vmatprep.subr.mxu0 0.0
  %332 = vmatpush1.msra.mxu0 0.0
  %333 = vmatprep.subr.mxu0 0.0
  %334 = vmatpush1.msra.mxu0 0.0
  %335 = vmatprep.mubr.f32.mxu0 0.0
  %336 = vmatmul.mubr.f32.gmra.mrb[0].mxu0 %v112
  %v337 = vpop.f32.mrb[0].mxu0
  %v338 = vadd.f32 0.0, %v337
  %v339 = vpop.f32.mrb[0].mxu0
  %340 = vmatprep.mubr.f32.mxu0 0.0
  %341 = vmatmul.mubr.f32.gmra.mrb[0].mxu0 %v115
  %v342 = vpop.f32.mrb[0].mxu0
  %v343 = vadd.f32 0.0, %v342
  %v344 = vpop.f32.mrb[0].mxu0
  %345 = vdwg.mxu0
  %v347 = vsel %vm110, %v34, 0
  %v350 = vsel %vm110, %v35, 0
  %352 = vmatprep.subr.mxu0 %v37
  %353 = vmatpush1.msra.mxu0 %v36
  %354 = vmatprep.subr.mxu0 %v43
  %355 = vmatpush1.msra.mxu0 %v42
  %356 = vmatprep.subr.mxu0 0.0
  %357 = vmatpush1.msra.mxu0 0.0
  %358 = vmatprep.subr.mxu0 0.0
  %359 = vmatpush1.msra.mxu0 0.0
  %360 = vmatprep.subr.mxu0 0.0
  %361 = vmatpush1.msra.mxu0 0.0
  %362 = vmatprep.subr.mxu0 0.0
  %363 = vmatpush1.msra.mxu0 0.0
  %364 = vmatprep.subr.mxu0 0.0
  %365 = vmatpush1.msra.mxu0 0.0
  %366 = vmatprep.subr.mxu0 0.0
  %367 = vmatpush1.msra.mxu0 0.0
  %368 = vmatprep.subr.mxu0 0.0
  %369 = vmatpush1.msra.mxu0 0.0
  %370 = vmatprep.subr.mxu0 0.0
  %371 = vmatpush1.msra.mxu0 0.0
  %372 = vmatprep.subr.mxu0 0.0
  %373 = vmatpush1.msra.mxu0 0.0
  %374 = vmatprep.subr.mxu0 0.0
  %375 = vmatpush1.msra.mxu0 0.0
  %376 = vmatprep.subr.mxu0 0.0
  %377 = vmatpush1.msra.mxu0 0.0
  %378 = vmatprep.subr.mxu0 0.0
  %379 = vmatpush1.msra.mxu0 0.0
  %380 = vmatprep.subr.mxu0 0.0
  %381 = vmatpush1.msra.mxu0 0.0
  %382 = vmatprep.subr.mxu0 0.0
  %383 = vmatpush1.msra.mxu0 0.0
  %384 = vmatprep.subr.mxu0 0.0
  %385 = vmatpush1.msra.mxu0 0.0
  %386 = vmatprep.subr.mxu0 0.0
  %387 = vmatpush1.msra.mxu0 0.0
  %388 = vmatprep.subr.mxu0 0.0
  %389 = vmatpush1.msra.mxu0 0.0
  %390 = vmatprep.subr.mxu0 0.0
  %391 = vmatpush1.msra.mxu0 0.0
  %392 = vmatprep.subr.mxu0 0.0
  %393 = vmatpush1.msra.mxu0 0.0
  %394 = vmatprep.subr.mxu0 0.0
  %395 = vmatpush1.msra.mxu0 0.0
  %396 = vmatprep.subr.mxu0 0.0
  %397 = vmatpush1.msra.mxu0 0.0
  %398 = vmatprep.subr.mxu0 0.0
  %399 = vmatpush1.msra.mxu0 0.0
  %400 = vmatprep.subr.mxu0 0.0
  %401 = vmatpush1.msra.mxu0 0.0
  %402 = vmatprep.subr.mxu0 0.0
  %403 = vmatpush1.msra.mxu0 0.0
  %404 = vmatprep.subr.mxu0 0.0
  %405 = vmatpush1.msra.mxu0 0.0
  %406 = vmatprep.subr.mxu0 0.0
  %407 = vmatpush1.msra.mxu0 0.0
  %408 = vmatprep.subr.mxu0 0.0
  %409 = vmatpush1.msra.mxu0 0.0
  %410 = vmatprep.subr.mxu0 0.0
  %411 = vmatpush1.msra.mxu0 0.0
  %412 = vmatprep.subr.mxu0 0.0
  %413 = vmatpush1.msra.mxu0 0.0
  %414 = vmatprep.subr.mxu0 0.0
  %415 = vmatpush1.msra.mxu0 0.0
  %416 = vmatprep.mubr.f32.mxu0 0.0
  %417 = vmatmul.mubr.f32.gmra.mrb[0].mxu0 %v347
  %v418 = vpop.f32.mrb[0].mxu0
  %v419 = vadd.f32 %v184, %v418
  %v420 = vpop.f32.mrb[0].mxu0
  %v421 = vadd.f32 %v186, %v420
  %422 = vmatprep.mubr.f32.mxu0 0.0
  %423 = vmatmul.mubr.f32.gmra.mrb[0].mxu0 %v350
  %v424 = vpop.f32.mrb[0].mxu0
  %v425 = vadd.f32 %v190, %v424
  %v426 = vpop.f32.mrb[0].mxu0
  %v427 = vadd.f32 %v192, %v426
  %428 = vdwg.mxu0
  %429 = vmatprep.subr.mxu0 %v39
  %430 = vmatpush1.msra.mxu0 %v38
  %431 = vmatprep.subr.mxu0 %v45
  %432 = vmatpush1.msra.mxu0 %v44
  %433 = vmatprep.subr.mxu0 0.0
  %434 = vmatpush1.msra.mxu0 0.0
  %435 = vmatprep.subr.mxu0 0.0
  %436 = vmatpush1.msra.mxu0 0.0
  %437 = vmatprep.subr.mxu0 0.0
  %438 = vmatpush1.msra.mxu0 0.0
  %439 = vmatprep.subr.mxu0 0.0
  %440 = vmatpush1.msra.mxu0 0.0
  %441 = vmatprep.subr.mxu0 0.0
  %442 = vmatpush1.msra.mxu0 0.0
  %443 = vmatprep.subr.mxu0 0.0
  %444 = vmatpush1.msra.mxu0 0.0
  %445 = vmatprep.subr.mxu0 0.0
  %446 = vmatpush1.msra.mxu0 0.0
  %447 = vmatprep.subr.mxu0 0.0
  %448 = vmatpush1.msra.mxu0 0.0
  %449 = vmatprep.subr.mxu0 0.0
  %450 = vmatpush1.msra.mxu0 0.0
  %451 = vmatprep.subr.mxu0 0.0
  %452 = vmatpush1.msra.mxu0 0.0
  %453 = vmatprep.subr.mxu0 0.0
  %454 = vmatpush1.msra.mxu0 0.0
  %455 = vmatprep.subr.mxu0 0.0
  %456 = vmatpush1.msra.mxu0 0.0
  %457 = vmatprep.subr.mxu0 0.0
  %458 = vmatpush1.msra.mxu0 0.0
  %459 = vmatprep.subr.mxu0 0.0
  %460 = vmatpush1.msra.mxu0 0.0
  %461 = vmatprep.subr.mxu0 0.0
  %462 = vmatpush1.msra.mxu0 0.0
  %463 = vmatprep.subr.mxu0 0.0
  %464 = vmatpush1.msra.mxu0 0.0
  %465 = vmatprep.subr.mxu0 0.0
  %466 = vmatpush1.msra.mxu0 0.0
  %467 = vmatprep.subr.mxu0 0.0
  %468 = vmatpush1.msra.mxu0 0.0
  %469 = vmatprep.subr.mxu0 0.0
  %470 = vmatpush1.msra.mxu0 0.0
  %471 = vmatprep.subr.mxu0 0.0
  %472 = vmatpush1.msra.mxu0 0.0
  %473 = vmatprep.subr.mxu0 0.0
  %474 = vmatpush1.msra.mxu0 0.0
  %475 = vmatprep.subr.mxu0 0.0
  %476 = vmatpush1.msra.mxu0 0.0
  %477 = vmatprep.subr.mxu0 0.0
  %478 = vmatpush1.msra.mxu0 0.0
  %479 = vmatprep.subr.mxu0 0.0
  %480 = vmatpush1.msra.mxu0 0.0
  %481 = vmatprep.subr.mxu0 0.0
  %482 = vmatpush1.msra.mxu0 0.0
  %483 = vmatprep.subr.mxu0 0.0
  %484 = vmatpush1.msra.mxu0 0.0
  %485 = vmatprep.subr.mxu0 0.0
  %486 = vmatpush1.msra.mxu0 0.0
  %487 = vmatprep.subr.mxu0 0.0
  %488 = vmatpush1.msra.mxu0 0.0
  %489 = vmatprep.subr.mxu0 0.0
  %490 = vmatpush1.msra.mxu0 0.0
  %491 = vmatprep.subr.mxu0 0.0
  %492 = vmatpush1.msra.mxu0 0.0
  %493 = vmatprep.mubr.f32.mxu0 0.0
  %494 = vmatmul.mubr.f32.gmra.mrb[0].mxu0 %v347
  %v495 = vpop.f32.mrb[0].mxu0
  %v496 = vadd.f32 %v261, %v495
  %v497 = vpop.f32.mrb[0].mxu0
  %v498 = vadd.f32 %v263, %v497
  %499 = vmatprep.mubr.f32.mxu0 0.0
  %500 = vmatmul.mubr.f32.gmra.mrb[0].mxu0 %v350
  %v501 = vpop.f32.mrb[0].mxu0
  %v502 = vadd.f32 %v267, %v501
  %v503 = vpop.f32.mrb[0].mxu0
  %v504 = vadd.f32 %v269, %v503
  %505 = vdwg.mxu0
  %506 = vmatprep.subr.mxu0 %v41
  %507 = vmatpush1.msra.mxu0 %v40
  %508 = vmatprep.subr.mxu0 %v47
  %509 = vmatpush1.msra.mxu0 %v46
  %510 = vmatprep.subr.mxu0 0.0
  %511 = vmatpush1.msra.mxu0 0.0
  %512 = vmatprep.subr.mxu0 0.0
  %513 = vmatpush1.msra.mxu0 0.0
  %514 = vmatprep.subr.mxu0 0.0
  %515 = vmatpush1.msra.mxu0 0.0
  %516 = vmatprep.subr.mxu0 0.0
  %517 = vmatpush1.msra.mxu0 0.0
  %518 = vmatprep.subr.mxu0 0.0
  %519 = vmatpush1.msra.mxu0 0.0
  %520 = vmatprep.subr.mxu0 0.0
  %521 = vmatpush1.msra.mxu0 0.0
  %522 = vmatprep.subr.mxu0 0.0
  %523 = vmatpush1.msra.mxu0 0.0
  %524 = vmatprep.subr.mxu0 0.0
  %525 = vmatpush1.msra.mxu0 0.0
  %526 = vmatprep.subr.mxu0 0.0
  %527 = vmatpush1.msra.mxu0 0.0
  %528 = vmatprep.subr.mxu0 0.0
  %529 = vmatpush1.msra.mxu0 0.0
  %530 = vmatprep.subr.mxu0 0.0
  %531 = vmatpush1.msra.mxu0 0.0
  %532 = vmatprep.subr.mxu0 0.0
  %533 = vmatpush1.msra.mxu0 0.0
  %534 = vmatprep.subr.mxu0 0.0
  %535 = vmatpush1.msra.mxu0 0.0
  %536 = vmatprep.subr.mxu0 0.0
  %537 = vmatpush1.msra.mxu0 0.0
  %538 = vmatprep.subr.mxu0 0.0
  %539 = vmatpush1.msra.mxu0 0.0
  %540 = vmatprep.subr.mxu0 0.0
  %541 = vmatpush1.msra.mxu0 0.0
  %542 = vmatprep.subr.mxu0 0.0
  %543 = vmatpush1.msra.mxu0 0.0
  %544 = vmatprep.subr.mxu0 0.0
  %545 = vmatpush1.msra.mxu0 0.0
  %546 = vmatprep.subr.mxu0 0.0
  %547 = vmatpush1.msra.mxu0 0.0
  %548 = vmatprep.subr.mxu0 0.0
  %549 = vmatpush1.msra.mxu0 0.0
  %550 = vmatprep.subr.mxu0 0.0
  %551 = vmatpush1.msra.mxu0 0.0
  %552 = vmatprep.subr.mxu0 0.0
  %553 = vmatpush1.msra.mxu0 0.0
  %554 = vmatprep.subr.mxu0 0.0
  %555 = vmatpush1.msra.mxu0 0.0
  %556 = vmatprep.subr.mxu0 0.0
  %557 = vmatpush1.msra.mxu0 0.0
  %558 = vmatprep.subr.mxu0 0.0
  %559 = vmatpush1.msra.mxu0 0.0
  %560 = vmatprep.subr.mxu0 0.0
  %561 = vmatpush1.msra.mxu0 0.0
  %562 = vmatprep.subr.mxu0 0.0
  %563 = vmatpush1.msra.mxu0 0.0
  %564 = vmatprep.subr.mxu0 0.0
  %565 = vmatpush1.msra.mxu0 0.0
  %566 = vmatprep.subr.mxu0 0.0
  %567 = vmatpush1.msra.mxu0 0.0
  %568 = vmatprep.subr.mxu0 0.0
  %569 = vmatpush1.msra.mxu0 0.0
  %570 = vmatprep.mubr.f32.mxu0 0.0
  %571 = vmatmul.mubr.f32.gmra.mrb[0].mxu0 %v347
  %v572 = vpop.f32.mrb[0].mxu0
  %v573 = vadd.f32 %v338, %v572
  %v574 = vpop.f32.mrb[0].mxu0
  %575 = vmatprep.mubr.f32.mxu0 0.0
  %576 = vmatmul.mubr.f32.gmra.mrb[0].mxu0 %v350
  %v577 = vpop.f32.mrb[0].mxu0
  %v578 = vadd.f32 %v343, %v577
  %v579 = vpop.f32.mrb[0].mxu0
  %580 = vdwg.mxu0
  %s581 = scalar_lea.vmem %s1, 32
  %v582 = vld [vmem:[%s581] sm:$0xff]
  %v583 = vld [vmem:[%s581 + $0x8] sm:$0xff]
  %584 = vrot.lane.b32.xlu0 %v36, 126
  %v585 = vpop.permute.xlu0 %584
  %586 = vrot.lane.b32.xlu0 %v37, 126
  %v587 = vpop.permute.xlu0 %586
  %588 = vrot.lane.b32.xlu0 %v38, 126
  %v589 = vpop.permute.xlu0 %588
  %590 = vrot.lane.b32.xlu0 %v39, 126
  %v591 = vpop.permute.xlu0 %590
  %592 = vrot.lane.b32.xlu0 %v40, 126
  %v593 = vpop.permute.xlu0 %592
  %594 = vrot.lane.b32.xlu0 %v41, 126
  %v595 = vpop.permute.xlu0 %594
  %596 = vrot.lane.b32.xlu0 %v42, 126
  %v597 = vpop.permute.xlu0 %596
  %598 = vrot.lane.b32.xlu0 %v43, 126
  %v599 = vpop.permute.xlu0 %598
  %600 = vrot.lane.b32.xlu0 %v44, 126
  %v601 = vpop.permute.xlu0 %600
  %602 = vrot.lane.b32.xlu0 %v45, 126
  %v603 = vpop.permute.xlu0 %602
  %604 = vrot.lane.b32.xlu0 %v46, 126
  %v605 = vpop.permute.xlu0 %604
  %606 = vrot.lane.b32.xlu0 %v47, 126
  %v607 = vpop.permute.xlu0 %606
  %vm608 = vcmask 1031168
  %v609 = vsel %vm608, %v585, %v587
  %v610 = vsel %vm608, %v587, %v589
  %v611 = vsel %vm608, %v589, %v591
  %v612 = vsel %vm608, %v591, %v593
  %v613 = vsel %vm608, %v593, %v595
  %v614 = vsel %vm608, %v597, %v599
  %v615 = vsel %vm608, %v599, %v601
  %v616 = vsel %vm608, %v601, %v603
  %v617 = vsel %vm608, %v603, %v605
  %v618 = vsel %vm608, %v605, %v607
  %v632 = vsel %vm110, %v582, 0
  %v635 = vsel %vm110, %v583, 0
  %637 = vmatprep.subr.mxu0 %v610
  %638 = vmatpush1.msra.mxu0 %v609
  %639 = vmatprep.subr.mxu0 %v615
  %640 = vmatpush1.msra.mxu0 %v614
  %641 = vmatprep.subr.mxu0 0.0
  %642 = vmatpush1.msra.mxu0 0.0
  %643 = vmatprep.subr.mxu0 0.0
  %644 = vmatpush1.msra.mxu0 0.0
  %645 = vmatprep.subr.mxu0 0.0
  %646 = vmatpush1.msra.mxu0 0.0
  %647 = vmatprep.subr.mxu0 0.0
  %648 = vmatpush1.msra.mxu0 0.0
  %649 = vmatprep.subr.mxu0 0.0
  %650 = vmatpush1.msra.mxu0 0.0
  %651 = vmatprep.subr.mxu0 0.0
  %652 = vmatpush1.msra.mxu0 0.0
  %653 = vmatprep.subr.mxu0 0.0
  %654 = vmatpush1.msra.mxu0 0.0
  %655 = vmatprep.subr.mxu0 0.0
  %656 = vmatpush1.msra.mxu0 0.0
  %657 = vmatprep.subr.mxu0 0.0
  %658 = vmatpush1.msra.mxu0 0.0
  %659 = vmatprep.subr.mxu0 0.0
  %660 = vmatpush1.msra.mxu0 0.0
  %661 = vmatprep.subr.mxu0 0.0
  %662 = vmatpush1.msra.mxu0 0.0
  %663 = vmatprep.subr.mxu0 0.0
  %664 = vmatpush1.msra.mxu0 0.0
  %665 = vmatprep.subr.mxu0 0.0
  %666 = vmatpush1.msra.mxu0 0.0
  %667 = vmatprep.subr.mxu0 0.0
  %668 = vmatpush1.msra.mxu0 0.0
  %669 = vmatprep.subr.mxu0 0.0
  %670 = vmatpush1.msra.mxu0 0.0
  %671 = vmatprep.subr.mxu0 0.0
  %672 = vmatpush1.msra.mxu0 0.0
  %673 = vmatprep.subr.mxu0 0.0
  %674 = vmatpush1.msra.mxu0 0.0
  %675 = vmatprep.subr.mxu0 0.0
  %676 = vmatpush1.msra.mxu0 0.0
  %677 = vmatprep.subr.mxu0 0.0
  %678 = vmatpush1.msra.mxu0 0.0
  %679 = vmatprep.subr.mxu0 0.0
  %680 = vmatpush1.msra.mxu0 0.0
  %681 = vmatprep.subr.mxu0 0.0
  %682 = vmatpush1.msra.mxu0 0.0
  %683 = vmatprep.subr.mxu0 0.0
  %684 = vmatpush1.msra.mxu0 0.0
  %685 = vmatprep.subr.mxu0 0.0
  %686 = vmatpush1.msra.mxu0 0.0
  %687 = vmatprep.subr.mxu0 0.0
  %688 = vmatpush1.msra.mxu0 0.0
  %689 = vmatprep.subr.mxu0 0.0
  %690 = vmatpush1.msra.mxu0 0.0
  %691 = vmatprep.subr.mxu0 0.0
  %692 = vmatpush1.msra.mxu0 0.0
  %693 = vmatprep.subr.mxu0 0.0
  %694 = vmatpush1.msra.mxu0 0.0
  %695 = vmatprep.subr.mxu0 0.0
  %696 = vmatpush1.msra.mxu0 0.0
  %697 = vmatprep.subr.mxu0 0.0
  %698 = vmatpush1.msra.mxu0 0.0
  %699 = vmatprep.subr.mxu0 0.0
  %700 = vmatpush1.msra.mxu0 0.0
  %701 = vmatprep.mubr.f32.mxu0 0.0
  %702 = vmatmul.mubr.f32.gmra.mrb[0].mxu0 %v632
  %v703 = vpop.f32.mrb[0].mxu0
  %v704 = vadd.f32 0.0, %v703
  %v705 = vpop.f32.mrb[0].mxu0
  %v706 = vadd.f32 0.0, %v705
  %707 = vmatprep.mubr.f32.mxu0 0.0
  %708 = vmatmul.mubr.f32.gmra.mrb[0].mxu0 %v635
  %v709 = vpop.f32.mrb[0].mxu0
  %v710 = vadd.f32 0.0, %v709
  %v711 = vpop.f32.mrb[0].mxu0
  %v712 = vadd.f32 0.0, %v711
  %713 = vdwg.mxu0
  %714 = vmatprep.subr.mxu0 %v612
  %715 = vmatpush1.msra.mxu0 %v611
  %716 = vmatprep.subr.mxu0 %v617
  %717 = vmatpush1.msra.mxu0 %v616
  %718 = vmatprep.subr.mxu0 0.0
  %719 = vmatpush1.msra.mxu0 0.0
  %720 = vmatprep.subr.mxu0 0.0
  %721 = vmatpush1.msra.mxu0 0.0
  %722 = vmatprep.subr.mxu0 0.0
  %723 = vmatpush1.msra.mxu0 0.0
  %724 = vmatprep.subr.mxu0 0.0
  %725 = vmatpush1.msra.mxu0 0.0
  %726 = vmatprep.subr.mxu0 0.0
  %727 = vmatpush1.msra.mxu0 0.0
  %728 = vmatprep.subr.mxu0 0.0
  %729 = vmatpush1.msra.mxu0 0.0
  %730 = vmatprep.subr.mxu0 0.0
  %731 = vmatpush1.msra.mxu0 0.0
  %732 = vmatprep.subr.mxu0 0.0
  %733 = vmatpush1.msra.mxu0 0.0
  %734 = vmatprep.subr.mxu0 0.0
  %735 = vmatpush1.msra.mxu0 0.0
  %736 = vmatprep.subr.mxu0 0.0
  %737 = vmatpush1.msra.mxu0 0.0
  %738 = vmatprep.subr.mxu0 0.0
  %739 = vmatpush1.msra.mxu0 0.0
  %740 = vmatprep.subr.mxu0 0.0
  %741 = vmatpush1.msra.mxu0 0.0
  %742 = vmatprep.subr.mxu0 0.0
  %743 = vmatpush1.msra.mxu0 0.0
  %744 = vmatprep.subr.mxu0 0.0
  %745 = vmatpush1.msra.mxu0 0.0
  %746 = vmatprep.subr.mxu0 0.0
  %747 = vmatpush1.msra.mxu0 0.0
  %748 = vmatprep.subr.mxu0 0.0
  %749 = vmatpush1.msra.mxu0 0.0
  %750 = vmatprep.subr.mxu0 0.0
  %751 = vmatpush1.msra.mxu0 0.0
  %752 = vmatprep.subr.mxu0 0.0
  %753 = vmatpush1.msra.mxu0 0.0
  %754 = vmatprep.subr.mxu0 0.0
  %755 = vmatpush1.msra.mxu0 0.0
  %756 = vmatprep.subr.mxu0 0.0
  %757 = vmatpush1.msra.mxu0 0.0
  %758 = vmatprep.subr.mxu0 0.0
  %759 = vmatpush1.msra.mxu0 0.0
  %760 = vmatprep.subr.mxu0 0.0
  %761 = vmatpush1.msra.mxu0 0.0
  %762 = vmatprep.subr.mxu0 0.0
  %763 = vmatpush1.msra.mxu0 0.0
  %764 = vmatprep.subr.mxu0 0.0
  %765 = vmatpush1.msra.mxu0 0.0
  %766 = vmatprep.subr.mxu0 0.0
  %767 = vmatpush1.msra.mxu0 0.0
  %768 = vmatprep.subr.mxu0 0.0
  %769 = vmatpush1.msra.mxu0 0.0
  %770 = vmatprep.subr.mxu0 0.0
  %771 = vmatpush1.msra.mxu0 0.0
  %772 = vmatprep.subr.mxu0 0.0
  %773 = vmatpush1.msra.mxu0 0.0
  %774 = vmatprep.subr.mxu0 0.0
  %775 = vmatpush1.msra.mxu0 0.0
  %776 = vmatprep.subr.mxu0 0.0
  %777 = vmatpush1.msra.mxu0 0.0
  %778 = vmatprep.mubr.f32.mxu0 0.0
  %779 = vmatmul.mubr.f32.gmra.mrb[0].mxu0 %v632
  %v780 = vpop.f32.mrb[0].mxu0
  %v781 = vadd.f32 0.0, %v780
  %v782 = vpop.f32.mrb[0].mxu0
  %v783 = vadd.f32 0.0, %v782
  %784 = vmatprep.mubr.f32.mxu0 0.0
  %785 = vmatmul.mubr.f32.gmra.mrb[0].mxu0 %v635
  %v786 = vpop.f32.mrb[0].mxu0
  %v787 = vadd.f32 0.0, %v786
  %v788 = vpop.f32.mrb[0].mxu0
  %v789 = vadd.f32 0.0, %v788
  %790 = vdwg.mxu0
  %791 = vmatprep.subr.mxu0 %v595
  %792 = vmatpush1.msra.mxu0 %v613
  %793 = vmatprep.subr.mxu0 %v607
  %794 = vmatpush1.msra.mxu0 %v618
  %795 = vmatprep.subr.mxu0 0.0
  %796 = vmatpush1.msra.mxu0 0.0
  %797 = vmatprep.subr.mxu0 0.0
  %798 = vmatpush1.msra.mxu0 0.0
  %799 = vmatprep.subr.mxu0 0.0
  %800 = vmatpush1.msra.mxu0 0.0
  %801 = vmatprep.subr.mxu0 0.0
  %802 = vmatpush1.msra.mxu0 0.0
  %803 = vmatprep.subr.mxu0 0.0
  %804 = vmatpush1.msra.mxu0 0.0
  %805 = vmatprep.subr.mxu0 0.0
  %806 = vmatpush1.msra.mxu0 0.0
  %807 = vmatprep.subr.mxu0 0.0
  %808 = vmatpush1.msra.mxu0 0.0
  %809 = vmatprep.subr.mxu0 0.0
  %810 = vmatpush1.msra.mxu0 0.0
  %811 = vmatprep.subr.mxu0 0.0
  %812 = vmatpush1.msra.mxu0 0.0
  %813 = vmatprep.subr.mxu0 0.0
  %814 = vmatpush1.msra.mxu0 0.0
  %815 = vmatprep.subr.mxu0 0.0
  %816 = vmatpush1.msra.mxu0 0.0
  %817 = vmatprep.subr.mxu0 0.0
  %818 = vmatpush1.msra.mxu0 0.0
  %819 = vmatprep.subr.mxu0 0.0
  %820 = vmatpush1.msra.mxu0 0.0
  %821 = vmatprep.subr.mxu0 0.0
  %822 = vmatpush1.msra.mxu0 0.0
  %823 = vmatprep.subr.mxu0 0.0
  %824 = vmatpush1.msra.mxu0 0.0
  %825 = vmatprep.subr.mxu0 0.0
  %826 = vmatpush1.msra.mxu0 0.0
  %827 = vmatprep.subr.mxu0 0.0
  %828 = vmatpush1.msra.mxu0 0.0
  %829 = vmatprep.subr.mxu0 0.0
  %830 = vmatpush1.msra.mxu0 0.0
  %831 = vmatprep.subr.mxu0 0.0
  %832 = vmatpush1.msra.mxu0 0.0
  %833 = vmatprep.subr.mxu0 0.0
  %834 = vmatpush1.msra.mxu0 0.0
  %835 = vmatprep.subr.mxu0 0.0
  %836 = vmatpush1.msra.mxu0 0.0
  %837 = vmatprep.subr.mxu0 0.0
  %838 = vmatpush1.msra.mxu0 0.0
  %839 = vmatprep.subr.mxu0 0.0
  %840 = vmatpush1.msra.mxu0 0.0
  %841 = vmatprep.subr.mxu0 0.0
  %842 = vmatpush1.msra.mxu0 0.0
  %843 = vmatprep.subr.mxu0 0.0
  %844 = vmatpush1.msra.mxu0 0.0
  %845 = vmatprep.subr.mxu0 0.0
  %846 = vmatpush1.msra.mxu0 0.0
  %847 = vmatprep.subr.mxu0 0.0
  %848 = vmatpush1.msra.mxu0 0.0
  %849 = vmatprep.subr.mxu0 0.0
  %850 = vmatpush1.msra.mxu0 0.0
  %851 = vmatprep.subr.mxu0 0.0
  %852 = vmatpush1.msra.mxu0 0.0
  %853 = vmatprep.subr.mxu0 0.0
  %854 = vmatpush1.msra.mxu0 0.0
  %855 = vmatprep.mubr.f32.mxu0 0.0
  %856 = vmatmul.mubr.f32.gmra.mrb[0].mxu0 %v632
  %v857 = vpop.f32.mrb[0].mxu0
  %v858 = vadd.f32 0.0, %v857
  %v859 = vpop.f32.mrb[0].mxu0
  %860 = vmatprep.mubr.f32.mxu0 0.0
  %861 = vmatmul.mubr.f32.gmra.mrb[0].mxu0 %v635
  %v862 = vpop.f32.mrb[0].mxu0
  %v863 = vadd.f32 0.0, %v862
  %v864 = vpop.f32.mrb[0].mxu0
  %865 = vdwg.mxu0
  %v866 = vadd.f32 %v419, %v704
  %v867 = vadd.f32 %v421, %v706
  %v868 = vadd.f32 %v496, %v781
  %v869 = vadd.f32 %v498, %v783
  %v870 = vadd.f32 %v573, %v858
  %v871 = vadd.f32 %v425, %v710
  %v872 = vadd.f32 %v427, %v712
  %v873 = vadd.f32 %v502, %v787
  %v874 = vadd.f32 %v504, %v789
  %v875 = vadd.f32 %v578, %v863
  %s876 = scalar_lea.vmem %s1, 48
  %v877 = vld [vmem:[%s876] sm:$0xff]
  %v878 = vld [vmem:[%s876 + $0x8] sm:$0xff]
  %879 = vrot.lane.b32.xlu0 %v36, 110
  %v880 = vpop.permute.xlu0 %879
  %881 = vrot.lane.b32.xlu0 %v37, 110
  %v882 = vpop.permute.xlu0 %881
  %883 = vrot.lane.b32.xlu0 %v38, 110
  %v884 = vpop.permute.xlu0 %883
  %885 = vrot.lane.b32.xlu0 %v39, 110
  %v886 = vpop.permute.xlu0 %885
  %887 = vrot.lane.b32.xlu0 %v40, 110
  %v888 = vpop.permute.xlu0 %887
  %889 = vrot.lane.b32.xlu0 %v41, 110
  %v890 = vpop.permute.xlu0 %889
  %891 = vrot.lane.b32.xlu0 %v42, 110
  %v892 = vpop.permute.xlu0 %891
  %893 = vrot.lane.b32.xlu0 %v43, 110
  %v894 = vpop.permute.xlu0 %893
  %895 = vrot.lane.b32.xlu0 %v44, 110
  %v896 = vpop.permute.xlu0 %895
  %897 = vrot.lane.b32.xlu0 %v45, 110
  %v898 = vpop.permute.xlu0 %897
  %899 = vrot.lane.b32.xlu0 %v46, 110
  %v900 = vpop.permute.xlu0 %899
  %901 = vrot.lane.b32.xlu0 %v47, 110
  %v902 = vpop.permute.xlu0 %901
  %vm903 = vcmask 900096
  %v904 = vsel %vm903, %v880, %v882
  %v905 = vsel %vm903, %v882, %v884
  %v906 = vsel %vm903, %v884, %v886
  %v907 = vsel %vm903, %v886, %v888
  %v908 = vsel %vm903, %v888, %v890
  %v909 = vsel %vm903, %v892, %v894
  %v910 = vsel %vm903, %v894, %v896
  %v911 = vsel %vm903, %v896, %v898
  %v912 = vsel %vm903, %v898, %v900
  %v913 = vsel %vm903, %v900, %v902
  %v927 = vsel %vm110, %v877, 0
  %v930 = vsel %vm110, %v878, 0
  %932 = vmatprep.subr.mxu0 %v905
  %933 = vmatpush1.msra.mxu0 %v904
  %934 = vmatprep.subr.mxu0 %v910
  %935 = vmatpush1.msra.mxu0 %v909
  %936 = vmatprep.subr.mxu0 0.0
  %937 = vmatpush1.msra.mxu0 0.0
  %938 = vmatprep.subr.mxu0 0.0
  %939 = vmatpush1.msra.mxu0 0.0
  %940 = vmatprep.subr.mxu0 0.0
  %941 = vmatpush1.msra.mxu0 0.0
  %942 = vmatprep.subr.mxu0 0.0
  %943 = vmatpush1.msra.mxu0 0.0
  %944 = vmatprep.subr.mxu0 0.0
  %945 = vmatpush1.msra.mxu0 0.0
  %946 = vmatprep.subr.mxu0 0.0
  %947 = vmatpush1.msra.mxu0 0.0
  %948 = vmatprep.subr.mxu0 0.0
  %949 = vmatpush1.msra.mxu0 0.0
  %950 = vmatprep.subr.mxu0 0.0
  %951 = vmatpush1.msra.mxu0 0.0
  %952 = vmatprep.subr.mxu0 0.0
  %953 = vmatpush1.msra.mxu0 0.0
  %954 = vmatprep.subr.mxu0 0.0
  %955 = vmatpush1.msra.mxu0 0.0
  %956 = vmatprep.subr.mxu0 0.0
  %957 = vmatpush1.msra.mxu0 0.0
  %958 = vmatprep.subr.mxu0 0.0
  %959 = vmatpush1.msra.mxu0 0.0
  %960 = vmatprep.subr.mxu0 0.0
  %961 = vmatpush1.msra.mxu0 0.0
  %962 = vmatprep.subr.mxu0 0.0
  %963 = vmatpush1.msra.mxu0 0.0
  %964 = vmatprep.subr.mxu0 0.0
  %965 = vmatpush1.msra.mxu0 0.0
  %966 = vmatprep.subr.mxu0 0.0
  %967 = vmatpush1.msra.mxu0 0.0
  %968 = vmatprep.subr.mxu0 0.0
  %969 = vmatpush1.msra.mxu0 0.0
  %970 = vmatprep.subr.mxu0 0.0
  %971 = vmatpush1.msra.mxu0 0.0
  %972 = vmatprep.subr.mxu0 0.0
  %973 = vmatpush1.msra.mxu0 0.0
  %974 = vmatprep.subr.mxu0 0.0
  %975 = vmatpush1.msra.mxu0 0.0
  %976 = vmatprep.subr.mxu0 0.0
  %977 = vmatpush1.msra.mxu0 0.0
  %978 = vmatprep.subr.mxu0 0.0
  %979 = vmatpush1.msra.mxu0 0.0
  %980 = vmatprep.subr.mxu0 0.0
  %981 = vmatpush1.msra.mxu0 0.0
  %982 = vmatprep.subr.mxu0 0.0
  %983 = vmatpush1.msra.mxu0 0.0
  %984 = vmatprep.subr.mxu0 0.0
  %985 = vmatpush1.msra.mxu0 0.0
  %986 = vmatprep.subr.mxu0 0.0
  %987 = vmatpush1.msra.mxu0 0.0
  %988 = vmatprep.subr.mxu0 0.0
  %989 = vmatpush1.msra.mxu0 0.0
  %990 = vmatprep.subr.mxu0 0.0
  %991 = vmatpush1.msra.mxu0 0.0
  %992 = vmatprep.subr.mxu0 0.0
  %993 = vmatpush1.msra.mxu0 0.0
  %994 = vmatprep.subr.mxu0 0.0
  %995 = vmatpush1.msra.mxu0 0.0
  %996 = vmatprep.mubr.f32.mxu0 0.0
  %997 = vmatmul.mubr.f32.gmra.mrb[0].mxu0 %v927
  %v998 = vpop.f32.mrb[0].mxu0
  %v999 = vadd.f32 0.0, %v998
  %v1000 = vpop.f32.mrb[0].mxu0
  %v1001 = vadd.f32 0.0, %v1000
  %1002 = vmatprep.mubr.f32.mxu0 0.0
  %1003 = vmatmul.mubr.f32.gmra.mrb[0].mxu0 %v930
  %v1004 = vpop.f32.mrb[0].mxu0
  %v1005 = vadd.f32 0.0, %v1004
  %v1006 = vpop.f32.mrb[0].mxu0
  %v1007 = vadd.f32 0.0, %v1006
  %1008 = vdwg.mxu0
  %1009 = vmatprep.subr.mxu0 %v907
  %1010 = vmatpush1.msra.mxu0 %v906
  %1011 = vmatprep.subr.mxu0 %v912
  %1012 = vmatpush1.msra.mxu0 %v911
  %1013 = vmatprep.subr.mxu0 0.0
  %1014 = vmatpush1.msra.mxu0 0.0
  %1015 = vmatprep.subr.mxu0 0.0
  %1016 = vmatpush1.msra.mxu0 0.0
  %1017 = vmatprep.subr.mxu0 0.0
  %1018 = vmatpush1.msra.mxu0 0.0
  %1019 = vmatprep.subr.mxu0 0.0
  %1020 = vmatpush1.msra.mxu0 0.0
  %1021 = vmatprep.subr.mxu0 0.0
  %1022 = vmatpush1.msra.mxu0 0.0
  %1023 = vmatprep.subr.mxu0 0.0
  %1024 = vmatpush1.msra.mxu0 0.0
  %1025 = vmatprep.subr.mxu0 0.0
  %1026 = vmatpush1.msra.mxu0 0.0
  %1027 = vmatprep.subr.mxu0 0.0
  %1028 = vmatpush1.msra.mxu0 0.0
  %1029 = vmatprep.subr.mxu0 0.0
  %1030 = vmatpush1.msra.mxu0 0.0
  %1031 = vmatprep.subr.mxu0 0.0
  %1032 = vmatpush1.msra.mxu0 0.0
  %1033 = vmatprep.subr.mxu0 0.0
  %1034 = vmatpush1.msra.mxu0 0.0
  %1035 = vmatprep.subr.mxu0 0.0
  %1036 = vmatpush1.msra.mxu0 0.0
  %1037 = vmatprep.subr.mxu0 0.0
  %1038 = vmatpush1.msra.mxu0 0.0
  %1039 = vmatprep.subr.mxu0 0.0
  %1040 = vmatpush1.msra.mxu0 0.0
  %1041 = vmatprep.subr.mxu0 0.0
  %1042 = vmatpush1.msra.mxu0 0.0
  %1043 = vmatprep.subr.mxu0 0.0
  %1044 = vmatpush1.msra.mxu0 0.0
  %1045 = vmatprep.subr.mxu0 0.0
  %1046 = vmatpush1.msra.mxu0 0.0
  %1047 = vmatprep.subr.mxu0 0.0
  %1048 = vmatpush1.msra.mxu0 0.0
  %1049 = vmatprep.subr.mxu0 0.0
  %1050 = vmatpush1.msra.mxu0 0.0
  %1051 = vmatprep.subr.mxu0 0.0
  %1052 = vmatpush1.msra.mxu0 0.0
  %1053 = vmatprep.subr.mxu0 0.0
  %1054 = vmatpush1.msra.mxu0 0.0
  %1055 = vmatprep.subr.mxu0 0.0
  %1056 = vmatpush1.msra.mxu0 0.0
  %1057 = vmatprep.subr.mxu0 0.0
  %1058 = vmatpush1.msra.mxu0 0.0
  %1059 = vmatprep.subr.mxu0 0.0
  %1060 = vmatpush1.msra.mxu0 0.0
  %1061 = vmatprep.subr.mxu0 0.0
  %1062 = vmatpush1.msra.mxu0 0.0
  %1063 = vmatprep.subr.mxu0 0.0
  %1064 = vmatpush1.msra.mxu0 0.0
  %1065 = vmatprep.subr.mxu0 0.0
  %1066 = vmatpush1.msra.mxu0 0.0
  %1067 = vmatprep.subr.mxu0 0.0
  %1068 = vmatpush1.msra.mxu0 0.0
  %1069 = vmatprep.subr.mxu0 0.0
  %1070 = vmatpush1.msra.mxu0 0.0
  %1071 = vmatprep.subr.mxu0 0.0
  %1072 = vmatpush1.msra.mxu0 0.0
  %1073 = vmatprep.mubr.f32.mxu0 0.0
  %1074 = vmatmul.mubr.f32.gmra.mrb[0].mxu0 %v927
  %v1075 = vpop.f32.mrb[0].mxu0
  %v1076 = vadd.f32 0.0, %v1075
  %v1077 = vpop.f32.mrb[0].mxu0
  %v1078 = vadd.f32 0.0, %v1077
  %1079 = vmatprep.mubr.f32.mxu0 0.0
  %1080 = vmatmul.mubr.f32.gmra.mrb[0].mxu0 %v930
  %v1081 = vpop.f32.mrb[0].mxu0
  %v1082 = vadd.f32 0.0, %v1081
  %v1083 = vpop.f32.mrb[0].mxu0
  %v1084 = vadd.f32 0.0, %v1083
  %1085 = vdwg.mxu0
  %1086 = vmatprep.subr.mxu0 %v890
  %1087 = vmatpush1.msra.mxu0 %v908
  %1088 = vmatprep.subr.mxu0 %v902
  %1089 = vmatpush1.msra.mxu0 %v913
  %1090 = vmatprep.subr.mxu0 0.0
  %1091 = vmatpush1.msra.mxu0 0.0
  %1092 = vmatprep.subr.mxu0 0.0
  %1093 = vmatpush1.msra.mxu0 0.0
  %1094 = vmatprep.subr.mxu0 0.0
  %1095 = vmatpush1.msra.mxu0 0.0
  %1096 = vmatprep.subr.mxu0 0.0
  %1097 = vmatpush1.msra.mxu0 0.0
  %1098 = vmatprep.subr.mxu0 0.0
  %1099 = vmatpush1.msra.mxu0 0.0
  %1100 = vmatprep.subr.mxu0 0.0
  %1101 = vmatpush1.msra.mxu0 0.0
  %1102 = vmatprep.subr.mxu0 0.0
  %1103 = vmatpush1.msra.mxu0 0.0
  %1104 = vmatprep.subr.mxu0 0.0
  %1105 = vmatpush1.msra.mxu0 0.0
  %1106 = vmatprep.subr.mxu0 0.0
  %1107 = vmatpush1.msra.mxu0 0.0
  %1108 = vmatprep.subr.mxu0 0.0
  %1109 = vmatpush1.msra.mxu0 0.0
  %1110 = vmatprep.subr.mxu0 0.0
  %1111 = vmatpush1.msra.mxu0 0.0
  %1112 = vmatprep.subr.mxu0 0.0
  %1113 = vmatpush1.msra.mxu0 0.0
  %1114 = vmatprep.subr.mxu0 0.0
  %1115 = vmatpush1.msra.mxu0 0.0
  %1116 = vmatprep.subr.mxu0 0.0
  %1117 = vmatpush1.msra.mxu0 0.0
  %1118 = vmatprep.subr.mxu0 0.0
  %1119 = vmatpush1.msra.mxu0 0.0
  %1120 = vmatprep.subr.mxu0 0.0
  %1121 = vmatpush1.msra.mxu0 0.0
  %1122 = vmatprep.subr.mxu0 0.0
  %1123 = vmatpush1.msra.mxu0 0.0
  %1124 = vmatprep.subr.mxu0 0.0
  %1125 = vmatpush1.msra.mxu0 0.0
  %1126 = vmatprep.subr.mxu0 0.0
  %1127 = vmatpush1.msra.mxu0 0.0
  %1128 = vmatprep.subr.mxu0 0.0
  %1129 = vmatpush1.msra.mxu0 0.0
  %1130 = vmatprep.subr.mxu0 0.0
  %1131 = vmatpush1.msra.mxu0 0.0
  %1132 = vmatprep.subr.mxu0 0.0
  %1133 = vmatpush1.msra.mxu0 0.0
  %1134 = vmatprep.subr.mxu0 0.0
  %1135 = vmatpush1.msra.mxu0 0.0
  %1136 = vmatprep.subr.mxu0 0.0
  %1137 = vmatpush1.msra.mxu0 0.0
  %1138 = vmatprep.subr.mxu0 0.0
  %1139 = vmatpush1.msra.mxu0 0.0
  %1140 = vmatprep.subr.mxu0 0.0
  %1141 = vmatpush1.msra.mxu0 0.0
  %1142 = vmatprep.subr.mxu0 0.0
  %1143 = vmatpush1.msra.mxu0 0.0
  %1144 = vmatprep.subr.mxu0 0.0
  %1145 = vmatpush1.msra.mxu0 0.0
  %1146 = vmatprep.subr.mxu0 0.0
  %1147 = vmatpush1.msra.mxu0 0.0
  %1148 = vmatprep.subr.mxu0 0.0
  %1149 = vmatpush1.msra.mxu0 0.0
  %1150 = vmatprep.mubr.f32.mxu0 0.0
  %1151 = vmatmul.mubr.f32.gmra.mrb[0].mxu0 %v927
  %v1152 = vpop.f32.mrb[0].mxu0
  %v1153 = vadd.f32 0.0, %v1152
  %v1154 = vpop.f32.mrb[0].mxu0
  %1155 = vmatprep.mubr.f32.mxu0 0.0
  %1156 = vmatmul.mubr.f32.gmra.mrb[0].mxu0 %v930
  %v1157 = vpop.f32.mrb[0].mxu0
  %v1158 = vadd.f32 0.0, %v1157
  %v1159 = vpop.f32.mrb[0].mxu0
  %1160 = vdwg.mxu0
  %v1161 = vadd.f32 %v866, %v999
  %v1162 = vadd.f32 %v867, %v1001
  %v1163 = vadd.f32 %v868, %v1076
  %v1164 = vadd.f32 %v869, %v1078
  %v1165 = vadd.f32 %v870, %v1153
  %v1166 = vadd.f32 %v871, %v1005
  %v1167 = vadd.f32 %v872, %v1007
  %v1168 = vadd.f32 %v873, %v1082
  %v1169 = vadd.f32 %v874, %v1084
  %v1170 = vadd.f32 %v875, %v1158
  %s1171 = scalar_lea.vmem %s1, 64
  %v1172 = vld [vmem:[%s1171] sm:$0xff]
  %v1173 = vld [vmem:[%s1171 + $0x8] sm:$0xff]
  %1174 = vrot.lane.b32.xlu0 %v36, 109
  %v1175 = vpop.permute.xlu0 %1174
  %1176 = vrot.lane.b32.xlu0 %v37, 109
  %v1177 = vpop.permute.xlu0 %1176
  %1178 = vrot.lane.b32.xlu0 %v38, 109
  %v1179 = vpop.permute.xlu0 %1178
  %1180 = vrot.lane.b32.xlu0 %v39, 109
  %v1181 = vpop.permute.xlu0 %1180
  %1182 = vrot.lane.b32.xlu0 %v40, 109
  %v1183 = vpop.permute.xlu0 %1182
  %1184 = vrot.lane.b32.xlu0 %v41, 109
  %v1185 = vpop.permute.xlu0 %1184
  %1186 = vrot.lane.b32.xlu0 %v42, 109
  %v1187 = vpop.permute.xlu0 %1186
  %1188 = vrot.lane.b32.xlu0 %v43, 109
  %v1189 = vpop.permute.xlu0 %1188
  %1190 = vrot.lane.b32.xlu0 %v44, 109
  %v1191 = vpop.permute.xlu0 %1190
  %1192 = vrot.lane.b32.xlu0 %v45, 109
  %v1193 = vpop.permute.xlu0 %1192
  %1194 = vrot.lane.b32.xlu0 %v46, 109
  %v1195 = vpop.permute.xlu0 %1194
  %1196 = vrot.lane.b32.xlu0 %v47, 109
  %v1197 = vpop.permute.xlu0 %1196
  %vm1198 = vcmask 891904
  %v1199 = vsel %vm1198, %v1175, %v1177
  %v1200 = vsel %vm1198, %v1177, %v1179
  %v1201 = vsel %vm1198, %v1179, %v1181
  %v1202 = vsel %vm1198, %v1181, %v1183
  %v1203 = vsel %vm1198, %v1183, %v1185
  %v1204 = vsel %vm1198, %v1187, %v1189
  %v1205 = vsel %vm1198, %v1189, %v1191
  %v1206 = vsel %vm1198, %v1191, %v1193
  %v1207 = vsel %vm1198, %v1193, %v1195
  %v1208 = vsel %vm1198, %v1195, %v1197
  %v1222 = vsel %vm110, %v1172, 0
  %v1225 = vsel %vm110, %v1173, 0
  %1227 = vmatprep.subr.mxu0 %v1200
  %1228 = vmatpush1.msra.mxu0 %v1199
  %1229 = vmatprep.subr.mxu0 %v1205
  %1230 = vmatpush1.msra.mxu0 %v1204
  %1231 = vmatprep.subr.mxu0 0.0
  %1232 = vmatpush1.msra.mxu0 0.0
  %1233 = vmatprep.subr.mxu0 0.0
  %1234 = vmatpush1.msra.mxu0 0.0
  %1235 = vmatprep.subr.mxu0 0.0
  %1236 = vmatpush1.msra.mxu0 0.0
  %1237 = vmatprep.subr.mxu0 0.0
  %1238 = vmatpush1.msra.mxu0 0.0
  %1239 = vmatprep.subr.mxu0 0.0
  %1240 = vmatpush1.msra.mxu0 0.0
  %1241 = vmatprep.subr.mxu0 0.0
  %1242 = vmatpush1.msra.mxu0 0.0
  %1243 = vmatprep.subr.mxu0 0.0
  %1244 = vmatpush1.msra.mxu0 0.0
  %1245 = vmatprep.subr.mxu0 0.0
  %1246 = vmatpush1.msra.mxu0 0.0
  %1247 = vmatprep.subr.mxu0 0.0
  %1248 = vmatpush1.msra.mxu0 0.0
  %1249 = vmatprep.subr.mxu0 0.0
  %1250 = vmatpush1.msra.mxu0 0.0
  %1251 = vmatprep.subr.mxu0 0.0
  %1252 = vmatpush1.msra.mxu0 0.0
  %1253 = vmatprep.subr.mxu0 0.0
  %1254 = vmatpush1.msra.mxu0 0.0
  %1255 = vmatprep.subr.mxu0 0.0
  %1256 = vmatpush1.msra.mxu0 0.0
  %1257 = vmatprep.subr.mxu0 0.0
  %1258 = vmatpush1.msra.mxu0 0.0
  %1259 = vmatprep.subr.mxu0 0.0
  %1260 = vmatpush1.msra.mxu0 0.0
  %1261 = vmatprep.subr.mxu0 0.0
  %1262 = vmatpush1.msra.mxu0 0.0
  %1263 = vmatprep.subr.mxu0 0.0
  %1264 = vmatpush1.msra.mxu0 0.0
  %1265 = vmatprep.subr.mxu0 0.0
  %1266 = vmatpush1.msra.mxu0 0.0
  %1267 = vmatprep.subr.mxu0 0.0
  %1268 = vmatpush1.msra.mxu0 0.0
  %1269 = vmatprep.subr.mxu0 0.0
  %1270 = vmatpush1.msra.mxu0 0.0
  %1271 = vmatprep.subr.mxu0 0.0
  %1272 = vmatpush1.msra.mxu0 0.0
  %1273 = vmatprep.subr.mxu0 0.0
  %1274 = vmatpush1.msra.mxu0 0.0
  %1275 = vmatprep.subr.mxu0 0.0
  %1276 = vmatpush1.msra.mxu0 0.0
  %1277 = vmatprep.subr.mxu0 0.0
  %1278 = vmatpush1.msra.mxu0 0.0
  %1279 = vmatprep.subr.mxu0 0.0
  %1280 = vmatpush1.msra.mxu0 0.0
  %1281 = vmatprep.subr.mxu0 0.0
  %1282 = vmatpush1.msra.mxu0 0.0
  %1283 = vmatprep.subr.mxu0 0.0
  %1284 = vmatpush1.msra.mxu0 0.0
  %1285 = vmatprep.subr.mxu0 0.0
  %1286 = vmatpush1.msra.mxu0 0.0
  %1287 = vmatprep.subr.mxu0 0.0
  %1288 = vmatpush1.msra.mxu0 0.0
  %1289 = vmatprep.subr.mxu0 0.0
  %1290 = vmatpush1.msra.mxu0 0.0
  %1291 = vmatprep.mubr.f32.mxu0 0.0
  %1292 = vmatmul.mubr.f32.gmra.mrb[0].mxu0 %v1222
  %v1293 = vpop.f32.mrb[0].mxu0
  %v1294 = vadd.f32 0.0, %v1293
  %v1295 = vpop.f32.mrb[0].mxu0
  %v1296 = vadd.f32 0.0, %v1295
  %1297 = vmatprep.mubr.f32.mxu0 0.0
  %1298 = vmatmul.mubr.f32.gmra.mrb[0].mxu0 %v1225
  %v1299 = vpop.f32.mrb[0].mxu0
  %v1300 = vadd.f32 0.0, %v1299
  %v1301 = vpop.f32.mrb[0].mxu0
  %v1302 = vadd.f32 0.0, %v1301
  %1303 = vdwg.mxu0
  %1304 = vmatprep.subr.mxu0 %v1202
  %1305 = vmatpush1.msra.mxu0 %v1201
  %1306 = vmatprep.subr.mxu0 %v1207
  %1307 = vmatpush1.msra.mxu0 %v1206
  %1308 = vmatprep.subr.mxu0 0.0
  %1309 = vmatpush1.msra.mxu0 0.0
  %1310 = vmatprep.subr.mxu0 0.0
  %1311 = vmatpush1.msra.mxu0 0.0
  %1312 = vmatprep.subr.mxu0 0.0
  %1313 = vmatpush1.msra.mxu0 0.0
  %1314 = vmatprep.subr.mxu0 0.0
  %1315 = vmatpush1.msra.mxu0 0.0
  %1316 = vmatprep.subr.mxu0 0.0
  %1317 = vmatpush1.msra.mxu0 0.0
  %1318 = vmatprep.subr.mxu0 0.0
  %1319 = vmatpush1.msra.mxu0 0.0
  %1320 = vmatprep.subr.mxu0 0.0
  %1321 = vmatpush1.msra.mxu0 0.0
  %1322 = vmatprep.subr.mxu0 0.0
  %1323 = vmatpush1.msra.mxu0 0.0
  %1324 = vmatprep.subr.mxu0 0.0
  %1325 = vmatpush1.msra.mxu0 0.0
  %1326 = vmatprep.subr.mxu0 0.0
  %1327 = vmatpush1.msra.mxu0 0.0
  %1328 = vmatprep.subr.mxu0 0.0
  %1329 = vmatpush1.msra.mxu0 0.0
  %1330 = vmatprep.subr.mxu0 0.0
  %1331 = vmatpush1.msra.mxu0 0.0
  %1332 = vmatprep.subr.mxu0 0.0
  %1333 = vmatpush1.msra.mxu0 0.0
  %1334 = vmatprep.subr.mxu0 0.0
  %1335 = vmatpush1.msra.mxu0 0.0
  %1336 = vmatprep.subr.mxu0 0.0
  %1337 = vmatpush1.msra.mxu0 0.0
  %1338 = vmatprep.subr.mxu0 0.0
  %1339 = vmatpush1.msra.mxu0 0.0
  %1340 = vmatprep.subr.mxu0 0.0
  %1341 = vmatpush1.msra.mxu0 0.0
  %1342 = vmatprep.subr.mxu0 0.0
  %1343 = vmatpush1.msra.mxu0 0.0
  %1344 = vmatprep.subr.mxu0 0.0
  %1345 = vmatpush1.msra.mxu0 0.0
  %1346 = vmatprep.subr.mxu0 0.0
  %1347 = vmatpush1.msra.mxu0 0.0
  %1348 = vmatprep.subr.mxu0 0.0
  %1349 = vmatpush1.msra.mxu0 0.0
  %1350 = vmatprep.subr.mxu0 0.0
  %1351 = vmatpush1.msra.mxu0 0.0
  %1352 = vmatprep.subr.mxu0 0.0
  %1353 = vmatpush1.msra.mxu0 0.0
  %1354 = vmatprep.subr.mxu0 0.0
  %1355 = vmatpush1.msra.mxu0 0.0
  %1356 = vmatprep.subr.mxu0 0.0
  %1357 = vmatpush1.msra.mxu0 0.0
  %1358 = vmatprep.subr.mxu0 0.0
  %1359 = vmatpush1.msra.mxu0 0.0
  %1360 = vmatprep.subr.mxu0 0.0
  %1361 = vmatpush1.msra.mxu0 0.0
  %1362 = vmatprep.subr.mxu0 0.0
  %1363 = vmatpush1.msra.mxu0 0.0
  %1364 = vmatprep.subr.mxu0 0.0
  %1365 = vmatpush1.msra.mxu0 0.0
  %1366 = vmatprep.subr.mxu0 0.0
  %1367 = vmatpush1.msra.mxu0 0.0
  %1368 = vmatprep.mubr.f32.mxu0 0.0
  %1369 = vmatmul.mubr.f32.gmra.mrb[0].mxu0 %v1222
  %v1370 = vpop.f32.mrb[0].mxu0
  %v1371 = vadd.f32 0.0, %v1370
  %v1372 = vpop.f32.mrb[0].mxu0
  %v1373 = vadd.f32 0.0, %v1372
  %1374 = vmatprep.mubr.f32.mxu0 0.0
  %1375 = vmatmul.mubr.f32.gmra.mrb[0].mxu0 %v1225
  %v1376 = vpop.f32.mrb[0].mxu0
  %v1377 = vadd.f32 0.0, %v1376
  %v1378 = vpop.f32.mrb[0].mxu0
  %v1379 = vadd.f32 0.0, %v1378
  %1380 = vdwg.mxu0
  %1381 = vmatprep.subr.mxu0 %v1185
  %1382 = vmatpush1.msra.mxu0 %v1203
  %1383 = vmatprep.subr.mxu0 %v1197
  %1384 = vmatpush1.msra.mxu0 %v1208
  %1385 = vmatprep.subr.mxu0 0.0
  %1386 = vmatpush1.msra.mxu0 0.0
  %1387 = vmatprep.subr.mxu0 0.0
  %1388 = vmatpush1.msra.mxu0 0.0
  %1389 = vmatprep.subr.mxu0 0.0
  %1390 = vmatpush1.msra.mxu0 0.0
  %1391 = vmatprep.subr.mxu0 0.0
  %1392 = vmatpush1.msra.mxu0 0.0
  %1393 = vmatprep.subr.mxu0 0.0
  %1394 = vmatpush1.msra.mxu0 0.0
  %1395 = vmatprep.subr.mxu0 0.0
  %1396 = vmatpush1.msra.mxu0 0.0
  %1397 = vmatprep.subr.mxu0 0.0
  %1398 = vmatpush1.msra.mxu0 0.0
  %1399 = vmatprep.subr.mxu0 0.0
  %1400 = vmatpush1.msra.mxu0 0.0
  %1401 = vmatprep.subr.mxu0 0.0
  %1402 = vmatpush1.msra.mxu0 0.0
  %1403 = vmatprep.subr.mxu0 0.0
  %1404 = vmatpush1.msra.mxu0 0.0
  %1405 = vmatprep.subr.mxu0 0.0
  %1406 = vmatpush1.msra.mxu0 0.0
  %1407 = vmatprep.subr.mxu0 0.0
  %1408 = vmatpush1.msra.mxu0 0.0
  %1409 = vmatprep.subr.mxu0 0.0
  %1410 = vmatpush1.msra.mxu0 0.0
  %1411 = vmatprep.subr.mxu0 0.0
  %1412 = vmatpush1.msra.mxu0 0.0
  %1413 = vmatprep.subr.mxu0 0.0
  %1414 = vmatpush1.msra.mxu0 0.0
  %1415 = vmatprep.subr.mxu0 0.0
  %1416 = vmatpush1.msra.mxu0 0.0
  %1417 = vmatprep.subr.mxu0 0.0
  %1418 = vmatpush1.msra.mxu0 0.0
  %1419 = vmatprep.subr.mxu0 0.0
  %1420 = vmatpush1.msra.mxu0 0.0
  %1421 = vmatprep.subr.mxu0 0.0
  %1422 = vmatpush1.msra.mxu0 0.0
  %1423 = vmatprep.subr.mxu0 0.0
  %1424 = vmatpush1.msra.mxu0 0.0
  %1425 = vmatprep.subr.mxu0 0.0
  %1426 = vmatpush1.msra.mxu0 0.0
  %1427 = vmatprep.subr.mxu0 0.0
  %1428 = vmatpush1.msra.mxu0 0.0
  %1429 = vmatprep.subr.mxu0 0.0
  %1430 = vmatpush1.msra.mxu0 0.0
  %1431 = vmatprep.subr.mxu0 0.0
  %1432 = vmatpush1.msra.mxu0 0.0
  %1433 = vmatprep.subr.mxu0 0.0
  %1434 = vmatpush1.msra.mxu0 0.0
  %1435 = vmatprep.subr.mxu0 0.0
  %1436 = vmatpush1.msra.mxu0 0.0
  %1437 = vmatprep.subr.mxu0 0.0
  %1438 = vmatpush1.msra.mxu0 0.0
  %1439 = vmatprep.subr.mxu0 0.0
  %1440 = vmatpush1.msra.mxu0 0.0
  %1441 = vmatprep.subr.mxu0 0.0
  %1442 = vmatpush1.msra.mxu0 0.0
  %1443 = vmatprep.subr.mxu0 0.0
  %1444 = vmatpush1.msra.mxu0 0.0
  %1445 = vmatprep.mubr.f32.mxu0 0.0
  %1446 = vmatmul.mubr.f32.gmra.mrb[0].mxu0 %v1222
  %v1447 = vpop.f32.mrb[0].mxu0
  %v1448 = vadd.f32 0.0, %v1447
  %v1449 = vpop.f32.mrb[0].mxu0
  %1450 = vmatprep.mubr.f32.mxu0 0.0
  %1451 = vmatmul.mubr.f32.gmra.mrb[0].mxu0 %v1225
  %v1452 = vpop.f32.mrb[0].mxu0
  %v1453 = vadd.f32 0.0, %v1452
  %v1454 = vpop.f32.mrb[0].mxu0
  %1455 = vdwg.mxu0
  %v1456 = vadd.f32 %v1161, %v1294
  %v1457 = vadd.f32 %v1162, %v1296
  %v1458 = vadd.f32 %v1163, %v1371
  %v1459 = vadd.f32 %v1164, %v1373
  %v1460 = vadd.f32 %v1165, %v1448
  %v1461 = vadd.f32 %v1166, %v1300
  %v1462 = vadd.f32 %v1167, %v1302
  %v1463 = vadd.f32 %v1168, %v1377
  %v1464 = vadd.f32 %v1169, %v1379
  %v1465 = vadd.f32 %v1170, %v1453
  %s1466 = scalar_lea.vmem %s1, 80
  %v1467 = vld [vmem:[%s1466] sm:$0xff]
  %v1468 = vld [vmem:[%s1466 + $0x8] sm:$0xff]
  %1469 = vrot.lane.b32.xlu0 %v36, 108
  %v1470 = vpop.permute.xlu0 %1469
  %1471 = vrot.lane.b32.xlu0 %v37, 108
  %v1472 = vpop.permute.xlu0 %1471
  %1473 = vrot.lane.b32.xlu0 %v38, 108
  %v1474 = vpop.permute.xlu0 %1473
  %1475 = vrot.lane.b32.xlu0 %v39, 108
  %v1476 = vpop.permute.xlu0 %1475
  %1477 = vrot.lane.b32.xlu0 %v40, 108
  %v1478 = vpop.permute.xlu0 %1477
  %1479 = vrot.lane.b32.xlu0 %v41, 108
  %v1480 = vpop.permute.xlu0 %1479
  %1481 = vrot.lane.b32.xlu0 %v42, 108
  %v1482 = vpop.permute.xlu0 %1481
  %1483 = vrot.lane.b32.xlu0 %v43, 108
  %v1484 = vpop.permute.xlu0 %1483
  %1485 = vrot.lane.b32.xlu0 %v44, 108
  %v1486 = vpop.permute.xlu0 %1485
  %1487 = vrot.lane.b32.xlu0 %v45, 108
  %v1488 = vpop.permute.xlu0 %1487
  %1489 = vrot.lane.b32.xlu0 %v46, 108
  %v1490 = vpop.permute.xlu0 %1489
  %1491 = vrot.lane.b32.xlu0 %v47, 108
  %v1492 = vpop.permute.xlu0 %1491
  %vm1493 = vcmask 883712
  %v1494 = vsel %vm1493, %v1470, %v1472
  %v1495 = vsel %vm1493, %v1472, %v1474
  %v1496 = vsel %vm1493, %v1474, %v1476
  %v1497 = vsel %vm1493, %v1476, %v1478
  %v1498 = vsel %vm1493, %v1478, %v1480
  %v1499 = vsel %vm1493, %v1482, %v1484
  %v1500 = vsel %vm1493, %v1484, %v1486
  %v1501 = vsel %vm1493, %v1486, %v1488
  %v1502 = vsel %vm1493, %v1488, %v1490
  %v1503 = vsel %vm1493, %v1490, %v1492
  %v1517 = vsel %vm110, %v1467, 0
  %v1520 = vsel %vm110, %v1468, 0
  %1522 = vmatprep.subr.mxu0 %v1495
  %1523 = vmatpush1.msra.mxu0 %v1494
  %1524 = vmatprep.subr.mxu0 %v1500
  %1525 = vmatpush1.msra.mxu0 %v1499
  %1526 = vmatprep.subr.mxu0 0.0
  %1527 = vmatpush1.msra.mxu0 0.0
  %1528 = vmatprep.subr.mxu0 0.0
  %1529 = vmatpush1.msra.mxu0 0.0
  %1530 = vmatprep.subr.mxu0 0.0
  %1531 = vmatpush1.msra.mxu0 0.0
  %1532 = vmatprep.subr.mxu0 0.0
  %1533 = vmatpush1.msra.mxu0 0.0
  %1534 = vmatprep.subr.mxu0 0.0
  %1535 = vmatpush1.msra.mxu0 0.0
  %1536 = vmatprep.subr.mxu0 0.0
  %1537 = vmatpush1.msra.mxu0 0.0
  %1538 = vmatprep.subr.mxu0 0.0
  %1539 = vmatpush1.msra.mxu0 0.0
  %1540 = vmatprep.subr.mxu0 0.0
  %1541 = vmatpush1.msra.mxu0 0.0
  %1542 = vmatprep.subr.mxu0 0.0
  %1543 = vmatpush1.msra.mxu0 0.0
  %1544 = vmatprep.subr.mxu0 0.0
  %1545 = vmatpush1.msra.mxu0 0.0
  %1546 = vmatprep.subr.mxu0 0.0
  %1547 = vmatpush1.msra.mxu0 0.0
  %1548 = vmatprep.subr.mxu0 0.0
  %1549 = vmatpush1.msra.mxu0 0.0
  %1550 = vmatprep.subr.mxu0 0.0
  %1551 = vmatpush1.msra.mxu0 0.0
  %1552 = vmatprep.subr.mxu0 0.0
  %1553 = vmatpush1.msra.mxu0 0.0
  %1554 = vmatprep.subr.mxu0 0.0
  %1555 = vmatpush1.msra.mxu0 0.0
  %1556 = vmatprep.subr.mxu0 0.0
  %1557 = vmatpush1.msra.mxu0 0.0
  %1558 = vmatprep.subr.mxu0 0.0
  %1559 = vmatpush1.msra.mxu0 0.0
  %1560 = vmatprep.subr.mxu0 0.0
  %1561 = vmatpush1.msra.mxu0 0.0
  %1562 = vmatprep.subr.mxu0 0.0
  %1563 = vmatpush1.msra.mxu0 0.0
  %1564 = vmatprep.subr.mxu0 0.0
  %1565 = vmatpush1.msra.mxu0 0.0
  %1566 = vmatprep.subr.mxu0 0.0
  %1567 = vmatpush1.msra.mxu0 0.0
  %1568 = vmatprep.subr.mxu0 0.0
  %1569 = vmatpush1.msra.mxu0 0.0
  %1570 = vmatprep.subr.mxu0 0.0
  %1571 = vmatpush1.msra.mxu0 0.0
  %1572 = vmatprep.subr.mxu0 0.0
  %1573 = vmatpush1.msra.mxu0 0.0
  %1574 = vmatprep.subr.mxu0 0.0
  %1575 = vmatpush1.msra.mxu0 0.0
  %1576 = vmatprep.subr.mxu0 0.0
  %1577 = vmatpush1.msra.mxu0 0.0
  %1578 = vmatprep.subr.mxu0 0.0
  %1579 = vmatpush1.msra.mxu0 0.0
  %1580 = vmatprep.subr.mxu0 0.0
  %1581 = vmatpush1.msra.mxu0 0.0
  %1582 = vmatprep.subr.mxu0 0.0
  %1583 = vmatpush1.msra.mxu0 0.0
  %1584 = vmatprep.subr.mxu0 0.0
  %1585 = vmatpush1.msra.mxu0 0.0
  %1586 = vmatprep.mubr.f32.mxu0 0.0
  %1587 = vmatmul.mubr.f32.gmra.mrb[0].mxu0 %v1517
  %v1588 = vpop.f32.mrb[0].mxu0
  %v1589 = vadd.f32 0.0, %v1588
  %v1590 = vpop.f32.mrb[0].mxu0
  %v1591 = vadd.f32 0.0, %v1590
  %1592 = vmatprep.mubr.f32.mxu0 0.0
  %1593 = vmatmul.mubr.f32.gmra.mrb[0].mxu0 %v1520
  %v1594 = vpop.f32.mrb[0].mxu0
  %v1595 = vadd.f32 0.0, %v1594
  %v1596 = vpop.f32.mrb[0].mxu0
  %v1597 = vadd.f32 0.0, %v1596
  %1598 = vdwg.mxu0
  %1599 = vmatprep.subr.mxu0 %v1497
  %1600 = vmatpush1.msra.mxu0 %v1496
  %1601 = vmatprep.subr.mxu0 %v1502
  %1602 = vmatpush1.msra.mxu0 %v1501
  %1603 = vmatprep.subr.mxu0 0.0
  %1604 = vmatpush1.msra.mxu0 0.0
  %1605 = vmatprep.subr.mxu0 0.0
  %1606 = vmatpush1.msra.mxu0 0.0
  %1607 = vmatprep.subr.mxu0 0.0
  %1608 = vmatpush1.msra.mxu0 0.0
  %1609 = vmatprep.subr.mxu0 0.0
  %1610 = vmatpush1.msra.mxu0 0.0
  %1611 = vmatprep.subr.mxu0 0.0
  %1612 = vmatpush1.msra.mxu0 0.0
  %1613 = vmatprep.subr.mxu0 0.0
  %1614 = vmatpush1.msra.mxu0 0.0
  %1615 = vmatprep.subr.mxu0 0.0
  %1616 = vmatpush1.msra.mxu0 0.0
  %1617 = vmatprep.subr.mxu0 0.0
  %1618 = vmatpush1.msra.mxu0 0.0
  %1619 = vmatprep.subr.mxu0 0.0
  %1620 = vmatpush1.msra.mxu0 0.0
  %1621 = vmatprep.subr.mxu0 0.0
  %1622 = vmatpush1.msra.mxu0 0.0
  %1623 = vmatprep.subr.mxu0 0.0
  %1624 = vmatpush1.msra.mxu0 0.0
  %1625 = vmatprep.subr.mxu0 0.0
  %1626 = vmatpush1.msra.mxu0 0.0
  %1627 = vmatprep.subr.mxu0 0.0
  %1628 = vmatpush1.msra.mxu0 0.0
  %1629 = vmatprep.subr.mxu0 0.0
  %1630 = vmatpush1.msra.mxu0 0.0
  %1631 = vmatprep.subr.mxu0 0.0
  %1632 = vmatpush1.msra.mxu0 0.0
  %1633 = vmatprep.subr.mxu0 0.0
  %1634 = vmatpush1.msra.mxu0 0.0
  %1635 = vmatprep.subr.mxu0 0.0
  %1636 = vmatpush1.msra.mxu0 0.0
  %1637 = vmatprep.subr.mxu0 0.0
  %1638 = vmatpush1.msra.mxu0 0.0
  %1639 = vmatprep.subr.mxu0 0.0
  %1640 = vmatpush1.msra.mxu0 0.0
  %1641 = vmatprep.subr.mxu0 0.0
  %1642 = vmatpush1.msra.mxu0 0.0
  %1643 = vmatprep.subr.mxu0 0.0
  %1644 = vmatpush1.msra.mxu0 0.0
  %1645 = vmatprep.subr.mxu0 0.0
  %1646 = vmatpush1.msra.mxu0 0.0
  %1647 = vmatprep.subr.mxu0 0.0
  %1648 = vmatpush1.msra.mxu0 0.0
  %1649 = vmatprep.subr.mxu0 0.0
  %1650 = vmatpush1.msra.mxu0 0.0
  %1651 = vmatprep.subr.mxu0 0.0
  %1652 = vmatpush1.msra.mxu0 0.0
  %1653 = vmatprep.subr.mxu0 0.0
  %1654 = vmatpush1.msra.mxu0 0.0
  %1655 = vmatprep.subr.mxu0 0.0
  %1656 = vmatpush1.msra.mxu0 0.0
  %1657 = vmatprep.subr.mxu0 0.0
  %1658 = vmatpush1.msra.mxu0 0.0
  %1659 = vmatprep.subr.mxu0 0.0
  %1660 = vmatpush1.msra.mxu0 0.0
  %1661 = vmatprep.subr.mxu0 0.0
  %1662 = vmatpush1.msra.mxu0 0.0
  %1663 = vmatprep.mubr.f32.mxu0 0.0
  %1664 = vmatmul.mubr.f32.gmra.mrb[0].mxu0 %v1517
  %v1665 = vpop.f32.mrb[0].mxu0
  %v1666 = vadd.f32 0.0, %v1665
  %v1667 = vpop.f32.mrb[0].mxu0
  %v1668 = vadd.f32 0.0, %v1667
  %1669 = vmatprep.mubr.f32.mxu0 0.0
  %1670 = vmatmul.mubr.f32.gmra.mrb[0].mxu0 %v1520
  %v1671 = vpop.f32.mrb[0].mxu0
  %v1672 = vadd.f32 0.0, %v1671
  %v1673 = vpop.f32.mrb[0].mxu0
  %v1674 = vadd.f32 0.0, %v1673
  %1675 = vdwg.mxu0
  %1676 = vmatprep.subr.mxu0 %v1480
  %1677 = vmatpush1.msra.mxu0 %v1498
  %1678 = vmatprep.subr.mxu0 %v1492
  %1679 = vmatpush1.msra.mxu0 %v1503
  %1680 = vmatprep.subr.mxu0 0.0
  %1681 = vmatpush1.msra.mxu0 0.0
  %1682 = vmatprep.subr.mxu0 0.0
  %1683 = vmatpush1.msra.mxu0 0.0
  %1684 = vmatprep.subr.mxu0 0.0
  %1685 = vmatpush1.msra.mxu0 0.0
  %1686 = vmatprep.subr.mxu0 0.0
  %1687 = vmatpush1.msra.mxu0 0.0
  %1688 = vmatprep.subr.mxu0 0.0
  %1689 = vmatpush1.msra.mxu0 0.0
  %1690 = vmatprep.subr.mxu0 0.0
  %1691 = vmatpush1.msra.mxu0 0.0
  %1692 = vmatprep.subr.mxu0 0.0
  %1693 = vmatpush1.msra.mxu0 0.0
  %1694 = vmatprep.subr.mxu0 0.0
  %1695 = vmatpush1.msra.mxu0 0.0
  %1696 = vmatprep.subr.mxu0 0.0
  %1697 = vmatpush1.msra.mxu0 0.0
  %1698 = vmatprep.subr.mxu0 0.0
  %1699 = vmatpush1.msra.mxu0 0.0
  %1700 = vmatprep.subr.mxu0 0.0
  %1701 = vmatpush1.msra.mxu0 0.0
  %1702 = vmatprep.subr.mxu0 0.0
  %1703 = vmatpush1.msra.mxu0 0.0
  %1704 = vmatprep.subr.mxu0 0.0
  %1705 = vmatpush1.msra.mxu0 0.0
  %1706 = vmatprep.subr.mxu0 0.0
  %1707 = vmatpush1.msra.mxu0 0.0
  %1708 = vmatprep.subr.mxu0 0.0
  %1709 = vmatpush1.msra.mxu0 0.0
  %1710 = vmatprep.subr.mxu0 0.0
  %1711 = vmatpush1.msra.mxu0 0.0
  %1712 = vmatprep.subr.mxu0 0.0
  %1713 = vmatpush1.msra.mxu0 0.0
  %1714 = vmatprep.subr.mxu0 0.0
  %1715 = vmatpush1.msra.mxu0 0.0
  %1716 = vmatprep.subr.mxu0 0.0
  %1717 = vmatpush1.msra.mxu0 0.0
  %1718 = vmatprep.subr.mxu0 0.0
  %1719 = vmatpush1.msra.mxu0 0.0
  %1720 = vmatprep.subr.mxu0 0.0
  %1721 = vmatpush1.msra.mxu0 0.0
  %1722 = vmatprep.subr.mxu0 0.0
  %1723 = vmatpush1.msra.mxu0 0.0
  %1724 = vmatprep.subr.mxu0 0.0
  %1725 = vmatpush1.msra.mxu0 0.0
  %1726 = vmatprep.subr.mxu0 0.0
  %1727 = vmatpush1.msra.mxu0 0.0
  %1728 = vmatprep.subr.mxu0 0.0
  %1729 = vmatpush1.msra.mxu0 0.0
  %1730 = vmatprep.subr.mxu0 0.0
  %1731 = vmatpush1.msra.mxu0 0.0
  %1732 = vmatprep.subr.mxu0 0.0
  %1733 = vmatpush1.msra.mxu0 0.0
  %1734 = vmatprep.subr.mxu0 0.0
  %1735 = vmatpush1.msra.mxu0 0.0
  %1736 = vmatprep.subr.mxu0 0.0
  %1737 = vmatpush1.msra.mxu0 0.0
  %1738 = vmatprep.subr.mxu0 0.0
  %1739 = vmatpush1.msra.mxu0 0.0
  %1740 = vmatprep.mubr.f32.mxu0 0.0
  %1741 = vmatmul.mubr.f32.gmra.mrb[0].mxu0 %v1517
  %v1742 = vpop.f32.mrb[0].mxu0
  %v1743 = vadd.f32 0.0, %v1742
  %v1744 = vpop.f32.mrb[0].mxu0
  %1745 = vmatprep.mubr.f32.mxu0 0.0
  %1746 = vmatmul.mubr.f32.gmra.mrb[0].mxu0 %v1520
  %v1747 = vpop.f32.mrb[0].mxu0
  %v1748 = vadd.f32 0.0, %v1747
  %v1749 = vpop.f32.mrb[0].mxu0
  %1750 = vdwg.mxu0
  %v1751 = vadd.f32 %v1456, %v1589
  %v1752 = vadd.f32 %v1457, %v1591
  %v1753 = vadd.f32 %v1458, %v1666
  %v1754 = vadd.f32 %v1459, %v1668
  %v1755 = vadd.f32 %v1460, %v1743
  %v1756 = vadd.f32 %v1461, %v1595
  %v1757 = vadd.f32 %v1462, %v1597
  %v1758 = vadd.f32 %v1463, %v1672
  %v1759 = vadd.f32 %v1464, %v1674
  %v1760 = vadd.f32 %v1465, %v1748
  %s1761 = scalar_lea.vmem %s1, 96
  %v1762 = vld [vmem:[%s1761] sm:$0xff]
  %v1763 = vld [vmem:[%s1761 + $0x8] sm:$0xff]
  %1764 = vrot.lane.b32.xlu0 %v36, 92
  %v1765 = vpop.permute.xlu0 %1764
  %1766 = vrot.lane.b32.xlu0 %v37, 92
  %v1767 = vpop.permute.xlu0 %1766
  %1768 = vrot.lane.b32.xlu0 %v38, 92
  %v1769 = vpop.permute.xlu0 %1768
  %1770 = vrot.lane.b32.xlu0 %v39, 92
  %v1771 = vpop.permute.xlu0 %1770
  %1772 = vrot.lane.b32.xlu0 %v40, 92
  %v1773 = vpop.permute.xlu0 %1772
  %1774 = vrot.lane.b32.xlu0 %v41, 92
  %v1775 = vpop.permute.xlu0 %1774
  %1776 = vrot.lane.b32.xlu0 %v42, 92
  %v1777 = vpop.permute.xlu0 %1776
  %1778 = vrot.lane.b32.xlu0 %v43, 92
  %v1779 = vpop.permute.xlu0 %1778
  %1780 = vrot.lane.b32.xlu0 %v44, 92
  %v1781 = vpop.permute.xlu0 %1780
  %1782 = vrot.lane.b32.xlu0 %v45, 92
  %v1783 = vpop.permute.xlu0 %1782
  %1784 = vrot.lane.b32.xlu0 %v46, 92
  %v1785 = vpop.permute.xlu0 %1784
  %1786 = vrot.lane.b32.xlu0 %v47, 92
  %v1787 = vpop.permute.xlu0 %1786
  %vm1788 = vcmask 752640
  %v1789 = vsel %vm1788, %v1765, %v1767
  %v1790 = vsel %vm1788, %v1767, %v1769
  %v1791 = vsel %vm1788, %v1769, %v1771
  %v1792 = vsel %vm1788, %v1771, %v1773
  %v1793 = vsel %vm1788, %v1773, %v1775
  %v1794 = vsel %vm1788, %v1777, %v1779
  %v1795 = vsel %vm1788, %v1779, %v1781
  %v1796 = vsel %vm1788, %v1781, %v1783
  %v1797 = vsel %vm1788, %v1783, %v1785
  %v1798 = vsel %vm1788, %v1785, %v1787
  %v1812 = vsel %vm110, %v1762, 0
  %v1815 = vsel %vm110, %v1763, 0
  %1817 = vmatprep.subr.mxu0 %v1790
  %1818 = vmatpush1.msra.mxu0 %v1789
  %1819 = vmatprep.subr.mxu0 %v1795
  %1820 = vmatpush1.msra.mxu0 %v1794
  %1821 = vmatprep.subr.mxu0 0.0
  %1822 = vmatpush1.msra.mxu0 0.0
  %1823 = vmatprep.subr.mxu0 0.0
  %1824 = vmatpush1.msra.mxu0 0.0
  %1825 = vmatprep.subr.mxu0 0.0
  %1826 = vmatpush1.msra.mxu0 0.0
  %1827 = vmatprep.subr.mxu0 0.0
  %1828 = vmatpush1.msra.mxu0 0.0
  %1829 = vmatprep.subr.mxu0 0.0
  %1830 = vmatpush1.msra.mxu0 0.0
  %1831 = vmatprep.subr.mxu0 0.0
  %1832 = vmatpush1.msra.mxu0 0.0
  %1833 = vmatprep.subr.mxu0 0.0
  %1834 = vmatpush1.msra.mxu0 0.0
  %1835 = vmatprep.subr.mxu0 0.0
  %1836 = vmatpush1.msra.mxu0 0.0
  %1837 = vmatprep.subr.mxu0 0.0
  %1838 = vmatpush1.msra.mxu0 0.0
  %1839 = vmatprep.subr.mxu0 0.0
  %1840 = vmatpush1.msra.mxu0 0.0
  %1841 = vmatprep.subr.mxu0 0.0
  %1842 = vmatpush1.msra.mxu0 0.0
  %1843 = vmatprep.subr.mxu0 0.0
  %1844 = vmatpush1.msra.mxu0 0.0
  %1845 = vmatprep.subr.mxu0 0.0
  %1846 = vmatpush1.msra.mxu0 0.0
  %1847 = vmatprep.subr.mxu0 0.0
  %1848 = vmatpush1.msra.mxu0 0.0
  %1849 = vmatprep.subr.mxu0 0.0
  %1850 = vmatpush1.msra.mxu0 0.0
  %1851 = vmatprep.subr.mxu0 0.0
  %1852 = vmatpush1.msra.mxu0 0.0
  %1853 = vmatprep.subr.mxu0 0.0
  %1854 = vmatpush1.msra.mxu0 0.0
  %1855 = vmatprep.subr.mxu0 0.0
  %1856 = vmatpush1.msra.mxu0 0.0
  %1857 = vmatprep.subr.mxu0 0.0
  %1858 = vmatpush1.msra.mxu0 0.0
  %1859 = vmatprep.subr.mxu0 0.0
  %1860 = vmatpush1.msra.mxu0 0.0
  %1861 = vmatprep.subr.mxu0 0.0
  %1862 = vmatpush1.msra.mxu0 0.0
  %1863 = vmatprep.subr.mxu0 0.0
  %1864 = vmatpush1.msra.mxu0 0.0
  %1865 = vmatprep.subr.mxu0 0.0
  %1866 = vmatpush1.msra.mxu0 0.0
  %1867 = vmatprep.subr.mxu0 0.0
  %1868 = vmatpush1.msra.mxu0 0.0
  %1869 = vmatprep.subr.mxu0 0.0
  %1870 = vmatpush1.msra.mxu0 0.0
  %1871 = vmatprep.subr.mxu0 0.0
  %1872 = vmatpush1.msra.mxu0 0.0
  %1873 = vmatprep.subr.mxu0 0.0
  %1874 = vmatpush1.msra.mxu0 0.0
  %1875 = vmatprep.subr.mxu0 0.0
  %1876 = vmatpush1.msra.mxu0 0.0
  %1877 = vmatprep.subr.mxu0 0.0
  %1878 = vmatpush1.msra.mxu0 0.0
  %1879 = vmatprep.subr.mxu0 0.0
  %1880 = vmatpush1.msra.mxu0 0.0
  %1881 = vmatprep.mubr.f32.mxu0 0.0
  %1882 = vmatmul.mubr.f32.gmra.mrb[0].mxu0 %v1812
  %v1883 = vpop.f32.mrb[0].mxu0
  %v1884 = vadd.f32 0.0, %v1883
  %v1885 = vpop.f32.mrb[0].mxu0
  %v1886 = vadd.f32 0.0, %v1885
  %1887 = vmatprep.mubr.f32.mxu0 0.0
  %1888 = vmatmul.mubr.f32.gmra.mrb[0].mxu0 %v1815
  %v1889 = vpop.f32.mrb[0].mxu0
  %v1890 = vadd.f32 0.0, %v1889
  %v1891 = vpop.f32.mrb[0].mxu0
  %v1892 = vadd.f32 0.0, %v1891
  %1893 = vdwg.mxu0
  %1894 = vmatprep.subr.mxu0 %v1792
  %1895 = vmatpush1.msra.mxu0 %v1791
  %1896 = vmatprep.subr.mxu0 %v1797
  %1897 = vmatpush1.msra.mxu0 %v1796
  %1898 = vmatprep.subr.mxu0 0.0
  %1899 = vmatpush1.msra.mxu0 0.0
  %1900 = vmatprep.subr.mxu0 0.0
  %1901 = vmatpush1.msra.mxu0 0.0
  %1902 = vmatprep.subr.mxu0 0.0
  %1903 = vmatpush1.msra.mxu0 0.0
  %1904 = vmatprep.subr.mxu0 0.0
  %1905 = vmatpush1.msra.mxu0 0.0
  %1906 = vmatprep.subr.mxu0 0.0
  %1907 = vmatpush1.msra.mxu0 0.0
  %1908 = vmatprep.subr.mxu0 0.0
  %1909 = vmatpush1.msra.mxu0 0.0
  %1910 = vmatprep.subr.mxu0 0.0
  %1911 = vmatpush1.msra.mxu0 0.0
  %1912 = vmatprep.subr.mxu0 0.0
  %1913 = vmatpush1.msra.mxu0 0.0
  %1914 = vmatprep.subr.mxu0 0.0
  %1915 = vmatpush1.msra.mxu0 0.0
  %1916 = vmatprep.subr.mxu0 0.0
  %1917 = vmatpush1.msra.mxu0 0.0
  %1918 = vmatprep.subr.mxu0 0.0
  %1919 = vmatpush1.msra.mxu0 0.0
  %1920 = vmatprep.subr.mxu0 0.0
  %1921 = vmatpush1.msra.mxu0 0.0
  %1922 = vmatprep.subr.mxu0 0.0
  %1923 = vmatpush1.msra.mxu0 0.0
  %1924 = vmatprep.subr.mxu0 0.0
  %1925 = vmatpush1.msra.mxu0 0.0
  %1926 = vmatprep.subr.mxu0 0.0
  %1927 = vmatpush1.msra.mxu0 0.0
  %1928 = vmatprep.subr.mxu0 0.0
  %1929 = vmatpush1.msra.mxu0 0.0
  %1930 = vmatprep.subr.mxu0 0.0
  %1931 = vmatpush1.msra.mxu0 0.0
  %1932 = vmatprep.subr.mxu0 0.0
  %1933 = vmatpush1.msra.mxu0 0.0
  %1934 = vmatprep.subr.mxu0 0.0
  %1935 = vmatpush1.msra.mxu0 0.0
  %1936 = vmatprep.subr.mxu0 0.0
  %1937 = vmatpush1.msra.mxu0 0.0
  %1938 = vmatprep.subr.mxu0 0.0
  %1939 = vmatpush1.msra.mxu0 0.0
  %1940 = vmatprep.subr.mxu0 0.0
  %1941 = vmatpush1.msra.mxu0 0.0
  %1942 = vmatprep.subr.mxu0 0.0
  %1943 = vmatpush1.msra.mxu0 0.0
  %1944 = vmatprep.subr.mxu0 0.0
  %1945 = vmatpush1.msra.mxu0 0.0
  %1946 = vmatprep.subr.mxu0 0.0
  %1947 = vmatpush1.msra.mxu0 0.0
  %1948 = vmatprep.subr.mxu0 0.0
  %1949 = vmatpush1.msra.mxu0 0.0
  %1950 = vmatprep.subr.mxu0 0.0
  %1951 = vmatpush1.msra.mxu0 0.0
  %1952 = vmatprep.subr.mxu0 0.0
  %1953 = vmatpush1.msra.mxu0 0.0
  %1954 = vmatprep.subr.mxu0 0.0
  %1955 = vmatpush1.msra.mxu0 0.0
  %1956 = vmatprep.subr.mxu0 0.0
  %1957 = vmatpush1.msra.mxu0 0.0
  %1958 = vmatprep.mubr.f32.mxu0 0.0
  %1959 = vmatmul.mubr.f32.gmra.mrb[0].mxu0 %v1812
  %v1960 = vpop.f32.mrb[0].mxu0
  %v1961 = vadd.f32 0.0, %v1960
  %v1962 = vpop.f32.mrb[0].mxu0
  %v1963 = vadd.f32 0.0, %v1962
  %1964 = vmatprep.mubr.f32.mxu0 0.0
  %1965 = vmatmul.mubr.f32.gmra.mrb[0].mxu0 %v1815
  %v1966 = vpop.f32.mrb[0].mxu0
  %v1967 = vadd.f32 0.0, %v1966
  %v1968 = vpop.f32.mrb[0].mxu0
  %v1969 = vadd.f32 0.0, %v1968
  %1970 = vdwg.mxu0
  %1971 = vmatprep.subr.mxu0 %v1775
  %1972 = vmatpush1.msra.mxu0 %v1793
  %1973 = vmatprep.subr.mxu0 %v1787
  %1974 = vmatpush1.msra.mxu0 %v1798
  %1975 = vmatprep.subr.mxu0 0.0
  %1976 = vmatpush1.msra.mxu0 0.0
  %1977 = vmatprep.subr.mxu0 0.0
  %1978 = vmatpush1.msra.mxu0 0.0
  %1979 = vmatprep.subr.mxu0 0.0
  %1980 = vmatpush1.msra.mxu0 0.0
  %1981 = vmatprep.subr.mxu0 0.0
  %1982 = vmatpush1.msra.mxu0 0.0
  %1983 = vmatprep.subr.mxu0 0.0
  %1984 = vmatpush1.msra.mxu0 0.0
  %1985 = vmatprep.subr.mxu0 0.0
  %1986 = vmatpush1.msra.mxu0 0.0
  %1987 = vmatprep.subr.mxu0 0.0
  %1988 = vmatpush1.msra.mxu0 0.0
  %1989 = vmatprep.subr.mxu0 0.0
  %1990 = vmatpush1.msra.mxu0 0.0
  %1991 = vmatprep.subr.mxu0 0.0
  %1992 = vmatpush1.msra.mxu0 0.0
  %1993 = vmatprep.subr.mxu0 0.0
  %1994 = vmatpush1.msra.mxu0 0.0
  %1995 = vmatprep.subr.mxu0 0.0
  %1996 = vmatpush1.msra.mxu0 0.0
  %1997 = vmatprep.subr.mxu0 0.0
  %1998 = vmatpush1.msra.mxu0 0.0
  %1999 = vmatprep.subr.mxu0 0.0
  %2000 = vmatpush1.msra.mxu0 0.0
  %2001 = vmatprep.subr.mxu0 0.0
  %2002 = vmatpush1.msra.mxu0 0.0
  %2003 = vmatprep.subr.mxu0 0.0
  %2004 = vmatpush1.msra.mxu0 0.0
  %2005 = vmatprep.subr.mxu0 0.0
  %2006 = vmatpush1.msra.mxu0 0.0
  %2007 = vmatprep.subr.mxu0 0.0
  %2008 = vmatpush1.msra.mxu0 0.0
  %2009 = vmatprep.subr.mxu0 0.0
  %2010 = vmatpush1.msra.mxu0 0.0
  %2011 = vmatprep.subr.mxu0 0.0
  %2012 = vmatpush1.msra.mxu0 0.0
  %2013 = vmatprep.subr.mxu0 0.0
  %2014 = vmatpush1.msra.mxu0 0.0
  %2015 = vmatprep.subr.mxu0 0.0
  %2016 = vmatpush1.msra.mxu0 0.0
  %2017 = vmatprep.subr.mxu0 0.0
  %2018 = vmatpush1.msra.mxu0 0.0
  %2019 = vmatprep.subr.mxu0 0.0
  %2020 = vmatpush1.msra.mxu0 0.0
  %2021 = vmatprep.subr.mxu0 0.0
  %2022 = vmatpush1.msra.mxu0 0.0
  %2023 = vmatprep.subr.mxu0 0.0
  %2024 = vmatpush1.msra.mxu0 0.0
  %2025 = vmatprep.subr.mxu0 0.0
  %2026 = vmatpush1.msra.mxu0 0.0
  %2027 = vmatprep.subr.mxu0 0.0
  %2028 = vmatpush1.msra.mxu0 0.0
  %2029 = vmatprep.subr.mxu0 0.0
  %2030 = vmatpush1.msra.mxu0 0.0
  %2031 = vmatprep.subr.mxu0 0.0
  %2032 = vmatpush1.msra.mxu0 0.0
  %2033 = vmatprep.subr.mxu0 0.0
  %2034 = vmatpush1.msra.mxu0 0.0
  %2035 = vmatprep.mubr.f32.mxu0 0.0
  %2036 = vmatmul.mubr.f32.gmra.mrb[0].mxu0 %v1812
  %v2037 = vpop.f32.mrb[0].mxu0
  %v2038 = vadd.f32 0.0, %v2037
  %v2039 = vpop.f32.mrb[0].mxu0
  %2040 = vmatprep.mubr.f32.mxu0 0.0
  %2041 = vmatmul.mubr.f32.gmra.mrb[0].mxu0 %v1815
  %v2042 = vpop.f32.mrb[0].mxu0
  %v2043 = vadd.f32 0.0, %v2042
  %v2044 = vpop.f32.mrb[0].mxu0
  %2045 = vdwg.mxu0
  %v2046 = vadd.f32 %v1751, %v1884
  %v2047 = vadd.f32 %v1752, %v1886
  %v2048 = vadd.f32 %v1753, %v1961
  %v2049 = vadd.f32 %v1754, %v1963
  %v2050 = vadd.f32 %v1755, %v2038
  %v2051 = vadd.f32 %v1756, %v1890
  %v2052 = vadd.f32 %v1757, %v1892
  %v2053 = vadd.f32 %v1758, %v1967
  %v2054 = vadd.f32 %v1759, %v1969
  %v2055 = vadd.f32 %v1760, %v2043
  %s2056 = scalar_lea.vmem %s1, 112
  %v2057 = vld [vmem:[%s2056] sm:$0xff]
  %v2058 = vld [vmem:[%s2056 + $0x8] sm:$0xff]
  %2059 = vrot.lane.b32.xlu0 %v36, 91
  %v2060 = vpop.permute.xlu0 %2059
  %2061 = vrot.lane.b32.xlu0 %v37, 91
  %v2062 = vpop.permute.xlu0 %2061
  %2063 = vrot.lane.b32.xlu0 %v38, 91
  %v2064 = vpop.permute.xlu0 %2063
  %2065 = vrot.lane.b32.xlu0 %v39, 91
  %v2066 = vpop.permute.xlu0 %2065
  %2067 = vrot.lane.b32.xlu0 %v40, 91
  %v2068 = vpop.permute.xlu0 %2067
  %2069 = vrot.lane.b32.xlu0 %v41, 91
  %v2070 = vpop.permute.xlu0 %2069
  %2071 = vrot.lane.b32.xlu0 %v42, 91
  %v2072 = vpop.permute.xlu0 %2071
  %2073 = vrot.lane.b32.xlu0 %v43, 91
  %v2074 = vpop.permute.xlu0 %2073
  %2075 = vrot.lane.b32.xlu0 %v44, 91
  %v2076 = vpop.permute.xlu0 %2075
  %2077 = vrot.lane.b32.xlu0 %v45, 91
  %v2078 = vpop.permute.xlu0 %2077
  %2079 = vrot.lane.b32.xlu0 %v46, 91
  %v2080 = vpop.permute.xlu0 %2079
  %2081 = vrot.lane.b32.xlu0 %v47, 91
  %v2082 = vpop.permute.xlu0 %2081
  %vm2083 = vcmask 744448
  %v2084 = vsel %vm2083, %v2060, %v2062
  %v2085 = vsel %vm2083, %v2062, %v2064
  %v2086 = vsel %vm2083, %v2064, %v2066
  %v2087 = vsel %vm2083, %v2066, %v2068
  %v2088 = vsel %vm2083, %v2068, %v2070
  %v2089 = vsel %vm2083, %v2072, %v2074
  %v2090 = vsel %vm2083, %v2074, %v2076
  %v2091 = vsel %vm2083, %v2076, %v2078
  %v2092 = vsel %vm2083, %v2078, %v2080
  %v2093 = vsel %vm2083, %v2080, %v2082
  %v2107 = vsel %vm110, %v2057, 0
  %v2110 = vsel %vm110, %v2058, 0
  %2112 = vmatprep.subr.mxu0 %v2085
  %2113 = vmatpush1.msra.mxu0 %v2084
  %2114 = vmatprep.subr.mxu0 %v2090
  %2115 = vmatpush1.msra.mxu0 %v2089
  %2116 = vmatprep.subr.mxu0 0.0
  %2117 = vmatpush1.msra.mxu0 0.0
  %2118 = vmatprep.subr.mxu0 0.0
  %2119 = vmatpush1.msra.mxu0 0.0
  %2120 = vmatprep.subr.mxu0 0.0
  %2121 = vmatpush1.msra.mxu0 0.0
  %2122 = vmatprep.subr.mxu0 0.0
  %2123 = vmatpush1.msra.mxu0 0.0
  %2124 = vmatprep.subr.mxu0 0.0
  %2125 = vmatpush1.msra.mxu0 0.0
  %2126 = vmatprep.subr.mxu0 0.0
  %2127 = vmatpush1.msra.mxu0 0.0
  %2128 = vmatprep.subr.mxu0 0.0
  %2129 = vmatpush1.msra.mxu0 0.0
  %2130 = vmatprep.subr.mxu0 0.0
  %2131 = vmatpush1.msra.mxu0 0.0
  %2132 = vmatprep.subr.mxu0 0.0
  %2133 = vmatpush1.msra.mxu0 0.0
  %2134 = vmatprep.subr.mxu0 0.0
  %2135 = vmatpush1.msra.mxu0 0.0
  %2136 = vmatprep.subr.mxu0 0.0
  %2137 = vmatpush1.msra.mxu0 0.0
  %2138 = vmatprep.subr.mxu0 0.0
  %2139 = vmatpush1.msra.mxu0 0.0
  %2140 = vmatprep.subr.mxu0 0.0
  %2141 = vmatpush1.msra.mxu0 0.0
  %2142 = vmatprep.subr.mxu0 0.0
  %2143 = vmatpush1.msra.mxu0 0.0
  %2144 = vmatprep.subr.mxu0 0.0
  %2145 = vmatpush1.msra.mxu0 0.0
  %2146 = vmatprep.subr.mxu0 0.0
  %2147 = vmatpush1.msra.mxu0 0.0
  %2148 = vmatprep.subr.mxu0 0.0
  %2149 = vmatpush1.msra.mxu0 0.0
  %2150 = vmatprep.subr.mxu0 0.0
  %2151 = vmatpush1.msra.mxu0 0.0
  %2152 = vmatprep.subr.mxu0 0.0
  %2153 = vmatpush1.msra.mxu0 0.0
  %2154 = vmatprep.subr.mxu0 0.0
  %2155 = vmatpush1.msra.mxu0 0.0
  %2156 = vmatprep.subr.mxu0 0.0
  %2157 = vmatpush1.msra.mxu0 0.0
  %2158 = vmatprep.subr.mxu0 0.0
  %2159 = vmatpush1.msra.mxu0 0.0
  %2160 = vmatprep.subr.mxu0 0.0
  %2161 = vmatpush1.msra.mxu0 0.0
  %2162 = vmatprep.subr.mxu0 0.0
  %2163 = vmatpush1.msra.mxu0 0.0
  %2164 = vmatprep.subr.mxu0 0.0
  %2165 = vmatpush1.msra.mxu0 0.0
  %2166 = vmatprep.subr.mxu0 0.0
  %2167 = vmatpush1.msra.mxu0 0.0
  %2168 = vmatprep.subr.mxu0 0.0
  %2169 = vmatpush1.msra.mxu0 0.0
  %2170 = vmatprep.subr.mxu0 0.0
  %2171 = vmatpush1.msra.mxu0 0.0
  %2172 = vmatprep.subr.mxu0 0.0
  %2173 = vmatpush1.msra.mxu0 0.0
  %2174 = vmatprep.subr.mxu0 0.0
  %2175 = vmatpush1.msra.mxu0 0.0
  %2176 = vmatprep.mubr.f32.mxu0 0.0
  %2177 = vmatmul.mubr.f32.gmra.mrb[0].mxu0 %v2107
  %v2178 = vpop.f32.mrb[0].mxu0
  %v2179 = vadd.f32 0.0, %v2178
  %v2180 = vpop.f32.mrb[0].mxu0
  %v2181 = vadd.f32 0.0, %v2180
  %2182 = vmatprep.mubr.f32.mxu0 0.0
  %2183 = vmatmul.mubr.f32.gmra.mrb[0].mxu0 %v2110
  %v2184 = vpop.f32.mrb[0].mxu0
  %v2185 = vadd.f32 0.0, %v2184
  %v2186 = vpop.f32.mrb[0].mxu0
  %v2187 = vadd.f32 0.0, %v2186
  %2188 = vdwg.mxu0
  %2189 = vmatprep.subr.mxu0 %v2087
  %2190 = vmatpush1.msra.mxu0 %v2086
  %2191 = vmatprep.subr.mxu0 %v2092
  %2192 = vmatpush1.msra.mxu0 %v2091
  %2193 = vmatprep.subr.mxu0 0.0
  %2194 = vmatpush1.msra.mxu0 0.0
  %2195 = vmatprep.subr.mxu0 0.0
  %2196 = vmatpush1.msra.mxu0 0.0
  %2197 = vmatprep.subr.mxu0 0.0
  %2198 = vmatpush1.msra.mxu0 0.0
  %2199 = vmatprep.subr.mxu0 0.0
  %2200 = vmatpush1.msra.mxu0 0.0
  %2201 = vmatprep.subr.mxu0 0.0
  %2202 = vmatpush1.msra.mxu0 0.0
  %2203 = vmatprep.subr.mxu0 0.0
  %2204 = vmatpush1.msra.mxu0 0.0
  %2205 = vmatprep.subr.mxu0 0.0
  %2206 = vmatpush1.msra.mxu0 0.0
  %2207 = vmatprep.subr.mxu0 0.0
  %2208 = vmatpush1.msra.mxu0 0.0
  %2209 = vmatprep.subr.mxu0 0.0
  %2210 = vmatpush1.msra.mxu0 0.0
  %2211 = vmatprep.subr.mxu0 0.0
  %2212 = vmatpush1.msra.mxu0 0.0
  %2213 = vmatprep.subr.mxu0 0.0
  %2214 = vmatpush1.msra.mxu0 0.0
  %2215 = vmatprep.subr.mxu0 0.0
  %2216 = vmatpush1.msra.mxu0 0.0
  %2217 = vmatprep.subr.mxu0 0.0
  %2218 = vmatpush1.msra.mxu0 0.0
  %2219 = vmatprep.subr.mxu0 0.0
  %2220 = vmatpush1.msra.mxu0 0.0
  %2221 = vmatprep.subr.mxu0 0.0
  %2222 = vmatpush1.msra.mxu0 0.0
  %2223 = vmatprep.subr.mxu0 0.0
  %2224 = vmatpush1.msra.mxu0 0.0
  %2225 = vmatprep.subr.mxu0 0.0
  %2226 = vmatpush1.msra.mxu0 0.0
  %2227 = vmatprep.subr.mxu0 0.0
  %2228 = vmatpush1.msra.mxu0 0.0
  %2229 = vmatprep.subr.mxu0 0.0
  %2230 = vmatpush1.msra.mxu0 0.0
  %2231 = vmatprep.subr.mxu0 0.0
  %2232 = vmatpush1.msra.mxu0 0.0
  %2233 = vmatprep.subr.mxu0 0.0
  %2234 = vmatpush1.msra.mxu0 0.0
  %2235 = vmatprep.subr.mxu0 0.0
  %2236 = vmatpush1.msra.mxu0 0.0
  %2237 = vmatprep.subr.mxu0 0.0
  %2238 = vmatpush1.msra.mxu0 0.0
  %2239 = vmatprep.subr.mxu0 0.0
  %2240 = vmatpush1.msra.mxu0 0.0
  %2241 = vmatprep.subr.mxu0 0.0
  %2242 = vmatpush1.msra.mxu0 0.0
  %2243 = vmatprep.subr.mxu0 0.0
  %2244 = vmatpush1.msra.mxu0 0.0
  %2245 = vmatprep.subr.mxu0 0.0
  %2246 = vmatpush1.msra.mxu0 0.0
  %2247 = vmatprep.subr.mxu0 0.0
  %2248 = vmatpush1.msra.mxu0 0.0
  %2249 = vmatprep.subr.mxu0 0.0
  %2250 = vmatpush1.msra.mxu0 0.0
  %2251 = vmatprep.subr.mxu0 0.0
  %2252 = vmatpush1.msra.mxu0 0.0
  %2253 = vmatprep.mubr.f32.mxu0 0.0
  %2254 = vmatmul.mubr.f32.gmra.mrb[0].mxu0 %v2107
  %v2255 = vpop.f32.mrb[0].mxu0
  %v2256 = vadd.f32 0.0, %v2255
  %v2257 = vpop.f32.mrb[0].mxu0
  %v2258 = vadd.f32 0.0, %v2257
  %2259 = vmatprep.mubr.f32.mxu0 0.0
  %2260 = vmatmul.mubr.f32.gmra.mrb[0].mxu0 %v2110
  %v2261 = vpop.f32.mrb[0].mxu0
  %v2262 = vadd.f32 0.0, %v2261
  %v2263 = vpop.f32.mrb[0].mxu0
  %v2264 = vadd.f32 0.0, %v2263
  %2265 = vdwg.mxu0
  %2266 = vmatprep.subr.mxu0 %v2070
  %2267 = vmatpush1.msra.mxu0 %v2088
  %2268 = vmatprep.subr.mxu0 %v2082
  %2269 = vmatpush1.msra.mxu0 %v2093
  %2270 = vmatprep.subr.mxu0 0.0
  %2271 = vmatpush1.msra.mxu0 0.0
  %2272 = vmatprep.subr.mxu0 0.0
  %2273 = vmatpush1.msra.mxu0 0.0
  %2274 = vmatprep.subr.mxu0 0.0
  %2275 = vmatpush1.msra.mxu0 0.0
  %2276 = vmatprep.subr.mxu0 0.0
  %2277 = vmatpush1.msra.mxu0 0.0
  %2278 = vmatprep.subr.mxu0 0.0
  %2279 = vmatpush1.msra.mxu0 0.0
  %2280 = vmatprep.subr.mxu0 0.0
  %2281 = vmatpush1.msra.mxu0 0.0
  %2282 = vmatprep.subr.mxu0 0.0
  %2283 = vmatpush1.msra.mxu0 0.0
  %2284 = vmatprep.subr.mxu0 0.0
  %2285 = vmatpush1.msra.mxu0 0.0
  %2286 = vmatprep.subr.mxu0 0.0
  %2287 = vmatpush1.msra.mxu0 0.0
  %2288 = vmatprep.subr.mxu0 0.0
  %2289 = vmatpush1.msra.mxu0 0.0
  %2290 = vmatprep.subr.mxu0 0.0
  %2291 = vmatpush1.msra.mxu0 0.0
  %2292 = vmatprep.subr.mxu0 0.0
  %2293 = vmatpush1.msra.mxu0 0.0
  %2294 = vmatprep.subr.mxu0 0.0
  %2295 = vmatpush1.msra.mxu0 0.0
  %2296 = vmatprep.subr.mxu0 0.0
  %2297 = vmatpush1.msra.mxu0 0.0
  %2298 = vmatprep.subr.mxu0 0.0
  %2299 = vmatpush1.msra.mxu0 0.0
  %2300 = vmatprep.subr.mxu0 0.0
  %2301 = vmatpush1.msra.mxu0 0.0
  %2302 = vmatprep.subr.mxu0 0.0
  %2303 = vmatpush1.msra.mxu0 0.0
  %2304 = vmatprep.subr.mxu0 0.0
  %2305 = vmatpush1.msra.mxu0 0.0
  %2306 = vmatprep.subr.mxu0 0.0
  %2307 = vmatpush1.msra.mxu0 0.0
  %2308 = vmatprep.subr.mxu0 0.0
  %2309 = vmatpush1.msra.mxu0 0.0
  %2310 = vmatprep.subr.mxu0 0.0
  %2311 = vmatpush1.msra.mxu0 0.0
  %2312 = vmatprep.subr.mxu0 0.0
  %2313 = vmatpush1.msra.mxu0 0.0
  %2314 = vmatprep.subr.mxu0 0.0
  %2315 = vmatpush1.msra.mxu0 0.0
  %2316 = vmatprep.subr.mxu0 0.0
  %2317 = vmatpush1.msra.mxu0 0.0
  %2318 = vmatprep.subr.mxu0 0.0
  %2319 = vmatpush1.msra.mxu0 0.0
  %2320 = vmatprep.subr.mxu0 0.0
  %2321 = vmatpush1.msra.mxu0 0.0
  %2322 = vmatprep.subr.mxu0 0.0
  %2323 = vmatpush1.msra.mxu0 0.0
  %2324 = vmatprep.subr.mxu0 0.0
  %2325 = vmatpush1.msra.mxu0 0.0
  %2326 = vmatprep.subr.mxu0 0.0
  %2327 = vmatpush1.msra.mxu0 0.0
  %2328 = vmatprep.subr.mxu0 0.0
  %2329 = vmatpush1.msra.mxu0 0.0
  %2330 = vmatprep.mubr.f32.mxu0 0.0
  %2331 = vmatmul.mubr.f32.gmra.mrb[0].mxu0 %v2107
  %v2332 = vpop.f32.mrb[0].mxu0
  %v2333 = vadd.f32 0.0, %v2332
  %v2334 = vpop.f32.mrb[0].mxu0
  %2335 = vmatprep.mubr.f32.mxu0 0.0
  %2336 = vmatmul.mubr.f32.gmra.mrb[0].mxu0 %v2110
  %v2337 = vpop.f32.mrb[0].mxu0
  %v2338 = vadd.f32 0.0, %v2337
  %v2339 = vpop.f32.mrb[0].mxu0
  %2340 = vdwg.mxu0
  %v2341 = vadd.f32 %v2046, %v2179
  %v2342 = vadd.f32 %v2047, %v2181
  %v2343 = vadd.f32 %v2048, %v2256
  %v2344 = vadd.f32 %v2049, %v2258
  %v2345 = vadd.f32 %v2050, %v2333
  %v2346 = vadd.f32 %v2051, %v2185
  %v2347 = vadd.f32 %v2052, %v2187
  %v2348 = vadd.f32 %v2053, %v2262
  %v2349 = vadd.f32 %v2054, %v2264
  %v2350 = vadd.f32 %v2055, %v2338
  %s2351 = scalar_lea.vmem %s1, 128
  %v2352 = vld [vmem:[%s2351] sm:$0xff]
  %v2353 = vld [vmem:[%s2351 + $0x8] sm:$0xff]
  %2354 = vrot.lane.b32.xlu0 %v36, 90
  %v2355 = vpop.permute.xlu0 %2354
  %2356 = vrot.lane.b32.xlu0 %v37, 90
  %v2357 = vpop.permute.xlu0 %2356
  %2358 = vrot.lane.b32.xlu0 %v38, 90
  %v2359 = vpop.permute.xlu0 %2358
  %2360 = vrot.lane.b32.xlu0 %v39, 90
  %v2361 = vpop.permute.xlu0 %2360
  %2362 = vrot.lane.b32.xlu0 %v40, 90
  %v2363 = vpop.permute.xlu0 %2362
  %2364 = vrot.lane.b32.xlu0 %v41, 90
  %v2365 = vpop.permute.xlu0 %2364
  %2366 = vrot.lane.b32.xlu0 %v42, 90
  %v2367 = vpop.permute.xlu0 %2366
  %2368 = vrot.lane.b32.xlu0 %v43, 90
  %v2369 = vpop.permute.xlu0 %2368
  %2370 = vrot.lane.b32.xlu0 %v44, 90
  %v2371 = vpop.permute.xlu0 %2370
  %2372 = vrot.lane.b32.xlu0 %v45, 90
  %v2373 = vpop.permute.xlu0 %2372
  %2374 = vrot.lane.b32.xlu0 %v46, 90
  %v2375 = vpop.permute.xlu0 %2374
  %2376 = vrot.lane.b32.xlu0 %v47, 90
  %v2377 = vpop.permute.xlu0 %2376
  %vm2378 = vcmask 736256
  %v2379 = vsel %vm2378, %v2355, %v2357
  %v2380 = vsel %vm2378, %v2357, %v2359
  %v2381 = vsel %vm2378, %v2359, %v2361
  %v2382 = vsel %vm2378, %v2361, %v2363
  %v2383 = vsel %vm2378, %v2363, %v2365
  %v2384 = vsel %vm2378, %v2367, %v2369
  %v2385 = vsel %vm2378, %v2369, %v2371
  %v2386 = vsel %vm2378, %v2371, %v2373
  %v2387 = vsel %vm2378, %v2373, %v2375
  %v2388 = vsel %vm2378, %v2375, %v2377
  %v2402 = vsel %vm110, %v2352, 0
  %v2405 = vsel %vm110, %v2353, 0
  %2407 = vmatprep.subr.mxu0 %v2380
  %2408 = vmatpush1.msra.mxu0 %v2379
  %2409 = vmatprep.subr.mxu0 %v2385
  %2410 = vmatpush1.msra.mxu0 %v2384
  %2411 = vmatprep.subr.mxu0 0.0
  %2412 = vmatpush1.msra.mxu0 0.0
  %2413 = vmatprep.subr.mxu0 0.0
  %2414 = vmatpush1.msra.mxu0 0.0
  %2415 = vmatprep.subr.mxu0 0.0
  %2416 = vmatpush1.msra.mxu0 0.0
  %2417 = vmatprep.subr.mxu0 0.0
  %2418 = vmatpush1.msra.mxu0 0.0
  %2419 = vmatprep.subr.mxu0 0.0
  %2420 = vmatpush1.msra.mxu0 0.0
  %2421 = vmatprep.subr.mxu0 0.0
  %2422 = vmatpush1.msra.mxu0 0.0
  %2423 = vmatprep.subr.mxu0 0.0
  %2424 = vmatpush1.msra.mxu0 0.0
  %2425 = vmatprep.subr.mxu0 0.0
  %2426 = vmatpush1.msra.mxu0 0.0
  %2427 = vmatprep.subr.mxu0 0.0
  %2428 = vmatpush1.msra.mxu0 0.0
  %2429 = vmatprep.subr.mxu0 0.0
  %2430 = vmatpush1.msra.mxu0 0.0
  %2431 = vmatprep.subr.mxu0 0.0
  %2432 = vmatpush1.msra.mxu0 0.0
  %2433 = vmatprep.subr.mxu0 0.0
  %2434 = vmatpush1.msra.mxu0 0.0
  %2435 = vmatprep.subr.mxu0 0.0
  %2436 = vmatpush1.msra.mxu0 0.0
  %2437 = vmatprep.subr.mxu0 0.0
  %2438 = vmatpush1.msra.mxu0 0.0
  %2439 = vmatprep.subr.mxu0 0.0
  %2440 = vmatpush1.msra.mxu0 0.0
  %2441 = vmatprep.subr.mxu0 0.0
  %2442 = vmatpush1.msra.mxu0 0.0
  %2443 = vmatprep.subr.mxu0 0.0
  %2444 = vmatpush1.msra.mxu0 0.0
  %2445 = vmatprep.subr.mxu0 0.0
  %2446 = vmatpush1.msra.mxu0 0.0
  %2447 = vmatprep.subr.mxu0 0.0
  %2448 = vmatpush1.msra.mxu0 0.0
  %2449 = vmatprep.subr.mxu0 0.0
  %2450 = vmatpush1.msra.mxu0 0.0
  %2451 = vmatprep.subr.mxu0 0.0
  %2452 = vmatpush1.msra.mxu0 0.0
  %2453 = vmatprep.subr.mxu0 0.0
  %2454 = vmatpush1.msra.mxu0 0.0
  %2455 = vmatprep.subr.mxu0 0.0
  %2456 = vmatpush1.msra.mxu0 0.0
  %2457 = vmatprep.subr.mxu0 0.0
  %2458 = vmatpush1.msra.mxu0 0.0
  %2459 = vmatprep.subr.mxu0 0.0
  %2460 = vmatpush1.msra.mxu0 0.0
  %2461 = vmatprep.subr.mxu0 0.0
  %2462 = vmatpush1.msra.mxu0 0.0
  %2463 = vmatprep.subr.mxu0 0.0
  %2464 = vmatpush1.msra.mxu0 0.0
  %2465 = vmatprep.subr.mxu0 0.0
  %2466 = vmatpush1.msra.mxu0 0.0
  %2467 = vmatprep.subr.mxu0 0.0
  %2468 = vmatpush1.msra.mxu0 0.0
  %2469 = vmatprep.subr.mxu0 0.0
  %2470 = vmatpush1.msra.mxu0 0.0
  %2471 = vmatprep.mubr.f32.mxu0 0.0
  %2472 = vmatmul.mubr.f32.gmra.mrb[0].mxu0 %v2402
  %v2473 = vpop.f32.mrb[0].mxu0
  %v2474 = vadd.f32 0.0, %v2473
  %v2475 = vpop.f32.mrb[0].mxu0
  %v2476 = vadd.f32 0.0, %v2475
  %2477 = vmatprep.mubr.f32.mxu0 0.0
  %2478 = vmatmul.mubr.f32.gmra.mrb[0].mxu0 %v2405
  %v2479 = vpop.f32.mrb[0].mxu0
  %v2480 = vadd.f32 0.0, %v2479
  %v2481 = vpop.f32.mrb[0].mxu0
  %v2482 = vadd.f32 0.0, %v2481
  %2483 = vdwg.mxu0
  %2484 = vmatprep.subr.mxu0 %v2382
  %2485 = vmatpush1.msra.mxu0 %v2381
  %2486 = vmatprep.subr.mxu0 %v2387
  %2487 = vmatpush1.msra.mxu0 %v2386
  %2488 = vmatprep.subr.mxu0 0.0
  %2489 = vmatpush1.msra.mxu0 0.0
  %2490 = vmatprep.subr.mxu0 0.0
  %2491 = vmatpush1.msra.mxu0 0.0
  %2492 = vmatprep.subr.mxu0 0.0
  %2493 = vmatpush1.msra.mxu0 0.0
  %2494 = vmatprep.subr.mxu0 0.0
  %2495 = vmatpush1.msra.mxu0 0.0
  %2496 = vmatprep.subr.mxu0 0.0
  %2497 = vmatpush1.msra.mxu0 0.0
  %2498 = vmatprep.subr.mxu0 0.0
  %2499 = vmatpush1.msra.mxu0 0.0
  %2500 = vmatprep.subr.mxu0 0.0
  %2501 = vmatpush1.msra.mxu0 0.0
  %2502 = vmatprep.subr.mxu0 0.0
  %2503 = vmatpush1.msra.mxu0 0.0
  %2504 = vmatprep.subr.mxu0 0.0
  %2505 = vmatpush1.msra.mxu0 0.0
  %2506 = vmatprep.subr.mxu0 0.0
  %2507 = vmatpush1.msra.mxu0 0.0
  %2508 = vmatprep.subr.mxu0 0.0
  %2509 = vmatpush1.msra.mxu0 0.0
  %2510 = vmatprep.subr.mxu0 0.0
  %2511 = vmatpush1.msra.mxu0 0.0
  %2512 = vmatprep.subr.mxu0 0.0
  %2513 = vmatpush1.msra.mxu0 0.0
  %2514 = vmatprep.subr.mxu0 0.0
  %2515 = vmatpush1.msra.mxu0 0.0
  %2516 = vmatprep.subr.mxu0 0.0
  %2517 = vmatpush1.msra.mxu0 0.0
  %2518 = vmatprep.subr.mxu0 0.0
  %2519 = vmatpush1.msra.mxu0 0.0
  %2520 = vmatprep.subr.mxu0 0.0
  %2521 = vmatpush1.msra.mxu0 0.0
  %2522 = vmatprep.subr.mxu0 0.0
  %2523 = vmatpush1.msra.mxu0 0.0
  %2524 = vmatprep.subr.mxu0 0.0
  %2525 = vmatpush1.msra.mxu0 0.0
  %2526 = vmatprep.subr.mxu0 0.0
  %2527 = vmatpush1.msra.mxu0 0.0
  %2528 = vmatprep.subr.mxu0 0.0
  %2529 = vmatpush1.msra.mxu0 0.0
  %2530 = vmatprep.subr.mxu0 0.0
  %2531 = vmatpush1.msra.mxu0 0.0
  %2532 = vmatprep.subr.mxu0 0.0
  %2533 = vmatpush1.msra.mxu0 0.0
  %2534 = vmatprep.subr.mxu0 0.0
  %2535 = vmatpush1.msra.mxu0 0.0
  %2536 = vmatprep.subr.mxu0 0.0
  %2537 = vmatpush1.msra.mxu0 0.0
  %2538 = vmatprep.subr.mxu0 0.0
  %2539 = vmatpush1.msra.mxu0 0.0
  %2540 = vmatprep.subr.mxu0 0.0
  %2541 = vmatpush1.msra.mxu0 0.0
  %2542 = vmatprep.subr.mxu0 0.0
  %2543 = vmatpush1.msra.mxu0 0.0
  %2544 = vmatprep.subr.mxu0 0.0
  %2545 = vmatpush1.msra.mxu0 0.0
  %2546 = vmatprep.subr.mxu0 0.0
  %2547 = vmatpush1.msra.mxu0 0.0
  %2548 = vmatprep.mubr.f32.mxu0 0.0
  %2549 = vmatmul.mubr.f32.gmra.mrb[0].mxu0 %v2402
  %v2550 = vpop.f32.mrb[0].mxu0
  %v2551 = vadd.f32 0.0, %v2550
  %v2552 = vpop.f32.mrb[0].mxu0
  %v2553 = vadd.f32 0.0, %v2552
  %2554 = vmatprep.mubr.f32.mxu0 0.0
  %2555 = vmatmul.mubr.f32.gmra.mrb[0].mxu0 %v2405
  %v2556 = vpop.f32.mrb[0].mxu0
  %v2557 = vadd.f32 0.0, %v2556
  %v2558 = vpop.f32.mrb[0].mxu0
  %v2559 = vadd.f32 0.0, %v2558
  %2560 = vdwg.mxu0
  %2561 = vmatprep.subr.mxu0 %v2365
  %2562 = vmatpush1.msra.mxu0 %v2383
  %2563 = vmatprep.subr.mxu0 %v2377
  %2564 = vmatpush1.msra.mxu0 %v2388
  %2565 = vmatprep.subr.mxu0 0.0
  %2566 = vmatpush1.msra.mxu0 0.0
  %2567 = vmatprep.subr.mxu0 0.0
  %2568 = vmatpush1.msra.mxu0 0.0
  %2569 = vmatprep.subr.mxu0 0.0
  %2570 = vmatpush1.msra.mxu0 0.0
  %2571 = vmatprep.subr.mxu0 0.0
  %2572 = vmatpush1.msra.mxu0 0.0
  %2573 = vmatprep.subr.mxu0 0.0
  %2574 = vmatpush1.msra.mxu0 0.0
  %2575 = vmatprep.subr.mxu0 0.0
  %2576 = vmatpush1.msra.mxu0 0.0
  %2577 = vmatprep.subr.mxu0 0.0
  %2578 = vmatpush1.msra.mxu0 0.0
  %2579 = vmatprep.subr.mxu0 0.0
  %2580 = vmatpush1.msra.mxu0 0.0
  %2581 = vmatprep.subr.mxu0 0.0
  %2582 = vmatpush1.msra.mxu0 0.0
  %2583 = vmatprep.subr.mxu0 0.0
  %2584 = vmatpush1.msra.mxu0 0.0
  %2585 = vmatprep.subr.mxu0 0.0
  %2586 = vmatpush1.msra.mxu0 0.0
  %2587 = vmatprep.subr.mxu0 0.0
  %2588 = vmatpush1.msra.mxu0 0.0
  %2589 = vmatprep.subr.mxu0 0.0
  %2590 = vmatpush1.msra.mxu0 0.0
  %2591 = vmatprep.subr.mxu0 0.0
  %2592 = vmatpush1.msra.mxu0 0.0
  %2593 = vmatprep.subr.mxu0 0.0
  %2594 = vmatpush1.msra.mxu0 0.0
  %2595 = vmatprep.subr.mxu0 0.0
  %2596 = vmatpush1.msra.mxu0 0.0
  %2597 = vmatprep.subr.mxu0 0.0
  %2598 = vmatpush1.msra.mxu0 0.0
  %2599 = vmatprep.subr.mxu0 0.0
  %2600 = vmatpush1.msra.mxu0 0.0
  %2601 = vmatprep.subr.mxu0 0.0
  %2602 = vmatpush1.msra.mxu0 0.0
  %2603 = vmatprep.subr.mxu0 0.0
  %2604 = vmatpush1.msra.mxu0 0.0
  %2605 = vmatprep.subr.mxu0 0.0
  %2606 = vmatpush1.msra.mxu0 0.0
  %2607 = vmatprep.subr.mxu0 0.0
  %2608 = vmatpush1.msra.mxu0 0.0
  %2609 = vmatprep.subr.mxu0 0.0
  %2610 = vmatpush1.msra.mxu0 0.0
  %2611 = vmatprep.subr.mxu0 0.0
  %2612 = vmatpush1.msra.mxu0 0.0
  %2613 = vmatprep.subr.mxu0 0.0
  %2614 = vmatpush1.msra.mxu0 0.0
  %2615 = vmatprep.subr.mxu0 0.0
  %2616 = vmatpush1.msra.mxu0 0.0
  %2617 = vmatprep.subr.mxu0 0.0
  %2618 = vmatpush1.msra.mxu0 0.0
  %2619 = vmatprep.subr.mxu0 0.0
  %2620 = vmatpush1.msra.mxu0 0.0
  %2621 = vmatprep.subr.mxu0 0.0
  %2622 = vmatpush1.msra.mxu0 0.0
  %2623 = vmatprep.subr.mxu0 0.0
  %2624 = vmatpush1.msra.mxu0 0.0
  %2625 = vmatprep.mubr.f32.mxu0 0.0
  %2626 = vmatmul.mubr.f32.gmra.mrb[0].mxu0 %v2402
  %v2627 = vpop.f32.mrb[0].mxu0
  %v2628 = vadd.f32 0.0, %v2627
  %v2629 = vpop.f32.mrb[0].mxu0
  %2630 = vmatprep.mubr.f32.mxu0 0.0
  %2631 = vmatmul.mubr.f32.gmra.mrb[0].mxu0 %v2405
  %v2632 = vpop.f32.mrb[0].mxu0
  %v2633 = vadd.f32 0.0, %v2632
  %v2634 = vpop.f32.mrb[0].mxu0
  %2635 = vdwg.mxu0
  %v2636 = vadd.f32 %v2341, %v2474
  %v2637 = vadd.f32 %v2342, %v2476
  %v2638 = vadd.f32 %v2343, %v2551
  %v2639 = vadd.f32 %v2344, %v2553
  %v2640 = vadd.f32 %v2345, %v2628
  %v2641 = vadd.f32 %v2346, %v2480
  %v2642 = vadd.f32 %v2347, %v2482
  %v2643 = vadd.f32 %v2348, %v2557
  %v2644 = vadd.f32 %v2349, %v2559
  %v2645 = vadd.f32 %v2350, %v2633
  %v2646 = vld [vmem:[%s4] sm:$0xff]
  %v2647 = vld [vmem:[%s4 + $0x8] sm:$0xff]
  %2649 = vset.pattern.permute.xlu0 0
  %2650 = vperm.xlu0 %2649, %v2646
  %v2651 = vpop.permute.xlu0 %2650
  %2654 = vset.pattern.permute.xlu0 0
  %2655 = vperm.xlu0 %2654, %v2647
  %v2656 = vpop.permute.xlu0 %2655
  %v2658 = vadd.f32 %v2636, %v2651
  %v2659 = vadd.f32 %v2637, %v2651
  %v2660 = vadd.f32 %v2638, %v2651
  %v2661 = vadd.f32 %v2639, %v2651
  %v2662 = vadd.f32 %v2640, %v2651
  %v2663 = vadd.f32 %v2641, %v2656
  %v2664 = vadd.f32 %v2642, %v2656
  %v2665 = vadd.f32 %v2643, %v2656
  %v2666 = vadd.f32 %v2644, %v2656
  %v2667 = vadd.f32 %v2645, %v2656
  %v2668 = vmul.f32 %v2658, 0.01
  %v2669 = vmul.f32 %v2659, 0.01
  %v2670 = vmul.f32 %v2660, 0.01
  %v2671 = vmul.f32 %v2661, 0.01
  %v2672 = vmul.f32 %v2662, 0.01
  %v2673 = vmul.f32 %v2663, 0.01
  %v2674 = vmul.f32 %v2664, 0.01
  %v2675 = vmul.f32 %v2665, 0.01
  %v2676 = vmul.f32 %v2666, 0.01
  %v2677 = vmul.f32 %v2667, 0.01
  %v2678 = vmax.f32 %v2658, %v2668
  %v2679 = vmax.f32 %v2659, %v2669
  %v2680 = vmax.f32 %v2660, %v2670
  %v2681 = vmax.f32 %v2661, %v2671
  %v2682 = vmax.f32 %v2662, %v2672
  %v2683 = vmax.f32 %v2663, %v2673
  %v2684 = vmax.f32 %v2664, %v2674
  %v2685 = vmax.f32 %v2665, %v2675
  %v2686 = vmax.f32 %v2666, %v2676
  %v2687 = vmax.f32 %v2667, %v2677
  %2688 = vst [vmem:[#allocation2] sm:$0xff] 0.0
  %2689 = vst [vmem:[#allocation2 + $0x8] sm:$0xff] 0.0
  %2690 = vst [vmem:[#allocation2 + $0x10] sm:$0xff] 0.0
  %2691 = vst [vmem:[#allocation2 + $0x18] sm:$0xff] 0.0
  %2692 = vst [vmem:[#allocation2 + $0x20] sm:$0xff] 0.0
  %2693 = vst [vmem:[#allocation2 + $0x28] sm:$0xff] 0.0
  %2694 = vst [vmem:[#allocation2 + $0x30] sm:$0xff] 0.0
  %2695 = vst [vmem:[#allocation2 + $0x38] sm:$0xff] 0.0
  %2696 = vst [vmem:[#allocation2 + $0x40] sm:$0xff] 0.0
  %2697 = vst [vmem:[#allocation2 + $0x48] sm:$0xff] 0.0
  %2698 = vst [vmem:[#allocation2 + $0x50] sm:$0xff] 0.0
  %2699 = vst [vmem:[#allocation2 + $0x58] sm:$0xff] 0.0
  %2702 = vrot.lane.b32.xlu0 %v2678, 19
  %v2703 = vpop.permute.xlu0 %2702
  %2704 = vrot.lane.b32.xlu0 %v2683, 19
  %v2705 = vpop.permute.xlu0 %2704
  %vm2708 = vcmask 285848
  %2709 = vst.msk [vmem:[#allocation2] sm:$0xff] %vm2708, %v2703
  %2710 = vst.msk [vmem:[#allocation2 + $0x30] sm:$0xff] %vm2708, %v2705
  %vm2711 = vcmask 433448
  %2712 = vst.msk [vmem:[#allocation2] sm:$0xff] %vm2711, %v2703
  %2713 = vst.msk [vmem:[#allocation2 + $0x30] sm:$0xff] %vm2711, %v2705
  %vm2714 = vcmask 581048
  %2715 = vst.msk [vmem:[#allocation2] sm:$0xff] %vm2714, %v2703
  %2716 = vst.msk [vmem:[#allocation2 + $0x30] sm:$0xff] %vm2714, %v2705
  %vm2717 = vcmask 728648
  %2718 = vst.msk [vmem:[#allocation2] sm:$0xff] %vm2717, %v2703
  %2719 = vst.msk [vmem:[#allocation2 + $0x30] sm:$0xff] %vm2717, %v2705
  %vm2720 = vcmask 876248
  %2721 = vst.msk [vmem:[#allocation2] sm:$0xff] %vm2720, %v2703
  %2722 = vst.msk [vmem:[#allocation2 + $0x30] sm:$0xff] %vm2720, %v2705
  %vm2723 = vcmask 1023848
  %2724 = vst.msk [vmem:[#allocation2] sm:$0xff] %vm2723, %v2703
  %2725 = vst.msk [vmem:[#allocation2 + $0x30] sm:$0xff] %vm2723, %v2705
  %vm2726 = vcmask 1048568
  %2727 = vst.msk [vmem:[#allocation2] sm:$0xff] %vm2726, %v2703
  %vm2728 = vcmask 121856
  %2729 = vst.msk [vmem:[#allocation2 + $0x8] sm:$0xff] %vm2728, %v2703
  %2730 = vst.msk [vmem:[#allocation2 + $0x30] sm:$0xff] %vm2726, %v2705
  %2731 = vst.msk [vmem:[#allocation2 + $0x38] sm:$0xff] %vm2728, %v2705
  %2734 = vrot.lane.b32.xlu0 %v2679, 19
  %v2735 = vpop.permute.xlu0 %2734
  %2736 = vrot.lane.b32.xlu0 %v2684, 19
  %v2737 = vpop.permute.xlu0 %2736
  %vm2738 = vcmask 154624
  %v2739 = vsel %vm2738, %v2703, %v2735
  %v2740 = vsel %vm2738, %v2705, %v2737
  %vm2743 = vcmask 269448
  %2744 = vst.msk [vmem:[#allocation2 + $0x8] sm:$0xff] %vm2743, %v2739
  %2745 = vst.msk [vmem:[#allocation2 + $0x38] sm:$0xff] %vm2743, %v2740
  %vm2748 = vcmask 417048
  %2749 = vst.msk [vmem:[#allocation2 + $0x8] sm:$0xff] %vm2748, %v2735
  %2750 = vst.msk [vmem:[#allocation2 + $0x38] sm:$0xff] %vm2748, %v2737
  %vm2751 = vcmask 564648
  %2752 = vst.msk [vmem:[#allocation2 + $0x8] sm:$0xff] %vm2751, %v2735
  %2753 = vst.msk [vmem:[#allocation2 + $0x38] sm:$0xff] %vm2751, %v2737
  %vm2754 = vcmask 712248
  %2755 = vst.msk [vmem:[#allocation2 + $0x8] sm:$0xff] %vm2754, %v2735
  %2756 = vst.msk [vmem:[#allocation2 + $0x38] sm:$0xff] %vm2754, %v2737
  %vm2757 = vcmask 859848
  %2758 = vst.msk [vmem:[#allocation2 + $0x8] sm:$0xff] %vm2757, %v2735
  %2759 = vst.msk [vmem:[#allocation2 + $0x38] sm:$0xff] %vm2757, %v2737
  %vm2760 = vcmask 1007448
  %2761 = vst.msk [vmem:[#allocation2 + $0x8] sm:$0xff] %vm2760, %v2735
  %2762 = vst.msk [vmem:[#allocation2 + $0x38] sm:$0xff] %vm2760, %v2737
  %vm2763 = vcmask 1048552
  %2764 = vst.msk [vmem:[#allocation2 + $0x8] sm:$0xff] %vm2763, %v2735
  %vm2765 = vcmask 105472
  %2766 = vst.msk [vmem:[#allocation2 + $0x10] sm:$0xff] %vm2765, %v2735
  %2767 = vst.msk [vmem:[#allocation2 + $0x38] sm:$0xff] %vm2763, %v2737
  %2768 = vst.msk [vmem:[#allocation2 + $0x40] sm:$0xff] %vm2765, %v2737
  %2771 = vrot.lane.b32.xlu0 %v2680, 19
  %v2772 = vpop.permute.xlu0 %2771
  %2773 = vrot.lane.b32.xlu0 %v2685, 19
  %v2774 = vpop.permute.xlu0 %2773
  %v2775 = vsel %vm2738, %v2735, %v2772
  %v2776 = vsel %vm2738, %v2737, %v2774
  %vm2779 = vcmask 253048
  %2780 = vst.msk [vmem:[#allocation2 + $0x10] sm:$0xff] %vm2779, %v2775
  %2781 = vst.msk [vmem:[#allocation2 + $0x40] sm:$0xff] %vm2779, %v2776
  %vm2784 = vcmask 400648
  %2785 = vst.msk [vmem:[#allocation2 + $0x10] sm:$0xff] %vm2784, %v2772
  %2786 = vst.msk [vmem:[#allocation2 + $0x40] sm:$0xff] %vm2784, %v2774
  %vm2787 = vcmask 843448
  %2788 = vst.msk [vmem:[#allocation2 + $0x10] sm:$0xff] %vm2787, %v2772
  %2789 = vst.msk [vmem:[#allocation2 + $0x40] sm:$0xff] %vm2787, %v2774
  %vm2790 = vcmask 991048
  %2791 = vst.msk [vmem:[#allocation2 + $0x10] sm:$0xff] %vm2790, %v2772
  %2792 = vst.msk [vmem:[#allocation2 + $0x40] sm:$0xff] %vm2790, %v2774
  %vm2793 = vcmask 1048536
  %2794 = vst.msk [vmem:[#allocation2 + $0x10] sm:$0xff] %vm2793, %v2772
  %vm2795 = vcmask 89088
  %2796 = vst.msk [vmem:[#allocation2 + $0x18] sm:$0xff] %vm2795, %v2772
  %2797 = vst.msk [vmem:[#allocation2 + $0x40] sm:$0xff] %vm2793, %v2774
  %2798 = vst.msk [vmem:[#allocation2 + $0x48] sm:$0xff] %vm2795, %v2774
  %2801 = vrot.lane.b32.xlu0 %v2681, 19
  %v2802 = vpop.permute.xlu0 %2801
  %2803 = vrot.lane.b32.xlu0 %v2686, 19
  %v2804 = vpop.permute.xlu0 %2803
  %v2805 = vsel %vm2738, %v2772, %v2802
  %v2806 = vsel %vm2738, %v2774, %v2804
  %vm2809 = vcmask 236648
  %2810 = vst.msk [vmem:[#allocation2 + $0x18] sm:$0xff] %vm2809, %v2805
  %2811 = vst.msk [vmem:[#allocation2 + $0x48] sm:$0xff] %vm2809, %v2806
  %vm2814 = vcmask 384248
  %2815 = vst.msk [vmem:[#allocation2 + $0x18] sm:$0xff] %vm2814, %v2802
  %2816 = vst.msk [vmem:[#allocation2 + $0x48] sm:$0xff] %vm2814, %v2804
  %vm2817 = vcmask 531848
  %2818 = vst.msk [vmem:[#allocation2 + $0x18] sm:$0xff] %vm2817, %v2802
  %2819 = vst.msk [vmem:[#allocation2 + $0x48] sm:$0xff] %vm2817, %v2804
  %vm2820 = vcmask 679448
  %2821 = vst.msk [vmem:[#allocation2 + $0x18] sm:$0xff] %vm2820, %v2802
  %2822 = vst.msk [vmem:[#allocation2 + $0x48] sm:$0xff] %vm2820, %v2804
  %vm2823 = vcmask 827048
  %2824 = vst.msk [vmem:[#allocation2 + $0x18] sm:$0xff] %vm2823, %v2802
  %2825 = vst.msk [vmem:[#allocation2 + $0x48] sm:$0xff] %vm2823, %v2804
  %vm2826 = vcmask 974648
  %2827 = vst.msk [vmem:[#allocation2 + $0x18] sm:$0xff] %vm2826, %v2802
  %2828 = vst.msk [vmem:[#allocation2 + $0x48] sm:$0xff] %vm2826, %v2804
  %vm2829 = vcmask 1048520
  %2830 = vst.msk [vmem:[#allocation2 + $0x18] sm:$0xff] %vm2829, %v2802
  %vm2831 = vcmask 72704
  %2832 = vst.msk [vmem:[#allocation2 + $0x20] sm:$0xff] %vm2831, %v2802
  %2833 = vst.msk [vmem:[#allocation2 + $0x48] sm:$0xff] %vm2829, %v2804
  %2834 = vst.msk [vmem:[#allocation2 + $0x50] sm:$0xff] %vm2831, %v2804
  %2837 = vrot.lane.b32.xlu0 %v2682, 19
  %v2838 = vpop.permute.xlu0 %2837
  %2839 = vrot.lane.b32.xlu0 %v2687, 19
  %v2840 = vpop.permute.xlu0 %2839
  %v2841 = vsel %vm2738, %v2802, %v2838
  %v2842 = vsel %vm2738, %v2804, %v2840
  %vm2845 = vcmask 220248
  %2846 = vst.msk [vmem:[#allocation2 + $0x20] sm:$0xff] %vm2845, %v2841
  %2847 = vst.msk [vmem:[#allocation2 + $0x50] sm:$0xff] %vm2845, %v2842
  %vm2850 = vcmask 367848
  %2851 = vst.msk [vmem:[#allocation2 + $0x20] sm:$0xff] %vm2850, %v2838
  %2852 = vst.msk [vmem:[#allocation2 + $0x50] sm:$0xff] %vm2850, %v2840
  %vm2853 = vcmask 515448
  %2854 = vst.msk [vmem:[#allocation2 + $0x20] sm:$0xff] %vm2853, %v2838
  %2855 = vst.msk [vmem:[#allocation2 + $0x50] sm:$0xff] %vm2853, %v2840
  %vm2856 = vcmask 663048
  %2857 = vst.msk [vmem:[#allocation2 + $0x20] sm:$0xff] %vm2856, %v2838
  %2858 = vst.msk [vmem:[#allocation2 + $0x50] sm:$0xff] %vm2856, %v2840
  %vm2859 = vcmask 810648
  %2860 = vst.msk [vmem:[#allocation2 + $0x20] sm:$0xff] %vm2859, %v2838
  %2861 = vst.msk [vmem:[#allocation2 + $0x50] sm:$0xff] %vm2859, %v2840
  %vm2862 = vcmask 958248
  %2863 = vst.msk [vmem:[#allocation2 + $0x20] sm:$0xff] %vm2862, %v2838
  %2864 = vst.msk [vmem:[#allocation2 + $0x50] sm:$0xff] %vm2862, %v2840
  %v2865 = vld [vmem:[%s2] sm:$0xff]
  %v2866 = vld [vmem:[%s2 + $0x8] sm:$0xff]
  %v2867 = vld [vmem:[#allocation2] sm:$0xff]
  %v2868 = vld [vmem:[#allocation2 + $0x8] sm:$0xff]
  %v2869 = vld [vmem:[#allocation2 + $0x10] sm:$0xff]
  %v2870 = vld [vmem:[#allocation2 + $0x18] sm:$0xff]
  %v2871 = vld [vmem:[#allocation2 + $0x20] sm:$0xff]
  %v2872 = vld [vmem:[#allocation2 + $0x28] sm:$0xff]
  %v2873 = vld [vmem:[#allocation2 + $0x30] sm:$0xff]
  %v2874 = vld [vmem:[#allocation2 + $0x38] sm:$0xff]
  %v2875 = vld [vmem:[#allocation2 + $0x40] sm:$0xff]
  %v2876 = vld [vmem:[#allocation2 + $0x48] sm:$0xff]
  %v2877 = vld [vmem:[#allocation2 + $0x50] sm:$0xff]
  %v2878 = vld [vmem:[#allocation2 + $0x58] sm:$0xff]
  %s2879 = scalar_lea.vmem %s2, 16
  %v2880 = vld [vmem:[%s2879] sm:$0xff]
  %v2881 = vld [vmem:[%s2879 + $0x8] sm:$0xff]
  %2894 = vrot.lane.b32.xlu0 %v2867, 127
  %v2895 = vpop.permute.xlu0 %2894
  %2896 = vrot.lane.b32.xlu0 %v2868, 127
  %v2897 = vpop.permute.xlu0 %2896
  %2898 = vrot.lane.b32.xlu0 %v2869, 127
  %v2899 = vpop.permute.xlu0 %2898
  %2900 = vrot.lane.b32.xlu0 %v2870, 127
  %v2901 = vpop.permute.xlu0 %2900
  %2902 = vrot.lane.b32.xlu0 %v2871, 127
  %v2903 = vpop.permute.xlu0 %2902
  %2904 = vrot.lane.b32.xlu0 %v2872, 127
  %v2905 = vpop.permute.xlu0 %2904
  %2906 = vrot.lane.b32.xlu0 %v2873, 127
  %v2907 = vpop.permute.xlu0 %2906
  %2908 = vrot.lane.b32.xlu0 %v2874, 127
  %v2909 = vpop.permute.xlu0 %2908
  %2910 = vrot.lane.b32.xlu0 %v2875, 127
  %v2911 = vpop.permute.xlu0 %2910
  %2912 = vrot.lane.b32.xlu0 %v2876, 127
  %v2913 = vpop.permute.xlu0 %2912
  %2914 = vrot.lane.b32.xlu0 %v2877, 127
  %v2915 = vpop.permute.xlu0 %2914
  %2916 = vrot.lane.b32.xlu0 %v2878, 127
  %v2917 = vpop.permute.xlu0 %2916
  %v2918 = vsel %vm87, %v2895, %v2897
  %v2919 = vsel %vm87, %v2897, %v2899
  %v2920 = vsel %vm87, %v2899, %v2901
  %v2921 = vsel %vm87, %v2901, %v2903
  %v2922 = vsel %vm87, %v2903, %v2905
  %v2923 = vsel %vm87, %v2907, %v2909
  %v2924 = vsel %vm87, %v2909, %v2911
  %v2925 = vsel %vm87, %v2911, %v2913
  %v2926 = vsel %vm87, %v2913, %v2915
  %v2927 = vsel %vm87, %v2915, %v2917
  %v2941 = vsel %vm110, %v2880, 0
  %v2944 = vsel %vm110, %v2881, 0
  %2946 = vmatprep.subr.mxu0 %v2919
  %2947 = vmatpush1.msra.mxu0 %v2918
  %2948 = vmatprep.subr.mxu0 %v2924
  %2949 = vmatpush1.msra.mxu0 %v2923
  %2950 = vmatprep.subr.mxu0 0.0
  %2951 = vmatpush1.msra.mxu0 0.0
  %2952 = vmatprep.subr.mxu0 0.0
  %2953 = vmatpush1.msra.mxu0 0.0
  %2954 = vmatprep.subr.mxu0 0.0
  %2955 = vmatpush1.msra.mxu0 0.0
  %2956 = vmatprep.subr.mxu0 0.0
  %2957 = vmatpush1.msra.mxu0 0.0
  %2958 = vmatprep.subr.mxu0 0.0
  %2959 = vmatpush1.msra.mxu0 0.0
  %2960 = vmatprep.subr.mxu0 0.0
  %2961 = vmatpush1.msra.mxu0 0.0
  %2962 = vmatprep.subr.mxu0 0.0
  %2963 = vmatpush1.msra.mxu0 0.0
  %2964 = vmatprep.subr.mxu0 0.0
  %2965 = vmatpush1.msra.mxu0 0.0
  %2966 = vmatprep.subr.mxu0 0.0
  %2967 = vmatpush1.msra.mxu0 0.0
  %2968 = vmatprep.subr.mxu0 0.0
  %2969 = vmatpush1.msra.mxu0 0.0
  %2970 = vmatprep.subr.mxu0 0.0
  %2971 = vmatpush1.msra.mxu0 0.0
  %2972 = vmatprep.subr.mxu0 0.0
  %2973 = vmatpush1.msra.mxu0 0.0
  %2974 = vmatprep.subr.mxu0 0.0
  %2975 = vmatpush1.msra.mxu0 0.0
  %2976 = vmatprep.subr.mxu0 0.0
  %2977 = vmatpush1.msra.mxu0 0.0
  %2978 = vmatprep.subr.mxu0 0.0
  %2979 = vmatpush1.msra.mxu0 0.0
  %2980 = vmatprep.subr.mxu0 0.0
  %2981 = vmatpush1.msra.mxu0 0.0
  %2982 = vmatprep.subr.mxu0 0.0
  %2983 = vmatpush1.msra.mxu0 0.0
  %2984 = vmatprep.subr.mxu0 0.0
  %2985 = vmatpush1.msra.mxu0 0.0
  %2986 = vmatprep.subr.mxu0 0.0
  %2987 = vmatpush1.msra.mxu0 0.0
  %2988 = vmatprep.subr.mxu0 0.0
  %2989 = vmatpush1.msra.mxu0 0.0
  %2990 = vmatprep.subr.mxu0 0.0
  %2991 = vmatpush1.msra.mxu0 0.0
  %2992 = vmatprep.subr.mxu0 0.0
  %2993 = vmatpush1.msra.mxu0 0.0
  %2994 = vmatprep.subr.mxu0 0.0
  %2995 = vmatpush1.msra.mxu0 0.0
  %2996 = vmatprep.subr.mxu0 0.0
  %2997 = vmatpush1.msra.mxu0 0.0
  %2998 = vmatprep.subr.mxu0 0.0
  %2999 = vmatpush1.msra.mxu0 0.0
  %3000 = vmatprep.subr.mxu0 0.0
  %3001 = vmatpush1.msra.mxu0 0.0
  %3002 = vmatprep.subr.mxu0 0.0
  %3003 = vmatpush1.msra.mxu0 0.0
  %3004 = vmatprep.subr.mxu0 0.0
  %3005 = vmatpush1.msra.mxu0 0.0
  %3006 = vmatprep.subr.mxu0 0.0
  %3007 = vmatpush1.msra.mxu0 0.0
  %3008 = vmatprep.subr.mxu0 0.0
  %3009 = vmatpush1.msra.mxu0 0.0
  %3010 = vmatprep.mubr.f32.mxu0 0.0
  %3011 = vmatmul.mubr.f32.gmra.mrb[0].mxu0 %v2941
  %v3012 = vpop.f32.mrb[0].mxu0
  %v3013 = vadd.f32 0.0, %v3012
  %v3014 = vpop.f32.mrb[0].mxu0
  %v3015 = vadd.f32 0.0, %v3014
  %3016 = vmatprep.mubr.f32.mxu0 0.0
  %3017 = vmatmul.mubr.f32.gmra.mrb[0].mxu0 %v2944
  %v3018 = vpop.f32.mrb[0].mxu0
  %v3019 = vadd.f32 0.0, %v3018
  %v3020 = vpop.f32.mrb[0].mxu0
  %v3021 = vadd.f32 0.0, %v3020
  %3022 = vdwg.mxu0
  %3023 = vmatprep.subr.mxu0 %v2921
  %3024 = vmatpush1.msra.mxu0 %v2920
  %3025 = vmatprep.subr.mxu0 %v2926
  %3026 = vmatpush1.msra.mxu0 %v2925
  %3027 = vmatprep.subr.mxu0 0.0
  %3028 = vmatpush1.msra.mxu0 0.0
  %3029 = vmatprep.subr.mxu0 0.0
  %3030 = vmatpush1.msra.mxu0 0.0
  %3031 = vmatprep.subr.mxu0 0.0
  %3032 = vmatpush1.msra.mxu0 0.0
  %3033 = vmatprep.subr.mxu0 0.0
  %3034 = vmatpush1.msra.mxu0 0.0
  %3035 = vmatprep.subr.mxu0 0.0
  %3036 = vmatpush1.msra.mxu0 0.0
  %3037 = vmatprep.subr.mxu0 0.0
  %3038 = vmatpush1.msra.mxu0 0.0
  %3039 = vmatprep.subr.mxu0 0.0
  %3040 = vmatpush1.msra.mxu0 0.0
  %3041 = vmatprep.subr.mxu0 0.0
  %3042 = vmatpush1.msra.mxu0 0.0
  %3043 = vmatprep.subr.mxu0 0.0
  %3044 = vmatpush1.msra.mxu0 0.0
  %3045 = vmatprep.subr.mxu0 0.0
  %3046 = vmatpush1.msra.mxu0 0.0
  %3047 = vmatprep.subr.mxu0 0.0
  %3048 = vmatpush1.msra.mxu0 0.0
  %3049 = vmatprep.subr.mxu0 0.0
  %3050 = vmatpush1.msra.mxu0 0.0
  %3051 = vmatprep.subr.mxu0 0.0
  %3052 = vmatpush1.msra.mxu0 0.0
  %3053 = vmatprep.subr.mxu0 0.0
  %3054 = vmatpush1.msra.mxu0 0.0
  %3055 = vmatprep.subr.mxu0 0.0
  %3056 = vmatpush1.msra.mxu0 0.0
  %3057 = vmatprep.subr.mxu0 0.0
  %3058 = vmatpush1.msra.mxu0 0.0
  %3059 = vmatprep.subr.mxu0 0.0
  %3060 = vmatpush1.msra.mxu0 0.0
  %3061 = vmatprep.subr.mxu0 0.0
  %3062 = vmatpush1.msra.mxu0 0.0
  %3063 = vmatprep.subr.mxu0 0.0
  %3064 = vmatpush1.msra.mxu0 0.0
  %3065 = vmatprep.subr.mxu0 0.0
  %3066 = vmatpush1.msra.mxu0 0.0
  %3067 = vmatprep.subr.mxu0 0.0
  %3068 = vmatpush1.msra.mxu0 0.0
  %3069 = vmatprep.subr.mxu0 0.0
  %3070 = vmatpush1.msra.mxu0 0.0
  %3071 = vmatprep.subr.mxu0 0.0
  %3072 = vmatpush1.msra.mxu0 0.0
  %3073 = vmatprep.subr.mxu0 0.0
  %3074 = vmatpush1.msra.mxu0 0.0
  %3075 = vmatprep.subr.mxu0 0.0
  %3076 = vmatpush1.msra.mxu0 0.0
  %3077 = vmatprep.subr.mxu0 0.0
  %3078 = vmatpush1.msra.mxu0 0.0
  %3079 = vmatprep.subr.mxu0 0.0
  %3080 = vmatpush1.msra.mxu0 0.0
  %3081 = vmatprep.subr.mxu0 0.0
  %3082 = vmatpush1.msra.mxu0 0.0
  %3083 = vmatprep.subr.mxu0 0.0
  %3084 = vmatpush1.msra.mxu0 0.0
  %3085 = vmatprep.subr.mxu0 0.0
  %3086 = vmatpush1.msra.mxu0 0.0
  %3087 = vmatprep.mubr.f32.mxu0 0.0
  %3088 = vmatmul.mubr.f32.gmra.mrb[0].mxu0 %v2941
  %v3089 = vpop.f32.mrb[0].mxu0
  %v3090 = vadd.f32 0.0, %v3089
  %v3091 = vpop.f32.mrb[0].mxu0
  %v3092 = vadd.f32 0.0, %v3091
  %3093 = vmatprep.mubr.f32.mxu0 0.0
  %3094 = vmatmul.mubr.f32.gmra.mrb[0].mxu0 %v2944
  %v3095 = vpop.f32.mrb[0].mxu0
  %v3096 = vadd.f32 0.0, %v3095
  %v3097 = vpop.f32.mrb[0].mxu0
  %v3098 = vadd.f32 0.0, %v3097
  %3099 = vdwg.mxu0
  %3100 = vmatprep.subr.mxu0 %v2905
  %3101 = vmatpush1.msra.mxu0 %v2922
  %3102 = vmatprep.subr.mxu0 %v2917
  %3103 = vmatpush1.msra.mxu0 %v2927
  %3104 = vmatprep.subr.mxu0 0.0
  %3105 = vmatpush1.msra.mxu0 0.0
  %3106 = vmatprep.subr.mxu0 0.0
  %3107 = vmatpush1.msra.mxu0 0.0
  %3108 = vmatprep.subr.mxu0 0.0
  %3109 = vmatpush1.msra.mxu0 0.0
  %3110 = vmatprep.subr.mxu0 0.0
  %3111 = vmatpush1.msra.mxu0 0.0
  %3112 = vmatprep.subr.mxu0 0.0
  %3113 = vmatpush1.msra.mxu0 0.0
  %3114 = vmatprep.subr.mxu0 0.0
  %3115 = vmatpush1.msra.mxu0 0.0
  %3116 = vmatprep.subr.mxu0 0.0
  %3117 = vmatpush1.msra.mxu0 0.0
  %3118 = vmatprep.subr.mxu0 0.0
  %3119 = vmatpush1.msra.mxu0 0.0
  %3120 = vmatprep.subr.mxu0 0.0
  %3121 = vmatpush1.msra.mxu0 0.0
  %3122 = vmatprep.subr.mxu0 0.0
  %3123 = vmatpush1.msra.mxu0 0.0
  %3124 = vmatprep.subr.mxu0 0.0
  %3125 = vmatpush1.msra.mxu0 0.0
  %3126 = vmatprep.subr.mxu0 0.0
  %3127 = vmatpush1.msra.mxu0 0.0
  %3128 = vmatprep.subr.mxu0 0.0
  %3129 = vmatpush1.msra.mxu0 0.0
  %3130 = vmatprep.subr.mxu0 0.0
  %3131 = vmatpush1.msra.mxu0 0.0
  %3132 = vmatprep.subr.mxu0 0.0
  %3133 = vmatpush1.msra.mxu0 0.0
  %3134 = vmatprep.subr.mxu0 0.0
  %3135 = vmatpush1.msra.mxu0 0.0
  %3136 = vmatprep.subr.mxu0 0.0
  %3137 = vmatpush1.msra.mxu0 0.0
  %3138 = vmatprep.subr.mxu0 0.0
  %3139 = vmatpush1.msra.mxu0 0.0
  %3140 = vmatprep.subr.mxu0 0.0
  %3141 = vmatpush1.msra.mxu0 0.0
  %3142 = vmatprep.subr.mxu0 0.0
  %3143 = vmatpush1.msra.mxu0 0.0
  %3144 = vmatprep.subr.mxu0 0.0
  %3145 = vmatpush1.msra.mxu0 0.0
  %3146 = vmatprep.subr.mxu0 0.0
  %3147 = vmatpush1.msra.mxu0 0.0
  %3148 = vmatprep.subr.mxu0 0.0
  %3149 = vmatpush1.msra.mxu0 0.0
  %3150 = vmatprep.subr.mxu0 0.0
  %3151 = vmatpush1.msra.mxu0 0.0
  %3152 = vmatprep.subr.mxu0 0.0
  %3153 = vmatpush1.msra.mxu0 0.0
  %3154 = vmatprep.subr.mxu0 0.0
  %3155 = vmatpush1.msra.mxu0 0.0
  %3156 = vmatprep.subr.mxu0 0.0
  %3157 = vmatpush1.msra.mxu0 0.0
  %3158 = vmatprep.subr.mxu0 0.0
  %3159 = vmatpush1.msra.mxu0 0.0
  %3160 = vmatprep.subr.mxu0 0.0
  %3161 = vmatpush1.msra.mxu0 0.0
  %3162 = vmatprep.subr.mxu0 0.0
  %3163 = vmatpush1.msra.mxu0 0.0
  %3164 = vmatprep.mubr.f32.mxu0 0.0
  %3165 = vmatmul.mubr.f32.gmra.mrb[0].mxu0 %v2941
  %v3166 = vpop.f32.mrb[0].mxu0
  %v3167 = vadd.f32 0.0, %v3166
  %v3168 = vpop.f32.mrb[0].mxu0
  %3169 = vmatprep.mubr.f32.mxu0 0.0
  %3170 = vmatmul.mubr.f32.gmra.mrb[0].mxu0 %v2944
  %v3171 = vpop.f32.mrb[0].mxu0
  %v3172 = vadd.f32 0.0, %v3171
  %v3173 = vpop.f32.mrb[0].mxu0
  %3174 = vdwg.mxu0
  %v3176 = vsel %vm110, %v2865, 0
  %v3179 = vsel %vm110, %v2866, 0
  %3181 = vmatprep.subr.mxu0 %v2868
  %3182 = vmatpush1.msra.mxu0 %v2867
  %3183 = vmatprep.subr.mxu0 %v2874
  %3184 = vmatpush1.msra.mxu0 %v2873
  %3185 = vmatprep.subr.mxu0 0.0
  %3186 = vmatpush1.msra.mxu0 0.0
  %3187 = vmatprep.subr.mxu0 0.0
  %3188 = vmatpush1.msra.mxu0 0.0
  %3189 = vmatprep.subr.mxu0 0.0
  %3190 = vmatpush1.msra.mxu0 0.0
  %3191 = vmatprep.subr.mxu0 0.0
  %3192 = vmatpush1.msra.mxu0 0.0
  %3193 = vmatprep.subr.mxu0 0.0
  %3194 = vmatpush1.msra.mxu0 0.0
  %3195 = vmatprep.subr.mxu0 0.0
  %3196 = vmatpush1.msra.mxu0 0.0
  %3197 = vmatprep.subr.mxu0 0.0
  %3198 = vmatpush1.msra.mxu0 0.0
  %3199 = vmatprep.subr.mxu0 0.0
  %3200 = vmatpush1.msra.mxu0 0.0
  %3201 = vmatprep.subr.mxu0 0.0
  %3202 = vmatpush1.msra.mxu0 0.0
  %3203 = vmatprep.subr.mxu0 0.0
  %3204 = vmatpush1.msra.mxu0 0.0
  %3205 = vmatprep.subr.mxu0 0.0
  %3206 = vmatpush1.msra.mxu0 0.0
  %3207 = vmatprep.subr.mxu0 0.0
  %3208 = vmatpush1.msra.mxu0 0.0
  %3209 = vmatprep.subr.mxu0 0.0
  %3210 = vmatpush1.msra.mxu0 0.0
  %3211 = vmatprep.subr.mxu0 0.0
  %3212 = vmatpush1.msra.mxu0 0.0
  %3213 = vmatprep.subr.mxu0 0.0
  %3214 = vmatpush1.msra.mxu0 0.0
  %3215 = vmatprep.subr.mxu0 0.0
  %3216 = vmatpush1.msra.mxu0 0.0
  %3217 = vmatprep.subr.mxu0 0.0
  %3218 = vmatpush1.msra.mxu0 0.0
  %3219 = vmatprep.subr.mxu0 0.0
  %3220 = vmatpush1.msra.mxu0 0.0
  %3221 = vmatprep.subr.mxu0 0.0
  %3222 = vmatpush1.msra.mxu0 0.0
  %3223 = vmatprep.subr.mxu0 0.0
  %3224 = vmatpush1.msra.mxu0 0.0
  %3225 = vmatprep.subr.mxu0 0.0
  %3226 = vmatpush1.msra.mxu0 0.0
  %3227 = vmatprep.subr.mxu0 0.0
  %3228 = vmatpush1.msra.mxu0 0.0
  %3229 = vmatprep.subr.mxu0 0.0
  %3230 = vmatpush1.msra.mxu0 0.0
  %3231 = vmatprep.subr.mxu0 0.0
  %3232 = vmatpush1.msra.mxu0 0.0
  %3233 = vmatprep.subr.mxu0 0.0
  %3234 = vmatpush1.msra.mxu0 0.0
  %3235 = vmatprep.subr.mxu0 0.0
  %3236 = vmatpush1.msra.mxu0 0.0
  %3237 = vmatprep.subr.mxu0 0.0
  %3238 = vmatpush1.msra.mxu0 0.0
  %3239 = vmatprep.subr.mxu0 0.0
  %3240 = vmatpush1.msra.mxu0 0.0
  %3241 = vmatprep.subr.mxu0 0.0
  %3242 = vmatpush1.msra.mxu0 0.0
  %3243 = vmatprep.subr.mxu0 0.0
  %3244 = vmatpush1.msra.mxu0 0.0
  %3245 = vmatprep.mubr.f32.mxu0 0.0
  %3246 = vmatmul.mubr.f32.gmra.mrb[0].mxu0 %v3176
  %v3247 = vpop.f32.mrb[0].mxu0
  %v3248 = vadd.f32 %v3013, %v3247
  %v3249 = vpop.f32.mrb[0].mxu0
  %v3250 = vadd.f32 %v3015, %v3249
  %3251 = vmatprep.mubr.f32.mxu0 0.0
  %3252 = vmatmul.mubr.f32.gmra.mrb[0].mxu0 %v3179
  %v3253 = vpop.f32.mrb[0].mxu0
  %v3254 = vadd.f32 %v3019, %v3253
  %v3255 = vpop.f32.mrb[0].mxu0
  %v3256 = vadd.f32 %v3021, %v3255
  %3257 = vdwg.mxu0
  %3258 = vmatprep.subr.mxu0 %v2870
  %3259 = vmatpush1.msra.mxu0 %v2869
  %3260 = vmatprep.subr.mxu0 %v2876
  %3261 = vmatpush1.msra.mxu0 %v2875
  %3262 = vmatprep.subr.mxu0 0.0
  %3263 = vmatpush1.msra.mxu0 0.0
  %3264 = vmatprep.subr.mxu0 0.0
  %3265 = vmatpush1.msra.mxu0 0.0
  %3266 = vmatprep.subr.mxu0 0.0
  %3267 = vmatpush1.msra.mxu0 0.0
  %3268 = vmatprep.subr.mxu0 0.0
  %3269 = vmatpush1.msra.mxu0 0.0
  %3270 = vmatprep.subr.mxu0 0.0
  %3271 = vmatpush1.msra.mxu0 0.0
  %3272 = vmatprep.subr.mxu0 0.0
  %3273 = vmatpush1.msra.mxu0 0.0
  %3274 = vmatprep.subr.mxu0 0.0
  %3275 = vmatpush1.msra.mxu0 0.0
  %3276 = vmatprep.subr.mxu0 0.0
  %3277 = vmatpush1.msra.mxu0 0.0
  %3278 = vmatprep.subr.mxu0 0.0
  %3279 = vmatpush1.msra.mxu0 0.0
  %3280 = vmatprep.subr.mxu0 0.0
  %3281 = vmatpush1.msra.mxu0 0.0
  %3282 = vmatprep.subr.mxu0 0.0
  %3283 = vmatpush1.msra.mxu0 0.0
  %3284 = vmatprep.subr.mxu0 0.0
  %3285 = vmatpush1.msra.mxu0 0.0
  %3286 = vmatprep.subr.mxu0 0.0
  %3287 = vmatpush1.msra.mxu0 0.0
  %3288 = vmatprep.subr.mxu0 0.0
  %3289 = vmatpush1.msra.mxu0 0.0
  %3290 = vmatprep.subr.mxu0 0.0
  %3291 = vmatpush1.msra.mxu0 0.0
  %3292 = vmatprep.subr.mxu0 0.0
  %3293 = vmatpush1.msra.mxu0 0.0
  %3294 = vmatprep.subr.mxu0 0.0
  %3295 = vmatpush1.msra.mxu0 0.0
  %3296 = vmatprep.subr.mxu0 0.0
  %3297 = vmatpush1.msra.mxu0 0.0
  %3298 = vmatprep.subr.mxu0 0.0
  %3299 = vmatpush1.msra.mxu0 0.0
  %3300 = vmatprep.subr.mxu0 0.0
  %3301 = vmatpush1.msra.mxu0 0.0
  %3302 = vmatprep.subr.mxu0 0.0
  %3303 = vmatpush1.msra.mxu0 0.0
  %3304 = vmatprep.subr.mxu0 0.0
  %3305 = vmatpush1.msra.mxu0 0.0
  %3306 = vmatprep.subr.mxu0 0.0
  %3307 = vmatpush1.msra.mxu0 0.0
  %3308 = vmatprep.subr.mxu0 0.0
  %3309 = vmatpush1.msra.mxu0 0.0
  %3310 = vmatprep.subr.mxu0 0.0
  %3311 = vmatpush1.msra.mxu0 0.0
  %3312 = vmatprep.subr.mxu0 0.0
  %3313 = vmatpush1.msra.mxu0 0.0
  %3314 = vmatprep.subr.mxu0 0.0
  %3315 = vmatpush1.msra.mxu0 0.0
  %3316 = vmatprep.subr.mxu0 0.0
  %3317 = vmatpush1.msra.mxu0 0.0
  %3318 = vmatprep.subr.mxu0 0.0
  %3319 = vmatpush1.msra.mxu0 0.0
  %3320 = vmatprep.subr.mxu0 0.0
  %3321 = vmatpush1.msra.mxu0 0.0
  %3322 = vmatprep.mubr.f32.mxu0 0.0
  %3323 = vmatmul.mubr.f32.gmra.mrb[0].mxu0 %v3176
  %v3324 = vpop.f32.mrb[0].mxu0
  %v3325 = vadd.f32 %v3090, %v3324
  %v3326 = vpop.f32.mrb[0].mxu0
  %v3327 = vadd.f32 %v3092, %v3326
  %3328 = vmatprep.mubr.f32.mxu0 0.0
  %3329 = vmatmul.mubr.f32.gmra.mrb[0].mxu0 %v3179
  %v3330 = vpop.f32.mrb[0].mxu0
  %v3331 = vadd.f32 %v3096, %v3330
  %v3332 = vpop.f32.mrb[0].mxu0
  %v3333 = vadd.f32 %v3098, %v3332
  %3334 = vdwg.mxu0
  %3335 = vmatprep.subr.mxu0 %v2872
  %3336 = vmatpush1.msra.mxu0 %v2871
  %3337 = vmatprep.subr.mxu0 %v2878
  %3338 = vmatpush1.msra.mxu0 %v2877
  %3339 = vmatprep.subr.mxu0 0.0
  %3340 = vmatpush1.msra.mxu0 0.0
  %3341 = vmatprep.subr.mxu0 0.0
  %3342 = vmatpush1.msra.mxu0 0.0
  %3343 = vmatprep.subr.mxu0 0.0
  %3344 = vmatpush1.msra.mxu0 0.0
  %3345 = vmatprep.subr.mxu0 0.0
  %3346 = vmatpush1.msra.mxu0 0.0
  %3347 = vmatprep.subr.mxu0 0.0
  %3348 = vmatpush1.msra.mxu0 0.0
  %3349 = vmatprep.subr.mxu0 0.0
  %3350 = vmatpush1.msra.mxu0 0.0
  %3351 = vmatprep.subr.mxu0 0.0
  %3352 = vmatpush1.msra.mxu0 0.0
  %3353 = vmatprep.subr.mxu0 0.0
  %3354 = vmatpush1.msra.mxu0 0.0
  %3355 = vmatprep.subr.mxu0 0.0
  %3356 = vmatpush1.msra.mxu0 0.0
  %3357 = vmatprep.subr.mxu0 0.0
  %3358 = vmatpush1.msra.mxu0 0.0
  %3359 = vmatprep.subr.mxu0 0.0
  %3360 = vmatpush1.msra.mxu0 0.0
  %3361 = vmatprep.subr.mxu0 0.0
  %3362 = vmatpush1.msra.mxu0 0.0
  %3363 = vmatprep.subr.mxu0 0.0
  %3364 = vmatpush1.msra.mxu0 0.0
  %3365 = vmatprep.subr.mxu0 0.0
  %3366 = vmatpush1.msra.mxu0 0.0
  %3367 = vmatprep.subr.mxu0 0.0
  %3368 = vmatpush1.msra.mxu0 0.0
  %3369 = vmatprep.subr.mxu0 0.0
  %3370 = vmatpush1.msra.mxu0 0.0
  %3371 = vmatprep.subr.mxu0 0.0
  %3372 = vmatpush1.msra.mxu0 0.0
  %3373 = vmatprep.subr.mxu0 0.0
  %3374 = vmatpush1.msra.mxu0 0.0
  %3375 = vmatprep.subr.mxu0 0.0
  %3376 = vmatpush1.msra.mxu0 0.0
  %3377 = vmatprep.subr.mxu0 0.0
  %3378 = vmatpush1.msra.mxu0 0.0
  %3379 = vmatprep.subr.mxu0 0.0
  %3380 = vmatpush1.msra.mxu0 0.0
  %3381 = vmatprep.subr.mxu0 0.0
  %3382 = vmatpush1.msra.mxu0 0.0
  %3383 = vmatprep.subr.mxu0 0.0
  %3384 = vmatpush1.msra.mxu0 0.0
  %3385 = vmatprep.subr.mxu0 0.0
  %3386 = vmatpush1.msra.mxu0 0.0
  %3387 = vmatprep.subr.mxu0 0.0
  %3388 = vmatpush1.msra.mxu0 0.0
  %3389 = vmatprep.subr.mxu0 0.0
  %3390 = vmatpush1.msra.mxu0 0.0
  %3391 = vmatprep.subr.mxu0 0.0
  %3392 = vmatpush1.msra.mxu0 0.0
  %3393 = vmatprep.subr.mxu0 0.0
  %3394 = vmatpush1.msra.mxu0 0.0
  %3395 = vmatprep.subr.mxu0 0.0
  %3396 = vmatpush1.msra.mxu0 0.0
  %3397 = vmatprep.subr.mxu0 0.0
  %3398 = vmatpush1.msra.mxu0 0.0
  %3399 = vmatprep.mubr.f32.mxu0 0.0
  %3400 = vmatmul.mubr.f32.gmra.mrb[0].mxu0 %v3176
  %v3401 = vpop.f32.mrb[0].mxu0
  %v3402 = vadd.f32 %v3167, %v3401
  %v3403 = vpop.f32.mrb[0].mxu0
  %3404 = vmatprep.mubr.f32.mxu0 0.0
  %3405 = vmatmul.mubr.f32.gmra.mrb[0].mxu0 %v3179
  %v3406 = vpop.f32.mrb[0].mxu0
  %v3407 = vadd.f32 %v3172, %v3406
  %v3408 = vpop.f32.mrb[0].mxu0
  %3409 = vdwg.mxu0
  %s3410 = scalar_lea.vmem %s2, 32
  %v3411 = vld [vmem:[%s3410] sm:$0xff]
  %v3412 = vld [vmem:[%s3410 + $0x8] sm:$0xff]
  %3413 = vrot.lane.b32.xlu0 %v2867, 126
  %v3414 = vpop.permute.xlu0 %3413
  %3415 = vrot.lane.b32.xlu0 %v2868, 126
  %v3416 = vpop.permute.xlu0 %3415
  %3417 = vrot.lane.b32.xlu0 %v2869, 126
  %v3418 = vpop.permute.xlu0 %3417
  %3419 = vrot.lane.b32.xlu0 %v2870, 126
  %v3420 = vpop.permute.xlu0 %3419
  %3421 = vrot.lane.b32.xlu0 %v2871, 126
  %v3422 = vpop.permute.xlu0 %3421
  %3423 = vrot.lane.b32.xlu0 %v2872, 126
  %v3424 = vpop.permute.xlu0 %3423
  %3425 = vrot.lane.b32.xlu0 %v2873, 126
  %v3426 = vpop.permute.xlu0 %3425
  %3427 = vrot.lane.b32.xlu0 %v2874, 126
  %v3428 = vpop.permute.xlu0 %3427
  %3429 = vrot.lane.b32.xlu0 %v2875, 126
  %v3430 = vpop.permute.xlu0 %3429
  %3431 = vrot.lane.b32.xlu0 %v2876, 126
  %v3432 = vpop.permute.xlu0 %3431
  %3433 = vrot.lane.b32.xlu0 %v2877, 126
  %v3434 = vpop.permute.xlu0 %3433
  %3435 = vrot.lane.b32.xlu0 %v2878, 126
  %v3436 = vpop.permute.xlu0 %3435
  %v3437 = vsel %vm608, %v3414, %v3416
  %v3438 = vsel %vm608, %v3416, %v3418
  %v3439 = vsel %vm608, %v3418, %v3420
  %v3440 = vsel %vm608, %v3420, %v3422
  %v3441 = vsel %vm608, %v3422, %v3424
  %v3442 = vsel %vm608, %v3426, %v3428
  %v3443 = vsel %vm608, %v3428, %v3430
  %v3444 = vsel %vm608, %v3430, %v3432
  %v3445 = vsel %vm608, %v3432, %v3434
  %v3446 = vsel %vm608, %v3434, %v3436
  %v3460 = vsel %vm110, %v3411, 0
  %v3463 = vsel %vm110, %v3412, 0
  %3465 = vmatprep.subr.mxu0 %v3438
  %3466 = vmatpush1.msra.mxu0 %v3437
  %3467 = vmatprep.subr.mxu0 %v3443
  %3468 = vmatpush1.msra.mxu0 %v3442
  %3469 = vmatprep.subr.mxu0 0.0
  %3470 = vmatpush1.msra.mxu0 0.0
  %3471 = vmatprep.subr.mxu0 0.0
  %3472 = vmatpush1.msra.mxu0 0.0
  %3473 = vmatprep.subr.mxu0 0.0
  %3474 = vmatpush1.msra.mxu0 0.0
  %3475 = vmatprep.subr.mxu0 0.0
  %3476 = vmatpush1.msra.mxu0 0.0
  %3477 = vmatprep.subr.mxu0 0.0
  %3478 = vmatpush1.msra.mxu0 0.0
  %3479 = vmatprep.subr.mxu0 0.0
  %3480 = vmatpush1.msra.mxu0 0.0
  %3481 = vmatprep.subr.mxu0 0.0
  %3482 = vmatpush1.msra.mxu0 0.0
  %3483 = vmatprep.subr.mxu0 0.0
  %3484 = vmatpush1.msra.mxu0 0.0
  %3485 = vmatprep.subr.mxu0 0.0
  %3486 = vmatpush1.msra.mxu0 0.0
  %3487 = vmatprep.subr.mxu0 0.0
  %3488 = vmatpush1.msra.mxu0 0.0
  %3489 = vmatprep.subr.mxu0 0.0
  %3490 = vmatpush1.msra.mxu0 0.0
  %3491 = vmatprep.subr.mxu0 0.0
  %3492 = vmatpush1.msra.mxu0 0.0
  %3493 = vmatprep.subr.mxu0 0.0
  %3494 = vmatpush1.msra.mxu0 0.0
  %3495 = vmatprep.subr.mxu0 0.0
  %3496 = vmatpush1.msra.mxu0 0.0
  %3497 = vmatprep.subr.mxu0 0.0
  %3498 = vmatpush1.msra.mxu0 0.0
  %3499 = vmatprep.subr.mxu0 0.0
  %3500 = vmatpush1.msra.mxu0 0.0
  %3501 = vmatprep.subr.mxu0 0.0
  %3502 = vmatpush1.msra.mxu0 0.0
  %3503 = vmatprep.subr.mxu0 0.0
  %3504 = vmatpush1.msra.mxu0 0.0
  %3505 = vmatprep.subr.mxu0 0.0
  %3506 = vmatpush1.msra.mxu0 0.0
  %3507 = vmatprep.subr.mxu0 0.0
  %3508 = vmatpush1.msra.mxu0 0.0
  %3509 = vmatprep.subr.mxu0 0.0
  %3510 = vmatpush1.msra.mxu0 0.0
  %3511 = vmatprep.subr.mxu0 0.0
  %3512 = vmatpush1.msra.mxu0 0.0
  %3513 = vmatprep.subr.mxu0 0.0
  %3514 = vmatpush1.msra.mxu0 0.0
  %3515 = vmatprep.subr.mxu0 0.0
  %3516 = vmatpush1.msra.mxu0 0.0
  %3517 = vmatprep.subr.mxu0 0.0
  %3518 = vmatpush1.msra.mxu0 0.0
  %3519 = vmatprep.subr.mxu0 0.0
  %3520 = vmatpush1.msra.mxu0 0.0
  %3521 = vmatprep.subr.mxu0 0.0
  %3522 = vmatpush1.msra.mxu0 0.0
  %3523 = vmatprep.subr.mxu0 0.0
  %3524 = vmatpush1.msra.mxu0 0.0
  %3525 = vmatprep.subr.mxu0 0.0
  %3526 = vmatpush1.msra.mxu0 0.0
  %3527 = vmatprep.subr.mxu0 0.0
  %3528 = vmatpush1.msra.mxu0 0.0
  %3529 = vmatprep.mubr.f32.mxu0 0.0
  %3530 = vmatmul.mubr.f32.gmra.mrb[0].mxu0 %v3460
  %v3531 = vpop.f32.mrb[0].mxu0
  %v3532 = vadd.f32 0.0, %v3531
  %v3533 = vpop.f32.mrb[0].mxu0
  %v3534 = vadd.f32 0.0, %v3533
  %3535 = vmatprep.mubr.f32.mxu0 0.0
  %3536 = vmatmul.mubr.f32.gmra.mrb[0].mxu0 %v3463
  %v3537 = vpop.f32.mrb[0].mxu0
  %v3538 = vadd.f32 0.0, %v3537
  %v3539 = vpop.f32.mrb[0].mxu0
  %v3540 = vadd.f32 0.0, %v3539
  %3541 = vdwg.mxu0
  %3542 = vmatprep.subr.mxu0 %v3440
  %3543 = vmatpush1.msra.mxu0 %v3439
  %3544 = vmatprep.subr.mxu0 %v3445
  %3545 = vmatpush1.msra.mxu0 %v3444
  %3546 = vmatprep.subr.mxu0 0.0
  %3547 = vmatpush1.msra.mxu0 0.0
  %3548 = vmatprep.subr.mxu0 0.0
  %3549 = vmatpush1.msra.mxu0 0.0
  %3550 = vmatprep.subr.mxu0 0.0
  %3551 = vmatpush1.msra.mxu0 0.0
  %3552 = vmatprep.subr.mxu0 0.0
  %3553 = vmatpush1.msra.mxu0 0.0
  %3554 = vmatprep.subr.mxu0 0.0
  %3555 = vmatpush1.msra.mxu0 0.0
  %3556 = vmatprep.subr.mxu0 0.0
  %3557 = vmatpush1.msra.mxu0 0.0
  %3558 = vmatprep.subr.mxu0 0.0
  %3559 = vmatpush1.msra.mxu0 0.0
  %3560 = vmatprep.subr.mxu0 0.0
  %3561 = vmatpush1.msra.mxu0 0.0
  %3562 = vmatprep.subr.mxu0 0.0
  %3563 = vmatpush1.msra.mxu0 0.0
  %3564 = vmatprep.subr.mxu0 0.0
  %3565 = vmatpush1.msra.mxu0 0.0
  %3566 = vmatprep.subr.mxu0 0.0
  %3567 = vmatpush1.msra.mxu0 0.0
  %3568 = vmatprep.subr.mxu0 0.0
  %3569 = vmatpush1.msra.mxu0 0.0
  %3570 = vmatprep.subr.mxu0 0.0
  %3571 = vmatpush1.msra.mxu0 0.0
  %3572 = vmatprep.subr.mxu0 0.0
  %3573 = vmatpush1.msra.mxu0 0.0
  %3574 = vmatprep.subr.mxu0 0.0
  %3575 = vmatpush1.msra.mxu0 0.0
  %3576 = vmatprep.subr.mxu0 0.0
  %3577 = vmatpush1.msra.mxu0 0.0
  %3578 = vmatprep.subr.mxu0 0.0
  %3579 = vmatpush1.msra.mxu0 0.0
  %3580 = vmatprep.subr.mxu0 0.0
  %3581 = vmatpush1.msra.mxu0 0.0
  %3582 = vmatprep.subr.mxu0 0.0
  %3583 = vmatpush1.msra.mxu0 0.0
  %3584 = vmatprep.subr.mxu0 0.0
  %3585 = vmatpush1.msra.mxu0 0.0
  %3586 = vmatprep.subr.mxu0 0.0
  %3587 = vmatpush1.msra.mxu0 0.0
  %3588 = vmatprep.subr.mxu0 0.0
  %3589 = vmatpush1.msra.mxu0 0.0
  %3590 = vmatprep.subr.mxu0 0.0
  %3591 = vmatpush1.msra.mxu0 0.0
  %3592 = vmatprep.subr.mxu0 0.0
  %3593 = vmatpush1.msra.mxu0 0.0
  %3594 = vmatprep.subr.mxu0 0.0
  %3595 = vmatpush1.msra.mxu0 0.0
  %3596 = vmatprep.subr.mxu0 0.0
  %3597 = vmatpush1.msra.mxu0 0.0
  %3598 = vmatprep.subr.mxu0 0.0
  %3599 = vmatpush1.msra.mxu0 0.0
  %3600 = vmatprep.subr.mxu0 0.0
  %3601 = vmatpush1.msra.mxu0 0.0
  %3602 = vmatprep.subr.mxu0 0.0
  %3603 = vmatpush1.msra.mxu0 0.0
  %3604 = vmatprep.subr.mxu0 0.0
  %3605 = vmatpush1.msra.mxu0 0.0
  %3606 = vmatprep.mubr.f32.mxu0 0.0
  %3607 = vmatmul.mubr.f32.gmra.mrb[0].mxu0 %v3460
  %v3608 = vpop.f32.mrb[0].mxu0
  %v3609 = vadd.f32 0.0, %v3608
  %v3610 = vpop.f32.mrb[0].mxu0
  %v3611 = vadd.f32 0.0, %v3610
  %3612 = vmatprep.mubr.f32.mxu0 0.0
  %3613 = vmatmul.mubr.f32.gmra.mrb[0].mxu0 %v3463
  %v3614 = vpop.f32.mrb[0].mxu0
  %v3615 = vadd.f32 0.0, %v3614
  %v3616 = vpop.f32.mrb[0].mxu0
  %v3617 = vadd.f32 0.0, %v3616
  %3618 = vdwg.mxu0
  %3619 = vmatprep.subr.mxu0 %v3424
  %3620 = vmatpush1.msra.mxu0 %v3441
  %3621 = vmatprep.subr.mxu0 %v3436
  %3622 = vmatpush1.msra.mxu0 %v3446
  %3623 = vmatprep.subr.mxu0 0.0
  %3624 = vmatpush1.msra.mxu0 0.0
  %3625 = vmatprep.subr.mxu0 0.0
  %3626 = vmatpush1.msra.mxu0 0.0
  %3627 = vmatprep.subr.mxu0 0.0
  %3628 = vmatpush1.msra.mxu0 0.0
  %3629 = vmatprep.subr.mxu0 0.0
  %3630 = vmatpush1.msra.mxu0 0.0
  %3631 = vmatprep.subr.mxu0 0.0
  %3632 = vmatpush1.msra.mxu0 0.0
  %3633 = vmatprep.subr.mxu0 0.0
  %3634 = vmatpush1.msra.mxu0 0.0
  %3635 = vmatprep.subr.mxu0 0.0
  %3636 = vmatpush1.msra.mxu0 0.0
  %3637 = vmatprep.subr.mxu0 0.0
  %3638 = vmatpush1.msra.mxu0 0.0
  %3639 = vmatprep.subr.mxu0 0.0
  %3640 = vmatpush1.msra.mxu0 0.0
  %3641 = vmatprep.subr.mxu0 0.0
  %3642 = vmatpush1.msra.mxu0 0.0
  %3643 = vmatprep.subr.mxu0 0.0
  %3644 = vmatpush1.msra.mxu0 0.0
  %3645 = vmatprep.subr.mxu0 0.0
  %3646 = vmatpush1.msra.mxu0 0.0
  %3647 = vmatprep.subr.mxu0 0.0
  %3648 = vmatpush1.msra.mxu0 0.0
  %3649 = vmatprep.subr.mxu0 0.0
  %3650 = vmatpush1.msra.mxu0 0.0
  %3651 = vmatprep.subr.mxu0 0.0
  %3652 = vmatpush1.msra.mxu0 0.0
  %3653 = vmatprep.subr.mxu0 0.0
  %3654 = vmatpush1.msra.mxu0 0.0
  %3655 = vmatprep.subr.mxu0 0.0
  %3656 = vmatpush1.msra.mxu0 0.0
  %3657 = vmatprep.subr.mxu0 0.0
  %3658 = vmatpush1.msra.mxu0 0.0
  %3659 = vmatprep.subr.mxu0 0.0
  %3660 = vmatpush1.msra.mxu0 0.0
  %3661 = vmatprep.subr.mxu0 0.0
  %3662 = vmatpush1.msra.mxu0 0.0
  %3663 = vmatprep.subr.mxu0 0.0
  %3664 = vmatpush1.msra.mxu0 0.0
  %3665 = vmatprep.subr.mxu0 0.0
  %3666 = vmatpush1.msra.mxu0 0.0
  %3667 = vmatprep.subr.mxu0 0.0
  %3668 = vmatpush1.msra.mxu0 0.0
  %3669 = vmatprep.subr.mxu0 0.0
  %3670 = vmatpush1.msra.mxu0 0.0
  %3671 = vmatprep.subr.mxu0 0.0
  %3672 = vmatpush1.msra.mxu0 0.0
  %3673 = vmatprep.subr.mxu0 0.0
  %3674 = vmatpush1.msra.mxu0 0.0
  %3675 = vmatprep.subr.mxu0 0.0
  %3676 = vmatpush1.msra.mxu0 0.0
  %3677 = vmatprep.subr.mxu0 0.0
  %3678 = vmatpush1.msra.mxu0 0.0
  %3679 = vmatprep.subr.mxu0 0.0
  %3680 = vmatpush1.msra.mxu0 0.0
  %3681 = vmatprep.subr.mxu0 0.0
  %3682 = vmatpush1.msra.mxu0 0.0
  %3683 = vmatprep.mubr.f32.mxu0 0.0
  %3684 = vmatmul.mubr.f32.gmra.mrb[0].mxu0 %v3460
  %v3685 = vpop.f32.mrb[0].mxu0
  %v3686 = vadd.f32 0.0, %v3685
  %v3687 = vpop.f32.mrb[0].mxu0
  %3688 = vmatprep.mubr.f32.mxu0 0.0
  %3689 = vmatmul.mubr.f32.gmra.mrb[0].mxu0 %v3463
  %v3690 = vpop.f32.mrb[0].mxu0
  %v3691 = vadd.f32 0.0, %v3690
  %v3692 = vpop.f32.mrb[0].mxu0
  %3693 = vdwg.mxu0
  %v3694 = vadd.f32 %v3248, %v3532
  %v3695 = vadd.f32 %v3250, %v3534
  %v3696 = vadd.f32 %v3325, %v3609
  %v3697 = vadd.f32 %v3327, %v3611
  %v3698 = vadd.f32 %v3402, %v3686
  %v3699 = vadd.f32 %v3254, %v3538
  %v3700 = vadd.f32 %v3256, %v3540
  %v3701 = vadd.f32 %v3331, %v3615
  %v3702 = vadd.f32 %v3333, %v3617
  %v3703 = vadd.f32 %v3407, %v3691
  %s3704 = scalar_lea.vmem %s2, 48
  %v3705 = vld [vmem:[%s3704] sm:$0xff]
  %v3706 = vld [vmem:[%s3704 + $0x8] sm:$0xff]
  %3707 = vrot.lane.b32.xlu0 %v2867, 110
  %v3708 = vpop.permute.xlu0 %3707
  %3709 = vrot.lane.b32.xlu0 %v2868, 110
  %v3710 = vpop.permute.xlu0 %3709
  %3711 = vrot.lane.b32.xlu0 %v2869, 110
  %v3712 = vpop.permute.xlu0 %3711
  %3713 = vrot.lane.b32.xlu0 %v2870, 110
  %v3714 = vpop.permute.xlu0 %3713
  %3715 = vrot.lane.b32.xlu0 %v2871, 110
  %v3716 = vpop.permute.xlu0 %3715
  %3717 = vrot.lane.b32.xlu0 %v2872, 110
  %v3718 = vpop.permute.xlu0 %3717
  %3719 = vrot.lane.b32.xlu0 %v2873, 110
  %v3720 = vpop.permute.xlu0 %3719
  %3721 = vrot.lane.b32.xlu0 %v2874, 110
  %v3722 = vpop.permute.xlu0 %3721
  %3723 = vrot.lane.b32.xlu0 %v2875, 110
  %v3724 = vpop.permute.xlu0 %3723
  %3725 = vrot.lane.b32.xlu0 %v2876, 110
  %v3726 = vpop.permute.xlu0 %3725
  %3727 = vrot.lane.b32.xlu0 %v2877, 110
  %v3728 = vpop.permute.xlu0 %3727
  %3729 = vrot.lane.b32.xlu0 %v2878, 110
  %v3730 = vpop.permute.xlu0 %3729
  %v3731 = vsel %vm903, %v3708, %v3710
  %v3732 = vsel %vm903, %v3710, %v3712
  %v3733 = vsel %vm903, %v3712, %v3714
  %v3734 = vsel %vm903, %v3714, %v3716
  %v3735 = vsel %vm903, %v3716, %v3718
  %v3736 = vsel %vm903, %v3720, %v3722
  %v3737 = vsel %vm903, %v3722, %v3724
  %v3738 = vsel %vm903, %v3724, %v3726
  %v3739 = vsel %vm903, %v3726, %v3728
  %v3740 = vsel %vm903, %v3728, %v3730
  %v3754 = vsel %vm110, %v3705, 0
  %v3757 = vsel %vm110, %v3706, 0
  %3759 = vmatprep.subr.mxu0 %v3732
  %3760 = vmatpush1.msra.mxu0 %v3731
  %3761 = vmatprep.subr.mxu0 %v3737
  %3762 = vmatpush1.msra.mxu0 %v3736
  %3763 = vmatprep.subr.mxu0 0.0
  %3764 = vmatpush1.msra.mxu0 0.0
  %3765 = vmatprep.subr.mxu0 0.0
  %3766 = vmatpush1.msra.mxu0 0.0
  %3767 = vmatprep.subr.mxu0 0.0
  %3768 = vmatpush1.msra.mxu0 0.0
  %3769 = vmatprep.subr.mxu0 0.0
  %3770 = vmatpush1.msra.mxu0 0.0
  %3771 = vmatprep.subr.mxu0 0.0
  %3772 = vmatpush1.msra.mxu0 0.0
  %3773 = vmatprep.subr.mxu0 0.0
  %3774 = vmatpush1.msra.mxu0 0.0
  %3775 = vmatprep.subr.mxu0 0.0
  %3776 = vmatpush1.msra.mxu0 0.0
  %3777 = vmatprep.subr.mxu0 0.0
  %3778 = vmatpush1.msra.mxu0 0.0
  %3779 = vmatprep.subr.mxu0 0.0
  %3780 = vmatpush1.msra.mxu0 0.0
  %3781 = vmatprep.subr.mxu0 0.0
  %3782 = vmatpush1.msra.mxu0 0.0
  %3783 = vmatprep.subr.mxu0 0.0
  %3784 = vmatpush1.msra.mxu0 0.0
  %3785 = vmatprep.subr.mxu0 0.0
  %3786 = vmatpush1.msra.mxu0 0.0
  %3787 = vmatprep.subr.mxu0 0.0
  %3788 = vmatpush1.msra.mxu0 0.0
  %3789 = vmatprep.subr.mxu0 0.0
  %3790 = vmatpush1.msra.mxu0 0.0
  %3791 = vmatprep.subr.mxu0 0.0
  %3792 = vmatpush1.msra.mxu0 0.0
  %3793 = vmatprep.subr.mxu0 0.0
  %3794 = vmatpush1.msra.mxu0 0.0
  %3795 = vmatprep.subr.mxu0 0.0
  %3796 = vmatpush1.msra.mxu0 0.0
  %3797 = vmatprep.subr.mxu0 0.0
  %3798 = vmatpush1.msra.mxu0 0.0
  %3799 = vmatprep.subr.mxu0 0.0
  %3800 = vmatpush1.msra.mxu0 0.0
  %3801 = vmatprep.subr.mxu0 0.0
  %3802 = vmatpush1.msra.mxu0 0.0
  %3803 = vmatprep.subr.mxu0 0.0
  %3804 = vmatpush1.msra.mxu0 0.0
  %3805 = vmatprep.subr.mxu0 0.0
  %3806 = vmatpush1.msra.mxu0 0.0
  %3807 = vmatprep.subr.mxu0 0.0
  %3808 = vmatpush1.msra.mxu0 0.0
  %3809 = vmatprep.subr.mxu0 0.0
  %3810 = vmatpush1.msra.mxu0 0.0
  %3811 = vmatprep.subr.mxu0 0.0
  %3812 = vmatpush1.msra.mxu0 0.0
  %3813 = vmatprep.subr.mxu0 0.0
  %3814 = vmatpush1.msra.mxu0 0.0
  %3815 = vmatprep.subr.mxu0 0.0
  %3816 = vmatpush1.msra.mxu0 0.0
  %3817 = vmatprep.subr.mxu0 0.0
  %3818 = vmatpush1.msra.mxu0 0.0
  %3819 = vmatprep.subr.mxu0 0.0
  %3820 = vmatpush1.msra.mxu0 0.0
  %3821 = vmatprep.subr.mxu0 0.0
  %3822 = vmatpush1.msra.mxu0 0.0
  %3823 = vmatprep.mubr.f32.mxu0 0.0
  %3824 = vmatmul.mubr.f32.gmra.mrb[0].mxu0 %v3754
  %v3825 = vpop.f32.mrb[0].mxu0
  %v3826 = vadd.f32 0.0, %v3825
  %v3827 = vpop.f32.mrb[0].mxu0
  %v3828 = vadd.f32 0.0, %v3827
  %3829 = vmatprep.mubr.f32.mxu0 0.0
  %3830 = vmatmul.mubr.f32.gmra.mrb[0].mxu0 %v3757
  %v3831 = vpop.f32.mrb[0].mxu0
  %v3832 = vadd.f32 0.0, %v3831
  %v3833 = vpop.f32.mrb[0].mxu0
  %v3834 = vadd.f32 0.0, %v3833
  %3835 = vdwg.mxu0
  %3836 = vmatprep.subr.mxu0 %v3734
  %3837 = vmatpush1.msra.mxu0 %v3733
  %3838 = vmatprep.subr.mxu0 %v3739
  %3839 = vmatpush1.msra.mxu0 %v3738
  %3840 = vmatprep.subr.mxu0 0.0
  %3841 = vmatpush1.msra.mxu0 0.0
  %3842 = vmatprep.subr.mxu0 0.0
  %3843 = vmatpush1.msra.mxu0 0.0
  %3844 = vmatprep.subr.mxu0 0.0
  %3845 = vmatpush1.msra.mxu0 0.0
  %3846 = vmatprep.subr.mxu0 0.0
  %3847 = vmatpush1.msra.mxu0 0.0
  %3848 = vmatprep.subr.mxu0 0.0
  %3849 = vmatpush1.msra.mxu0 0.0
  %3850 = vmatprep.subr.mxu0 0.0
  %3851 = vmatpush1.msra.mxu0 0.0
  %3852 = vmatprep.subr.mxu0 0.0
  %3853 = vmatpush1.msra.mxu0 0.0
  %3854 = vmatprep.subr.mxu0 0.0
  %3855 = vmatpush1.msra.mxu0 0.0
  %3856 = vmatprep.subr.mxu0 0.0
  %3857 = vmatpush1.msra.mxu0 0.0
  %3858 = vmatprep.subr.mxu0 0.0
  %3859 = vmatpush1.msra.mxu0 0.0
  %3860 = vmatprep.subr.mxu0 0.0
  %3861 = vmatpush1.msra.mxu0 0.0
  %3862 = vmatprep.subr.mxu0 0.0
  %3863 = vmatpush1.msra.mxu0 0.0
  %3864 = vmatprep.subr.mxu0 0.0
  %3865 = vmatpush1.msra.mxu0 0.0
  %3866 = vmatprep.subr.mxu0 0.0
  %3867 = vmatpush1.msra.mxu0 0.0
  %3868 = vmatprep.subr.mxu0 0.0
  %3869 = vmatpush1.msra.mxu0 0.0
  %3870 = vmatprep.subr.mxu0 0.0
  %3871 = vmatpush1.msra.mxu0 0.0
  %3872 = vmatprep.subr.mxu0 0.0
  %3873 = vmatpush1.msra.mxu0 0.0
  %3874 = vmatprep.subr.mxu0 0.0
  %3875 = vmatpush1.msra.mxu0 0.0
  %3876 = vmatprep.subr.mxu0 0.0
  %3877 = vmatpush1.msra.mxu0 0.0
  %3878 = vmatprep.subr.mxu0 0.0
  %3879 = vmatpush1.msra.mxu0 0.0
  %3880 = vmatprep.subr.mxu0 0.0
  %3881 = vmatpush1.msra.mxu0 0.0
  %3882 = vmatprep.subr.mxu0 0.0
  %3883 = vmatpush1.msra.mxu0 0.0
  %3884 = vmatprep.subr.mxu0 0.0
  %3885 = vmatpush1.msra.mxu0 0.0
  %3886 = vmatprep.subr.mxu0 0.0
  %3887 = vmatpush1.msra.mxu0 0.0
  %3888 = vmatprep.subr.mxu0 0.0
  %3889 = vmatpush1.msra.mxu0 0.0
  %3890 = vmatprep.subr.mxu0 0.0
  %3891 = vmatpush1.msra.mxu0 0.0
  %3892 = vmatprep.subr.mxu0 0.0
  %3893 = vmatpush1.msra.mxu0 0.0
  %3894 = vmatprep.subr.mxu0 0.0
  %3895 = vmatpush1.msra.mxu0 0.0
  %3896 = vmatprep.subr.mxu0 0.0
  %3897 = vmatpush1.msra.mxu0 0.0
  %3898 = vmatprep.subr.mxu0 0.0
  %3899 = vmatpush1.msra.mxu0 0.0
  %3900 = vmatprep.mubr.f32.mxu0 0.0
  %3901 = vmatmul.mubr.f32.gmra.mrb[0].mxu0 %v3754
  %v3902 = vpop.f32.mrb[0].mxu0
  %v3903 = vadd.f32 0.0, %v3902
  %v3904 = vpop.f32.mrb[0].mxu0
  %v3905 = vadd.f32 0.0, %v3904
  %3906 = vmatprep.mubr.f32.mxu0 0.0
  %3907 = vmatmul.mubr.f32.gmra.mrb[0].mxu0 %v3757
  %v3908 = vpop.f32.mrb[0].mxu0
  %v3909 = vadd.f32 0.0, %v3908
  %v3910 = vpop.f32.mrb[0].mxu0
  %v3911 = vadd.f32 0.0, %v3910
  %3912 = vdwg.mxu0
  %3913 = vmatprep.subr.mxu0 %v3718
  %3914 = vmatpush1.msra.mxu0 %v3735
  %3915 = vmatprep.subr.mxu0 %v3730
  %3916 = vmatpush1.msra.mxu0 %v3740
  %3917 = vmatprep.subr.mxu0 0.0
  %3918 = vmatpush1.msra.mxu0 0.0
  %3919 = vmatprep.subr.mxu0 0.0
  %3920 = vmatpush1.msra.mxu0 0.0
  %3921 = vmatprep.subr.mxu0 0.0
  %3922 = vmatpush1.msra.mxu0 0.0
  %3923 = vmatprep.subr.mxu0 0.0
  %3924 = vmatpush1.msra.mxu0 0.0
  %3925 = vmatprep.subr.mxu0 0.0
  %3926 = vmatpush1.msra.mxu0 0.0
  %3927 = vmatprep.subr.mxu0 0.0
  %3928 = vmatpush1.msra.mxu0 0.0
  %3929 = vmatprep.subr.mxu0 0.0
  %3930 = vmatpush1.msra.mxu0 0.0
  %3931 = vmatprep.subr.mxu0 0.0
  %3932 = vmatpush1.msra.mxu0 0.0
  %3933 = vmatprep.subr.mxu0 0.0
  %3934 = vmatpush1.msra.mxu0 0.0
  %3935 = vmatprep.subr.mxu0 0.0
  %3936 = vmatpush1.msra.mxu0 0.0
  %3937 = vmatprep.subr.mxu0 0.0
  %3938 = vmatpush1.msra.mxu0 0.0
  %3939 = vmatprep.subr.mxu0 0.0
  %3940 = vmatpush1.msra.mxu0 0.0
  %3941 = vmatprep.subr.mxu0 0.0
  %3942 = vmatpush1.msra.mxu0 0.0
  %3943 = vmatprep.subr.mxu0 0.0
  %3944 = vmatpush1.msra.mxu0 0.0
  %3945 = vmatprep.subr.mxu0 0.0
  %3946 = vmatpush1.msra.mxu0 0.0
  %3947 = vmatprep.subr.mxu0 0.0
  %3948 = vmatpush1.msra.mxu0 0.0
  %3949 = vmatprep.subr.mxu0 0.0
  %3950 = vmatpush1.msra.mxu0 0.0
  %3951 = vmatprep.subr.mxu0 0.0
  %3952 = vmatpush1.msra.mxu0 0.0
  %3953 = vmatprep.subr.mxu0 0.0
  %3954 = vmatpush1.msra.mxu0 0.0
  %3955 = vmatprep.subr.mxu0 0.0
  %3956 = vmatpush1.msra.mxu0 0.0
  %3957 = vmatprep.subr.mxu0 0.0
  %3958 = vmatpush1.msra.mxu0 0.0
  %3959 = vmatprep.subr.mxu0 0.0
  %3960 = vmatpush1.msra.mxu0 0.0
  %3961 = vmatprep.subr.mxu0 0.0
  %3962 = vmatpush1.msra.mxu0 0.0
  %3963 = vmatprep.subr.mxu0 0.0
  %3964 = vmatpush1.msra.mxu0 0.0
  %3965 = vmatprep.subr.mxu0 0.0
  %3966 = vmatpush1.msra.mxu0 0.0
  %3967 = vmatprep.subr.mxu0 0.0
  %3968 = vmatpush1.msra.mxu0 0.0
  %3969 = vmatprep.subr.mxu0 0.0
  %3970 = vmatpush1.msra.mxu0 0.0
  %3971 = vmatprep.subr.mxu0 0.0
  %3972 = vmatpush1.msra.mxu0 0.0
  %3973 = vmatprep.subr.mxu0 0.0
  %3974 = vmatpush1.msra.mxu0 0.0
  %3975 = vmatprep.subr.mxu0 0.0
  %3976 = vmatpush1.msra.mxu0 0.0
  %3977 = vmatprep.mubr.f32.mxu0 0.0
  %3978 = vmatmul.mubr.f32.gmra.mrb[0].mxu0 %v3754
  %v3979 = vpop.f32.mrb[0].mxu0
  %v3980 = vadd.f32 0.0, %v3979
  %v3981 = vpop.f32.mrb[0].mxu0
  %3982 = vmatprep.mubr.f32.mxu0 0.0
  %3983 = vmatmul.mubr.f32.gmra.mrb[0].mxu0 %v3757
  %v3984 = vpop.f32.mrb[0].mxu0
  %v3985 = vadd.f32 0.0, %v3984
  %v3986 = vpop.f32.mrb[0].mxu0
  %3987 = vdwg.mxu0
  %v3988 = vadd.f32 %v3694, %v3826
  %v3989 = vadd.f32 %v3695, %v3828
  %v3990 = vadd.f32 %v3696, %v3903
  %v3991 = vadd.f32 %v3697, %v3905
  %v3992 = vadd.f32 %v3698, %v3980
  %v3993 = vadd.f32 %v3699, %v3832
  %v3994 = vadd.f32 %v3700, %v3834
  %v3995 = vadd.f32 %v3701, %v3909
  %v3996 = vadd.f32 %v3702, %v3911
  %v3997 = vadd.f32 %v3703, %v3985
  %s3998 = scalar_lea.vmem %s2, 64
  %v3999 = vld [vmem:[%s3998] sm:$0xff]
  %v4000 = vld [vmem:[%s3998 + $0x8] sm:$0xff]
  %4001 = vrot.lane.b32.xlu0 %v2867, 109
  %v4002 = vpop.permute.xlu0 %4001
  %4003 = vrot.lane.b32.xlu0 %v2868, 109
  %v4004 = vpop.permute.xlu0 %4003
  %4005 = vrot.lane.b32.xlu0 %v2869, 109
  %v4006 = vpop.permute.xlu0 %4005
  %4007 = vrot.lane.b32.xlu0 %v2870, 109
  %v4008 = vpop.permute.xlu0 %4007
  %4009 = vrot.lane.b32.xlu0 %v2871, 109
  %v4010 = vpop.permute.xlu0 %4009
  %4011 = vrot.lane.b32.xlu0 %v2872, 109
  %v4012 = vpop.permute.xlu0 %4011
  %4013 = vrot.lane.b32.xlu0 %v2873, 109
  %v4014 = vpop.permute.xlu0 %4013
  %4015 = vrot.lane.b32.xlu0 %v2874, 109
  %v4016 = vpop.permute.xlu0 %4015
  %4017 = vrot.lane.b32.xlu0 %v2875, 109
  %v4018 = vpop.permute.xlu0 %4017
  %4019 = vrot.lane.b32.xlu0 %v2876, 109
  %v4020 = vpop.permute.xlu0 %4019
  %4021 = vrot.lane.b32.xlu0 %v2877, 109
  %v4022 = vpop.permute.xlu0 %4021
  %4023 = vrot.lane.b32.xlu0 %v2878, 109
  %v4024 = vpop.permute.xlu0 %4023
  %v4025 = vsel %vm1198, %v4002, %v4004
  %v4026 = vsel %vm1198, %v4004, %v4006
  %v4027 = vsel %vm1198, %v4006, %v4008
  %v4028 = vsel %vm1198, %v4008, %v4010
  %v4029 = vsel %vm1198, %v4010, %v4012
  %v4030 = vsel %vm1198, %v4014, %v4016
  %v4031 = vsel %vm1198, %v4016, %v4018
  %v4032 = vsel %vm1198, %v4018, %v4020
  %v4033 = vsel %vm1198, %v4020, %v4022
  %v4034 = vsel %vm1198, %v4022, %v4024
  %v4048 = vsel %vm110, %v3999, 0
  %v4051 = vsel %vm110, %v4000, 0
  %4053 = vmatprep.subr.mxu0 %v4026
  %4054 = vmatpush1.msra.mxu0 %v4025
  %4055 = vmatprep.subr.mxu0 %v4031
  %4056 = vmatpush1.msra.mxu0 %v4030
  %4057 = vmatprep.subr.mxu0 0.0
  %4058 = vmatpush1.msra.mxu0 0.0
  %4059 = vmatprep.subr.mxu0 0.0
  %4060 = vmatpush1.msra.mxu0 0.0
  %4061 = vmatprep.subr.mxu0 0.0
  %4062 = vmatpush1.msra.mxu0 0.0
  %4063 = vmatprep.subr.mxu0 0.0
  %4064 = vmatpush1.msra.mxu0 0.0
  %4065 = vmatprep.subr.mxu0 0.0
  %4066 = vmatpush1.msra.mxu0 0.0
  %4067 = vmatprep.subr.mxu0 0.0
  %4068 = vmatpush1.msra.mxu0 0.0
  %4069 = vmatprep.subr.mxu0 0.0
  %4070 = vmatpush1.msra.mxu0 0.0
  %4071 = vmatprep.subr.mxu0 0.0
  %4072 = vmatpush1.msra.mxu0 0.0
  %4073 = vmatprep.subr.mxu0 0.0
  %4074 = vmatpush1.msra.mxu0 0.0
  %4075 = vmatprep.subr.mxu0 0.0
  %4076 = vmatpush1.msra.mxu0 0.0
  %4077 = vmatprep.subr.mxu0 0.0
  %4078 = vmatpush1.msra.mxu0 0.0
  %4079 = vmatprep.subr.mxu0 0.0
  %4080 = vmatpush1.msra.mxu0 0.0
  %4081 = vmatprep.subr.mxu0 0.0
  %4082 = vmatpush1.msra.mxu0 0.0
  %4083 = vmatprep.subr.mxu0 0.0
  %4084 = vmatpush1.msra.mxu0 0.0
  %4085 = vmatprep.subr.mxu0 0.0
  %4086 = vmatpush1.msra.mxu0 0.0
  %4087 = vmatprep.subr.mxu0 0.0
  %4088 = vmatpush1.msra.mxu0 0.0
  %4089 = vmatprep.subr.mxu0 0.0
  %4090 = vmatpush1.msra.mxu0 0.0
  %4091 = vmatprep.subr.mxu0 0.0
  %4092 = vmatpush1.msra.mxu0 0.0
  %4093 = vmatprep.subr.mxu0 0.0
  %4094 = vmatpush1.msra.mxu0 0.0
  %4095 = vmatprep.subr.mxu0 0.0
  %4096 = vmatpush1.msra.mxu0 0.0
  %4097 = vmatprep.subr.mxu0 0.0
  %4098 = vmatpush1.msra.mxu0 0.0
  %4099 = vmatprep.subr.mxu0 0.0
  %4100 = vmatpush1.msra.mxu0 0.0
  %4101 = vmatprep.subr.mxu0 0.0
  %4102 = vmatpush1.msra.mxu0 0.0
  %4103 = vmatprep.subr.mxu0 0.0
  %4104 = vmatpush1.msra.mxu0 0.0
  %4105 = vmatprep.subr.mxu0 0.0
  %4106 = vmatpush1.msra.mxu0 0.0
  %4107 = vmatprep.subr.mxu0 0.0
  %4108 = vmatpush1.msra.mxu0 0.0
  %4109 = vmatprep.subr.mxu0 0.0
  %4110 = vmatpush1.msra.mxu0 0.0
  %4111 = vmatprep.subr.mxu0 0.0
  %4112 = vmatpush1.msra.mxu0 0.0
  %4113 = vmatprep.subr.mxu0 0.0
  %4114 = vmatpush1.msra.mxu0 0.0
  %4115 = vmatprep.subr.mxu0 0.0
  %4116 = vmatpush1.msra.mxu0 0.0
  %4117 = vmatprep.mubr.f32.mxu0 0.0
  %4118 = vmatmul.mubr.f32.gmra.mrb[0].mxu0 %v4048
  %v4119 = vpop.f32.mrb[0].mxu0
  %v4120 = vadd.f32 0.0, %v4119
  %v4121 = vpop.f32.mrb[0].mxu0
  %v4122 = vadd.f32 0.0, %v4121
  %4123 = vmatprep.mubr.f32.mxu0 0.0
  %4124 = vmatmul.mubr.f32.gmra.mrb[0].mxu0 %v4051
  %v4125 = vpop.f32.mrb[0].mxu0
  %v4126 = vadd.f32 0.0, %v4125
  %v4127 = vpop.f32.mrb[0].mxu0
  %v4128 = vadd.f32 0.0, %v4127
  %4129 = vdwg.mxu0
  %4130 = vmatprep.subr.mxu0 %v4028
  %4131 = vmatpush1.msra.mxu0 %v4027
  %4132 = vmatprep.subr.mxu0 %v4033
  %4133 = vmatpush1.msra.mxu0 %v4032
  %4134 = vmatprep.subr.mxu0 0.0
  %4135 = vmatpush1.msra.mxu0 0.0
  %4136 = vmatprep.subr.mxu0 0.0
  %4137 = vmatpush1.msra.mxu0 0.0
  %4138 = vmatprep.subr.mxu0 0.0
  %4139 = vmatpush1.msra.mxu0 0.0
  %4140 = vmatprep.subr.mxu0 0.0
  %4141 = vmatpush1.msra.mxu0 0.0
  %4142 = vmatprep.subr.mxu0 0.0
  %4143 = vmatpush1.msra.mxu0 0.0
  %4144 = vmatprep.subr.mxu0 0.0
  %4145 = vmatpush1.msra.mxu0 0.0
  %4146 = vmatprep.subr.mxu0 0.0
  %4147 = vmatpush1.msra.mxu0 0.0
  %4148 = vmatprep.subr.mxu0 0.0
  %4149 = vmatpush1.msra.mxu0 0.0
  %4150 = vmatprep.subr.mxu0 0.0
  %4151 = vmatpush1.msra.mxu0 0.0
  %4152 = vmatprep.subr.mxu0 0.0
  %4153 = vmatpush1.msra.mxu0 0.0
  %4154 = vmatprep.subr.mxu0 0.0
  %4155 = vmatpush1.msra.mxu0 0.0
  %4156 = vmatprep.subr.mxu0 0.0
  %4157 = vmatpush1.msra.mxu0 0.0
  %4158 = vmatprep.subr.mxu0 0.0
  %4159 = vmatpush1.msra.mxu0 0.0
  %4160 = vmatprep.subr.mxu0 0.0
  %4161 = vmatpush1.msra.mxu0 0.0
  %4162 = vmatprep.subr.mxu0 0.0
  %4163 = vmatpush1.msra.mxu0 0.0
  %4164 = vmatprep.subr.mxu0 0.0
  %4165 = vmatpush1.msra.mxu0 0.0
  %4166 = vmatprep.subr.mxu0 0.0
  %4167 = vmatpush1.msra.mxu0 0.0
  %4168 = vmatprep.subr.mxu0 0.0
  %4169 = vmatpush1.msra.mxu0 0.0
  %4170 = vmatprep.subr.mxu0 0.0
  %4171 = vmatpush1.msra.mxu0 0.0
  %4172 = vmatprep.subr.mxu0 0.0
  %4173 = vmatpush1.msra.mxu0 0.0
  %4174 = vmatprep.subr.mxu0 0.0
  %4175 = vmatpush1.msra.mxu0 0.0
  %4176 = vmatprep.subr.mxu0 0.0
  %4177 = vmatpush1.msra.mxu0 0.0
  %4178 = vmatprep.subr.mxu0 0.0
  %4179 = vmatpush1.msra.mxu0 0.0
  %4180 = vmatprep.subr.mxu0 0.0
  %4181 = vmatpush1.msra.mxu0 0.0
  %4182 = vmatprep.subr.mxu0 0.0
  %4183 = vmatpush1.msra.mxu0 0.0
  %4184 = vmatprep.subr.mxu0 0.0
  %4185 = vmatpush1.msra.mxu0 0.0
  %4186 = vmatprep.subr.mxu0 0.0
  %4187 = vmatpush1.msra.mxu0 0.0
  %4188 = vmatprep.subr.mxu0 0.0
  %4189 = vmatpush1.msra.mxu0 0.0
  %4190 = vmatprep.subr.mxu0 0.0
  %4191 = vmatpush1.msra.mxu0 0.0
  %4192 = vmatprep.subr.mxu0 0.0
  %4193 = vmatpush1.msra.mxu0 0.0
  %4194 = vmatprep.mubr.f32.mxu0 0.0
  %4195 = vmatmul.mubr.f32.gmra.mrb[0].mxu0 %v4048
  %v4196 = vpop.f32.mrb[0].mxu0
  %v4197 = vadd.f32 0.0, %v4196
  %v4198 = vpop.f32.mrb[0].mxu0
  %v4199 = vadd.f32 0.0, %v4198
  %4200 = vmatprep.mubr.f32.mxu0 0.0
  %4201 = vmatmul.mubr.f32.gmra.mrb[0].mxu0 %v4051
  %v4202 = vpop.f32.mrb[0].mxu0
  %v4203 = vadd.f32 0.0, %v4202
  %v4204 = vpop.f32.mrb[0].mxu0
  %v4205 = vadd.f32 0.0, %v4204
  %4206 = vdwg.mxu0
  %4207 = vmatprep.subr.mxu0 %v4012
  %4208 = vmatpush1.msra.mxu0 %v4029
  %4209 = vmatprep.subr.mxu0 %v4024
  %4210 = vmatpush1.msra.mxu0 %v4034
  %4211 = vmatprep.subr.mxu0 0.0
  %4212 = vmatpush1.msra.mxu0 0.0
  %4213 = vmatprep.subr.mxu0 0.0
  %4214 = vmatpush1.msra.mxu0 0.0
  %4215 = vmatprep.subr.mxu0 0.0
  %4216 = vmatpush1.msra.mxu0 0.0
  %4217 = vmatprep.subr.mxu0 0.0
  %4218 = vmatpush1.msra.mxu0 0.0
  %4219 = vmatprep.subr.mxu0 0.0
  %4220 = vmatpush1.msra.mxu0 0.0
  %4221 = vmatprep.subr.mxu0 0.0
  %4222 = vmatpush1.msra.mxu0 0.0
  %4223 = vmatprep.subr.mxu0 0.0
  %4224 = vmatpush1.msra.mxu0 0.0
  %4225 = vmatprep.subr.mxu0 0.0
  %4226 = vmatpush1.msra.mxu0 0.0
  %4227 = vmatprep.subr.mxu0 0.0
  %4228 = vmatpush1.msra.mxu0 0.0
  %4229 = vmatprep.subr.mxu0 0.0
  %4230 = vmatpush1.msra.mxu0 0.0
  %4231 = vmatprep.subr.mxu0 0.0
  %4232 = vmatpush1.msra.mxu0 0.0
  %4233 = vmatprep.subr.mxu0 0.0
  %4234 = vmatpush1.msra.mxu0 0.0
  %4235 = vmatprep.subr.mxu0 0.0
  %4236 = vmatpush1.msra.mxu0 0.0
  %4237 = vmatprep.subr.mxu0 0.0
  %4238 = vmatpush1.msra.mxu0 0.0
  %4239 = vmatprep.subr.mxu0 0.0
  %4240 = vmatpush1.msra.mxu0 0.0
  %4241 = vmatprep.subr.mxu0 0.0
  %4242 = vmatpush1.msra.mxu0 0.0
  %4243 = vmatprep.subr.mxu0 0.0
  %4244 = vmatpush1.msra.mxu0 0.0
  %4245 = vmatprep.subr.mxu0 0.0
  %4246 = vmatpush1.msra.mxu0 0.0
  %4247 = vmatprep.subr.mxu0 0.0
  %4248 = vmatpush1.msra.mxu0 0.0
  %4249 = vmatprep.subr.mxu0 0.0
  %4250 = vmatpush1.msra.mxu0 0.0
  %4251 = vmatprep.subr.mxu0 0.0
  %4252 = vmatpush1.msra.mxu0 0.0
  %4253 = vmatprep.subr.mxu0 0.0
  %4254 = vmatpush1.msra.mxu0 0.0
  %4255 = vmatprep.subr.mxu0 0.0
  %4256 = vmatpush1.msra.mxu0 0.0
  %4257 = vmatprep.subr.mxu0 0.0
  %4258 = vmatpush1.msra.mxu0 0.0
  %4259 = vmatprep.subr.mxu0 0.0
  %4260 = vmatpush1.msra.mxu0 0.0
  %4261 = vmatprep.subr.mxu0 0.0
  %4262 = vmatpush1.msra.mxu0 0.0
  %4263 = vmatprep.subr.mxu0 0.0
  %4264 = vmatpush1.msra.mxu0 0.0
  %4265 = vmatprep.subr.mxu0 0.0
  %4266 = vmatpush1.msra.mxu0 0.0
  %4267 = vmatprep.subr.mxu0 0.0
  %4268 = vmatpush1.msra.mxu0 0.0
  %4269 = vmatprep.subr.mxu0 0.0
  %4270 = vmatpush1.msra.mxu0 0.0
  %4271 = vmatprep.mubr.f32.mxu0 0.0
  %4272 = vmatmul.mubr.f32.gmra.mrb[0].mxu0 %v4048
  %v4273 = vpop.f32.mrb[0].mxu0
  %v4274 = vadd.f32 0.0, %v4273
  %v4275 = vpop.f32.mrb[0].mxu0
  %4276 = vmatprep.mubr.f32.mxu0 0.0
  %4277 = vmatmul.mubr.f32.gmra.mrb[0].mxu0 %v4051
  %v4278 = vpop.f32.mrb[0].mxu0
  %v4279 = vadd.f32 0.0, %v4278
  %v4280 = vpop.f32.mrb[0].mxu0
  %4281 = vdwg.mxu0
  %v4282 = vadd.f32 %v3988, %v4120
  %v4283 = vadd.f32 %v3989, %v4122
  %v4284 = vadd.f32 %v3990, %v4197
  %v4285 = vadd.f32 %v3991, %v4199
  %v4286 = vadd.f32 %v3992, %v4274
  %v4287 = vadd.f32 %v3993, %v4126
  %v4288 = vadd.f32 %v3994, %v4128
  %v4289 = vadd.f32 %v3995, %v4203
  %v4290 = vadd.f32 %v3996, %v4205
  %v4291 = vadd.f32 %v3997, %v4279
  %s4292 = scalar_lea.vmem %s2, 80
  %v4293 = vld [vmem:[%s4292] sm:$0xff]
  %v4294 = vld [vmem:[%s4292 + $0x8] sm:$0xff]
  %4295 = vrot.lane.b32.xlu0 %v2867, 108
  %v4296 = vpop.permute.xlu0 %4295
  %4297 = vrot.lane.b32.xlu0 %v2868, 108
  %v4298 = vpop.permute.xlu0 %4297
  %4299 = vrot.lane.b32.xlu0 %v2869, 108
  %v4300 = vpop.permute.xlu0 %4299
  %4301 = vrot.lane.b32.xlu0 %v2870, 108
  %v4302 = vpop.permute.xlu0 %4301
  %4303 = vrot.lane.b32.xlu0 %v2871, 108
  %v4304 = vpop.permute.xlu0 %4303
  %4305 = vrot.lane.b32.xlu0 %v2872, 108
  %v4306 = vpop.permute.xlu0 %4305
  %4307 = vrot.lane.b32.xlu0 %v2873, 108
  %v4308 = vpop.permute.xlu0 %4307
  %4309 = vrot.lane.b32.xlu0 %v2874, 108
  %v4310 = vpop.permute.xlu0 %4309
  %4311 = vrot.lane.b32.xlu0 %v2875, 108
  %v4312 = vpop.permute.xlu0 %4311
  %4313 = vrot.lane.b32.xlu0 %v2876, 108
  %v4314 = vpop.permute.xlu0 %4313
  %4315 = vrot.lane.b32.xlu0 %v2877, 108
  %v4316 = vpop.permute.xlu0 %4315
  %4317 = vrot.lane.b32.xlu0 %v2878, 108
  %v4318 = vpop.permute.xlu0 %4317
  %v4319 = vsel %vm1493, %v4296, %v4298
  %v4320 = vsel %vm1493, %v4298, %v4300
  %v4321 = vsel %vm1493, %v4300, %v4302
  %v4322 = vsel %vm1493, %v4302, %v4304
  %v4323 = vsel %vm1493, %v4304, %v4306
  %v4324 = vsel %vm1493, %v4308, %v4310
  %v4325 = vsel %vm1493, %v4310, %v4312
  %v4326 = vsel %vm1493, %v4312, %v4314
  %v4327 = vsel %vm1493, %v4314, %v4316
  %v4328 = vsel %vm1493, %v4316, %v4318
  %v4342 = vsel %vm110, %v4293, 0
  %v4345 = vsel %vm110, %v4294, 0
  %4347 = vmatprep.subr.mxu0 %v4320
  %4348 = vmatpush1.msra.mxu0 %v4319
  %4349 = vmatprep.subr.mxu0 %v4325
  %4350 = vmatpush1.msra.mxu0 %v4324
  %4351 = vmatprep.subr.mxu0 0.0
  %4352 = vmatpush1.msra.mxu0 0.0
  %4353 = vmatprep.subr.mxu0 0.0
  %4354 = vmatpush1.msra.mxu0 0.0
  %4355 = vmatprep.subr.mxu0 0.0
  %4356 = vmatpush1.msra.mxu0 0.0
  %4357 = vmatprep.subr.mxu0 0.0
  %4358 = vmatpush1.msra.mxu0 0.0
  %4359 = vmatprep.subr.mxu0 0.0
  %4360 = vmatpush1.msra.mxu0 0.0
  %4361 = vmatprep.subr.mxu0 0.0
  %4362 = vmatpush1.msra.mxu0 0.0
  %4363 = vmatprep.subr.mxu0 0.0
  %4364 = vmatpush1.msra.mxu0 0.0
  %4365 = vmatprep.subr.mxu0 0.0
  %4366 = vmatpush1.msra.mxu0 0.0
  %4367 = vmatprep.subr.mxu0 0.0
  %4368 = vmatpush1.msra.mxu0 0.0
  %4369 = vmatprep.subr.mxu0 0.0
  %4370 = vmatpush1.msra.mxu0 0.0
  %4371 = vmatprep.subr.mxu0 0.0
  %4372 = vmatpush1.msra.mxu0 0.0
  %4373 = vmatprep.subr.mxu0 0.0
  %4374 = vmatpush1.msra.mxu0 0.0
  %4375 = vmatprep.subr.mxu0 0.0
  %4376 = vmatpush1.msra.mxu0 0.0
  %4377 = vmatprep.subr.mxu0 0.0
  %4378 = vmatpush1.msra.mxu0 0.0
  %4379 = vmatprep.subr.mxu0 0.0
  %4380 = vmatpush1.msra.mxu0 0.0
  %4381 = vmatprep.subr.mxu0 0.0
  %4382 = vmatpush1.msra.mxu0 0.0
  %4383 = vmatprep.subr.mxu0 0.0
  %4384 = vmatpush1.msra.mxu0 0.0
  %4385 = vmatprep.subr.mxu0 0.0
  %4386 = vmatpush1.msra.mxu0 0.0
  %4387 = vmatprep.subr.mxu0 0.0
  %4388 = vmatpush1.msra.mxu0 0.0
  %4389 = vmatprep.subr.mxu0 0.0
  %4390 = vmatpush1.msra.mxu0 0.0
  %4391 = vmatprep.subr.mxu0 0.0
  %4392 = vmatpush1.msra.mxu0 0.0
  %4393 = vmatprep.subr.mxu0 0.0
  %4394 = vmatpush1.msra.mxu0 0.0
  %4395 = vmatprep.subr.mxu0 0.0
  %4396 = vmatpush1.msra.mxu0 0.0
  %4397 = vmatprep.subr.mxu0 0.0
  %4398 = vmatpush1.msra.mxu0 0.0
  %4399 = vmatprep.subr.mxu0 0.0
  %4400 = vmatpush1.msra.mxu0 0.0
  %4401 = vmatprep.subr.mxu0 0.0
  %4402 = vmatpush1.msra.mxu0 0.0
  %4403 = vmatprep.subr.mxu0 0.0
  %4404 = vmatpush1.msra.mxu0 0.0
  %4405 = vmatprep.subr.mxu0 0.0
  %4406 = vmatpush1.msra.mxu0 0.0
  %4407 = vmatprep.subr.mxu0 0.0
  %4408 = vmatpush1.msra.mxu0 0.0
  %4409 = vmatprep.subr.mxu0 0.0
  %4410 = vmatpush1.msra.mxu0 0.0
  %4411 = vmatprep.mubr.f32.mxu0 0.0
  %4412 = vmatmul.mubr.f32.gmra.mrb[0].mxu0 %v4342
  %v4413 = vpop.f32.mrb[0].mxu0
  %v4414 = vadd.f32 0.0, %v4413
  %v4415 = vpop.f32.mrb[0].mxu0
  %v4416 = vadd.f32 0.0, %v4415
  %4417 = vmatprep.mubr.f32.mxu0 0.0
  %4418 = vmatmul.mubr.f32.gmra.mrb[0].mxu0 %v4345
  %v4419 = vpop.f32.mrb[0].mxu0
  %v4420 = vadd.f32 0.0, %v4419
  %v4421 = vpop.f32.mrb[0].mxu0
  %v4422 = vadd.f32 0.0, %v4421
  %4423 = vdwg.mxu0
  %4424 = vmatprep.subr.mxu0 %v4322
  %4425 = vmatpush1.msra.mxu0 %v4321
  %4426 = vmatprep.subr.mxu0 %v4327
  %4427 = vmatpush1.msra.mxu0 %v4326
  %4428 = vmatprep.subr.mxu0 0.0
  %4429 = vmatpush1.msra.mxu0 0.0
  %4430 = vmatprep.subr.mxu0 0.0
  %4431 = vmatpush1.msra.mxu0 0.0
  %4432 = vmatprep.subr.mxu0 0.0
  %4433 = vmatpush1.msra.mxu0 0.0
  %4434 = vmatprep.subr.mxu0 0.0
  %4435 = vmatpush1.msra.mxu0 0.0
  %4436 = vmatprep.subr.mxu0 0.0
  %4437 = vmatpush1.msra.mxu0 0.0
  %4438 = vmatprep.subr.mxu0 0.0
  %4439 = vmatpush1.msra.mxu0 0.0
  %4440 = vmatprep.subr.mxu0 0.0
  %4441 = vmatpush1.msra.mxu0 0.0
  %4442 = vmatprep.subr.mxu0 0.0
  %4443 = vmatpush1.msra.mxu0 0.0
  %4444 = vmatprep.subr.mxu0 0.0
  %4445 = vmatpush1.msra.mxu0 0.0
  %4446 = vmatprep.subr.mxu0 0.0
  %4447 = vmatpush1.msra.mxu0 0.0
  %4448 = vmatprep.subr.mxu0 0.0
  %4449 = vmatpush1.msra.mxu0 0.0
  %4450 = vmatprep.subr.mxu0 0.0
  %4451 = vmatpush1.msra.mxu0 0.0
  %4452 = vmatprep.subr.mxu0 0.0
  %4453 = vmatpush1.msra.mxu0 0.0
  %4454 = vmatprep.subr.mxu0 0.0
  %4455 = vmatpush1.msra.mxu0 0.0
  %4456 = vmatprep.subr.mxu0 0.0
  %4457 = vmatpush1.msra.mxu0 0.0
  %4458 = vmatprep.subr.mxu0 0.0
  %4459 = vmatpush1.msra.mxu0 0.0
  %4460 = vmatprep.subr.mxu0 0.0
  %4461 = vmatpush1.msra.mxu0 0.0
  %4462 = vmatprep.subr.mxu0 0.0
  %4463 = vmatpush1.msra.mxu0 0.0
  %4464 = vmatprep.subr.mxu0 0.0
  %4465 = vmatpush1.msra.mxu0 0.0
  %4466 = vmatprep.subr.mxu0 0.0
  %4467 = vmatpush1.msra.mxu0 0.0
  %4468 = vmatprep.subr.mxu0 0.0
  %4469 = vmatpush1.msra.mxu0 0.0
  %4470 = vmatprep.subr.mxu0 0.0
  %4471 = vmatpush1.msra.mxu0 0.0
  %4472 = vmatprep.subr.mxu0 0.0
  %4473 = vmatpush1.msra.mxu0 0.0
  %4474 = vmatprep.subr.mxu0 0.0
  %4475 = vmatpush1.msra.mxu0 0.0
  %4476 = vmatprep.subr.mxu0 0.0
  %4477 = vmatpush1.msra.mxu0 0.0
  %4478 = vmatprep.subr.mxu0 0.0
  %4479 = vmatpush1.msra.mxu0 0.0
  %4480 = vmatprep.subr.mxu0 0.0
  %4481 = vmatpush1.msra.mxu0 0.0
  %4482 = vmatprep.subr.mxu0 0.0
  %4483 = vmatpush1.msra.mxu0 0.0
  %4484 = vmatprep.subr.mxu0 0.0
  %4485 = vmatpush1.msra.mxu0 0.0
  %4486 = vmatprep.subr.mxu0 0.0
  %4487 = vmatpush1.msra.mxu0 0.0
  %4488 = vmatprep.mubr.f32.mxu0 0.0
  %4489 = vmatmul.mubr.f32.gmra.mrb[0].mxu0 %v4342
  %v4490 = vpop.f32.mrb[0].mxu0
  %v4491 = vadd.f32 0.0, %v4490
  %v4492 = vpop.f32.mrb[0].mxu0
  %v4493 = vadd.f32 0.0, %v4492
  %4494 = vmatprep.mubr.f32.mxu0 0.0
  %4495 = vmatmul.mubr.f32.gmra.mrb[0].mxu0 %v4345
  %v4496 = vpop.f32.mrb[0].mxu0
  %v4497 = vadd.f32 0.0, %v4496
  %v4498 = vpop.f32.mrb[0].mxu0
  %v4499 = vadd.f32 0.0, %v4498
  %4500 = vdwg.mxu0
  %4501 = vmatprep.subr.mxu0 %v4306
  %4502 = vmatpush1.msra.mxu0 %v4323
  %4503 = vmatprep.subr.mxu0 %v4318
  %4504 = vmatpush1.msra.mxu0 %v4328
  %4505 = vmatprep.subr.mxu0 0.0
  %4506 = vmatpush1.msra.mxu0 0.0
  %4507 = vmatprep.subr.mxu0 0.0
  %4508 = vmatpush1.msra.mxu0 0.0
  %4509 = vmatprep.subr.mxu0 0.0
  %4510 = vmatpush1.msra.mxu0 0.0
  %4511 = vmatprep.subr.mxu0 0.0
  %4512 = vmatpush1.msra.mxu0 0.0
  %4513 = vmatprep.subr.mxu0 0.0
  %4514 = vmatpush1.msra.mxu0 0.0
  %4515 = vmatprep.subr.mxu0 0.0
  %4516 = vmatpush1.msra.mxu0 0.0
  %4517 = vmatprep.subr.mxu0 0.0
  %4518 = vmatpush1.msra.mxu0 0.0
  %4519 = vmatprep.subr.mxu0 0.0
  %4520 = vmatpush1.msra.mxu0 0.0
  %4521 = vmatprep.subr.mxu0 0.0
  %4522 = vmatpush1.msra.mxu0 0.0
  %4523 = vmatprep.subr.mxu0 0.0
  %4524 = vmatpush1.msra.mxu0 0.0
  %4525 = vmatprep.subr.mxu0 0.0
  %4526 = vmatpush1.msra.mxu0 0.0
  %4527 = vmatprep.subr.mxu0 0.0
  %4528 = vmatpush1.msra.mxu0 0.0
  %4529 = vmatprep.subr.mxu0 0.0
  %4530 = vmatpush1.msra.mxu0 0.0
  %4531 = vmatprep.subr.mxu0 0.0
  %4532 = vmatpush1.msra.mxu0 0.0
  %4533 = vmatprep.subr.mxu0 0.0
  %4534 = vmatpush1.msra.mxu0 0.0
  %4535 = vmatprep.subr.mxu0 0.0
  %4536 = vmatpush1.msra.mxu0 0.0
  %4537 = vmatprep.subr.mxu0 0.0
  %4538 = vmatpush1.msra.mxu0 0.0
  %4539 = vmatprep.subr.mxu0 0.0
  %4540 = vmatpush1.msra.mxu0 0.0
  %4541 = vmatprep.subr.mxu0 0.0
  %4542 = vmatpush1.msra.mxu0 0.0
  %4543 = vmatprep.subr.mxu0 0.0
  %4544 = vmatpush1.msra.mxu0 0.0
  %4545 = vmatprep.subr.mxu0 0.0
  %4546 = vmatpush1.msra.mxu0 0.0
  %4547 = vmatprep.subr.mxu0 0.0
  %4548 = vmatpush1.msra.mxu0 0.0
  %4549 = vmatprep.subr.mxu0 0.0
  %4550 = vmatpush1.msra.mxu0 0.0
  %4551 = vmatprep.subr.mxu0 0.0
  %4552 = vmatpush1.msra.mxu0 0.0
  %4553 = vmatprep.subr.mxu0 0.0
  %4554 = vmatpush1.msra.mxu0 0.0
  %4555 = vmatprep.subr.mxu0 0.0
  %4556 = vmatpush1.msra.mxu0 0.0
  %4557 = vmatprep.subr.mxu0 0.0
  %4558 = vmatpush1.msra.mxu0 0.0
  %4559 = vmatprep.subr.mxu0 0.0
  %4560 = vmatpush1.msra.mxu0 0.0
  %4561 = vmatprep.subr.mxu0 0.0
  %4562 = vmatpush1.msra.mxu0 0.0
  %4563 = vmatprep.subr.mxu0 0.0
  %4564 = vmatpush1.msra.mxu0 0.0
  %4565 = vmatprep.mubr.f32.mxu0 0.0
  %4566 = vmatmul.mubr.f32.gmra.mrb[0].mxu0 %v4342
  %v4567 = vpop.f32.mrb[0].mxu0
  %v4568 = vadd.f32 0.0, %v4567
  %v4569 = vpop.f32.mrb[0].mxu0
  %4570 = vmatprep.mubr.f32.mxu0 0.0
  %4571 = vmatmul.mubr.f32.gmra.mrb[0].mxu0 %v4345
  %v4572 = vpop.f32.mrb[0].mxu0
  %v4573 = vadd.f32 0.0, %v4572
  %v4574 = vpop.f32.mrb[0].mxu0
  %4575 = vdwg.mxu0
  %v4576 = vadd.f32 %v4282, %v4414
  %v4577 = vadd.f32 %v4283, %v4416
  %v4578 = vadd.f32 %v4284, %v4491
  %v4579 = vadd.f32 %v4285, %v4493
  %v4580 = vadd.f32 %v4286, %v4568
  %v4581 = vadd.f32 %v4287, %v4420
  %v4582 = vadd.f32 %v4288, %v4422
  %v4583 = vadd.f32 %v4289, %v4497
  %v4584 = vadd.f32 %v4290, %v4499
  %v4585 = vadd.f32 %v4291, %v4573
  %s4586 = scalar_lea.vmem %s2, 96
  %v4587 = vld [vmem:[%s4586] sm:$0xff]
  %v4588 = vld [vmem:[%s4586 + $0x8] sm:$0xff]
  %4589 = vrot.lane.b32.xlu0 %v2867, 92
  %v4590 = vpop.permute.xlu0 %4589
  %4591 = vrot.lane.b32.xlu0 %v2868, 92
  %v4592 = vpop.permute.xlu0 %4591
  %4593 = vrot.lane.b32.xlu0 %v2869, 92
  %v4594 = vpop.permute.xlu0 %4593
  %4595 = vrot.lane.b32.xlu0 %v2870, 92
  %v4596 = vpop.permute.xlu0 %4595
  %4597 = vrot.lane.b32.xlu0 %v2871, 92
  %v4598 = vpop.permute.xlu0 %4597
  %4599 = vrot.lane.b32.xlu0 %v2872, 92
  %v4600 = vpop.permute.xlu0 %4599
  %4601 = vrot.lane.b32.xlu0 %v2873, 92
  %v4602 = vpop.permute.xlu0 %4601
  %4603 = vrot.lane.b32.xlu0 %v2874, 92
  %v4604 = vpop.permute.xlu0 %4603
  %4605 = vrot.lane.b32.xlu0 %v2875, 92
  %v4606 = vpop.permute.xlu0 %4605
  %4607 = vrot.lane.b32.xlu0 %v2876, 92
  %v4608 = vpop.permute.xlu0 %4607
  %4609 = vrot.lane.b32.xlu0 %v2877, 92
  %v4610 = vpop.permute.xlu0 %4609
  %4611 = vrot.lane.b32.xlu0 %v2878, 92
  %v4612 = vpop.permute.xlu0 %4611
  %v4613 = vsel %vm1788, %v4590, %v4592
  %v4614 = vsel %vm1788, %v4592, %v4594
  %v4615 = vsel %vm1788, %v4594, %v4596
  %v4616 = vsel %vm1788, %v4596, %v4598
  %v4617 = vsel %vm1788, %v4598, %v4600
  %v4618 = vsel %vm1788, %v4602, %v4604
  %v4619 = vsel %vm1788, %v4604, %v4606
  %v4620 = vsel %vm1788, %v4606, %v4608
  %v4621 = vsel %vm1788, %v4608, %v4610
  %v4622 = vsel %vm1788, %v4610, %v4612
  %v4636 = vsel %vm110, %v4587, 0
  %v4639 = vsel %vm110, %v4588, 0
  %4641 = vmatprep.subr.mxu0 %v4614
  %4642 = vmatpush1.msra.mxu0 %v4613
  %4643 = vmatprep.subr.mxu0 %v4619
  %4644 = vmatpush1.msra.mxu0 %v4618
  %4645 = vmatprep.subr.mxu0 0.0
  %4646 = vmatpush1.msra.mxu0 0.0
  %4647 = vmatprep.subr.mxu0 0.0
  %4648 = vmatpush1.msra.mxu0 0.0
  %4649 = vmatprep.subr.mxu0 0.0
  %4650 = vmatpush1.msra.mxu0 0.0
  %4651 = vmatprep.subr.mxu0 0.0
  %4652 = vmatpush1.msra.mxu0 0.0
  %4653 = vmatprep.subr.mxu0 0.0
  %4654 = vmatpush1.msra.mxu0 0.0
  %4655 = vmatprep.subr.mxu0 0.0
  %4656 = vmatpush1.msra.mxu0 0.0
  %4657 = vmatprep.subr.mxu0 0.0
  %4658 = vmatpush1.msra.mxu0 0.0
  %4659 = vmatprep.subr.mxu0 0.0
  %4660 = vmatpush1.msra.mxu0 0.0
  %4661 = vmatprep.subr.mxu0 0.0
  %4662 = vmatpush1.msra.mxu0 0.0
  %4663 = vmatprep.subr.mxu0 0.0
  %4664 = vmatpush1.msra.mxu0 0.0
  %4665 = vmatprep.subr.mxu0 0.0
  %4666 = vmatpush1.msra.mxu0 0.0
  %4667 = vmatprep.subr.mxu0 0.0
  %4668 = vmatpush1.msra.mxu0 0.0
  %4669 = vmatprep.subr.mxu0 0.0
  %4670 = vmatpush1.msra.mxu0 0.0
  %4671 = vmatprep.subr.mxu0 0.0
  %4672 = vmatpush1.msra.mxu0 0.0
  %4673 = vmatprep.subr.mxu0 0.0
  %4674 = vmatpush1.msra.mxu0 0.0
  %4675 = vmatprep.subr.mxu0 0.0
  %4676 = vmatpush1.msra.mxu0 0.0
  %4677 = vmatprep.subr.mxu0 0.0
  %4678 = vmatpush1.msra.mxu0 0.0
  %4679 = vmatprep.subr.mxu0 0.0
  %4680 = vmatpush1.msra.mxu0 0.0
  %4681 = vmatprep.subr.mxu0 0.0
  %4682 = vmatpush1.msra.mxu0 0.0
  %4683 = vmatprep.subr.mxu0 0.0
  %4684 = vmatpush1.msra.mxu0 0.0
  %4685 = vmatprep.subr.mxu0 0.0
  %4686 = vmatpush1.msra.mxu0 0.0
  %4687 = vmatprep.subr.mxu0 0.0
  %4688 = vmatpush1.msra.mxu0 0.0
  %4689 = vmatprep.subr.mxu0 0.0
  %4690 = vmatpush1.msra.mxu0 0.0
  %4691 = vmatprep.subr.mxu0 0.0
  %4692 = vmatpush1.msra.mxu0 0.0
  %4693 = vmatprep.subr.mxu0 0.0
  %4694 = vmatpush1.msra.mxu0 0.0
  %4695 = vmatprep.subr.mxu0 0.0
  %4696 = vmatpush1.msra.mxu0 0.0
  %4697 = vmatprep.subr.mxu0 0.0
  %4698 = vmatpush1.msra.mxu0 0.0
  %4699 = vmatprep.subr.mxu0 0.0
  %4700 = vmatpush1.msra.mxu0 0.0
  %4701 = vmatprep.subr.mxu0 0.0
  %4702 = vmatpush1.msra.mxu0 0.0
  %4703 = vmatprep.subr.mxu0 0.0
  %4704 = vmatpush1.msra.mxu0 0.0
  %4705 = vmatprep.mubr.f32.mxu0 0.0
  %4706 = vmatmul.mubr.f32.gmra.mrb[0].mxu0 %v4636
  %v4707 = vpop.f32.mrb[0].mxu0
  %v4708 = vadd.f32 0.0, %v4707
  %v4709 = vpop.f32.mrb[0].mxu0
  %v4710 = vadd.f32 0.0, %v4709
  %4711 = vmatprep.mubr.f32.mxu0 0.0
  %4712 = vmatmul.mubr.f32.gmra.mrb[0].mxu0 %v4639
  %v4713 = vpop.f32.mrb[0].mxu0
  %v4714 = vadd.f32 0.0, %v4713
  %v4715 = vpop.f32.mrb[0].mxu0
  %v4716 = vadd.f32 0.0, %v4715
  %4717 = vdwg.mxu0
  %4718 = vmatprep.subr.mxu0 %v4616
  %4719 = vmatpush1.msra.mxu0 %v4615
  %4720 = vmatprep.subr.mxu0 %v4621
  %4721 = vmatpush1.msra.mxu0 %v4620
  %4722 = vmatprep.subr.mxu0 0.0
  %4723 = vmatpush1.msra.mxu0 0.0
  %4724 = vmatprep.subr.mxu0 0.0
  %4725 = vmatpush1.msra.mxu0 0.0
  %4726 = vmatprep.subr.mxu0 0.0
  %4727 = vmatpush1.msra.mxu0 0.0
  %4728 = vmatprep.subr.mxu0 0.0
  %4729 = vmatpush1.msra.mxu0 0.0
  %4730 = vmatprep.subr.mxu0 0.0
  %4731 = vmatpush1.msra.mxu0 0.0
  %4732 = vmatprep.subr.mxu0 0.0
  %4733 = vmatpush1.msra.mxu0 0.0
  %4734 = vmatprep.subr.mxu0 0.0
  %4735 = vmatpush1.msra.mxu0 0.0
  %4736 = vmatprep.subr.mxu0 0.0
  %4737 = vmatpush1.msra.mxu0 0.0
  %4738 = vmatprep.subr.mxu0 0.0
  %4739 = vmatpush1.msra.mxu0 0.0
  %4740 = vmatprep.subr.mxu0 0.0
  %4741 = vmatpush1.msra.mxu0 0.0
  %4742 = vmatprep.subr.mxu0 0.0
  %4743 = vmatpush1.msra.mxu0 0.0
  %4744 = vmatprep.subr.mxu0 0.0
  %4745 = vmatpush1.msra.mxu0 0.0
  %4746 = vmatprep.subr.mxu0 0.0
  %4747 = vmatpush1.msra.mxu0 0.0
  %4748 = vmatprep.subr.mxu0 0.0
  %4749 = vmatpush1.msra.mxu0 0.0
  %4750 = vmatprep.subr.mxu0 0.0
  %4751 = vmatpush1.msra.mxu0 0.0
  %4752 = vmatprep.subr.mxu0 0.0
  %4753 = vmatpush1.msra.mxu0 0.0
  %4754 = vmatprep.subr.mxu0 0.0
  %4755 = vmatpush1.msra.mxu0 0.0
  %4756 = vmatprep.subr.mxu0 0.0
  %4757 = vmatpush1.msra.mxu0 0.0
  %4758 = vmatprep.subr.mxu0 0.0
  %4759 = vmatpush1.msra.mxu0 0.0
  %4760 = vmatprep.subr.mxu0 0.0
  %4761 = vmatpush1.msra.mxu0 0.0
  %4762 = vmatprep.subr.mxu0 0.0
  %4763 = vmatpush1.msra.mxu0 0.0
  %4764 = vmatprep.subr.mxu0 0.0
  %4765 = vmatpush1.msra.mxu0 0.0
  %4766 = vmatprep.subr.mxu0 0.0
  %4767 = vmatpush1.msra.mxu0 0.0
  %4768 = vmatprep.subr.mxu0 0.0
  %4769 = vmatpush1.msra.mxu0 0.0
  %4770 = vmatprep.subr.mxu0 0.0
  %4771 = vmatpush1.msra.mxu0 0.0
  %4772 = vmatprep.subr.mxu0 0.0
  %4773 = vmatpush1.msra.mxu0 0.0
  %4774 = vmatprep.subr.mxu0 0.0
  %4775 = vmatpush1.msra.mxu0 0.0
  %4776 = vmatprep.subr.mxu0 0.0
  %4777 = vmatpush1.msra.mxu0 0.0
  %4778 = vmatprep.subr.mxu0 0.0
  %4779 = vmatpush1.msra.mxu0 0.0
  %4780 = vmatprep.subr.mxu0 0.0
  %4781 = vmatpush1.msra.mxu0 0.0
  %4782 = vmatprep.mubr.f32.mxu0 0.0
  %4783 = vmatmul.mubr.f32.gmra.mrb[0].mxu0 %v4636
  %v4784 = vpop.f32.mrb[0].mxu0
  %v4785 = vadd.f32 0.0, %v4784
  %v4786 = vpop.f32.mrb[0].mxu0
  %v4787 = vadd.f32 0.0, %v4786
  %4788 = vmatprep.mubr.f32.mxu0 0.0
  %4789 = vmatmul.mubr.f32.gmra.mrb[0].mxu0 %v4639
  %v4790 = vpop.f32.mrb[0].mxu0
  %v4791 = vadd.f32 0.0, %v4790
  %v4792 = vpop.f32.mrb[0].mxu0
  %v4793 = vadd.f32 0.0, %v4792
  %4794 = vdwg.mxu0
  %4795 = vmatprep.subr.mxu0 %v4600
  %4796 = vmatpush1.msra.mxu0 %v4617
  %4797 = vmatprep.subr.mxu0 %v4612
  %4798 = vmatpush1.msra.mxu0 %v4622
  %4799 = vmatprep.subr.mxu0 0.0
  %4800 = vmatpush1.msra.mxu0 0.0
  %4801 = vmatprep.subr.mxu0 0.0
  %4802 = vmatpush1.msra.mxu0 0.0
  %4803 = vmatprep.subr.mxu0 0.0
  %4804 = vmatpush1.msra.mxu0 0.0
  %4805 = vmatprep.subr.mxu0 0.0
  %4806 = vmatpush1.msra.mxu0 0.0
  %4807 = vmatprep.subr.mxu0 0.0
  %4808 = vmatpush1.msra.mxu0 0.0
  %4809 = vmatprep.subr.mxu0 0.0
  %4810 = vmatpush1.msra.mxu0 0.0
  %4811 = vmatprep.subr.mxu0 0.0
  %4812 = vmatpush1.msra.mxu0 0.0
  %4813 = vmatprep.subr.mxu0 0.0
  %4814 = vmatpush1.msra.mxu0 0.0
  %4815 = vmatprep.subr.mxu0 0.0
  %4816 = vmatpush1.msra.mxu0 0.0
  %4817 = vmatprep.subr.mxu0 0.0
  %4818 = vmatpush1.msra.mxu0 0.0
  %4819 = vmatprep.subr.mxu0 0.0
  %4820 = vmatpush1.msra.mxu0 0.0
  %4821 = vmatprep.subr.mxu0 0.0
  %4822 = vmatpush1.msra.mxu0 0.0
  %4823 = vmatprep.subr.mxu0 0.0
  %4824 = vmatpush1.msra.mxu0 0.0
  %4825 = vmatprep.subr.mxu0 0.0
  %4826 = vmatpush1.msra.mxu0 0.0
  %4827 = vmatprep.subr.mxu0 0.0
  %4828 = vmatpush1.msra.mxu0 0.0
  %4829 = vmatprep.subr.mxu0 0.0
  %4830 = vmatpush1.msra.mxu0 0.0
  %4831 = vmatprep.subr.mxu0 0.0
  %4832 = vmatpush1.msra.mxu0 0.0
  %4833 = vmatprep.subr.mxu0 0.0
  %4834 = vmatpush1.msra.mxu0 0.0
  %4835 = vmatprep.subr.mxu0 0.0
  %4836 = vmatpush1.msra.mxu0 0.0
  %4837 = vmatprep.subr.mxu0 0.0
  %4838 = vmatpush1.msra.mxu0 0.0
  %4839 = vmatprep.subr.mxu0 0.0
  %4840 = vmatpush1.msra.mxu0 0.0
  %4841 = vmatprep.subr.mxu0 0.0
  %4842 = vmatpush1.msra.mxu0 0.0
  %4843 = vmatprep.subr.mxu0 0.0
  %4844 = vmatpush1.msra.mxu0 0.0
  %4845 = vmatprep.subr.mxu0 0.0
  %4846 = vmatpush1.msra.mxu0 0.0
  %4847 = vmatprep.subr.mxu0 0.0
  %4848 = vmatpush1.msra.mxu0 0.0
  %4849 = vmatprep.subr.mxu0 0.0
  %4850 = vmatpush1.msra.mxu0 0.0
  %4851 = vmatprep.subr.mxu0 0.0
  %4852 = vmatpush1.msra.mxu0 0.0
  %4853 = vmatprep.subr.mxu0 0.0
  %4854 = vmatpush1.msra.mxu0 0.0
  %4855 = vmatprep.subr.mxu0 0.0
  %4856 = vmatpush1.msra.mxu0 0.0
  %4857 = vmatprep.subr.mxu0 0.0
  %4858 = vmatpush1.msra.mxu0 0.0
  %4859 = vmatprep.mubr.f32.mxu0 0.0
  %4860 = vmatmul.mubr.f32.gmra.mrb[0].mxu0 %v4636
  %v4861 = vpop.f32.mrb[0].mxu0
  %v4862 = vadd.f32 0.0, %v4861
  %v4863 = vpop.f32.mrb[0].mxu0
  %4864 = vmatprep.mubr.f32.mxu0 0.0
  %4865 = vmatmul.mubr.f32.gmra.mrb[0].mxu0 %v4639
  %v4866 = vpop.f32.mrb[0].mxu0
  %v4867 = vadd.f32 0.0, %v4866
  %v4868 = vpop.f32.mrb[0].mxu0
  %4869 = vdwg.mxu0
  %v4870 = vadd.f32 %v4576, %v4708
  %v4871 = vadd.f32 %v4577, %v4710
  %v4872 = vadd.f32 %v4578, %v4785
  %v4873 = vadd.f32 %v4579, %v4787
  %v4874 = vadd.f32 %v4580, %v4862
  %v4875 = vadd.f32 %v4581, %v4714
  %v4876 = vadd.f32 %v4582, %v4716
  %v4877 = vadd.f32 %v4583, %v4791
  %v4878 = vadd.f32 %v4584, %v4793
  %v4879 = vadd.f32 %v4585, %v4867
  %s4880 = scalar_lea.vmem %s2, 112
  %v4881 = vld [vmem:[%s4880] sm:$0xff]
  %v4882 = vld [vmem:[%s4880 + $0x8] sm:$0xff]
  %4883 = vrot.lane.b32.xlu0 %v2867, 91
  %v4884 = vpop.permute.xlu0 %4883
  %4885 = vrot.lane.b32.xlu0 %v2868, 91
  %v4886 = vpop.permute.xlu0 %4885
  %4887 = vrot.lane.b32.xlu0 %v2869, 91
  %v4888 = vpop.permute.xlu0 %4887
  %4889 = vrot.lane.b32.xlu0 %v2870, 91
  %v4890 = vpop.permute.xlu0 %4889
  %4891 = vrot.lane.b32.xlu0 %v2871, 91
  %v4892 = vpop.permute.xlu0 %4891
  %4893 = vrot.lane.b32.xlu0 %v2872, 91
  %v4894 = vpop.permute.xlu0 %4893
  %4895 = vrot.lane.b32.xlu0 %v2873, 91
  %v4896 = vpop.permute.xlu0 %4895
  %4897 = vrot.lane.b32.xlu0 %v2874, 91
  %v4898 = vpop.permute.xlu0 %4897
  %4899 = vrot.lane.b32.xlu0 %v2875, 91
  %v4900 = vpop.permute.xlu0 %4899
  %4901 = vrot.lane.b32.xlu0 %v2876, 91
  %v4902 = vpop.permute.xlu0 %4901
  %4903 = vrot.lane.b32.xlu0 %v2877, 91
  %v4904 = vpop.permute.xlu0 %4903
  %4905 = vrot.lane.b32.xlu0 %v2878, 91
  %v4906 = vpop.permute.xlu0 %4905
  %v4907 = vsel %vm2083, %v4884, %v4886
  %v4908 = vsel %vm2083, %v4886, %v4888
  %v4909 = vsel %vm2083, %v4888, %v4890
  %v4910 = vsel %vm2083, %v4890, %v4892
  %v4911 = vsel %vm2083, %v4892, %v4894
  %v4912 = vsel %vm2083, %v4896, %v4898
  %v4913 = vsel %vm2083, %v4898, %v4900
  %v4914 = vsel %vm2083, %v4900, %v4902
  %v4915 = vsel %vm2083, %v4902, %v4904
  %v4916 = vsel %vm2083, %v4904, %v4906
  %v4930 = vsel %vm110, %v4881, 0
  %v4933 = vsel %vm110, %v4882, 0
  %4935 = vmatprep.subr.mxu0 %v4908
  %4936 = vmatpush1.msra.mxu0 %v4907
  %4937 = vmatprep.subr.mxu0 %v4913
  %4938 = vmatpush1.msra.mxu0 %v4912
  %4939 = vmatprep.subr.mxu0 0.0
  %4940 = vmatpush1.msra.mxu0 0.0
  %4941 = vmatprep.subr.mxu0 0.0
  %4942 = vmatpush1.msra.mxu0 0.0
  %4943 = vmatprep.subr.mxu0 0.0
  %4944 = vmatpush1.msra.mxu0 0.0
  %4945 = vmatprep.subr.mxu0 0.0
  %4946 = vmatpush1.msra.mxu0 0.0
  %4947 = vmatprep.subr.mxu0 0.0
  %4948 = vmatpush1.msra.mxu0 0.0
  %4949 = vmatprep.subr.mxu0 0.0
  %4950 = vmatpush1.msra.mxu0 0.0
  %4951 = vmatprep.subr.mxu0 0.0
  %4952 = vmatpush1.msra.mxu0 0.0
  %4953 = vmatprep.subr.mxu0 0.0
  %4954 = vmatpush1.msra.mxu0 0.0
  %4955 = vmatprep.subr.mxu0 0.0
  %4956 = vmatpush1.msra.mxu0 0.0
  %4957 = vmatprep.subr.mxu0 0.0
  %4958 = vmatpush1.msra.mxu0 0.0
  %4959 = vmatprep.subr.mxu0 0.0
  %4960 = vmatpush1.msra.mxu0 0.0
  %4961 = vmatprep.subr.mxu0 0.0
  %4962 = vmatpush1.msra.mxu0 0.0
  %4963 = vmatprep.subr.mxu0 0.0
  %4964 = vmatpush1.msra.mxu0 0.0
  %4965 = vmatprep.subr.mxu0 0.0
  %4966 = vmatpush1.msra.mxu0 0.0
  %4967 = vmatprep.subr.mxu0 0.0
  %4968 = vmatpush1.msra.mxu0 0.0
  %4969 = vmatprep.subr.mxu0 0.0
  %4970 = vmatpush1.msra.mxu0 0.0
  %4971 = vmatprep.subr.mxu0 0.0
  %4972 = vmatpush1.msra.mxu0 0.0
  %4973 = vmatprep.subr.mxu0 0.0
  %4974 = vmatpush1.msra.mxu0 0.0
  %4975 = vmatprep.subr.mxu0 0.0
  %4976 = vmatpush1.msra.mxu0 0.0
  %4977 = vmatprep.subr.mxu0 0.0
  %4978 = vmatpush1.msra.mxu0 0.0
  %4979 = vmatprep.subr.mxu0 0.0
  %4980 = vmatpush1.msra.mxu0 0.0
  %4981 = vmatprep.subr.mxu0 0.0
  %4982 = vmatpush1.msra.mxu0 0.0
  %4983 = vmatprep.subr.mxu0 0.0
  %4984 = vmatpush1.msra.mxu0 0.0
  %4985 = vmatprep.subr.mxu0 0.0
  %4986 = vmatpush1.msra.mxu0 0.0
  %4987 = vmatprep.subr.mxu0 0.0
  %4988 = vmatpush1.msra.mxu0 0.0
  %4989 = vmatprep.subr.mxu0 0.0
  %4990 = vmatpush1.msra.mxu0 0.0
  %4991 = vmatprep.subr.mxu0 0.0
  %4992 = vmatpush1.msra.mxu0 0.0
  %4993 = vmatprep.subr.mxu0 0.0
  %4994 = vmatpush1.msra.mxu0 0.0
  %4995 = vmatprep.subr.mxu0 0.0
  %4996 = vmatpush1.msra.mxu0 0.0
  %4997 = vmatprep.subr.mxu0 0.0
  %4998 = vmatpush1.msra.mxu0 0.0
  %4999 = vmatprep.mubr.f32.mxu0 0.0
  %5000 = vmatmul.mubr.f32.gmra.mrb[0].mxu0 %v4930
  %v5001 = vpop.f32.mrb[0].mxu0
  %v5002 = vadd.f32 0.0, %v5001
  %v5003 = vpop.f32.mrb[0].mxu0
  %v5004 = vadd.f32 0.0, %v5003
  %5005 = vmatprep.mubr.f32.mxu0 0.0
  %5006 = vmatmul.mubr.f32.gmra.mrb[0].mxu0 %v4933
  %v5007 = vpop.f32.mrb[0].mxu0
  %v5008 = vadd.f32 0.0, %v5007
  %v5009 = vpop.f32.mrb[0].mxu0
  %v5010 = vadd.f32 0.0, %v5009
  %5011 = vdwg.mxu0
  %5012 = vmatprep.subr.mxu0 %v4910
  %5013 = vmatpush1.msra.mxu0 %v4909
  %5014 = vmatprep.subr.mxu0 %v4915
  %5015 = vmatpush1.msra.mxu0 %v4914
  %5016 = vmatprep.subr.mxu0 0.0
  %5017 = vmatpush1.msra.mxu0 0.0
  %5018 = vmatprep.subr.mxu0 0.0
  %5019 = vmatpush1.msra.mxu0 0.0
  %5020 = vmatprep.subr.mxu0 0.0
  %5021 = vmatpush1.msra.mxu0 0.0
  %5022 = vmatprep.subr.mxu0 0.0
  %5023 = vmatpush1.msra.mxu0 0.0
  %5024 = vmatprep.subr.mxu0 0.0
  %5025 = vmatpush1.msra.mxu0 0.0
  %5026 = vmatprep.subr.mxu0 0.0
  %5027 = vmatpush1.msra.mxu0 0.0
  %5028 = vmatprep.subr.mxu0 0.0
  %5029 = vmatpush1.msra.mxu0 0.0
  %5030 = vmatprep.subr.mxu0 0.0
  %5031 = vmatpush1.msra.mxu0 0.0
  %5032 = vmatprep.subr.mxu0 0.0
  %5033 = vmatpush1.msra.mxu0 0.0
  %5034 = vmatprep.subr.mxu0 0.0
  %5035 = vmatpush1.msra.mxu0 0.0
  %5036 = vmatprep.subr.mxu0 0.0
  %5037 = vmatpush1.msra.mxu0 0.0
  %5038 = vmatprep.subr.mxu0 0.0
  %5039 = vmatpush1.msra.mxu0 0.0
  %5040 = vmatprep.subr.mxu0 0.0
  %5041 = vmatpush1.msra.mxu0 0.0
  %5042 = vmatprep.subr.mxu0 0.0
  %5043 = vmatpush1.msra.mxu0 0.0
  %5044 = vmatprep.subr.mxu0 0.0
  %5045 = vmatpush1.msra.mxu0 0.0
  %5046 = vmatprep.subr.mxu0 0.0
  %5047 = vmatpush1.msra.mxu0 0.0
  %5048 = vmatprep.subr.mxu0 0.0
  %5049 = vmatpush1.msra.mxu0 0.0
  %5050 = vmatprep.subr.mxu0 0.0
  %5051 = vmatpush1.msra.mxu0 0.0
  %5052 = vmatprep.subr.mxu0 0.0
  %5053 = vmatpush1.msra.mxu0 0.0
  %5054 = vmatprep.subr.mxu0 0.0
  %5055 = vmatpush1.msra.mxu0 0.0
  %5056 = vmatprep.subr.mxu0 0.0
  %5057 = vmatpush1.msra.mxu0 0.0
  %5058 = vmatprep.subr.mxu0 0.0
  %5059 = vmatpush1.msra.mxu0 0.0
  %5060 = vmatprep.subr.mxu0 0.0
  %5061 = vmatpush1.msra.mxu0 0.0
  %5062 = vmatprep.subr.mxu0 0.0
  %5063 = vmatpush1.msra.mxu0 0.0
  %5064 = vmatprep.subr.mxu0 0.0
  %5065 = vmatpush1.msra.mxu0 0.0
  %5066 = vmatprep.subr.mxu0 0.0
  %5067 = vmatpush1.msra.mxu0 0.0
  %5068 = vmatprep.subr.mxu0 0.0
  %5069 = vmatpush1.msra.mxu0 0.0
  %5070 = vmatprep.subr.mxu0 0.0
  %5071 = vmatpush1.msra.mxu0 0.0
  %5072 = vmatprep.subr.mxu0 0.0
  %5073 = vmatpush1.msra.mxu0 0.0
  %5074 = vmatprep.subr.mxu0 0.0
  %5075 = vmatpush1.msra.mxu0 0.0
  %5076 = vmatprep.mubr.f32.mxu0 0.0
  %5077 = vmatmul.mubr.f32.gmra.mrb[0].mxu0 %v4930
  %v5078 = vpop.f32.mrb[0].mxu0
  %v5079 = vadd.f32 0.0, %v5078
  %v5080 = vpop.f32.mrb[0].mxu0
  %v5081 = vadd.f32 0.0, %v5080
  %5082 = vmatprep.mubr.f32.mxu0 0.0
  %5083 = vmatmul.mubr.f32.gmra.mrb[0].mxu0 %v4933
  %v5084 = vpop.f32.mrb[0].mxu0
  %v5085 = vadd.f32 0.0, %v5084
  %v5086 = vpop.f32.mrb[0].mxu0
  %v5087 = vadd.f32 0.0, %v5086
  %5088 = vdwg.mxu0
  %5089 = vmatprep.subr.mxu0 %v4894
  %5090 = vmatpush1.msra.mxu0 %v4911
  %5091 = vmatprep.subr.mxu0 %v4906
  %5092 = vmatpush1.msra.mxu0 %v4916
  %5093 = vmatprep.subr.mxu0 0.0
  %5094 = vmatpush1.msra.mxu0 0.0
  %5095 = vmatprep.subr.mxu0 0.0
  %5096 = vmatpush1.msra.mxu0 0.0
  %5097 = vmatprep.subr.mxu0 0.0
  %5098 = vmatpush1.msra.mxu0 0.0
  %5099 = vmatprep.subr.mxu0 0.0
  %5100 = vmatpush1.msra.mxu0 0.0
  %5101 = vmatprep.subr.mxu0 0.0
  %5102 = vmatpush1.msra.mxu0 0.0
  %5103 = vmatprep.subr.mxu0 0.0
  %5104 = vmatpush1.msra.mxu0 0.0
  %5105 = vmatprep.subr.mxu0 0.0
  %5106 = vmatpush1.msra.mxu0 0.0
  %5107 = vmatprep.subr.mxu0 0.0
  %5108 = vmatpush1.msra.mxu0 0.0
  %5109 = vmatprep.subr.mxu0 0.0
  %5110 = vmatpush1.msra.mxu0 0.0
  %5111 = vmatprep.subr.mxu0 0.0
  %5112 = vmatpush1.msra.mxu0 0.0
  %5113 = vmatprep.subr.mxu0 0.0
  %5114 = vmatpush1.msra.mxu0 0.0
  %5115 = vmatprep.subr.mxu0 0.0
  %5116 = vmatpush1.msra.mxu0 0.0
  %5117 = vmatprep.subr.mxu0 0.0
  %5118 = vmatpush1.msra.mxu0 0.0
  %5119 = vmatprep.subr.mxu0 0.0
  %5120 = vmatpush1.msra.mxu0 0.0
  %5121 = vmatprep.subr.mxu0 0.0
  %5122 = vmatpush1.msra.mxu0 0.0
  %5123 = vmatprep.subr.mxu0 0.0
  %5124 = vmatpush1.msra.mxu0 0.0
  %5125 = vmatprep.subr.mxu0 0.0
  %5126 = vmatpush1.msra.mxu0 0.0
  %5127 = vmatprep.subr.mxu0 0.0
  %5128 = vmatpush1.msra.mxu0 0.0
  %5129 = vmatprep.subr.mxu0 0.0
  %5130 = vmatpush1.msra.mxu0 0.0
  %5131 = vmatprep.subr.mxu0 0.0
  %5132 = vmatpush1.msra.mxu0 0.0
  %5133 = vmatprep.subr.mxu0 0.0
  %5134 = vmatpush1.msra.mxu0 0.0
  %5135 = vmatprep.subr.mxu0 0.0
  %5136 = vmatpush1.msra.mxu0 0.0
  %5137 = vmatprep.subr.mxu0 0.0
  %5138 = vmatpush1.msra.mxu0 0.0
  %5139 = vmatprep.subr.mxu0 0.0
  %5140 = vmatpush1.msra.mxu0 0.0
  %5141 = vmatprep.subr.mxu0 0.0
  %5142 = vmatpush1.msra.mxu0 0.0
  %5143 = vmatprep.subr.mxu0 0.0
  %5144 = vmatpush1.msra.mxu0 0.0
  %5145 = vmatprep.subr.mxu0 0.0
  %5146 = vmatpush1.msra.mxu0 0.0
  %5147 = vmatprep.subr.mxu0 0.0
  %5148 = vmatpush1.msra.mxu0 0.0
  %5149 = vmatprep.subr.mxu0 0.0
  %5150 = vmatpush1.msra.mxu0 0.0
  %5151 = vmatprep.subr.mxu0 0.0
  %5152 = vmatpush1.msra.mxu0 0.0
  %5153 = vmatprep.mubr.f32.mxu0 0.0
  %5154 = vmatmul.mubr.f32.gmra.mrb[0].mxu0 %v4930
  %v5155 = vpop.f32.mrb[0].mxu0
  %v5156 = vadd.f32 0.0, %v5155
  %v5157 = vpop.f32.mrb[0].mxu0
  %5158 = vmatprep.mubr.f32.mxu0 0.0
  %5159 = vmatmul.mubr.f32.gmra.mrb[0].mxu0 %v4933
  %v5160 = vpop.f32.mrb[0].mxu0
  %v5161 = vadd.f32 0.0, %v5160
  %v5162 = vpop.f32.mrb[0].mxu0
  %5163 = vdwg.mxu0
  %v5164 = vadd.f32 %v4870, %v5002
  %v5165 = vadd.f32 %v4871, %v5004
  %v5166 = vadd.f32 %v4872, %v5079
  %v5167 = vadd.f32 %v4873, %v5081
  %v5168 = vadd.f32 %v4874, %v5156
  %v5169 = vadd.f32 %v4875, %v5008
  %v5170 = vadd.f32 %v4876, %v5010
  %v5171 = vadd.f32 %v4877, %v5085
  %v5172 = vadd.f32 %v4878, %v5087
  %v5173 = vadd.f32 %v4879, %v5161
  %s5174 = scalar_lea.vmem %s2, 128
  %v5175 = vld [vmem:[%s5174] sm:$0xff]
  %v5176 = vld [vmem:[%s5174 + $0x8] sm:$0xff]
  %5177 = vrot.lane.b32.xlu0 %v2867, 90
  %v5178 = vpop.permute.xlu0 %5177
  %5179 = vrot.lane.b32.xlu0 %v2868, 90
  %v5180 = vpop.permute.xlu0 %5179
  %5181 = vrot.lane.b32.xlu0 %v2869, 90
  %v5182 = vpop.permute.xlu0 %5181
  %5183 = vrot.lane.b32.xlu0 %v2870, 90
  %v5184 = vpop.permute.xlu0 %5183
  %5185 = vrot.lane.b32.xlu0 %v2871, 90
  %v5186 = vpop.permute.xlu0 %5185
  %5187 = vrot.lane.b32.xlu0 %v2872, 90
  %v5188 = vpop.permute.xlu0 %5187
  %5189 = vrot.lane.b32.xlu0 %v2873, 90
  %v5190 = vpop.permute.xlu0 %5189
  %5191 = vrot.lane.b32.xlu0 %v2874, 90
  %v5192 = vpop.permute.xlu0 %5191
  %5193 = vrot.lane.b32.xlu0 %v2875, 90
  %v5194 = vpop.permute.xlu0 %5193
  %5195 = vrot.lane.b32.xlu0 %v2876, 90
  %v5196 = vpop.permute.xlu0 %5195
  %5197 = vrot.lane.b32.xlu0 %v2877, 90
  %v5198 = vpop.permute.xlu0 %5197
  %5199 = vrot.lane.b32.xlu0 %v2878, 90
  %v5200 = vpop.permute.xlu0 %5199
  %v5201 = vsel %vm2378, %v5178, %v5180
  %v5202 = vsel %vm2378, %v5180, %v5182
  %v5203 = vsel %vm2378, %v5182, %v5184
  %v5204 = vsel %vm2378, %v5184, %v5186
  %v5205 = vsel %vm2378, %v5186, %v5188
  %v5206 = vsel %vm2378, %v5190, %v5192
  %v5207 = vsel %vm2378, %v5192, %v5194
  %v5208 = vsel %vm2378, %v5194, %v5196
  %v5209 = vsel %vm2378, %v5196, %v5198
  %v5210 = vsel %vm2378, %v5198, %v5200
  %v5224 = vsel %vm110, %v5175, 0
  %v5227 = vsel %vm110, %v5176, 0
  %5229 = vmatprep.subr.mxu0 %v5202
  %5230 = vmatpush1.msra.mxu0 %v5201
  %5231 = vmatprep.subr.mxu0 %v5207
  %5232 = vmatpush1.msra.mxu0 %v5206
  %5233 = vmatprep.subr.mxu0 0.0
  %5234 = vmatpush1.msra.mxu0 0.0
  %5235 = vmatprep.subr.mxu0 0.0
  %5236 = vmatpush1.msra.mxu0 0.0
  %5237 = vmatprep.subr.mxu0 0.0
  %5238 = vmatpush1.msra.mxu0 0.0
  %5239 = vmatprep.subr.mxu0 0.0
  %5240 = vmatpush1.msra.mxu0 0.0
  %5241 = vmatprep.subr.mxu0 0.0
  %5242 = vmatpush1.msra.mxu0 0.0
  %5243 = vmatprep.subr.mxu0 0.0
  %5244 = vmatpush1.msra.mxu0 0.0
  %5245 = vmatprep.subr.mxu0 0.0
  %5246 = vmatpush1.msra.mxu0 0.0
  %5247 = vmatprep.subr.mxu0 0.0
  %5248 = vmatpush1.msra.mxu0 0.0
  %5249 = vmatprep.subr.mxu0 0.0
  %5250 = vmatpush1.msra.mxu0 0.0
  %5251 = vmatprep.subr.mxu0 0.0
  %5252 = vmatpush1.msra.mxu0 0.0
  %5253 = vmatprep.subr.mxu0 0.0
  %5254 = vmatpush1.msra.mxu0 0.0
  %5255 = vmatprep.subr.mxu0 0.0
  %5256 = vmatpush1.msra.mxu0 0.0
  %5257 = vmatprep.subr.mxu0 0.0
  %5258 = vmatpush1.msra.mxu0 0.0
  %5259 = vmatprep.subr.mxu0 0.0
  %5260 = vmatpush1.msra.mxu0 0.0
  %5261 = vmatprep.subr.mxu0 0.0
  %5262 = vmatpush1.msra.mxu0 0.0
  %5263 = vmatprep.subr.mxu0 0.0
  %5264 = vmatpush1.msra.mxu0 0.0
  %5265 = vmatprep.subr.mxu0 0.0
  %5266 = vmatpush1.msra.mxu0 0.0
  %5267 = vmatprep.subr.mxu0 0.0
  %5268 = vmatpush1.msra.mxu0 0.0
  %5269 = vmatprep.subr.mxu0 0.0
  %5270 = vmatpush1.msra.mxu0 0.0
  %5271 = vmatprep.subr.mxu0 0.0
  %5272 = vmatpush1.msra.mxu0 0.0
  %5273 = vmatprep.subr.mxu0 0.0
  %5274 = vmatpush1.msra.mxu0 0.0
  %5275 = vmatprep.subr.mxu0 0.0
  %5276 = vmatpush1.msra.mxu0 0.0
  %5277 = vmatprep.subr.mxu0 0.0
  %5278 = vmatpush1.msra.mxu0 0.0
  %5279 = vmatprep.subr.mxu0 0.0
  %5280 = vmatpush1.msra.mxu0 0.0
  %5281 = vmatprep.subr.mxu0 0.0
  %5282 = vmatpush1.msra.mxu0 0.0
  %5283 = vmatprep.subr.mxu0 0.0
  %5284 = vmatpush1.msra.mxu0 0.0
  %5285 = vmatprep.subr.mxu0 0.0
  %5286 = vmatpush1.msra.mxu0 0.0
  %5287 = vmatprep.subr.mxu0 0.0
  %5288 = vmatpush1.msra.mxu0 0.0
  %5289 = vmatprep.subr.mxu0 0.0
  %5290 = vmatpush1.msra.mxu0 0.0
  %5291 = vmatprep.subr.mxu0 0.0
  %5292 = vmatpush1.msra.mxu0 0.0
  %5293 = vmatprep.mubr.f32.mxu0 0.0
  %5294 = vmatmul.mubr.f32.gmra.mrb[0].mxu0 %v5224
  %v5295 = vpop.f32.mrb[0].mxu0
  %v5296 = vadd.f32 0.0, %v5295
  %v5297 = vpop.f32.mrb[0].mxu0
  %v5298 = vadd.f32 0.0, %v5297
  %5299 = vmatprep.mubr.f32.mxu0 0.0
  %5300 = vmatmul.mubr.f32.gmra.mrb[0].mxu0 %v5227
  %v5301 = vpop.f32.mrb[0].mxu0
  %v5302 = vadd.f32 0.0, %v5301
  %v5303 = vpop.f32.mrb[0].mxu0
  %v5304 = vadd.f32 0.0, %v5303
  %5305 = vdwg.mxu0
  %5306 = vmatprep.subr.mxu0 %v5204
  %5307 = vmatpush1.msra.mxu0 %v5203
  %5308 = vmatprep.subr.mxu0 %v5209
  %5309 = vmatpush1.msra.mxu0 %v5208
  %5310 = vmatprep.subr.mxu0 0.0
  %5311 = vmatpush1.msra.mxu0 0.0
  %5312 = vmatprep.subr.mxu0 0.0
  %5313 = vmatpush1.msra.mxu0 0.0
  %5314 = vmatprep.subr.mxu0 0.0
  %5315 = vmatpush1.msra.mxu0 0.0
  %5316 = vmatprep.subr.mxu0 0.0
  %5317 = vmatpush1.msra.mxu0 0.0
  %5318 = vmatprep.subr.mxu0 0.0
  %5319 = vmatpush1.msra.mxu0 0.0
  %5320 = vmatprep.subr.mxu0 0.0
  %5321 = vmatpush1.msra.mxu0 0.0
  %5322 = vmatprep.subr.mxu0 0.0
  %5323 = vmatpush1.msra.mxu0 0.0
  %5324 = vmatprep.subr.mxu0 0.0
  %5325 = vmatpush1.msra.mxu0 0.0
  %5326 = vmatprep.subr.mxu0 0.0
  %5327 = vmatpush1.msra.mxu0 0.0
  %5328 = vmatprep.subr.mxu0 0.0
  %5329 = vmatpush1.msra.mxu0 0.0
  %5330 = vmatprep.subr.mxu0 0.0
  %5331 = vmatpush1.msra.mxu0 0.0
  %5332 = vmatprep.subr.mxu0 0.0
  %5333 = vmatpush1.msra.mxu0 0.0
  %5334 = vmatprep.subr.mxu0 0.0
  %5335 = vmatpush1.msra.mxu0 0.0
  %5336 = vmatprep.subr.mxu0 0.0
  %5337 = vmatpush1.msra.mxu0 0.0
  %5338 = vmatprep.subr.mxu0 0.0
  %5339 = vmatpush1.msra.mxu0 0.0
  %5340 = vmatprep.subr.mxu0 0.0
  %5341 = vmatpush1.msra.mxu0 0.0
  %5342 = vmatprep.subr.mxu0 0.0
  %5343 = vmatpush1.msra.mxu0 0.0
  %5344 = vmatprep.subr.mxu0 0.0
  %5345 = vmatpush1.msra.mxu0 0.0
  %5346 = vmatprep.subr.mxu0 0.0
  %5347 = vmatpush1.msra.mxu0 0.0
  %5348 = vmatprep.subr.mxu0 0.0
  %5349 = vmatpush1.msra.mxu0 0.0
  %5350 = vmatprep.subr.mxu0 0.0
  %5351 = vmatpush1.msra.mxu0 0.0
  %5352 = vmatprep.subr.mxu0 0.0
  %5353 = vmatpush1.msra.mxu0 0.0
  %5354 = vmatprep.subr.mxu0 0.0
  %5355 = vmatpush1.msra.mxu0 0.0
  %5356 = vmatprep.subr.mxu0 0.0
  %5357 = vmatpush1.msra.mxu0 0.0
  %5358 = vmatprep.subr.mxu0 0.0
  %5359 = vmatpush1.msra.mxu0 0.0
  %5360 = vmatprep.subr.mxu0 0.0
  %5361 = vmatpush1.msra.mxu0 0.0
  %5362 = vmatprep.subr.mxu0 0.0
  %5363 = vmatpush1.msra.mxu0 0.0
  %5364 = vmatprep.subr.mxu0 0.0
  %5365 = vmatpush1.msra.mxu0 0.0
  %5366 = vmatprep.subr.mxu0 0.0
  %5367 = vmatpush1.msra.mxu0 0.0
  %5368 = vmatprep.subr.mxu0 0.0
  %5369 = vmatpush1.msra.mxu0 0.0
  %5370 = vmatprep.mubr.f32.mxu0 0.0
  %5371 = vmatmul.mubr.f32.gmra.mrb[0].mxu0 %v5224
  %v5372 = vpop.f32.mrb[0].mxu0
  %v5373 = vadd.f32 0.0, %v5372
  %v5374 = vpop.f32.mrb[0].mxu0
  %v5375 = vadd.f32 0.0, %v5374
  %5376 = vmatprep.mubr.f32.mxu0 0.0
  %5377 = vmatmul.mubr.f32.gmra.mrb[0].mxu0 %v5227
  %v5378 = vpop.f32.mrb[0].mxu0
  %v5379 = vadd.f32 0.0, %v5378
  %v5380 = vpop.f32.mrb[0].mxu0
  %v5381 = vadd.f32 0.0, %v5380
  %5382 = vdwg.mxu0
  %5383 = vmatprep.subr.mxu0 %v5188
  %5384 = vmatpush1.msra.mxu0 %v5205
  %5385 = vmatprep.subr.mxu0 %v5200
  %5386 = vmatpush1.msra.mxu0 %v5210
  %5387 = vmatprep.subr.mxu0 0.0
  %5388 = vmatpush1.msra.mxu0 0.0
  %5389 = vmatprep.subr.mxu0 0.0
  %5390 = vmatpush1.msra.mxu0 0.0
  %5391 = vmatprep.subr.mxu0 0.0
  %5392 = vmatpush1.msra.mxu0 0.0
  %5393 = vmatprep.subr.mxu0 0.0
  %5394 = vmatpush1.msra.mxu0 0.0
  %5395 = vmatprep.subr.mxu0 0.0
  %5396 = vmatpush1.msra.mxu0 0.0
  %5397 = vmatprep.subr.mxu0 0.0
  %5398 = vmatpush1.msra.mxu0 0.0
  %5399 = vmatprep.subr.mxu0 0.0
  %5400 = vmatpush1.msra.mxu0 0.0
  %5401 = vmatprep.subr.mxu0 0.0
  %5402 = vmatpush1.msra.mxu0 0.0
  %5403 = vmatprep.subr.mxu0 0.0
  %5404 = vmatpush1.msra.mxu0 0.0
  %5405 = vmatprep.subr.mxu0 0.0
  %5406 = vmatpush1.msra.mxu0 0.0
  %5407 = vmatprep.subr.mxu0 0.0
  %5408 = vmatpush1.msra.mxu0 0.0
  %5409 = vmatprep.subr.mxu0 0.0
  %5410 = vmatpush1.msra.mxu0 0.0
  %5411 = vmatprep.subr.mxu0 0.0
  %5412 = vmatpush1.msra.mxu0 0.0
  %5413 = vmatprep.subr.mxu0 0.0
  %5414 = vmatpush1.msra.mxu0 0.0
  %5415 = vmatprep.subr.mxu0 0.0
  %5416 = vmatpush1.msra.mxu0 0.0
  %5417 = vmatprep.subr.mxu0 0.0
  %5418 = vmatpush1.msra.mxu0 0.0
  %5419 = vmatprep.subr.mxu0 0.0
  %5420 = vmatpush1.msra.mxu0 0.0
  %5421 = vmatprep.subr.mxu0 0.0
  %5422 = vmatpush1.msra.mxu0 0.0
  %5423 = vmatprep.subr.mxu0 0.0
  %5424 = vmatpush1.msra.mxu0 0.0
  %5425 = vmatprep.subr.mxu0 0.0
  %5426 = vmatpush1.msra.mxu0 0.0
  %5427 = vmatprep.subr.mxu0 0.0
  %5428 = vmatpush1.msra.mxu0 0.0
  %5429 = vmatprep.subr.mxu0 0.0
  %5430 = vmatpush1.msra.mxu0 0.0
  %5431 = vmatprep.subr.mxu0 0.0
  %5432 = vmatpush1.msra.mxu0 0.0
  %5433 = vmatprep.subr.mxu0 0.0
  %5434 = vmatpush1.msra.mxu0 0.0
  %5435 = vmatprep.subr.mxu0 0.0
  %5436 = vmatpush1.msra.mxu0 0.0
  %5437 = vmatprep.subr.mxu0 0.0
  %5438 = vmatpush1.msra.mxu0 0.0
  %5439 = vmatprep.subr.mxu0 0.0
  %5440 = vmatpush1.msra.mxu0 0.0
  %5441 = vmatprep.subr.mxu0 0.0
  %5442 = vmatpush1.msra.mxu0 0.0
  %5443 = vmatprep.subr.mxu0 0.0
  %5444 = vmatpush1.msra.mxu0 0.0
  %5445 = vmatprep.subr.mxu0 0.0
  %5446 = vmatpush1.msra.mxu0 0.0
  %5447 = vmatprep.mubr.f32.mxu0 0.0
  %5448 = vmatmul.mubr.f32.gmra.mrb[0].mxu0 %v5224
  %v5449 = vpop.f32.mrb[0].mxu0
  %v5450 = vadd.f32 0.0, %v5449
  %v5451 = vpop.f32.mrb[0].mxu0
  %5452 = vmatprep.mubr.f32.mxu0 0.0
  %5453 = vmatmul.mubr.f32.gmra.mrb[0].mxu0 %v5227
  %v5454 = vpop.f32.mrb[0].mxu0
  %v5455 = vadd.f32 0.0, %v5454
  %v5456 = vpop.f32.mrb[0].mxu0
  %5457 = vdwg.mxu0
  %v5458 = vadd.f32 %v5164, %v5296
  %v5459 = vadd.f32 %v5165, %v5298
  %v5460 = vadd.f32 %v5166, %v5373
  %v5461 = vadd.f32 %v5167, %v5375
  %v5462 = vadd.f32 %v5168, %v5450
  %v5463 = vadd.f32 %v5169, %v5302
  %v5464 = vadd.f32 %v5170, %v5304
  %v5465 = vadd.f32 %v5171, %v5379
  %v5466 = vadd.f32 %v5172, %v5381
  %v5467 = vadd.f32 %v5173, %v5455
  %v5468 = vld [vmem:[%s5] sm:$0xff]
  %v5469 = vld [vmem:[%s5 + $0x8] sm:$0xff]
  %5471 = vset.pattern.permute.xlu0 0
  %5472 = vperm.xlu0 %5471, %v5468
  %v5473 = vpop.permute.xlu0 %5472
  %5476 = vset.pattern.permute.xlu0 0
  %5477 = vperm.xlu0 %5476, %v5469
  %v5478 = vpop.permute.xlu0 %5477
  %v5480 = vadd.f32 %v5458, %v5473
  %v5481 = vadd.f32 %v5459, %v5473
  %v5482 = vadd.f32 %v5460, %v5473
  %v5483 = vadd.f32 %v5461, %v5473
  %v5484 = vadd.f32 %v5462, %v5473
  %v5485 = vadd.f32 %v5463, %v5478
  %v5486 = vadd.f32 %v5464, %v5478
  %v5487 = vadd.f32 %v5465, %v5478
  %v5488 = vadd.f32 %v5466, %v5478
  %v5489 = vadd.f32 %v5467, %v5478
  %v5490 = vmul.f32 %v5480, 0.01
  %v5491 = vmul.f32 %v5481, 0.01
  %v5492 = vmul.f32 %v5482, 0.01
  %v5493 = vmul.f32 %v5483, 0.01
  %v5494 = vmul.f32 %v5484, 0.01
  %v5495 = vmul.f32 %v5485, 0.01
  %v5496 = vmul.f32 %v5486, 0.01
  %v5497 = vmul.f32 %v5487, 0.01
  %v5498 = vmul.f32 %v5488, 0.01
  %v5499 = vmul.f32 %v5489, 0.01
  %v5500 = vmax.f32 %v5480, %v5490
  %v5501 = vmax.f32 %v5481, %v5491
  %v5502 = vmax.f32 %v5482, %v5492
  %v5503 = vmax.f32 %v5483, %v5493
  %v5504 = vmax.f32 %v5484, %v5494
  %v5505 = vmax.f32 %v5485, %v5495
  %v5506 = vmax.f32 %v5486, %v5496
  %v5507 = vmax.f32 %v5487, %v5497
  %v5508 = vmax.f32 %v5488, %v5498
  %v5509 = vmax.f32 %v5489, %v5499
  %5510 = vst [vmem:[#allocation3] sm:$0xff] 0.0
  %5511 = vst [vmem:[#allocation3 + $0x8] sm:$0xff] 0.0
  %5512 = vst [vmem:[#allocation3 + $0x10] sm:$0xff] 0.0
  %5513 = vst [vmem:[#allocation3 + $0x18] sm:$0xff] 0.0
  %5514 = vst [vmem:[#allocation3 + $0x20] sm:$0xff] 0.0
  %5515 = vst [vmem:[#allocation3 + $0x28] sm:$0xff] 0.0
  %5516 = vst [vmem:[#allocation3 + $0x30] sm:$0xff] 0.0
  %5517 = vst [vmem:[#allocation3 + $0x38] sm:$0xff] 0.0
  %5518 = vst [vmem:[#allocation3 + $0x40] sm:$0xff] 0.0
  %5519 = vst [vmem:[#allocation3 + $0x48] sm:$0xff] 0.0
  %5520 = vst [vmem:[#allocation3 + $0x50] sm:$0xff] 0.0
  %5521 = vst [vmem:[#allocation3 + $0x58] sm:$0xff] 0.0
  %5524 = vrot.lane.b32.xlu0 %v5500, 19
  %v5525 = vpop.permute.xlu0 %5524
  %5526 = vrot.lane.b32.xlu0 %v5505, 19
  %v5527 = vpop.permute.xlu0 %5526
  %5530 = vst.msk [vmem:[#allocation3] sm:$0xff] %vm2708, %v5525
  %5531 = vst.msk [vmem:[#allocation3 + $0x30] sm:$0xff] %vm2708, %v5527
  %5532 = vst.msk [vmem:[#allocation3] sm:$0xff] %vm2711, %v5525
  %5533 = vst.msk [vmem:[#allocation3 + $0x30] sm:$0xff] %vm2711, %v5527
  %5534 = vst.msk [vmem:[#allocation3] sm:$0xff] %vm2714, %v5525
  %5535 = vst.msk [vmem:[#allocation3 + $0x30] sm:$0xff] %vm2714, %v5527
  %5536 = vst.msk [vmem:[#allocation3] sm:$0xff] %vm2717, %v5525
  %5537 = vst.msk [vmem:[#allocation3 + $0x30] sm:$0xff] %vm2717, %v5527
  %5538 = vst.msk [vmem:[#allocation3] sm:$0xff] %vm2720, %v5525
  %5539 = vst.msk [vmem:[#allocation3 + $0x30] sm:$0xff] %vm2720, %v5527
  %5540 = vst.msk [vmem:[#allocation3] sm:$0xff] %vm2723, %v5525
  %5541 = vst.msk [vmem:[#allocation3 + $0x30] sm:$0xff] %vm2723, %v5527
  %5542 = vst.msk [vmem:[#allocation3] sm:$0xff] %vm2726, %v5525
  %5543 = vst.msk [vmem:[#allocation3 + $0x8] sm:$0xff] %vm2728, %v5525
  %5544 = vst.msk [vmem:[#allocation3 + $0x30] sm:$0xff] %vm2726, %v5527
  %5545 = vst.msk [vmem:[#allocation3 + $0x38] sm:$0xff] %vm2728, %v5527
  %5548 = vrot.lane.b32.xlu0 %v5501, 19
  %v5549 = vpop.permute.xlu0 %5548
  %5550 = vrot.lane.b32.xlu0 %v5506, 19
  %v5551 = vpop.permute.xlu0 %5550
  %v5552 = vsel %vm2738, %v5525, %v5549
  %v5553 = vsel %vm2738, %v5527, %v5551
  %5556 = vst.msk [vmem:[#allocation3 + $0x8] sm:$0xff] %vm2743, %v5552
  %5557 = vst.msk [vmem:[#allocation3 + $0x38] sm:$0xff] %vm2743, %v5553
  %5560 = vst.msk [vmem:[#allocation3 + $0x8] sm:$0xff] %vm2748, %v5549
  %5561 = vst.msk [vmem:[#allocation3 + $0x38] sm:$0xff] %vm2748, %v5551
  %5562 = vst.msk [vmem:[#allocation3 + $0x8] sm:$0xff] %vm2751, %v5549
  %5563 = vst.msk [vmem:[#allocation3 + $0x38] sm:$0xff] %vm2751, %v5551
  %5564 = vst.msk [vmem:[#allocation3 + $0x8] sm:$0xff] %vm2754, %v5549
  %5565 = vst.msk [vmem:[#allocation3 + $0x38] sm:$0xff] %vm2754, %v5551
  %5566 = vst.msk [vmem:[#allocation3 + $0x8] sm:$0xff] %vm2757, %v5549
  %5567 = vst.msk [vmem:[#allocation3 + $0x38] sm:$0xff] %vm2757, %v5551
  %5568 = vst.msk [vmem:[#allocation3 + $0x8] sm:$0xff] %vm2760, %v5549
  %5569 = vst.msk [vmem:[#allocation3 + $0x38] sm:$0xff] %vm2760, %v5551
  %5570 = vst.msk [vmem:[#allocation3 + $0x8] sm:$0xff] %vm2763, %v5549
  %5571 = vst.msk [vmem:[#allocation3 + $0x10] sm:$0xff] %vm2765, %v5549
  %5572 = vst.msk [vmem:[#allocation3 + $0x38] sm:$0xff] %vm2763, %v5551
  %5573 = vst.msk [vmem:[#allocation3 + $0x40] sm:$0xff] %vm2765, %v5551
  %5576 = vrot.lane.b32.xlu0 %v5502, 19
  %v5577 = vpop.permute.xlu0 %5576
  %5578 = vrot.lane.b32.xlu0 %v5507, 19
  %v5579 = vpop.permute.xlu0 %5578
  %v5580 = vsel %vm2738, %v5549, %v5577
  %v5581 = vsel %vm2738, %v5551, %v5579
  %5584 = vst.msk [vmem:[#allocation3 + $0x10] sm:$0xff] %vm2779, %v5580
  %5585 = vst.msk [vmem:[#allocation3 + $0x40] sm:$0xff] %vm2779, %v5581
  %5588 = vst.msk [vmem:[#allocation3 + $0x10] sm:$0xff] %vm2784, %v5577
  %5589 = vst.msk [vmem:[#allocation3 + $0x40] sm:$0xff] %vm2784, %v5579
  %5590 = vst.msk [vmem:[#allocation3 + $0x10] sm:$0xff] %vm2787, %v5577
  %5591 = vst.msk [vmem:[#allocation3 + $0x40] sm:$0xff] %vm2787, %v5579
  %5592 = vst.msk [vmem:[#allocation3 + $0x10] sm:$0xff] %vm2790, %v5577
  %5593 = vst.msk [vmem:[#allocation3 + $0x40] sm:$0xff] %vm2790, %v5579
  %5594 = vst.msk [vmem:[#allocation3 + $0x10] sm:$0xff] %vm2793, %v5577
  %5595 = vst.msk [vmem:[#allocation3 + $0x18] sm:$0xff] %vm2795, %v5577
  %5596 = vst.msk [vmem:[#allocation3 + $0x40] sm:$0xff] %vm2793, %v5579
  %5597 = vst.msk [vmem:[#allocation3 + $0x48] sm:$0xff] %vm2795, %v5579
  %5600 = vrot.lane.b32.xlu0 %v5503, 19
  %v5601 = vpop.permute.xlu0 %5600
  %5602 = vrot.lane.b32.xlu0 %v5508, 19
  %v5603 = vpop.permute.xlu0 %5602
  %v5604 = vsel %vm2738, %v5577, %v5601
  %v5605 = vsel %vm2738, %v5579, %v5603
  %5608 = vst.msk [vmem:[#allocation3 + $0x18] sm:$0xff] %vm2809, %v5604
  %5609 = vst.msk [vmem:[#allocation3 + $0x48] sm:$0xff] %vm2809, %v5605
  %5612 = vst.msk [vmem:[#allocation3 + $0x18] sm:$0xff] %vm2814, %v5601
  %5613 = vst.msk [vmem:[#allocation3 + $0x48] sm:$0xff] %vm2814, %v5603
  %5614 = vst.msk [vmem:[#allocation3 + $0x18] sm:$0xff] %vm2817, %v5601
  %5615 = vst.msk [vmem:[#allocation3 + $0x48] sm:$0xff] %vm2817, %v5603
  %5616 = vst.msk [vmem:[#allocation3 + $0x18] sm:$0xff] %vm2820, %v5601
  %5617 = vst.msk [vmem:[#allocation3 + $0x48] sm:$0xff] %vm2820, %v5603
  %5618 = vst.msk [vmem:[#allocation3 + $0x18] sm:$0xff] %vm2823, %v5601
  %5619 = vst.msk [vmem:[#allocation3 + $0x48] sm:$0xff] %vm2823, %v5603
  %5620 = vst.msk [vmem:[#allocation3 + $0x18] sm:$0xff] %vm2826, %v5601
  %5621 = vst.msk [vmem:[#allocation3 + $0x48] sm:$0xff] %vm2826, %v5603
  %5622 = vst.msk [vmem:[#allocation3 + $0x18] sm:$0xff] %vm2829, %v5601
  %5623 = vst.msk [vmem:[#allocation3 + $0x20] sm:$0xff] %vm2831, %v5601
  %5624 = vst.msk [vmem:[#allocation3 + $0x48] sm:$0xff] %vm2829, %v5603
  %5625 = vst.msk [vmem:[#allocation3 + $0x50] sm:$0xff] %vm2831, %v5603
  %5628 = vrot.lane.b32.xlu0 %v5504, 19
  %v5629 = vpop.permute.xlu0 %5628
  %5630 = vrot.lane.b32.xlu0 %v5509, 19
  %v5631 = vpop.permute.xlu0 %5630
  %v5632 = vsel %vm2738, %v5601, %v5629
  %v5633 = vsel %vm2738, %v5603, %v5631
  %5636 = vst.msk [vmem:[#allocation3 + $0x20] sm:$0xff] %vm2845, %v5632
  %5637 = vst.msk [vmem:[#allocation3 + $0x50] sm:$0xff] %vm2845, %v5633
  %5640 = vst.msk [vmem:[#allocation3 + $0x20] sm:$0xff] %vm2850, %v5629
  %5641 = vst.msk [vmem:[#allocation3 + $0x50] sm:$0xff] %vm2850, %v5631
  %5642 = vst.msk [vmem:[#allocation3 + $0x20] sm:$0xff] %vm2853, %v5629
  %5643 = vst.msk [vmem:[#allocation3 + $0x50] sm:$0xff] %vm2853, %v5631
  %5644 = vst.msk [vmem:[#allocation3 + $0x20] sm:$0xff] %vm2856, %v5629
  %5645 = vst.msk [vmem:[#allocation3 + $0x50] sm:$0xff] %vm2856, %v5631
  %5646 = vst.msk [vmem:[#allocation3 + $0x20] sm:$0xff] %vm2859, %v5629
  %5647 = vst.msk [vmem:[#allocation3 + $0x50] sm:$0xff] %vm2859, %v5631
  %5648 = vst.msk [vmem:[#allocation3 + $0x20] sm:$0xff] %vm2862, %v5629
  %5649 = vst.msk [vmem:[#allocation3 + $0x50] sm:$0xff] %vm2862, %v5631
  %v5650 = vld [vmem:[%s3] sm:$0xff]
  %v5651 = vld [vmem:[%s3 + $0x8] sm:$0xff]
  %v5652 = vld [vmem:[#allocation3] sm:$0xff]
  %v5653 = vld [vmem:[#allocation3 + $0x8] sm:$0xff]
  %v5654 = vld [vmem:[#allocation3 + $0x10] sm:$0xff]
  %v5655 = vld [vmem:[#allocation3 + $0x18] sm:$0xff]
  %v5656 = vld [vmem:[#allocation3 + $0x20] sm:$0xff]
  %v5657 = vld [vmem:[#allocation3 + $0x28] sm:$0xff]
  %v5658 = vld [vmem:[#allocation3 + $0x30] sm:$0xff]
  %v5659 = vld [vmem:[#allocation3 + $0x38] sm:$0xff]
  %v5660 = vld [vmem:[#allocation3 + $0x40] sm:$0xff]
  %v5661 = vld [vmem:[#allocation3 + $0x48] sm:$0xff]
  %v5662 = vld [vmem:[#allocation3 + $0x50] sm:$0xff]
  %v5663 = vld [vmem:[#allocation3 + $0x58] sm:$0xff]
  %s5664 = scalar_lea.vmem %s3, 16
  %v5665 = vld [vmem:[%s5664] sm:$0xff]
  %v5666 = vld [vmem:[%s5664 + $0x8] sm:$0xff]
  %5679 = vrot.lane.b32.xlu0 %v5652, 127
  %v5680 = vpop.permute.xlu0 %5679
  %5681 = vrot.lane.b32.xlu0 %v5653, 127
  %v5682 = vpop.permute.xlu0 %5681
  %5683 = vrot.lane.b32.xlu0 %v5654, 127
  %v5684 = vpop.permute.xlu0 %5683
  %5685 = vrot.lane.b32.xlu0 %v5655, 127
  %v5686 = vpop.permute.xlu0 %5685
  %5687 = vrot.lane.b32.xlu0 %v5656, 127
  %v5688 = vpop.permute.xlu0 %5687
  %5689 = vrot.lane.b32.xlu0 %v5657, 127
  %v5690 = vpop.permute.xlu0 %5689
  %5691 = vrot.lane.b32.xlu0 %v5658, 127
  %v5692 = vpop.permute.xlu0 %5691
  %5693 = vrot.lane.b32.xlu0 %v5659, 127
  %v5694 = vpop.permute.xlu0 %5693
  %5695 = vrot.lane.b32.xlu0 %v5660, 127
  %v5696 = vpop.permute.xlu0 %5695
  %5697 = vrot.lane.b32.xlu0 %v5661, 127
  %v5698 = vpop.permute.xlu0 %5697
  %5699 = vrot.lane.b32.xlu0 %v5662, 127
  %v5700 = vpop.permute.xlu0 %5699
  %5701 = vrot.lane.b32.xlu0 %v5663, 127
  %v5702 = vpop.permute.xlu0 %5701
  %v5703 = vsel %vm87, %v5680, %v5682
  %v5704 = vsel %vm87, %v5682, %v5684
  %v5705 = vsel %vm87, %v5684, %v5686
  %v5706 = vsel %vm87, %v5686, %v5688
  %v5707 = vsel %vm87, %v5688, %v5690
  %v5708 = vsel %vm87, %v5692, %v5694
  %v5709 = vsel %vm87, %v5694, %v5696
  %v5710 = vsel %vm87, %v5696, %v5698
  %v5711 = vsel %vm87, %v5698, %v5700
  %v5712 = vsel %vm87, %v5700, %v5702
  %v5726 = vsel %vm110, %v5665, 0
  %v5729 = vsel %vm110, %v5666, 0
  %5731 = vmatprep.subr.mxu0 %v5704
  %5732 = vmatpush1.msra.mxu0 %v5703
  %5733 = vmatprep.subr.mxu0 %v5709
  %5734 = vmatpush1.msra.mxu0 %v5708
  %5735 = vmatprep.subr.mxu0 0.0
  %5736 = vmatpush1.msra.mxu0 0.0
  %5737 = vmatprep.subr.mxu0 0.0
  %5738 = vmatpush1.msra.mxu0 0.0
  %5739 = vmatprep.subr.mxu0 0.0
  %5740 = vmatpush1.msra.mxu0 0.0
  %5741 = vmatprep.subr.mxu0 0.0
  %5742 = vmatpush1.msra.mxu0 0.0
  %5743 = vmatprep.subr.mxu0 0.0
  %5744 = vmatpush1.msra.mxu0 0.0
  %5745 = vmatprep.subr.mxu0 0.0
  %5746 = vmatpush1.msra.mxu0 0.0
  %5747 = vmatprep.subr.mxu0 0.0
  %5748 = vmatpush1.msra.mxu0 0.0
  %5749 = vmatprep.subr.mxu0 0.0
  %5750 = vmatpush1.msra.mxu0 0.0
  %5751 = vmatprep.subr.mxu0 0.0
  %5752 = vmatpush1.msra.mxu0 0.0
  %5753 = vmatprep.subr.mxu0 0.0
  %5754 = vmatpush1.msra.mxu0 0.0
  %5755 = vmatprep.subr.mxu0 0.0
  %5756 = vmatpush1.msra.mxu0 0.0
  %5757 = vmatprep.subr.mxu0 0.0
  %5758 = vmatpush1.msra.mxu0 0.0
  %5759 = vmatprep.subr.mxu0 0.0
  %5760 = vmatpush1.msra.mxu0 0.0
  %5761 = vmatprep.subr.mxu0 0.0
  %5762 = vmatpush1.msra.mxu0 0.0
  %5763 = vmatprep.subr.mxu0 0.0
  %5764 = vmatpush1.msra.mxu0 0.0
  %5765 = vmatprep.subr.mxu0 0.0
  %5766 = vmatpush1.msra.mxu0 0.0
  %5767 = vmatprep.subr.mxu0 0.0
  %5768 = vmatpush1.msra.mxu0 0.0
  %5769 = vmatprep.subr.mxu0 0.0
  %5770 = vmatpush1.msra.mxu0 0.0
  %5771 = vmatprep.subr.mxu0 0.0
  %5772 = vmatpush1.msra.mxu0 0.0
  %5773 = vmatprep.subr.mxu0 0.0
  %5774 = vmatpush1.msra.mxu0 0.0
  %5775 = vmatprep.subr.mxu0 0.0
  %5776 = vmatpush1.msra.mxu0 0.0
  %5777 = vmatprep.subr.mxu0 0.0
  %5778 = vmatpush1.msra.mxu0 0.0
  %5779 = vmatprep.subr.mxu0 0.0
  %5780 = vmatpush1.msra.mxu0 0.0
  %5781 = vmatprep.subr.mxu0 0.0
  %5782 = vmatpush1.msra.mxu0 0.0
  %5783 = vmatprep.subr.mxu0 0.0
  %5784 = vmatpush1.msra.mxu0 0.0
  %5785 = vmatprep.subr.mxu0 0.0
  %5786 = vmatpush1.msra.mxu0 0.0
  %5787 = vmatprep.subr.mxu0 0.0
  %5788 = vmatpush1.msra.mxu0 0.0
  %5789 = vmatprep.subr.mxu0 0.0
  %5790 = vmatpush1.msra.mxu0 0.0
  %5791 = vmatprep.subr.mxu0 0.0
  %5792 = vmatpush1.msra.mxu0 0.0
  %5793 = vmatprep.subr.mxu0 0.0
  %5794 = vmatpush1.msra.mxu0 0.0
  %5795 = vmatprep.mubr.f32.mxu0 0.0
  %5796 = vmatmul.mubr.f32.gmra.mrb[0].mxu0 %v5726
  %v5797 = vpop.f32.mrb[0].mxu0
  %v5798 = vadd.f32 0.0, %v5797
  %v5799 = vpop.f32.mrb[0].mxu0
  %v5800 = vadd.f32 0.0, %v5799
  %5801 = vmatprep.mubr.f32.mxu0 0.0
  %5802 = vmatmul.mubr.f32.gmra.mrb[0].mxu0 %v5729
  %v5803 = vpop.f32.mrb[0].mxu0
  %v5804 = vadd.f32 0.0, %v5803
  %v5805 = vpop.f32.mrb[0].mxu0
  %v5806 = vadd.f32 0.0, %v5805
  %5807 = vdwg.mxu0
  %5808 = vmatprep.subr.mxu0 %v5706
  %5809 = vmatpush1.msra.mxu0 %v5705
  %5810 = vmatprep.subr.mxu0 %v5711
  %5811 = vmatpush1.msra.mxu0 %v5710
  %5812 = vmatprep.subr.mxu0 0.0
  %5813 = vmatpush1.msra.mxu0 0.0
  %5814 = vmatprep.subr.mxu0 0.0
  %5815 = vmatpush1.msra.mxu0 0.0
  %5816 = vmatprep.subr.mxu0 0.0
  %5817 = vmatpush1.msra.mxu0 0.0
  %5818 = vmatprep.subr.mxu0 0.0
  %5819 = vmatpush1.msra.mxu0 0.0
  %5820 = vmatprep.subr.mxu0 0.0
  %5821 = vmatpush1.msra.mxu0 0.0
  %5822 = vmatprep.subr.mxu0 0.0
  %5823 = vmatpush1.msra.mxu0 0.0
  %5824 = vmatprep.subr.mxu0 0.0
  %5825 = vmatpush1.msra.mxu0 0.0
  %5826 = vmatprep.subr.mxu0 0.0
  %5827 = vmatpush1.msra.mxu0 0.0
  %5828 = vmatprep.subr.mxu0 0.0
  %5829 = vmatpush1.msra.mxu0 0.0
  %5830 = vmatprep.subr.mxu0 0.0
  %5831 = vmatpush1.msra.mxu0 0.0
  %5832 = vmatprep.subr.mxu0 0.0
  %5833 = vmatpush1.msra.mxu0 0.0
  %5834 = vmatprep.subr.mxu0 0.0
  %5835 = vmatpush1.msra.mxu0 0.0
  %5836 = vmatprep.subr.mxu0 0.0
  %5837 = vmatpush1.msra.mxu0 0.0
  %5838 = vmatprep.subr.mxu0 0.0
  %5839 = vmatpush1.msra.mxu0 0.0
  %5840 = vmatprep.subr.mxu0 0.0
  %5841 = vmatpush1.msra.mxu0 0.0
  %5842 = vmatprep.subr.mxu0 0.0
  %5843 = vmatpush1.msra.mxu0 0.0
  %5844 = vmatprep.subr.mxu0 0.0
  %5845 = vmatpush1.msra.mxu0 0.0
  %5846 = vmatprep.subr.mxu0 0.0
  %5847 = vmatpush1.msra.mxu0 0.0
  %5848 = vmatprep.subr.mxu0 0.0
  %5849 = vmatpush1.msra.mxu0 0.0
  %5850 = vmatprep.subr.mxu0 0.0
  %5851 = vmatpush1.msra.mxu0 0.0
  %5852 = vmatprep.subr.mxu0 0.0
  %5853 = vmatpush1.msra.mxu0 0.0
  %5854 = vmatprep.subr.mxu0 0.0
  %5855 = vmatpush1.msra.mxu0 0.0
  %5856 = vmatprep.subr.mxu0 0.0
  %5857 = vmatpush1.msra.mxu0 0.0
  %5858 = vmatprep.subr.mxu0 0.0
  %5859 = vmatpush1.msra.mxu0 0.0
  %5860 = vmatprep.subr.mxu0 0.0
  %5861 = vmatpush1.msra.mxu0 0.0
  %5862 = vmatprep.subr.mxu0 0.0
  %5863 = vmatpush1.msra.mxu0 0.0
  %5864 = vmatprep.subr.mxu0 0.0
  %5865 = vmatpush1.msra.mxu0 0.0
  %5866 = vmatprep.subr.mxu0 0.0
  %5867 = vmatpush1.msra.mxu0 0.0
  %5868 = vmatprep.subr.mxu0 0.0
  %5869 = vmatpush1.msra.mxu0 0.0
  %5870 = vmatprep.subr.mxu0 0.0
  %5871 = vmatpush1.msra.mxu0 0.0
  %5872 = vmatprep.mubr.f32.mxu0 0.0
  %5873 = vmatmul.mubr.f32.gmra.mrb[0].mxu0 %v5726
  %v5874 = vpop.f32.mrb[0].mxu0
  %v5875 = vadd.f32 0.0, %v5874
  %v5876 = vpop.f32.mrb[0].mxu0
  %v5877 = vadd.f32 0.0, %v5876
  %5878 = vmatprep.mubr.f32.mxu0 0.0
  %5879 = vmatmul.mubr.f32.gmra.mrb[0].mxu0 %v5729
  %v5880 = vpop.f32.mrb[0].mxu0
  %v5881 = vadd.f32 0.0, %v5880
  %v5882 = vpop.f32.mrb[0].mxu0
  %v5883 = vadd.f32 0.0, %v5882
  %5884 = vdwg.mxu0
  %5885 = vmatprep.subr.mxu0 %v5690
  %5886 = vmatpush1.msra.mxu0 %v5707
  %5887 = vmatprep.subr.mxu0 %v5702
  %5888 = vmatpush1.msra.mxu0 %v5712
  %5889 = vmatprep.subr.mxu0 0.0
  %5890 = vmatpush1.msra.mxu0 0.0
  %5891 = vmatprep.subr.mxu0 0.0
  %5892 = vmatpush1.msra.mxu0 0.0
  %5893 = vmatprep.subr.mxu0 0.0
  %5894 = vmatpush1.msra.mxu0 0.0
  %5895 = vmatprep.subr.mxu0 0.0
  %5896 = vmatpush1.msra.mxu0 0.0
  %5897 = vmatprep.subr.mxu0 0.0
  %5898 = vmatpush1.msra.mxu0 0.0
  %5899 = vmatprep.subr.mxu0 0.0
  %5900 = vmatpush1.msra.mxu0 0.0
  %5901 = vmatprep.subr.mxu0 0.0
  %5902 = vmatpush1.msra.mxu0 0.0
  %5903 = vmatprep.subr.mxu0 0.0
  %5904 = vmatpush1.msra.mxu0 0.0
  %5905 = vmatprep.subr.mxu0 0.0
  %5906 = vmatpush1.msra.mxu0 0.0
  %5907 = vmatprep.subr.mxu0 0.0
  %5908 = vmatpush1.msra.mxu0 0.0
  %5909 = vmatprep.subr.mxu0 0.0
  %5910 = vmatpush1.msra.mxu0 0.0
  %5911 = vmatprep.subr.mxu0 0.0
  %5912 = vmatpush1.msra.mxu0 0.0
  %5913 = vmatprep.subr.mxu0 0.0
  %5914 = vmatpush1.msra.mxu0 0.0
  %5915 = vmatprep.subr.mxu0 0.0
  %5916 = vmatpush1.msra.mxu0 0.0
  %5917 = vmatprep.subr.mxu0 0.0
  %5918 = vmatpush1.msra.mxu0 0.0
  %5919 = vmatprep.subr.mxu0 0.0
  %5920 = vmatpush1.msra.mxu0 0.0
  %5921 = vmatprep.subr.mxu0 0.0
  %5922 = vmatpush1.msra.mxu0 0.0
  %5923 = vmatprep.subr.mxu0 0.0
  %5924 = vmatpush1.msra.mxu0 0.0
  %5925 = vmatprep.subr.mxu0 0.0
  %5926 = vmatpush1.msra.mxu0 0.0
  %5927 = vmatprep.subr.mxu0 0.0
  %5928 = vmatpush1.msra.mxu0 0.0
  %5929 = vmatprep.subr.mxu0 0.0
  %5930 = vmatpush1.msra.mxu0 0.0
  %5931 = vmatprep.subr.mxu0 0.0
  %5932 = vmatpush1.msra.mxu0 0.0
  %5933 = vmatprep.subr.mxu0 0.0
  %5934 = vmatpush1.msra.mxu0 0.0
  %5935 = vmatprep.subr.mxu0 0.0
  %5936 = vmatpush1.msra.mxu0 0.0
  %5937 = vmatprep.subr.mxu0 0.0
  %5938 = vmatpush1.msra.mxu0 0.0
  %5939 = vmatprep.subr.mxu0 0.0
  %5940 = vmatpush1.msra.mxu0 0.0
  %5941 = vmatprep.subr.mxu0 0.0
  %5942 = vmatpush1.msra.mxu0 0.0
  %5943 = vmatprep.subr.mxu0 0.0
  %5944 = vmatpush1.msra.mxu0 0.0
  %5945 = vmatprep.subr.mxu0 0.0
  %5946 = vmatpush1.msra.mxu0 0.0
  %5947 = vmatprep.subr.mxu0 0.0
  %5948 = vmatpush1.msra.mxu0 0.0
  %5949 = vmatprep.mubr.f32.mxu0 0.0
  %5950 = vmatmul.mubr.f32.gmra.mrb[0].mxu0 %v5726
  %v5951 = vpop.f32.mrb[0].mxu0
  %v5952 = vadd.f32 0.0, %v5951
  %v5953 = vpop.f32.mrb[0].mxu0
  %5954 = vmatprep.mubr.f32.mxu0 0.0
  %5955 = vmatmul.mubr.f32.gmra.mrb[0].mxu0 %v5729
  %v5956 = vpop.f32.mrb[0].mxu0
  %v5957 = vadd.f32 0.0, %v5956
  %v5958 = vpop.f32.mrb[0].mxu0
  %5959 = vdwg.mxu0
  %v5961 = vsel %vm110, %v5650, 0
  %v5964 = vsel %vm110, %v5651, 0
  %5966 = vmatprep.subr.mxu0 %v5653
  %5967 = vmatpush1.msra.mxu0 %v5652
  %5968 = vmatprep.subr.mxu0 %v5659
  %5969 = vmatpush1.msra.mxu0 %v5658
  %5970 = vmatprep.subr.mxu0 0.0
  %5971 = vmatpush1.msra.mxu0 0.0
  %5972 = vmatprep.subr.mxu0 0.0
  %5973 = vmatpush1.msra.mxu0 0.0
  %5974 = vmatprep.subr.mxu0 0.0
  %5975 = vmatpush1.msra.mxu0 0.0
  %5976 = vmatprep.subr.mxu0 0.0
  %5977 = vmatpush1.msra.mxu0 0.0
  %5978 = vmatprep.subr.mxu0 0.0
  %5979 = vmatpush1.msra.mxu0 0.0
  %5980 = vmatprep.subr.mxu0 0.0
  %5981 = vmatpush1.msra.mxu0 0.0
  %5982 = vmatprep.subr.mxu0 0.0
  %5983 = vmatpush1.msra.mxu0 0.0
  %5984 = vmatprep.subr.mxu0 0.0
  %5985 = vmatpush1.msra.mxu0 0.0
  %5986 = vmatprep.subr.mxu0 0.0
  %5987 = vmatpush1.msra.mxu0 0.0
  %5988 = vmatprep.subr.mxu0 0.0
  %5989 = vmatpush1.msra.mxu0 0.0
  %5990 = vmatprep.subr.mxu0 0.0
  %5991 = vmatpush1.msra.mxu0 0.0
  %5992 = vmatprep.subr.mxu0 0.0
  %5993 = vmatpush1.msra.mxu0 0.0
  %5994 = vmatprep.subr.mxu0 0.0
  %5995 = vmatpush1.msra.mxu0 0.0
  %5996 = vmatprep.subr.mxu0 0.0
  %5997 = vmatpush1.msra.mxu0 0.0
  %5998 = vmatprep.subr.mxu0 0.0
  %5999 = vmatpush1.msra.mxu0 0.0
  %6000 = vmatprep.subr.mxu0 0.0
  %6001 = vmatpush1.msra.mxu0 0.0
  %6002 = vmatprep.subr.mxu0 0.0
  %6003 = vmatpush1.msra.mxu0 0.0
  %6004 = vmatprep.subr.mxu0 0.0
  %6005 = vmatpush1.msra.mxu0 0.0
  %6006 = vmatprep.subr.mxu0 0.0
  %6007 = vmatpush1.msra.mxu0 0.0
  %6008 = vmatprep.subr.mxu0 0.0
  %6009 = vmatpush1.msra.mxu0 0.0
  %6010 = vmatprep.subr.mxu0 0.0
  %6011 = vmatpush1.msra.mxu0 0.0
  %6012 = vmatprep.subr.mxu0 0.0
  %6013 = vmatpush1.msra.mxu0 0.0
  %6014 = vmatprep.subr.mxu0 0.0
  %6015 = vmatpush1.msra.mxu0 0.0
  %6016 = vmatprep.subr.mxu0 0.0
  %6017 = vmatpush1.msra.mxu0 0.0
  %6018 = vmatprep.subr.mxu0 0.0
  %6019 = vmatpush1.msra.mxu0 0.0
  %6020 = vmatprep.subr.mxu0 0.0
  %6021 = vmatpush1.msra.mxu0 0.0
  %6022 = vmatprep.subr.mxu0 0.0
  %6023 = vmatpush1.msra.mxu0 0.0
  %6024 = vmatprep.subr.mxu0 0.0
  %6025 = vmatpush1.msra.mxu0 0.0
  %6026 = vmatprep.subr.mxu0 0.0
  %6027 = vmatpush1.msra.mxu0 0.0
  %6028 = vmatprep.subr.mxu0 0.0
  %6029 = vmatpush1.msra.mxu0 0.0
  %6030 = vmatprep.mubr.f32.mxu0 0.0
  %6031 = vmatmul.mubr.f32.gmra.mrb[0].mxu0 %v5961
  %v6032 = vpop.f32.mrb[0].mxu0
  %v6033 = vadd.f32 %v5798, %v6032
  %v6034 = vpop.f32.mrb[0].mxu0
  %v6035 = vadd.f32 %v5800, %v6034
  %6036 = vmatprep.mubr.f32.mxu0 0.0
  %6037 = vmatmul.mubr.f32.gmra.mrb[0].mxu0 %v5964
  %v6038 = vpop.f32.mrb[0].mxu0
  %v6039 = vadd.f32 %v5804, %v6038
  %v6040 = vpop.f32.mrb[0].mxu0
  %v6041 = vadd.f32 %v5806, %v6040
  %6042 = vdwg.mxu0
  %6043 = vmatprep.subr.mxu0 %v5655
  %6044 = vmatpush1.msra.mxu0 %v5654
  %6045 = vmatprep.subr.mxu0 %v5661
  %6046 = vmatpush1.msra.mxu0 %v5660
  %6047 = vmatprep.subr.mxu0 0.0
  %6048 = vmatpush1.msra.mxu0 0.0
  %6049 = vmatprep.subr.mxu0 0.0
  %6050 = vmatpush1.msra.mxu0 0.0
  %6051 = vmatprep.subr.mxu0 0.0
  %6052 = vmatpush1.msra.mxu0 0.0
  %6053 = vmatprep.subr.mxu0 0.0
  %6054 = vmatpush1.msra.mxu0 0.0
  %6055 = vmatprep.subr.mxu0 0.0
  %6056 = vmatpush1.msra.mxu0 0.0
  %6057 = vmatprep.subr.mxu0 0.0
  %6058 = vmatpush1.msra.mxu0 0.0
  %6059 = vmatprep.subr.mxu0 0.0
  %6060 = vmatpush1.msra.mxu0 0.0
  %6061 = vmatprep.subr.mxu0 0.0
  %6062 = vmatpush1.msra.mxu0 0.0
  %6063 = vmatprep.subr.mxu0 0.0
  %6064 = vmatpush1.msra.mxu0 0.0
  %6065 = vmatprep.subr.mxu0 0.0
  %6066 = vmatpush1.msra.mxu0 0.0
  %6067 = vmatprep.subr.mxu0 0.0
  %6068 = vmatpush1.msra.mxu0 0.0
  %6069 = vmatprep.subr.mxu0 0.0
  %6070 = vmatpush1.msra.mxu0 0.0
  %6071 = vmatprep.subr.mxu0 0.0
  %6072 = vmatpush1.msra.mxu0 0.0
  %6073 = vmatprep.subr.mxu0 0.0
  %6074 = vmatpush1.msra.mxu0 0.0
  %6075 = vmatprep.subr.mxu0 0.0
  %6076 = vmatpush1.msra.mxu0 0.0
  %6077 = vmatprep.subr.mxu0 0.0
  %6078 = vmatpush1.msra.mxu0 0.0
  %6079 = vmatprep.subr.mxu0 0.0
  %6080 = vmatpush1.msra.mxu0 0.0
  %6081 = vmatprep.subr.mxu0 0.0
  %6082 = vmatpush1.msra.mxu0 0.0
  %6083 = vmatprep.subr.mxu0 0.0
  %6084 = vmatpush1.msra.mxu0 0.0
  %6085 = vmatprep.subr.mxu0 0.0
  %6086 = vmatpush1.msra.mxu0 0.0
  %6087 = vmatprep.subr.mxu0 0.0
  %6088 = vmatpush1.msra.mxu0 0.0
  %6089 = vmatprep.subr.mxu0 0.0
  %6090 = vmatpush1.msra.mxu0 0.0
  %6091 = vmatprep.subr.mxu0 0.0
  %6092 = vmatpush1.msra.mxu0 0.0
  %6093 = vmatprep.subr.mxu0 0.0
  %6094 = vmatpush1.msra.mxu0 0.0
  %6095 = vmatprep.subr.mxu0 0.0
  %6096 = vmatpush1.msra.mxu0 0.0
  %6097 = vmatprep.subr.mxu0 0.0
  %6098 = vmatpush1.msra.mxu0 0.0
  %6099 = vmatprep.subr.mxu0 0.0
  %6100 = vmatpush1.msra.mxu0 0.0
  %6101 = vmatprep.subr.mxu0 0.0
  %6102 = vmatpush1.msra.mxu0 0.0
  %6103 = vmatprep.subr.mxu0 0.0
  %6104 = vmatpush1.msra.mxu0 0.0
  %6105 = vmatprep.subr.mxu0 0.0
  %6106 = vmatpush1.msra.mxu0 0.0
  %6107 = vmatprep.mubr.f32.mxu0 0.0
  %6108 = vmatmul.mubr.f32.gmra.mrb[0].mxu0 %v5961
  %v6109 = vpop.f32.mrb[0].mxu0
  %v6110 = vadd.f32 %v5875, %v6109
  %v6111 = vpop.f32.mrb[0].mxu0
  %v6112 = vadd.f32 %v5877, %v6111
  %6113 = vmatprep.mubr.f32.mxu0 0.0
  %6114 = vmatmul.mubr.f32.gmra.mrb[0].mxu0 %v5964
  %v6115 = vpop.f32.mrb[0].mxu0
  %v6116 = vadd.f32 %v5881, %v6115
  %v6117 = vpop.f32.mrb[0].mxu0
  %v6118 = vadd.f32 %v5883, %v6117
  %6119 = vdwg.mxu0
  %6120 = vmatprep.subr.mxu0 %v5657
  %6121 = vmatpush1.msra.mxu0 %v5656
  %6122 = vmatprep.subr.mxu0 %v5663
  %6123 = vmatpush1.msra.mxu0 %v5662
  %6124 = vmatprep.subr.mxu0 0.0
  %6125 = vmatpush1.msra.mxu0 0.0
  %6126 = vmatprep.subr.mxu0 0.0
  %6127 = vmatpush1.msra.mxu0 0.0
  %6128 = vmatprep.subr.mxu0 0.0
  %6129 = vmatpush1.msra.mxu0 0.0
  %6130 = vmatprep.subr.mxu0 0.0
  %6131 = vmatpush1.msra.mxu0 0.0
  %6132 = vmatprep.subr.mxu0 0.0
  %6133 = vmatpush1.msra.mxu0 0.0
  %6134 = vmatprep.subr.mxu0 0.0
  %6135 = vmatpush1.msra.mxu0 0.0
  %6136 = vmatprep.subr.mxu0 0.0
  %6137 = vmatpush1.msra.mxu0 0.0
  %6138 = vmatprep.subr.mxu0 0.0
  %6139 = vmatpush1.msra.mxu0 0.0
  %6140 = vmatprep.subr.mxu0 0.0
  %6141 = vmatpush1.msra.mxu0 0.0
  %6142 = vmatprep.subr.mxu0 0.0
  %6143 = vmatpush1.msra.mxu0 0.0
  %6144 = vmatprep.subr.mxu0 0.0
  %6145 = vmatpush1.msra.mxu0 0.0
  %6146 = vmatprep.subr.mxu0 0.0
  %6147 = vmatpush1.msra.mxu0 0.0
  %6148 = vmatprep.subr.mxu0 0.0
  %6149 = vmatpush1.msra.mxu0 0.0
  %6150 = vmatprep.subr.mxu0 0.0
  %6151 = vmatpush1.msra.mxu0 0.0
  %6152 = vmatprep.subr.mxu0 0.0
  %6153 = vmatpush1.msra.mxu0 0.0
  %6154 = vmatprep.subr.mxu0 0.0
  %6155 = vmatpush1.msra.mxu0 0.0
  %6156 = vmatprep.subr.mxu0 0.0
  %6157 = vmatpush1.msra.mxu0 0.0
  %6158 = vmatprep.subr.mxu0 0.0
  %6159 = vmatpush1.msra.mxu0 0.0
  %6160 = vmatprep.subr.mxu0 0.0
  %6161 = vmatpush1.msra.mxu0 0.0
  %6162 = vmatprep.subr.mxu0 0.0
  %6163 = vmatpush1.msra.mxu0 0.0
  %6164 = vmatprep.subr.mxu0 0.0
  %6165 = vmatpush1.msra.mxu0 0.0
  %6166 = vmatprep.subr.mxu0 0.0
  %6167 = vmatpush1.msra.mxu0 0.0
  %6168 = vmatprep.subr.mxu0 0.0
  %6169 = vmatpush1.msra.mxu0 0.0
  %6170 = vmatprep.subr.mxu0 0.0
  %6171 = vmatpush1.msra.mxu0 0.0
  %6172 = vmatprep.subr.mxu0 0.0
  %6173 = vmatpush1.msra.mxu0 0.0
  %6174 = vmatprep.subr.mxu0 0.0
  %6175 = vmatpush1.msra.mxu0 0.0
  %6176 = vmatprep.subr.mxu0 0.0
  %6177 = vmatpush1.msra.mxu0 0.0
  %6178 = vmatprep.subr.mxu0 0.0
  %6179 = vmatpush1.msra.mxu0 0.0
  %6180 = vmatprep.subr.mxu0 0.0
  %6181 = vmatpush1.msra.mxu0 0.0
  %6182 = vmatprep.subr.mxu0 0.0
  %6183 = vmatpush1.msra.mxu0 0.0
  %6184 = vmatprep.mubr.f32.mxu0 0.0
  %6185 = vmatmul.mubr.f32.gmra.mrb[0].mxu0 %v5961
  %v6186 = vpop.f32.mrb[0].mxu0
  %v6187 = vadd.f32 %v5952, %v6186
  %v6188 = vpop.f32.mrb[0].mxu0
  %6189 = vmatprep.mubr.f32.mxu0 0.0
  %6190 = vmatmul.mubr.f32.gmra.mrb[0].mxu0 %v5964
  %v6191 = vpop.f32.mrb[0].mxu0
  %v6192 = vadd.f32 %v5957, %v6191
  %v6193 = vpop.f32.mrb[0].mxu0
  %6194 = vdwg.mxu0
  %s6195 = scalar_lea.vmem %s3, 32
  %v6196 = vld [vmem:[%s6195] sm:$0xff]
  %v6197 = vld [vmem:[%s6195 + $0x8] sm:$0xff]
  %6198 = vrot.lane.b32.xlu0 %v5652, 126
  %v6199 = vpop.permute.xlu0 %6198
  %6200 = vrot.lane.b32.xlu0 %v5653, 126
  %v6201 = vpop.permute.xlu0 %6200
  %6202 = vrot.lane.b32.xlu0 %v5654, 126
  %v6203 = vpop.permute.xlu0 %6202
  %6204 = vrot.lane.b32.xlu0 %v5655, 126
  %v6205 = vpop.permute.xlu0 %6204
  %6206 = vrot.lane.b32.xlu0 %v5656, 126
  %v6207 = vpop.permute.xlu0 %6206
  %6208 = vrot.lane.b32.xlu0 %v5657, 126
  %v6209 = vpop.permute.xlu0 %6208
  %6210 = vrot.lane.b32.xlu0 %v5658, 126
  %v6211 = vpop.permute.xlu0 %6210
  %6212 = vrot.lane.b32.xlu0 %v5659, 126
  %v6213 = vpop.permute.xlu0 %6212
  %6214 = vrot.lane.b32.xlu0 %v5660, 126
  %v6215 = vpop.permute.xlu0 %6214
  %6216 = vrot.lane.b32.xlu0 %v5661, 126
  %v6217 = vpop.permute.xlu0 %6216
  %6218 = vrot.lane.b32.xlu0 %v5662, 126
  %v6219 = vpop.permute.xlu0 %6218
  %6220 = vrot.lane.b32.xlu0 %v5663, 126
  %v6221 = vpop.permute.xlu0 %6220
  %v6222 = vsel %vm608, %v6199, %v6201
  %v6223 = vsel %vm608, %v6201, %v6203
  %v6224 = vsel %vm608, %v6203, %v6205
  %v6225 = vsel %vm608, %v6205, %v6207
  %v6226 = vsel %vm608, %v6207, %v6209
  %v6227 = vsel %vm608, %v6211, %v6213
  %v6228 = vsel %vm608, %v6213, %v6215
  %v6229 = vsel %vm608, %v6215, %v6217
  %v6230 = vsel %vm608, %v6217, %v6219
  %v6231 = vsel %vm608, %v6219, %v6221
  %v6245 = vsel %vm110, %v6196, 0
  %v6248 = vsel %vm110, %v6197, 0
  %6250 = vmatprep.subr.mxu0 %v6223
  %6251 = vmatpush1.msra.mxu0 %v6222
  %6252 = vmatprep.subr.mxu0 %v6228
  %6253 = vmatpush1.msra.mxu0 %v6227
  %6254 = vmatprep.subr.mxu0 0.0
  %6255 = vmatpush1.msra.mxu0 0.0
  %6256 = vmatprep.subr.mxu0 0.0
  %6257 = vmatpush1.msra.mxu0 0.0
  %6258 = vmatprep.subr.mxu0 0.0
  %6259 = vmatpush1.msra.mxu0 0.0
  %6260 = vmatprep.subr.mxu0 0.0
  %6261 = vmatpush1.msra.mxu0 0.0
  %6262 = vmatprep.subr.mxu0 0.0
  %6263 = vmatpush1.msra.mxu0 0.0
  %6264 = vmatprep.subr.mxu0 0.0
  %6265 = vmatpush1.msra.mxu0 0.0
  %6266 = vmatprep.subr.mxu0 0.0
  %6267 = vmatpush1.msra.mxu0 0.0
  %6268 = vmatprep.subr.mxu0 0.0
  %6269 = vmatpush1.msra.mxu0 0.0
  %6270 = vmatprep.subr.mxu0 0.0
  %6271 = vmatpush1.msra.mxu0 0.0
  %6272 = vmatprep.subr.mxu0 0.0
  %6273 = vmatpush1.msra.mxu0 0.0
  %6274 = vmatprep.subr.mxu0 0.0
  %6275 = vmatpush1.msra.mxu0 0.0
  %6276 = vmatprep.subr.mxu0 0.0
  %6277 = vmatpush1.msra.mxu0 0.0
  %6278 = vmatprep.subr.mxu0 0.0
  %6279 = vmatpush1.msra.mxu0 0.0
  %6280 = vmatprep.subr.mxu0 0.0
  %6281 = vmatpush1.msra.mxu0 0.0
  %6282 = vmatprep.subr.mxu0 0.0
  %6283 = vmatpush1.msra.mxu0 0.0
  %6284 = vmatprep.subr.mxu0 0.0
  %6285 = vmatpush1.msra.mxu0 0.0
  %6286 = vmatprep.subr.mxu0 0.0
  %6287 = vmatpush1.msra.mxu0 0.0
  %6288 = vmatprep.subr.mxu0 0.0
  %6289 = vmatpush1.msra.mxu0 0.0
  %6290 = vmatprep.subr.mxu0 0.0
  %6291 = vmatpush1.msra.mxu0 0.0
  %6292 = vmatprep.subr.mxu0 0.0
  %6293 = vmatpush1.msra.mxu0 0.0
  %6294 = vmatprep.subr.mxu0 0.0
  %6295 = vmatpush1.msra.mxu0 0.0
  %6296 = vmatprep.subr.mxu0 0.0
  %6297 = vmatpush1.msra.mxu0 0.0
  %6298 = vmatprep.subr.mxu0 0.0
  %6299 = vmatpush1.msra.mxu0 0.0
  %6300 = vmatprep.subr.mxu0 0.0
  %6301 = vmatpush1.msra.mxu0 0.0
  %6302 = vmatprep.subr.mxu0 0.0
  %6303 = vmatpush1.msra.mxu0 0.0
  %6304 = vmatprep.subr.mxu0 0.0
  %6305 = vmatpush1.msra.mxu0 0.0
  %6306 = vmatprep.subr.mxu0 0.0
  %6307 = vmatpush1.msra.mxu0 0.0
  %6308 = vmatprep.subr.mxu0 0.0
  %6309 = vmatpush1.msra.mxu0 0.0
  %6310 = vmatprep.subr.mxu0 0.0
  %6311 = vmatpush1.msra.mxu0 0.0
  %6312 = vmatprep.subr.mxu0 0.0
  %6313 = vmatpush1.msra.mxu0 0.0
  %6314 = vmatprep.mubr.f32.mxu0 0.0
  %6315 = vmatmul.mubr.f32.gmra.mrb[0].mxu0 %v6245
  %v6316 = vpop.f32.mrb[0].mxu0
  %v6317 = vadd.f32 0.0, %v6316
  %v6318 = vpop.f32.mrb[0].mxu0
  %v6319 = vadd.f32 0.0, %v6318
  %6320 = vmatprep.mubr.f32.mxu0 0.0
  %6321 = vmatmul.mubr.f32.gmra.mrb[0].mxu0 %v6248
  %v6322 = vpop.f32.mrb[0].mxu0
  %v6323 = vadd.f32 0.0, %v6322
  %v6324 = vpop.f32.mrb[0].mxu0
  %v6325 = vadd.f32 0.0, %v6324
  %6326 = vdwg.mxu0
  %6327 = vmatprep.subr.mxu0 %v6225
  %6328 = vmatpush1.msra.mxu0 %v6224
  %6329 = vmatprep.subr.mxu0 %v6230
  %6330 = vmatpush1.msra.mxu0 %v6229
  %6331 = vmatprep.subr.mxu0 0.0
  %6332 = vmatpush1.msra.mxu0 0.0
  %6333 = vmatprep.subr.mxu0 0.0
  %6334 = vmatpush1.msra.mxu0 0.0
  %6335 = vmatprep.subr.mxu0 0.0
  %6336 = vmatpush1.msra.mxu0 0.0
  %6337 = vmatprep.subr.mxu0 0.0
  %6338 = vmatpush1.msra.mxu0 0.0
  %6339 = vmatprep.subr.mxu0 0.0
  %6340 = vmatpush1.msra.mxu0 0.0
  %6341 = vmatprep.subr.mxu0 0.0
  %6342 = vmatpush1.msra.mxu0 0.0
  %6343 = vmatprep.subr.mxu0 0.0
  %6344 = vmatpush1.msra.mxu0 0.0
  %6345 = vmatprep.subr.mxu0 0.0
  %6346 = vmatpush1.msra.mxu0 0.0
  %6347 = vmatprep.subr.mxu0 0.0
  %6348 = vmatpush1.msra.mxu0 0.0
  %6349 = vmatprep.subr.mxu0 0.0
  %6350 = vmatpush1.msra.mxu0 0.0
  %6351 = vmatprep.subr.mxu0 0.0
  %6352 = vmatpush1.msra.mxu0 0.0
  %6353 = vmatprep.subr.mxu0 0.0
  %6354 = vmatpush1.msra.mxu0 0.0
  %6355 = vmatprep.subr.mxu0 0.0
  %6356 = vmatpush1.msra.mxu0 0.0
  %6357 = vmatprep.subr.mxu0 0.0
  %6358 = vmatpush1.msra.mxu0 0.0
  %6359 = vmatprep.subr.mxu0 0.0
  %6360 = vmatpush1.msra.mxu0 0.0
  %6361 = vmatprep.subr.mxu0 0.0
  %6362 = vmatpush1.msra.mxu0 0.0
  %6363 = vmatprep.subr.mxu0 0.0
  %6364 = vmatpush1.msra.mxu0 0.0
  %6365 = vmatprep.subr.mxu0 0.0
  %6366 = vmatpush1.msra.mxu0 0.0
  %6367 = vmatprep.subr.mxu0 0.0
  %6368 = vmatpush1.msra.mxu0 0.0
  %6369 = vmatprep.subr.mxu0 0.0
  %6370 = vmatpush1.msra.mxu0 0.0
  %6371 = vmatprep.subr.mxu0 0.0
  %6372 = vmatpush1.msra.mxu0 0.0
  %6373 = vmatprep.subr.mxu0 0.0
  %6374 = vmatpush1.msra.mxu0 0.0
  %6375 = vmatprep.subr.mxu0 0.0
  %6376 = vmatpush1.msra.mxu0 0.0
  %6377 = vmatprep.subr.mxu0 0.0
  %6378 = vmatpush1.msra.mxu0 0.0
  %6379 = vmatprep.subr.mxu0 0.0
  %6380 = vmatpush1.msra.mxu0 0.0
  %6381 = vmatprep.subr.mxu0 0.0
  %6382 = vmatpush1.msra.mxu0 0.0
  %6383 = vmatprep.subr.mxu0 0.0
  %6384 = vmatpush1.msra.mxu0 0.0
  %6385 = vmatprep.subr.mxu0 0.0
  %6386 = vmatpush1.msra.mxu0 0.0
  %6387 = vmatprep.subr.mxu0 0.0
  %6388 = vmatpush1.msra.mxu0 0.0
  %6389 = vmatprep.subr.mxu0 0.0
  %6390 = vmatpush1.msra.mxu0 0.0
  %6391 = vmatprep.mubr.f32.mxu0 0.0
  %6392 = vmatmul.mubr.f32.gmra.mrb[0].mxu0 %v6245
  %v6393 = vpop.f32.mrb[0].mxu0
  %v6394 = vadd.f32 0.0, %v6393
  %v6395 = vpop.f32.mrb[0].mxu0
  %v6396 = vadd.f32 0.0, %v6395
  %6397 = vmatprep.mubr.f32.mxu0 0.0
  %6398 = vmatmul.mubr.f32.gmra.mrb[0].mxu0 %v6248
  %v6399 = vpop.f32.mrb[0].mxu0
  %v6400 = vadd.f32 0.0, %v6399
  %v6401 = vpop.f32.mrb[0].mxu0
  %v6402 = vadd.f32 0.0, %v6401
  %6403 = vdwg.mxu0
  %6404 = vmatprep.subr.mxu0 %v6209
  %6405 = vmatpush1.msra.mxu0 %v6226
  %6406 = vmatprep.subr.mxu0 %v6221
  %6407 = vmatpush1.msra.mxu0 %v6231
  %6408 = vmatprep.subr.mxu0 0.0
  %6409 = vmatpush1.msra.mxu0 0.0
  %6410 = vmatprep.subr.mxu0 0.0
  %6411 = vmatpush1.msra.mxu0 0.0
  %6412 = vmatprep.subr.mxu0 0.0
  %6413 = vmatpush1.msra.mxu0 0.0
  %6414 = vmatprep.subr.mxu0 0.0
  %6415 = vmatpush1.msra.mxu0 0.0
  %6416 = vmatprep.subr.mxu0 0.0
  %6417 = vmatpush1.msra.mxu0 0.0
  %6418 = vmatprep.subr.mxu0 0.0
  %6419 = vmatpush1.msra.mxu0 0.0
  %6420 = vmatprep.subr.mxu0 0.0
  %6421 = vmatpush1.msra.mxu0 0.0
  %6422 = vmatprep.subr.mxu0 0.0
  %6423 = vmatpush1.msra.mxu0 0.0
  %6424 = vmatprep.subr.mxu0 0.0
  %6425 = vmatpush1.msra.mxu0 0.0
  %6426 = vmatprep.subr.mxu0 0.0
  %6427 = vmatpush1.msra.mxu0 0.0
  %6428 = vmatprep.subr.mxu0 0.0
  %6429 = vmatpush1.msra.mxu0 0.0
  %6430 = vmatprep.subr.mxu0 0.0
  %6431 = vmatpush1.msra.mxu0 0.0
  %6432 = vmatprep.subr.mxu0 0.0
  %6433 = vmatpush1.msra.mxu0 0.0
  %6434 = vmatprep.subr.mxu0 0.0
  %6435 = vmatpush1.msra.mxu0 0.0
  %6436 = vmatprep.subr.mxu0 0.0
  %6437 = vmatpush1.msra.mxu0 0.0
  %6438 = vmatprep.subr.mxu0 0.0
  %6439 = vmatpush1.msra.mxu0 0.0
  %6440 = vmatprep.subr.mxu0 0.0
  %6441 = vmatpush1.msra.mxu0 0.0
  %6442 = vmatprep.subr.mxu0 0.0
  %6443 = vmatpush1.msra.mxu0 0.0
  %6444 = vmatprep.subr.mxu0 0.0
  %6445 = vmatpush1.msra.mxu0 0.0
  %6446 = vmatprep.subr.mxu0 0.0
  %6447 = vmatpush1.msra.mxu0 0.0
  %6448 = vmatprep.subr.mxu0 0.0
  %6449 = vmatpush1.msra.mxu0 0.0
  %6450 = vmatprep.subr.mxu0 0.0
  %6451 = vmatpush1.msra.mxu0 0.0
  %6452 = vmatprep.subr.mxu0 0.0
  %6453 = vmatpush1.msra.mxu0 0.0
  %6454 = vmatprep.subr.mxu0 0.0
  %6455 = vmatpush1.msra.mxu0 0.0
  %6456 = vmatprep.subr.mxu0 0.0
  %6457 = vmatpush1.msra.mxu0 0.0
  %6458 = vmatprep.subr.mxu0 0.0
  %6459 = vmatpush1.msra.mxu0 0.0
  %6460 = vmatprep.subr.mxu0 0.0
  %6461 = vmatpush1.msra.mxu0 0.0
  %6462 = vmatprep.subr.mxu0 0.0
  %6463 = vmatpush1.msra.mxu0 0.0
  %6464 = vmatprep.subr.mxu0 0.0
  %6465 = vmatpush1.msra.mxu0 0.0
  %6466 = vmatprep.subr.mxu0 0.0
  %6467 = vmatpush1.msra.mxu0 0.0
  %6468 = vmatprep.mubr.f32.mxu0 0.0
  %6469 = vmatmul.mubr.f32.gmra.mrb[0].mxu0 %v6245
  %v6470 = vpop.f32.mrb[0].mxu0
  %v6471 = vadd.f32 0.0, %v6470
  %v6472 = vpop.f32.mrb[0].mxu0
  %6473 = vmatprep.mubr.f32.mxu0 0.0
  %6474 = vmatmul.mubr.f32.gmra.mrb[0].mxu0 %v6248
  %v6475 = vpop.f32.mrb[0].mxu0
  %v6476 = vadd.f32 0.0, %v6475
  %v6477 = vpop.f32.mrb[0].mxu0
  %6478 = vdwg.mxu0
  %v6479 = vadd.f32 %v6033, %v6317
  %v6480 = vadd.f32 %v6035, %v6319
  %v6481 = vadd.f32 %v6110, %v6394
  %v6482 = vadd.f32 %v6112, %v6396
  %v6483 = vadd.f32 %v6187, %v6471
  %v6484 = vadd.f32 %v6039, %v6323
  %v6485 = vadd.f32 %v6041, %v6325
  %v6486 = vadd.f32 %v6116, %v6400
  %v6487 = vadd.f32 %v6118, %v6402
  %v6488 = vadd.f32 %v6192, %v6476
  %s6489 = scalar_lea.vmem %s3, 48
  %v6490 = vld [vmem:[%s6489] sm:$0xff]
  %v6491 = vld [vmem:[%s6489 + $0x8] sm:$0xff]
  %6492 = vrot.lane.b32.xlu0 %v5652, 110
  %v6493 = vpop.permute.xlu0 %6492
  %6494 = vrot.lane.b32.xlu0 %v5653, 110
  %v6495 = vpop.permute.xlu0 %6494
  %6496 = vrot.lane.b32.xlu0 %v5654, 110
  %v6497 = vpop.permute.xlu0 %6496
  %6498 = vrot.lane.b32.xlu0 %v5655, 110
  %v6499 = vpop.permute.xlu0 %6498
  %6500 = vrot.lane.b32.xlu0 %v5656, 110
  %v6501 = vpop.permute.xlu0 %6500
  %6502 = vrot.lane.b32.xlu0 %v5657, 110
  %v6503 = vpop.permute.xlu0 %6502
  %6504 = vrot.lane.b32.xlu0 %v5658, 110
  %v6505 = vpop.permute.xlu0 %6504
  %6506 = vrot.lane.b32.xlu0 %v5659, 110
  %v6507 = vpop.permute.xlu0 %6506
  %6508 = vrot.lane.b32.xlu0 %v5660, 110
  %v6509 = vpop.permute.xlu0 %6508
  %6510 = vrot.lane.b32.xlu0 %v5661, 110
  %v6511 = vpop.permute.xlu0 %6510
  %6512 = vrot.lane.b32.xlu0 %v5662, 110
  %v6513 = vpop.permute.xlu0 %6512
  %6514 = vrot.lane.b32.xlu0 %v5663, 110
  %v6515 = vpop.permute.xlu0 %6514
  %v6516 = vsel %vm903, %v6493, %v6495
  %v6517 = vsel %vm903, %v6495, %v6497
  %v6518 = vsel %vm903, %v6497, %v6499
  %v6519 = vsel %vm903, %v6499, %v6501
  %v6520 = vsel %vm903, %v6501, %v6503
  %v6521 = vsel %vm903, %v6505, %v6507
  %v6522 = vsel %vm903, %v6507, %v6509
  %v6523 = vsel %vm903, %v6509, %v6511
  %v6524 = vsel %vm903, %v6511, %v6513
  %v6525 = vsel %vm903, %v6513, %v6515
  %v6539 = vsel %vm110, %v6490, 0
  %v6542 = vsel %vm110, %v6491, 0
  %6544 = vmatprep.subr.mxu0 %v6517
  %6545 = vmatpush1.msra.mxu0 %v6516
  %6546 = vmatprep.subr.mxu0 %v6522
  %6547 = vmatpush1.msra.mxu0 %v6521
  %6548 = vmatprep.subr.mxu0 0.0
  %6549 = vmatpush1.msra.mxu0 0.0
  %6550 = vmatprep.subr.mxu0 0.0
  %6551 = vmatpush1.msra.mxu0 0.0
  %6552 = vmatprep.subr.mxu0 0.0
  %6553 = vmatpush1.msra.mxu0 0.0
  %6554 = vmatprep.subr.mxu0 0.0
  %6555 = vmatpush1.msra.mxu0 0.0
  %6556 = vmatprep.subr.mxu0 0.0
  %6557 = vmatpush1.msra.mxu0 0.0
  %6558 = vmatprep.subr.mxu0 0.0
  %6559 = vmatpush1.msra.mxu0 0.0
  %6560 = vmatprep.subr.mxu0 0.0
  %6561 = vmatpush1.msra.mxu0 0.0
  %6562 = vmatprep.subr.mxu0 0.0
  %6563 = vmatpush1.msra.mxu0 0.0
  %6564 = vmatprep.subr.mxu0 0.0
  %6565 = vmatpush1.msra.mxu0 0.0
  %6566 = vmatprep.subr.mxu0 0.0
  %6567 = vmatpush1.msra.mxu0 0.0
  %6568 = vmatprep.subr.mxu0 0.0
  %6569 = vmatpush1.msra.mxu0 0.0
  %6570 = vmatprep.subr.mxu0 0.0
  %6571 = vmatpush1.msra.mxu0 0.0
  %6572 = vmatprep.subr.mxu0 0.0
  %6573 = vmatpush1.msra.mxu0 0.0
  %6574 = vmatprep.subr.mxu0 0.0
  %6575 = vmatpush1.msra.mxu0 0.0
  %6576 = vmatprep.subr.mxu0 0.0
  %6577 = vmatpush1.msra.mxu0 0.0
  %6578 = vmatprep.subr.mxu0 0.0
  %6579 = vmatpush1.msra.mxu0 0.0
  %6580 = vmatprep.subr.mxu0 0.0
  %6581 = vmatpush1.msra.mxu0 0.0
  %6582 = vmatprep.subr.mxu0 0.0
  %6583 = vmatpush1.msra.mxu0 0.0
  %6584 = vmatprep.subr.mxu0 0.0
  %6585 = vmatpush1.msra.mxu0 0.0
  %6586 = vmatprep.subr.mxu0 0.0
  %6587 = vmatpush1.msra.mxu0 0.0
  %6588 = vmatprep.subr.mxu0 0.0
  %6589 = vmatpush1.msra.mxu0 0.0
  %6590 = vmatprep.subr.mxu0 0.0
  %6591 = vmatpush1.msra.mxu0 0.0
  %6592 = vmatprep.subr.mxu0 0.0
  %6593 = vmatpush1.msra.mxu0 0.0
  %6594 = vmatprep.subr.mxu0 0.0
  %6595 = vmatpush1.msra.mxu0 0.0
  %6596 = vmatprep.subr.mxu0 0.0
  %6597 = vmatpush1.msra.mxu0 0.0
  %6598 = vmatprep.subr.mxu0 0.0
  %6599 = vmatpush1.msra.mxu0 0.0
  %6600 = vmatprep.subr.mxu0 0.0
  %6601 = vmatpush1.msra.mxu0 0.0
  %6602 = vmatprep.subr.mxu0 0.0
  %6603 = vmatpush1.msra.mxu0 0.0
  %6604 = vmatprep.subr.mxu0 0.0
  %6605 = vmatpush1.msra.mxu0 0.0
  %6606 = vmatprep.subr.mxu0 0.0
  %6607 = vmatpush1.msra.mxu0 0.0
  %6608 = vmatprep.mubr.f32.mxu0 0.0
  %6609 = vmatmul.mubr.f32.gmra.mrb[0].mxu0 %v6539
  %v6610 = vpop.f32.mrb[0].mxu0
  %v6611 = vadd.f32 0.0, %v6610
  %v6612 = vpop.f32.mrb[0].mxu0
  %v6613 = vadd.f32 0.0, %v6612
  %6614 = vmatprep.mubr.f32.mxu0 0.0
  %6615 = vmatmul.mubr.f32.gmra.mrb[0].mxu0 %v6542
  %v6616 = vpop.f32.mrb[0].mxu0
  %v6617 = vadd.f32 0.0, %v6616
  %v6618 = vpop.f32.mrb[0].mxu0
  %v6619 = vadd.f32 0.0, %v6618
  %6620 = vdwg.mxu0
  %6621 = vmatprep.subr.mxu0 %v6519
  %6622 = vmatpush1.msra.mxu0 %v6518
  %6623 = vmatprep.subr.mxu0 %v6524
  %6624 = vmatpush1.msra.mxu0 %v6523
  %6625 = vmatprep.subr.mxu0 0.0
  %6626 = vmatpush1.msra.mxu0 0.0
  %6627 = vmatprep.subr.mxu0 0.0
  %6628 = vmatpush1.msra.mxu0 0.0
  %6629 = vmatprep.subr.mxu0 0.0
  %6630 = vmatpush1.msra.mxu0 0.0
  %6631 = vmatprep.subr.mxu0 0.0
  %6632 = vmatpush1.msra.mxu0 0.0
  %6633 = vmatprep.subr.mxu0 0.0
  %6634 = vmatpush1.msra.mxu0 0.0
  %6635 = vmatprep.subr.mxu0 0.0
  %6636 = vmatpush1.msra.mxu0 0.0
  %6637 = vmatprep.subr.mxu0 0.0
  %6638 = vmatpush1.msra.mxu0 0.0
  %6639 = vmatprep.subr.mxu0 0.0
  %6640 = vmatpush1.msra.mxu0 0.0
  %6641 = vmatprep.subr.mxu0 0.0
  %6642 = vmatpush1.msra.mxu0 0.0
  %6643 = vmatprep.subr.mxu0 0.0
  %6644 = vmatpush1.msra.mxu0 0.0
  %6645 = vmatprep.subr.mxu0 0.0
  %6646 = vmatpush1.msra.mxu0 0.0
  %6647 = vmatprep.subr.mxu0 0.0
  %6648 = vmatpush1.msra.mxu0 0.0
  %6649 = vmatprep.subr.mxu0 0.0
  %6650 = vmatpush1.msra.mxu0 0.0
  %6651 = vmatprep.subr.mxu0 0.0
  %6652 = vmatpush1.msra.mxu0 0.0
  %6653 = vmatprep.subr.mxu0 0.0
  %6654 = vmatpush1.msra.mxu0 0.0
  %6655 = vmatprep.subr.mxu0 0.0
  %6656 = vmatpush1.msra.mxu0 0.0
  %6657 = vmatprep.subr.mxu0 0.0
  %6658 = vmatpush1.msra.mxu0 0.0
  %6659 = vmatprep.subr.mxu0 0.0
  %6660 = vmatpush1.msra.mxu0 0.0
  %6661 = vmatprep.subr.mxu0 0.0
  %6662 = vmatpush1.msra.mxu0 0.0
  %6663 = vmatprep.subr.mxu0 0.0
  %6664 = vmatpush1.msra.mxu0 0.0
  %6665 = vmatprep.subr.mxu0 0.0
  %6666 = vmatpush1.msra.mxu0 0.0
  %6667 = vmatprep.subr.mxu0 0.0
  %6668 = vmatpush1.msra.mxu0 0.0
  %6669 = vmatprep.subr.mxu0 0.0
  %6670 = vmatpush1.msra.mxu0 0.0
  %6671 = vmatprep.subr.mxu0 0.0
  %6672 = vmatpush1.msra.mxu0 0.0
  %6673 = vmatprep.subr.mxu0 0.0
  %6674 = vmatpush1.msra.mxu0 0.0
  %6675 = vmatprep.subr.mxu0 0.0
  %6676 = vmatpush1.msra.mxu0 0.0
  %6677 = vmatprep.subr.mxu0 0.0
  %6678 = vmatpush1.msra.mxu0 0.0
  %6679 = vmatprep.subr.mxu0 0.0
  %6680 = vmatpush1.msra.mxu0 0.0
  %6681 = vmatprep.subr.mxu0 0.0
  %6682 = vmatpush1.msra.mxu0 0.0
  %6683 = vmatprep.subr.mxu0 0.0
  %6684 = vmatpush1.msra.mxu0 0.0
  %6685 = vmatprep.mubr.f32.mxu0 0.0
  %6686 = vmatmul.mubr.f32.gmra.mrb[0].mxu0 %v6539
  %v6687 = vpop.f32.mrb[0].mxu0
  %v6688 = vadd.f32 0.0, %v6687
  %v6689 = vpop.f32.mrb[0].mxu0
  %v6690 = vadd.f32 0.0, %v6689
  %6691 = vmatprep.mubr.f32.mxu0 0.0
  %6692 = vmatmul.mubr.f32.gmra.mrb[0].mxu0 %v6542
  %v6693 = vpop.f32.mrb[0].mxu0
  %v6694 = vadd.f32 0.0, %v6693
  %v6695 = vpop.f32.mrb[0].mxu0
  %v6696 = vadd.f32 0.0, %v6695
  %6697 = vdwg.mxu0
  %6698 = vmatprep.subr.mxu0 %v6503
  %6699 = vmatpush1.msra.mxu0 %v6520
  %6700 = vmatprep.subr.mxu0 %v6515
  %6701 = vmatpush1.msra.mxu0 %v6525
  %6702 = vmatprep.subr.mxu0 0.0
  %6703 = vmatpush1.msra.mxu0 0.0
  %6704 = vmatprep.subr.mxu0 0.0
  %6705 = vmatpush1.msra.mxu0 0.0
  %6706 = vmatprep.subr.mxu0 0.0
  %6707 = vmatpush1.msra.mxu0 0.0
  %6708 = vmatprep.subr.mxu0 0.0
  %6709 = vmatpush1.msra.mxu0 0.0
  %6710 = vmatprep.subr.mxu0 0.0
  %6711 = vmatpush1.msra.mxu0 0.0
  %6712 = vmatprep.subr.mxu0 0.0
  %6713 = vmatpush1.msra.mxu0 0.0
  %6714 = vmatprep.subr.mxu0 0.0
  %6715 = vmatpush1.msra.mxu0 0.0
  %6716 = vmatprep.subr.mxu0 0.0
  %6717 = vmatpush1.msra.mxu0 0.0
  %6718 = vmatprep.subr.mxu0 0.0
  %6719 = vmatpush1.msra.mxu0 0.0
  %6720 = vmatprep.subr.mxu0 0.0
  %6721 = vmatpush1.msra.mxu0 0.0
  %6722 = vmatprep.subr.mxu0 0.0
  %6723 = vmatpush1.msra.mxu0 0.0
  %6724 = vmatprep.subr.mxu0 0.0
  %6725 = vmatpush1.msra.mxu0 0.0
  %6726 = vmatprep.subr.mxu0 0.0
  %6727 = vmatpush1.msra.mxu0 0.0
  %6728 = vmatprep.subr.mxu0 0.0
  %6729 = vmatpush1.msra.mxu0 0.0
  %6730 = vmatprep.subr.mxu0 0.0
  %6731 = vmatpush1.msra.mxu0 0.0
  %6732 = vmatprep.subr.mxu0 0.0
  %6733 = vmatpush1.msra.mxu0 0.0
  %6734 = vmatprep.subr.mxu0 0.0
  %6735 = vmatpush1.msra.mxu0 0.0
  %6736 = vmatprep.subr.mxu0 0.0
  %6737 = vmatpush1.msra.mxu0 0.0
  %6738 = vmatprep.subr.mxu0 0.0
  %6739 = vmatpush1.msra.mxu0 0.0
  %6740 = vmatprep.subr.mxu0 0.0
  %6741 = vmatpush1.msra.mxu0 0.0
  %6742 = vmatprep.subr.mxu0 0.0
  %6743 = vmatpush1.msra.mxu0 0.0
  %6744 = vmatprep.subr.mxu0 0.0
  %6745 = vmatpush1.msra.mxu0 0.0
  %6746 = vmatprep.subr.mxu0 0.0
  %6747 = vmatpush1.msra.mxu0 0.0
  %6748 = vmatprep.subr.mxu0 0.0
  %6749 = vmatpush1.msra.mxu0 0.0
  %6750 = vmatprep.subr.mxu0 0.0
  %6751 = vmatpush1.msra.mxu0 0.0
  %6752 = vmatprep.subr.mxu0 0.0
  %6753 = vmatpush1.msra.mxu0 0.0
  %6754 = vmatprep.subr.mxu0 0.0
  %6755 = vmatpush1.msra.mxu0 0.0
  %6756 = vmatprep.subr.mxu0 0.0
  %6757 = vmatpush1.msra.mxu0 0.0
  %6758 = vmatprep.subr.mxu0 0.0
  %6759 = vmatpush1.msra.mxu0 0.0
  %6760 = vmatprep.subr.mxu0 0.0
  %6761 = vmatpush1.msra.mxu0 0.0
  %6762 = vmatprep.mubr.f32.mxu0 0.0
  %6763 = vmatmul.mubr.f32.gmra.mrb[0].mxu0 %v6539
  %v6764 = vpop.f32.mrb[0].mxu0
  %v6765 = vadd.f32 0.0, %v6764
  %v6766 = vpop.f32.mrb[0].mxu0
  %6767 = vmatprep.mubr.f32.mxu0 0.0
  %6768 = vmatmul.mubr.f32.gmra.mrb[0].mxu0 %v6542
  %v6769 = vpop.f32.mrb[0].mxu0
  %v6770 = vadd.f32 0.0, %v6769
  %v6771 = vpop.f32.mrb[0].mxu0
  %6772 = vdwg.mxu0
  %v6773 = vadd.f32 %v6479, %v6611
  %v6774 = vadd.f32 %v6480, %v6613
  %v6775 = vadd.f32 %v6481, %v6688
  %v6776 = vadd.f32 %v6482, %v6690
  %v6777 = vadd.f32 %v6483, %v6765
  %v6778 = vadd.f32 %v6484, %v6617
  %v6779 = vadd.f32 %v6485, %v6619
  %v6780 = vadd.f32 %v6486, %v6694
  %v6781 = vadd.f32 %v6487, %v6696
  %v6782 = vadd.f32 %v6488, %v6770
  %s6783 = scalar_lea.vmem %s3, 64
  %v6784 = vld [vmem:[%s6783] sm:$0xff]
  %v6785 = vld [vmem:[%s6783 + $0x8] sm:$0xff]
  %6786 = vrot.lane.b32.xlu0 %v5652, 109
  %v6787 = vpop.permute.xlu0 %6786
  %6788 = vrot.lane.b32.xlu0 %v5653, 109
  %v6789 = vpop.permute.xlu0 %6788
  %6790 = vrot.lane.b32.xlu0 %v5654, 109
  %v6791 = vpop.permute.xlu0 %6790
  %6792 = vrot.lane.b32.xlu0 %v5655, 109
  %v6793 = vpop.permute.xlu0 %6792
  %6794 = vrot.lane.b32.xlu0 %v5656, 109
  %v6795 = vpop.permute.xlu0 %6794
  %6796 = vrot.lane.b32.xlu0 %v5657, 109
  %v6797 = vpop.permute.xlu0 %6796
  %6798 = vrot.lane.b32.xlu0 %v5658, 109
  %v6799 = vpop.permute.xlu0 %6798
  %6800 = vrot.lane.b32.xlu0 %v5659, 109
  %v6801 = vpop.permute.xlu0 %6800
  %6802 = vrot.lane.b32.xlu0 %v5660, 109
  %v6803 = vpop.permute.xlu0 %6802
  %6804 = vrot.lane.b32.xlu0 %v5661, 109
  %v6805 = vpop.permute.xlu0 %6804
  %6806 = vrot.lane.b32.xlu0 %v5662, 109
  %v6807 = vpop.permute.xlu0 %6806
  %6808 = vrot.lane.b32.xlu0 %v5663, 109
  %v6809 = vpop.permute.xlu0 %6808
  %v6810 = vsel %vm1198, %v6787, %v6789
  %v6811 = vsel %vm1198, %v6789, %v6791
  %v6812 = vsel %vm1198, %v6791, %v6793
  %v6813 = vsel %vm1198, %v6793, %v6795
  %v6814 = vsel %vm1198, %v6795, %v6797
  %v6815 = vsel %vm1198, %v6799, %v6801
  %v6816 = vsel %vm1198, %v6801, %v6803
  %v6817 = vsel %vm1198, %v6803, %v6805
  %v6818 = vsel %vm1198, %v6805, %v6807
  %v6819 = vsel %vm1198, %v6807, %v6809
  %v6833 = vsel %vm110, %v6784, 0
  %v6836 = vsel %vm110, %v6785, 0
  %6838 = vmatprep.subr.mxu0 %v6811
  %6839 = vmatpush1.msra.mxu0 %v6810
  %6840 = vmatprep.subr.mxu0 %v6816
  %6841 = vmatpush1.msra.mxu0 %v6815
  %6842 = vmatprep.subr.mxu0 0.0
  %6843 = vmatpush1.msra.mxu0 0.0
  %6844 = vmatprep.subr.mxu0 0.0
  %6845 = vmatpush1.msra.mxu0 0.0
  %6846 = vmatprep.subr.mxu0 0.0
  %6847 = vmatpush1.msra.mxu0 0.0
  %6848 = vmatprep.subr.mxu0 0.0
  %6849 = vmatpush1.msra.mxu0 0.0
  %6850 = vmatprep.subr.mxu0 0.0
  %6851 = vmatpush1.msra.mxu0 0.0
  %6852 = vmatprep.subr.mxu0 0.0
  %6853 = vmatpush1.msra.mxu0 0.0
  %6854 = vmatprep.subr.mxu0 0.0
  %6855 = vmatpush1.msra.mxu0 0.0
  %6856 = vmatprep.subr.mxu0 0.0
  %6857 = vmatpush1.msra.mxu0 0.0
  %6858 = vmatprep.subr.mxu0 0.0
  %6859 = vmatpush1.msra.mxu0 0.0
  %6860 = vmatprep.subr.mxu0 0.0
  %6861 = vmatpush1.msra.mxu0 0.0
  %6862 = vmatprep.subr.mxu0 0.0
  %6863 = vmatpush1.msra.mxu0 0.0
  %6864 = vmatprep.subr.mxu0 0.0
  %6865 = vmatpush1.msra.mxu0 0.0
  %6866 = vmatprep.subr.mxu0 0.0
  %6867 = vmatpush1.msra.mxu0 0.0
  %6868 = vmatprep.subr.mxu0 0.0
  %6869 = vmatpush1.msra.mxu0 0.0
  %6870 = vmatprep.subr.mxu0 0.0
  %6871 = vmatpush1.msra.mxu0 0.0
  %6872 = vmatprep.subr.mxu0 0.0
  %6873 = vmatpush1.msra.mxu0 0.0
  %6874 = vmatprep.subr.mxu0 0.0
  %6875 = vmatpush1.msra.mxu0 0.0
  %6876 = vmatprep.subr.mxu0 0.0
  %6877 = vmatpush1.msra.mxu0 0.0
  %6878 = vmatprep.subr.mxu0 0.0
  %6879 = vmatpush1.msra.mxu0 0.0
  %6880 = vmatprep.subr.mxu0 0.0
  %6881 = vmatpush1.msra.mxu0 0.0
  %6882 = vmatprep.subr.mxu0 0.0
  %6883 = vmatpush1.msra.mxu0 0.0
  %6884 = vmatprep.subr.mxu0 0.0
  %6885 = vmatpush1.msra.mxu0 0.0
  %6886 = vmatprep.subr.mxu0 0.0
  %6887 = vmatpush1.msra.mxu0 0.0
  %6888 = vmatprep.subr.mxu0 0.0
  %6889 = vmatpush1.msra.mxu0 0.0
  %6890 = vmatprep.subr.mxu0 0.0
  %6891 = vmatpush1.msra.mxu0 0.0
  %6892 = vmatprep.subr.mxu0 0.0
  %6893 = vmatpush1.msra.mxu0 0.0
  %6894 = vmatprep.subr.mxu0 0.0
  %6895 = vmatpush1.msra.mxu0 0.0
  %6896 = vmatprep.subr.mxu0 0.0
  %6897 = vmatpush1.msra.mxu0 0.0
  %6898 = vmatprep.subr.mxu0 0.0
  %6899 = vmatpush1.msra.mxu0 0.0
  %6900 = vmatprep.subr.mxu0 0.0
  %6901 = vmatpush1.msra.mxu0 0.0
  %6902 = vmatprep.mubr.f32.mxu0 0.0
  %6903 = vmatmul.mubr.f32.gmra.mrb[0].mxu0 %v6833
  %v6904 = vpop.f32.mrb[0].mxu0
  %v6905 = vadd.f32 0.0, %v6904
  %v6906 = vpop.f32.mrb[0].mxu0
  %v6907 = vadd.f32 0.0, %v6906
  %6908 = vmatprep.mubr.f32.mxu0 0.0
  %6909 = vmatmul.mubr.f32.gmra.mrb[0].mxu0 %v6836
  %v6910 = vpop.f32.mrb[0].mxu0
  %v6911 = vadd.f32 0.0, %v6910
  %v6912 = vpop.f32.mrb[0].mxu0
  %v6913 = vadd.f32 0.0, %v6912
  %6914 = vdwg.mxu0
  %6915 = vmatprep.subr.mxu0 %v6813
  %6916 = vmatpush1.msra.mxu0 %v6812
  %6917 = vmatprep.subr.mxu0 %v6818
  %6918 = vmatpush1.msra.mxu0 %v6817
  %6919 = vmatprep.subr.mxu0 0.0
  %6920 = vmatpush1.msra.mxu0 0.0
  %6921 = vmatprep.subr.mxu0 0.0
  %6922 = vmatpush1.msra.mxu0 0.0
  %6923 = vmatprep.subr.mxu0 0.0
  %6924 = vmatpush1.msra.mxu0 0.0
  %6925 = vmatprep.subr.mxu0 0.0
  %6926 = vmatpush1.msra.mxu0 0.0
  %6927 = vmatprep.subr.mxu0 0.0
  %6928 = vmatpush1.msra.mxu0 0.0
  %6929 = vmatprep.subr.mxu0 0.0
  %6930 = vmatpush1.msra.mxu0 0.0
  %6931 = vmatprep.subr.mxu0 0.0
  %6932 = vmatpush1.msra.mxu0 0.0
  %6933 = vmatprep.subr.mxu0 0.0
  %6934 = vmatpush1.msra.mxu0 0.0
  %6935 = vmatprep.subr.mxu0 0.0
  %6936 = vmatpush1.msra.mxu0 0.0
  %6937 = vmatprep.subr.mxu0 0.0
  %6938 = vmatpush1.msra.mxu0 0.0
  %6939 = vmatprep.subr.mxu0 0.0
  %6940 = vmatpush1.msra.mxu0 0.0
  %6941 = vmatprep.subr.mxu0 0.0
  %6942 = vmatpush1.msra.mxu0 0.0
  %6943 = vmatprep.subr.mxu0 0.0
  %6944 = vmatpush1.msra.mxu0 0.0
  %6945 = vmatprep.subr.mxu0 0.0
  %6946 = vmatpush1.msra.mxu0 0.0
  %6947 = vmatprep.subr.mxu0 0.0
  %6948 = vmatpush1.msra.mxu0 0.0
  %6949 = vmatprep.subr.mxu0 0.0
  %6950 = vmatpush1.msra.mxu0 0.0
  %6951 = vmatprep.subr.mxu0 0.0
  %6952 = vmatpush1.msra.mxu0 0.0
  %6953 = vmatprep.subr.mxu0 0.0
  %6954 = vmatpush1.msra.mxu0 0.0
  %6955 = vmatprep.subr.mxu0 0.0
  %6956 = vmatpush1.msra.mxu0 0.0
  %6957 = vmatprep.subr.mxu0 0.0
  %6958 = vmatpush1.msra.mxu0 0.0
  %6959 = vmatprep.subr.mxu0 0.0
  %6960 = vmatpush1.msra.mxu0 0.0
  %6961 = vmatprep.subr.mxu0 0.0
  %6962 = vmatpush1.msra.mxu0 0.0
  %6963 = vmatprep.subr.mxu0 0.0
  %6964 = vmatpush1.msra.mxu0 0.0
  %6965 = vmatprep.subr.mxu0 0.0
  %6966 = vmatpush1.msra.mxu0 0.0
  %6967 = vmatprep.subr.mxu0 0.0
  %6968 = vmatpush1.msra.mxu0 0.0
  %6969 = vmatprep.subr.mxu0 0.0
  %6970 = vmatpush1.msra.mxu0 0.0
  %6971 = vmatprep.subr.mxu0 0.0
  %6972 = vmatpush1.msra.mxu0 0.0
  %6973 = vmatprep.subr.mxu0 0.0
  %6974 = vmatpush1.msra.mxu0 0.0
  %6975 = vmatprep.subr.mxu0 0.0
  %6976 = vmatpush1.msra.mxu0 0.0
  %6977 = vmatprep.subr.mxu0 0.0
  %6978 = vmatpush1.msra.mxu0 0.0
  %6979 = vmatprep.mubr.f32.mxu0 0.0
  %6980 = vmatmul.mubr.f32.gmra.mrb[0].mxu0 %v6833
  %v6981 = vpop.f32.mrb[0].mxu0
  %v6982 = vadd.f32 0.0, %v6981
  %v6983 = vpop.f32.mrb[0].mxu0
  %v6984 = vadd.f32 0.0, %v6983
  %6985 = vmatprep.mubr.f32.mxu0 0.0
  %6986 = vmatmul.mubr.f32.gmra.mrb[0].mxu0 %v6836
  %v6987 = vpop.f32.mrb[0].mxu0
  %v6988 = vadd.f32 0.0, %v6987
  %v6989 = vpop.f32.mrb[0].mxu0
  %v6990 = vadd.f32 0.0, %v6989
  %6991 = vdwg.mxu0
  %6992 = vmatprep.subr.mxu0 %v6797
  %6993 = vmatpush1.msra.mxu0 %v6814
  %6994 = vmatprep.subr.mxu0 %v6809
  %6995 = vmatpush1.msra.mxu0 %v6819
  %6996 = vmatprep.subr.mxu0 0.0
  %6997 = vmatpush1.msra.mxu0 0.0
  %6998 = vmatprep.subr.mxu0 0.0
  %6999 = vmatpush1.msra.mxu0 0.0
  %7000 = vmatprep.subr.mxu0 0.0
  %7001 = vmatpush1.msra.mxu0 0.0
  %7002 = vmatprep.subr.mxu0 0.0
  %7003 = vmatpush1.msra.mxu0 0.0
  %7004 = vmatprep.subr.mxu0 0.0
  %7005 = vmatpush1.msra.mxu0 0.0
  %7006 = vmatprep.subr.mxu0 0.0
  %7007 = vmatpush1.msra.mxu0 0.0
  %7008 = vmatprep.subr.mxu0 0.0
  %7009 = vmatpush1.msra.mxu0 0.0
  %7010 = vmatprep.subr.mxu0 0.0
  %7011 = vmatpush1.msra.mxu0 0.0
  %7012 = vmatprep.subr.mxu0 0.0
  %7013 = vmatpush1.msra.mxu0 0.0
  %7014 = vmatprep.subr.mxu0 0.0
  %7015 = vmatpush1.msra.mxu0 0.0
  %7016 = vmatprep.subr.mxu0 0.0
  %7017 = vmatpush1.msra.mxu0 0.0
  %7018 = vmatprep.subr.mxu0 0.0
  %7019 = vmatpush1.msra.mxu0 0.0
  %7020 = vmatprep.subr.mxu0 0.0
  %7021 = vmatpush1.msra.mxu0 0.0
  %7022 = vmatprep.subr.mxu0 0.0
  %7023 = vmatpush1.msra.mxu0 0.0
  %7024 = vmatprep.subr.mxu0 0.0
  %7025 = vmatpush1.msra.mxu0 0.0
  %7026 = vmatprep.subr.mxu0 0.0
  %7027 = vmatpush1.msra.mxu0 0.0
  %7028 = vmatprep.subr.mxu0 0.0
  %7029 = vmatpush1.msra.mxu0 0.0
  %7030 = vmatprep.subr.mxu0 0.0
  %7031 = vmatpush1.msra.mxu0 0.0
  %7032 = vmatprep.subr.mxu0 0.0
  %7033 = vmatpush1.msra.mxu0 0.0
  %7034 = vmatprep.subr.mxu0 0.0
  %7035 = vmatpush1.msra.mxu0 0.0
  %7036 = vmatprep.subr.mxu0 0.0
  %7037 = vmatpush1.msra.mxu0 0.0
  %7038 = vmatprep.subr.mxu0 0.0
  %7039 = vmatpush1.msra.mxu0 0.0
  %7040 = vmatprep.subr.mxu0 0.0
  %7041 = vmatpush1.msra.mxu0 0.0
  %7042 = vmatprep.subr.mxu0 0.0
  %7043 = vmatpush1.msra.mxu0 0.0
  %7044 = vmatprep.subr.mxu0 0.0
  %7045 = vmatpush1.msra.mxu0 0.0
  %7046 = vmatprep.subr.mxu0 0.0
  %7047 = vmatpush1.msra.mxu0 0.0
  %7048 = vmatprep.subr.mxu0 0.0
  %7049 = vmatpush1.msra.mxu0 0.0
  %7050 = vmatprep.subr.mxu0 0.0
  %7051 = vmatpush1.msra.mxu0 0.0
  %7052 = vmatprep.subr.mxu0 0.0
  %7053 = vmatpush1.msra.mxu0 0.0
  %7054 = vmatprep.subr.mxu0 0.0
  %7055 = vmatpush1.msra.mxu0 0.0
  %7056 = vmatprep.mubr.f32.mxu0 0.0
  %7057 = vmatmul.mubr.f32.gmra.mrb[0].mxu0 %v6833
  %v7058 = vpop.f32.mrb[0].mxu0
  %v7059 = vadd.f32 0.0, %v7058
  %v7060 = vpop.f32.mrb[0].mxu0
  %7061 = vmatprep.mubr.f32.mxu0 0.0
  %7062 = vmatmul.mubr.f32.gmra.mrb[0].mxu0 %v6836
  %v7063 = vpop.f32.mrb[0].mxu0
  %v7064 = vadd.f32 0.0, %v7063
  %v7065 = vpop.f32.mrb[0].mxu0
  %7066 = vdwg.mxu0
  %v7067 = vadd.f32 %v6773, %v6905
  %v7068 = vadd.f32 %v6774, %v6907
  %v7069 = vadd.f32 %v6775, %v6982
  %v7070 = vadd.f32 %v6776, %v6984
  %v7071 = vadd.f32 %v6777, %v7059
  %v7072 = vadd.f32 %v6778, %v6911
  %v7073 = vadd.f32 %v6779, %v6913
  %v7074 = vadd.f32 %v6780, %v6988
  %v7075 = vadd.f32 %v6781, %v6990
  %v7076 = vadd.f32 %v6782, %v7064
  %s7077 = scalar_lea.vmem %s3, 80
  %v7078 = vld [vmem:[%s7077] sm:$0xff]
  %v7079 = vld [vmem:[%s7077 + $0x8] sm:$0xff]
  %7080 = vrot.lane.b32.xlu0 %v5652, 108
  %v7081 = vpop.permute.xlu0 %7080
  %7082 = vrot.lane.b32.xlu0 %v5653, 108
  %v7083 = vpop.permute.xlu0 %7082
  %7084 = vrot.lane.b32.xlu0 %v5654, 108
  %v7085 = vpop.permute.xlu0 %7084
  %7086 = vrot.lane.b32.xlu0 %v5655, 108
  %v7087 = vpop.permute.xlu0 %7086
  %7088 = vrot.lane.b32.xlu0 %v5656, 108
  %v7089 = vpop.permute.xlu0 %7088
  %7090 = vrot.lane.b32.xlu0 %v5657, 108
  %v7091 = vpop.permute.xlu0 %7090
  %7092 = vrot.lane.b32.xlu0 %v5658, 108
  %v7093 = vpop.permute.xlu0 %7092
  %7094 = vrot.lane.b32.xlu0 %v5659, 108
  %v7095 = vpop.permute.xlu0 %7094
  %7096 = vrot.lane.b32.xlu0 %v5660, 108
  %v7097 = vpop.permute.xlu0 %7096
  %7098 = vrot.lane.b32.xlu0 %v5661, 108
  %v7099 = vpop.permute.xlu0 %7098
  %7100 = vrot.lane.b32.xlu0 %v5662, 108
  %v7101 = vpop.permute.xlu0 %7100
  %7102 = vrot.lane.b32.xlu0 %v5663, 108
  %v7103 = vpop.permute.xlu0 %7102
  %v7104 = vsel %vm1493, %v7081, %v7083
  %v7105 = vsel %vm1493, %v7083, %v7085
  %v7106 = vsel %vm1493, %v7085, %v7087
  %v7107 = vsel %vm1493, %v7087, %v7089
  %v7108 = vsel %vm1493, %v7089, %v7091
  %v7109 = vsel %vm1493, %v7093, %v7095
  %v7110 = vsel %vm1493, %v7095, %v7097
  %v7111 = vsel %vm1493, %v7097, %v7099
  %v7112 = vsel %vm1493, %v7099, %v7101
  %v7113 = vsel %vm1493, %v7101, %v7103
  %v7127 = vsel %vm110, %v7078, 0
  %v7130 = vsel %vm110, %v7079, 0
  %7132 = vmatprep.subr.mxu0 %v7105
  %7133 = vmatpush1.msra.mxu0 %v7104
  %7134 = vmatprep.subr.mxu0 %v7110
  %7135 = vmatpush1.msra.mxu0 %v7109
  %7136 = vmatprep.subr.mxu0 0.0
  %7137 = vmatpush1.msra.mxu0 0.0
  %7138 = vmatprep.subr.mxu0 0.0
  %7139 = vmatpush1.msra.mxu0 0.0
  %7140 = vmatprep.subr.mxu0 0.0
  %7141 = vmatpush1.msra.mxu0 0.0
  %7142 = vmatprep.subr.mxu0 0.0
  %7143 = vmatpush1.msra.mxu0 0.0
  %7144 = vmatprep.subr.mxu0 0.0
  %7145 = vmatpush1.msra.mxu0 0.0
  %7146 = vmatprep.subr.mxu0 0.0
  %7147 = vmatpush1.msra.mxu0 0.0
  %7148 = vmatprep.subr.mxu0 0.0
  %7149 = vmatpush1.msra.mxu0 0.0
  %7150 = vmatprep.subr.mxu0 0.0
  %7151 = vmatpush1.msra.mxu0 0.0
  %7152 = vmatprep.subr.mxu0 0.0
  %7153 = vmatpush1.msra.mxu0 0.0
  %7154 = vmatprep.subr.mxu0 0.0
  %7155 = vmatpush1.msra.mxu0 0.0
  %7156 = vmatprep.subr.mxu0 0.0
  %7157 = vmatpush1.msra.mxu0 0.0
  %7158 = vmatprep.subr.mxu0 0.0
  %7159 = vmatpush1.msra.mxu0 0.0
  %7160 = vmatprep.subr.mxu0 0.0
  %7161 = vmatpush1.msra.mxu0 0.0
  %7162 = vmatprep.subr.mxu0 0.0
  %7163 = vmatpush1.msra.mxu0 0.0
  %7164 = vmatprep.subr.mxu0 0.0
  %7165 = vmatpush1.msra.mxu0 0.0
  %7166 = vmatprep.subr.mxu0 0.0
  %7167 = vmatpush1.msra.mxu0 0.0
  %7168 = vmatprep.subr.mxu0 0.0
  %7169 = vmatpush1.msra.mxu0 0.0
  %7170 = vmatprep.subr.mxu0 0.0
  %7171 = vmatpush1.msra.mxu0 0.0
  %7172 = vmatprep.subr.mxu0 0.0
  %7173 = vmatpush1.msra.mxu0 0.0
  %7174 = vmatprep.subr.mxu0 0.0
  %7175 = vmatpush1.msra.mxu0 0.0
  %7176 = vmatprep.subr.mxu0 0.0
  %7177 = vmatpush1.msra.mxu0 0.0
  %7178 = vmatprep.subr.mxu0 0.0
  %7179 = vmatpush1.msra.mxu0 0.0
  %7180 = vmatprep.subr.mxu0 0.0
  %7181 = vmatpush1.msra.mxu0 0.0
  %7182 = vmatprep.subr.mxu0 0.0
  %7183 = vmatpush1.msra.mxu0 0.0
  %7184 = vmatprep.subr.mxu0 0.0
  %7185 = vmatpush1.msra.mxu0 0.0
  %7186 = vmatprep.subr.mxu0 0.0
  %7187 = vmatpush1.msra.mxu0 0.0
  %7188 = vmatprep.subr.mxu0 0.0
  %7189 = vmatpush1.msra.mxu0 0.0
  %7190 = vmatprep.subr.mxu0 0.0
  %7191 = vmatpush1.msra.mxu0 0.0
  %7192 = vmatprep.subr.mxu0 0.0
  %7193 = vmatpush1.msra.mxu0 0.0
  %7194 = vmatprep.subr.mxu0 0.0
  %7195 = vmatpush1.msra.mxu0 0.0
  %7196 = vmatprep.mubr.f32.mxu0 0.0
  %7197 = vmatmul.mubr.f32.gmra.mrb[0].mxu0 %v7127
  %v7198 = vpop.f32.mrb[0].mxu0
  %v7199 = vadd.f32 0.0, %v7198
  %v7200 = vpop.f32.mrb[0].mxu0
  %v7201 = vadd.f32 0.0, %v7200
  %7202 = vmatprep.mubr.f32.mxu0 0.0
  %7203 = vmatmul.mubr.f32.gmra.mrb[0].mxu0 %v7130
  %v7204 = vpop.f32.mrb[0].mxu0
  %v7205 = vadd.f32 0.0, %v7204
  %v7206 = vpop.f32.mrb[0].mxu0
  %v7207 = vadd.f32 0.0, %v7206
  %7208 = vdwg.mxu0
  %7209 = vmatprep.subr.mxu0 %v7107
  %7210 = vmatpush1.msra.mxu0 %v7106
  %7211 = vmatprep.subr.mxu0 %v7112
  %7212 = vmatpush1.msra.mxu0 %v7111
  %7213 = vmatprep.subr.mxu0 0.0
  %7214 = vmatpush1.msra.mxu0 0.0
  %7215 = vmatprep.subr.mxu0 0.0
  %7216 = vmatpush1.msra.mxu0 0.0
  %7217 = vmatprep.subr.mxu0 0.0
  %7218 = vmatpush1.msra.mxu0 0.0
  %7219 = vmatprep.subr.mxu0 0.0
  %7220 = vmatpush1.msra.mxu0 0.0
  %7221 = vmatprep.subr.mxu0 0.0
  %7222 = vmatpush1.msra.mxu0 0.0
  %7223 = vmatprep.subr.mxu0 0.0
  %7224 = vmatpush1.msra.mxu0 0.0
  %7225 = vmatprep.subr.mxu0 0.0
  %7226 = vmatpush1.msra.mxu0 0.0
  %7227 = vmatprep.subr.mxu0 0.0
  %7228 = vmatpush1.msra.mxu0 0.0
  %7229 = vmatprep.subr.mxu0 0.0
  %7230 = vmatpush1.msra.mxu0 0.0
  %7231 = vmatprep.subr.mxu0 0.0
  %7232 = vmatpush1.msra.mxu0 0.0
  %7233 = vmatprep.subr.mxu0 0.0
  %7234 = vmatpush1.msra.mxu0 0.0
  %7235 = vmatprep.subr.mxu0 0.0
  %7236 = vmatpush1.msra.mxu0 0.0
  %7237 = vmatprep.subr.mxu0 0.0
  %7238 = vmatpush1.msra.mxu0 0.0
  %7239 = vmatprep.subr.mxu0 0.0
  %7240 = vmatpush1.msra.mxu0 0.0
  %7241 = vmatprep.subr.mxu0 0.0
  %7242 = vmatpush1.msra.mxu0 0.0
  %7243 = vmatprep.subr.mxu0 0.0
  %7244 = vmatpush1.msra.mxu0 0.0
  %7245 = vmatprep.subr.mxu0 0.0
  %7246 = vmatpush1.msra.mxu0 0.0
  %7247 = vmatprep.subr.mxu0 0.0
  %7248 = vmatpush1.msra.mxu0 0.0
  %7249 = vmatprep.subr.mxu0 0.0
  %7250 = vmatpush1.msra.mxu0 0.0
  %7251 = vmatprep.subr.mxu0 0.0
  %7252 = vmatpush1.msra.mxu0 0.0
  %7253 = vmatprep.subr.mxu0 0.0
  %7254 = vmatpush1.msra.mxu0 0.0
  %7255 = vmatprep.subr.mxu0 0.0
  %7256 = vmatpush1.msra.mxu0 0.0
  %7257 = vmatprep.subr.mxu0 0.0
  %7258 = vmatpush1.msra.mxu0 0.0
  %7259 = vmatprep.subr.mxu0 0.0
  %7260 = vmatpush1.msra.mxu0 0.0
  %7261 = vmatprep.subr.mxu0 0.0
  %7262 = vmatpush1.msra.mxu0 0.0
  %7263 = vmatprep.subr.mxu0 0.0
  %7264 = vmatpush1.msra.mxu0 0.0
  %7265 = vmatprep.subr.mxu0 0.0
  %7266 = vmatpush1.msra.mxu0 0.0
  %7267 = vmatprep.subr.mxu0 0.0
  %7268 = vmatpush1.msra.mxu0 0.0
  %7269 = vmatprep.subr.mxu0 0.0
  %7270 = vmatpush1.msra.mxu0 0.0
  %7271 = vmatprep.subr.mxu0 0.0
  %7272 = vmatpush1.msra.mxu0 0.0
  %7273 = vmatprep.mubr.f32.mxu0 0.0
  %7274 = vmatmul.mubr.f32.gmra.mrb[0].mxu0 %v7127
  %v7275 = vpop.f32.mrb[0].mxu0
  %v7276 = vadd.f32 0.0, %v7275
  %v7277 = vpop.f32.mrb[0].mxu0
  %v7278 = vadd.f32 0.0, %v7277
  %7279 = vmatprep.mubr.f32.mxu0 0.0
  %7280 = vmatmul.mubr.f32.gmra.mrb[0].mxu0 %v7130
  %v7281 = vpop.f32.mrb[0].mxu0
  %v7282 = vadd.f32 0.0, %v7281
  %v7283 = vpop.f32.mrb[0].mxu0
  %v7284 = vadd.f32 0.0, %v7283
  %7285 = vdwg.mxu0
  %7286 = vmatprep.subr.mxu0 %v7091
  %7287 = vmatpush1.msra.mxu0 %v7108
  %7288 = vmatprep.subr.mxu0 %v7103
  %7289 = vmatpush1.msra.mxu0 %v7113
  %7290 = vmatprep.subr.mxu0 0.0
  %7291 = vmatpush1.msra.mxu0 0.0
  %7292 = vmatprep.subr.mxu0 0.0
  %7293 = vmatpush1.msra.mxu0 0.0
  %7294 = vmatprep.subr.mxu0 0.0
  %7295 = vmatpush1.msra.mxu0 0.0
  %7296 = vmatprep.subr.mxu0 0.0
  %7297 = vmatpush1.msra.mxu0 0.0
  %7298 = vmatprep.subr.mxu0 0.0
  %7299 = vmatpush1.msra.mxu0 0.0
  %7300 = vmatprep.subr.mxu0 0.0
  %7301 = vmatpush1.msra.mxu0 0.0
  %7302 = vmatprep.subr.mxu0 0.0
  %7303 = vmatpush1.msra.mxu0 0.0
  %7304 = vmatprep.subr.mxu0 0.0
  %7305 = vmatpush1.msra.mxu0 0.0
  %7306 = vmatprep.subr.mxu0 0.0
  %7307 = vmatpush1.msra.mxu0 0.0
  %7308 = vmatprep.subr.mxu0 0.0
  %7309 = vmatpush1.msra.mxu0 0.0
  %7310 = vmatprep.subr.mxu0 0.0
  %7311 = vmatpush1.msra.mxu0 0.0
  %7312 = vmatprep.subr.mxu0 0.0
  %7313 = vmatpush1.msra.mxu0 0.0
  %7314 = vmatprep.subr.mxu0 0.0
  %7315 = vmatpush1.msra.mxu0 0.0
  %7316 = vmatprep.subr.mxu0 0.0
  %7317 = vmatpush1.msra.mxu0 0.0
  %7318 = vmatprep.subr.mxu0 0.0
  %7319 = vmatpush1.msra.mxu0 0.0
  %7320 = vmatprep.subr.mxu0 0.0
  %7321 = vmatpush1.msra.mxu0 0.0
  %7322 = vmatprep.subr.mxu0 0.0
  %7323 = vmatpush1.msra.mxu0 0.0
  %7324 = vmatprep.subr.mxu0 0.0
  %7325 = vmatpush1.msra.mxu0 0.0
  %7326 = vmatprep.subr.mxu0 0.0
  %7327 = vmatpush1.msra.mxu0 0.0
  %7328 = vmatprep.subr.mxu0 0.0
  %7329 = vmatpush1.msra.mxu0 0.0
  %7330 = vmatprep.subr.mxu0 0.0
  %7331 = vmatpush1.msra.mxu0 0.0
  %7332 = vmatprep.subr.mxu0 0.0
  %7333 = vmatpush1.msra.mxu0 0.0
  %7334 = vmatprep.subr.mxu0 0.0
  %7335 = vmatpush1.msra.mxu0 0.0
  %7336 = vmatprep.subr.mxu0 0.0
  %7337 = vmatpush1.msra.mxu0 0.0
  %7338 = vmatprep.subr.mxu0 0.0
  %7339 = vmatpush1.msra.mxu0 0.0
  %7340 = vmatprep.subr.mxu0 0.0
  %7341 = vmatpush1.msra.mxu0 0.0
  %7342 = vmatprep.subr.mxu0 0.0
  %7343 = vmatpush1.msra.mxu0 0.0
  %7344 = vmatprep.subr.mxu0 0.0
  %7345 = vmatpush1.msra.mxu0 0.0
  %7346 = vmatprep.subr.mxu0 0.0
  %7347 = vmatpush1.msra.mxu0 0.0
  %7348 = vmatprep.subr.mxu0 0.0
  %7349 = vmatpush1.msra.mxu0 0.0
  %7350 = vmatprep.mubr.f32.mxu0 0.0
  %7351 = vmatmul.mubr.f32.gmra.mrb[0].mxu0 %v7127
  %v7352 = vpop.f32.mrb[0].mxu0
  %v7353 = vadd.f32 0.0, %v7352
  %v7354 = vpop.f32.mrb[0].mxu0
  %7355 = vmatprep.mubr.f32.mxu0 0.0
  %7356 = vmatmul.mubr.f32.gmra.mrb[0].mxu0 %v7130
  %v7357 = vpop.f32.mrb[0].mxu0
  %v7358 = vadd.f32 0.0, %v7357
  %v7359 = vpop.f32.mrb[0].mxu0
  %7360 = vdwg.mxu0
  %v7361 = vadd.f32 %v7067, %v7199
  %v7362 = vadd.f32 %v7068, %v7201
  %v7363 = vadd.f32 %v7069, %v7276
  %v7364 = vadd.f32 %v7070, %v7278
  %v7365 = vadd.f32 %v7071, %v7353
  %v7366 = vadd.f32 %v7072, %v7205
  %v7367 = vadd.f32 %v7073, %v7207
  %v7368 = vadd.f32 %v7074, %v7282
  %v7369 = vadd.f32 %v7075, %v7284
  %v7370 = vadd.f32 %v7076, %v7358
  %s7371 = scalar_lea.vmem %s3, 96
  %v7372 = vld [vmem:[%s7371] sm:$0xff]
  %v7373 = vld [vmem:[%s7371 + $0x8] sm:$0xff]
  %7374 = vrot.lane.b32.xlu0 %v5652, 92
  %v7375 = vpop.permute.xlu0 %7374
  %7376 = vrot.lane.b32.xlu0 %v5653, 92
  %v7377 = vpop.permute.xlu0 %7376
  %7378 = vrot.lane.b32.xlu0 %v5654, 92
  %v7379 = vpop.permute.xlu0 %7378
  %7380 = vrot.lane.b32.xlu0 %v5655, 92
  %v7381 = vpop.permute.xlu0 %7380
  %7382 = vrot.lane.b32.xlu0 %v5656, 92
  %v7383 = vpop.permute.xlu0 %7382
  %7384 = vrot.lane.b32.xlu0 %v5657, 92
  %v7385 = vpop.permute.xlu0 %7384
  %7386 = vrot.lane.b32.xlu0 %v5658, 92
  %v7387 = vpop.permute.xlu0 %7386
  %7388 = vrot.lane.b32.xlu0 %v5659, 92
  %v7389 = vpop.permute.xlu0 %7388
  %7390 = vrot.lane.b32.xlu0 %v5660, 92
  %v7391 = vpop.permute.xlu0 %7390
  %7392 = vrot.lane.b32.xlu0 %v5661, 92
  %v7393 = vpop.permute.xlu0 %7392
  %7394 = vrot.lane.b32.xlu0 %v5662, 92
  %v7395 = vpop.permute.xlu0 %7394
  %7396 = vrot.lane.b32.xlu0 %v5663, 92
  %v7397 = vpop.permute.xlu0 %7396
  %v7398 = vsel %vm1788, %v7375, %v7377
  %v7399 = vsel %vm1788, %v7377, %v7379
  %v7400 = vsel %vm1788, %v7379, %v7381
  %v7401 = vsel %vm1788, %v7381, %v7383
  %v7402 = vsel %vm1788, %v7383, %v7385
  %v7403 = vsel %vm1788, %v7387, %v7389
  %v7404 = vsel %vm1788, %v7389, %v7391
  %v7405 = vsel %vm1788, %v7391, %v7393
  %v7406 = vsel %vm1788, %v7393, %v7395
  %v7407 = vsel %vm1788, %v7395, %v7397
  %v7421 = vsel %vm110, %v7372, 0
  %v7424 = vsel %vm110, %v7373, 0
  %7426 = vmatprep.subr.mxu0 %v7399
  %7427 = vmatpush1.msra.mxu0 %v7398
  %7428 = vmatprep.subr.mxu0 %v7404
  %7429 = vmatpush1.msra.mxu0 %v7403
  %7430 = vmatprep.subr.mxu0 0.0
  %7431 = vmatpush1.msra.mxu0 0.0
  %7432 = vmatprep.subr.mxu0 0.0
  %7433 = vmatpush1.msra.mxu0 0.0
  %7434 = vmatprep.subr.mxu0 0.0
  %7435 = vmatpush1.msra.mxu0 0.0
  %7436 = vmatprep.subr.mxu0 0.0
  %7437 = vmatpush1.msra.mxu0 0.0
  %7438 = vmatprep.subr.mxu0 0.0
  %7439 = vmatpush1.msra.mxu0 0.0
  %7440 = vmatprep.subr.mxu0 0.0
  %7441 = vmatpush1.msra.mxu0 0.0
  %7442 = vmatprep.subr.mxu0 0.0
  %7443 = vmatpush1.msra.mxu0 0.0
  %7444 = vmatprep.subr.mxu0 0.0
  %7445 = vmatpush1.msra.mxu0 0.0
  %7446 = vmatprep.subr.mxu0 0.0
  %7447 = vmatpush1.msra.mxu0 0.0
  %7448 = vmatprep.subr.mxu0 0.0
  %7449 = vmatpush1.msra.mxu0 0.0
  %7450 = vmatprep.subr.mxu0 0.0
  %7451 = vmatpush1.msra.mxu0 0.0
  %7452 = vmatprep.subr.mxu0 0.0
  %7453 = vmatpush1.msra.mxu0 0.0
  %7454 = vmatprep.subr.mxu0 0.0
  %7455 = vmatpush1.msra.mxu0 0.0
  %7456 = vmatprep.subr.mxu0 0.0
  %7457 = vmatpush1.msra.mxu0 0.0
  %7458 = vmatprep.subr.mxu0 0.0
  %7459 = vmatpush1.msra.mxu0 0.0
  %7460 = vmatprep.subr.mxu0 0.0
  %7461 = vmatpush1.msra.mxu0 0.0
  %7462 = vmatprep.subr.mxu0 0.0
  %7463 = vmatpush1.msra.mxu0 0.0
  %7464 = vmatprep.subr.mxu0 0.0
  %7465 = vmatpush1.msra.mxu0 0.0
  %7466 = vmatprep.subr.mxu0 0.0
  %7467 = vmatpush1.msra.mxu0 0.0
  %7468 = vmatprep.subr.mxu0 0.0
  %7469 = vmatpush1.msra.mxu0 0.0
  %7470 = vmatprep.subr.mxu0 0.0
  %7471 = vmatpush1.msra.mxu0 0.0
  %7472 = vmatprep.subr.mxu0 0.0
  %7473 = vmatpush1.msra.mxu0 0.0
  %7474 = vmatprep.subr.mxu0 0.0
  %7475 = vmatpush1.msra.mxu0 0.0
  %7476 = vmatprep.subr.mxu0 0.0
  %7477 = vmatpush1.msra.mxu0 0.0
  %7478 = vmatprep.subr.mxu0 0.0
  %7479 = vmatpush1.msra.mxu0 0.0
  %7480 = vmatprep.subr.mxu0 0.0
  %7481 = vmatpush1.msra.mxu0 0.0
  %7482 = vmatprep.subr.mxu0 0.0
  %7483 = vmatpush1.msra.mxu0 0.0
  %7484 = vmatprep.subr.mxu0 0.0
  %7485 = vmatpush1.msra.mxu0 0.0
  %7486 = vmatprep.subr.mxu0 0.0
  %7487 = vmatpush1.msra.mxu0 0.0
  %7488 = vmatprep.subr.mxu0 0.0
  %7489 = vmatpush1.msra.mxu0 0.0
  %7490 = vmatprep.mubr.f32.mxu0 0.0
  %7491 = vmatmul.mubr.f32.gmra.mrb[0].mxu0 %v7421
  %v7492 = vpop.f32.mrb[0].mxu0
  %v7493 = vadd.f32 0.0, %v7492
  %v7494 = vpop.f32.mrb[0].mxu0
  %v7495 = vadd.f32 0.0, %v7494
  %7496 = vmatprep.mubr.f32.mxu0 0.0
  %7497 = vmatmul.mubr.f32.gmra.mrb[0].mxu0 %v7424
  %v7498 = vpop.f32.mrb[0].mxu0
  %v7499 = vadd.f32 0.0, %v7498
  %v7500 = vpop.f32.mrb[0].mxu0
  %v7501 = vadd.f32 0.0, %v7500
  %7502 = vdwg.mxu0
  %7503 = vmatprep.subr.mxu0 %v7401
  %7504 = vmatpush1.msra.mxu0 %v7400
  %7505 = vmatprep.subr.mxu0 %v7406
  %7506 = vmatpush1.msra.mxu0 %v7405
  %7507 = vmatprep.subr.mxu0 0.0
  %7508 = vmatpush1.msra.mxu0 0.0
  %7509 = vmatprep.subr.mxu0 0.0
  %7510 = vmatpush1.msra.mxu0 0.0
  %7511 = vmatprep.subr.mxu0 0.0
  %7512 = vmatpush1.msra.mxu0 0.0
  %7513 = vmatprep.subr.mxu0 0.0
  %7514 = vmatpush1.msra.mxu0 0.0
  %7515 = vmatprep.subr.mxu0 0.0
  %7516 = vmatpush1.msra.mxu0 0.0
  %7517 = vmatprep.subr.mxu0 0.0
  %7518 = vmatpush1.msra.mxu0 0.0
  %7519 = vmatprep.subr.mxu0 0.0
  %7520 = vmatpush1.msra.mxu0 0.0
  %7521 = vmatprep.subr.mxu0 0.0
  %7522 = vmatpush1.msra.mxu0 0.0
  %7523 = vmatprep.subr.mxu0 0.0
  %7524 = vmatpush1.msra.mxu0 0.0
  %7525 = vmatprep.subr.mxu0 0.0
  %7526 = vmatpush1.msra.mxu0 0.0
  %7527 = vmatprep.subr.mxu0 0.0
  %7528 = vmatpush1.msra.mxu0 0.0
  %7529 = vmatprep.subr.mxu0 0.0
  %7530 = vmatpush1.msra.mxu0 0.0
  %7531 = vmatprep.subr.mxu0 0.0
  %7532 = vmatpush1.msra.mxu0 0.0
  %7533 = vmatprep.subr.mxu0 0.0
  %7534 = vmatpush1.msra.mxu0 0.0
  %7535 = vmatprep.subr.mxu0 0.0
  %7536 = vmatpush1.msra.mxu0 0.0
  %7537 = vmatprep.subr.mxu0 0.0
  %7538 = vmatpush1.msra.mxu0 0.0
  %7539 = vmatprep.subr.mxu0 0.0
  %7540 = vmatpush1.msra.mxu0 0.0
  %7541 = vmatprep.subr.mxu0 0.0
  %7542 = vmatpush1.msra.mxu0 0.0
  %7543 = vmatprep.subr.mxu0 0.0
  %7544 = vmatpush1.msra.mxu0 0.0
  %7545 = vmatprep.subr.mxu0 0.0
  %7546 = vmatpush1.msra.mxu0 0.0
  %7547 = vmatprep.subr.mxu0 0.0
  %7548 = vmatpush1.msra.mxu0 0.0
  %7549 = vmatprep.subr.mxu0 0.0
  %7550 = vmatpush1.msra.mxu0 0.0
  %7551 = vmatprep.subr.mxu0 0.0
  %7552 = vmatpush1.msra.mxu0 0.0
  %7553 = vmatprep.subr.mxu0 0.0
  %7554 = vmatpush1.msra.mxu0 0.0
  %7555 = vmatprep.subr.mxu0 0.0
  %7556 = vmatpush1.msra.mxu0 0.0
  %7557 = vmatprep.subr.mxu0 0.0
  %7558 = vmatpush1.msra.mxu0 0.0
  %7559 = vmatprep.subr.mxu0 0.0
  %7560 = vmatpush1.msra.mxu0 0.0
  %7561 = vmatprep.subr.mxu0 0.0
  %7562 = vmatpush1.msra.mxu0 0.0
  %7563 = vmatprep.subr.mxu0 0.0
  %7564 = vmatpush1.msra.mxu0 0.0
  %7565 = vmatprep.subr.mxu0 0.0
  %7566 = vmatpush1.msra.mxu0 0.0
  %7567 = vmatprep.mubr.f32.mxu0 0.0
  %7568 = vmatmul.mubr.f32.gmra.mrb[0].mxu0 %v7421
  %v7569 = vpop.f32.mrb[0].mxu0
  %v7570 = vadd.f32 0.0, %v7569
  %v7571 = vpop.f32.mrb[0].mxu0
  %v7572 = vadd.f32 0.0, %v7571
  %7573 = vmatprep.mubr.f32.mxu0 0.0
  %7574 = vmatmul.mubr.f32.gmra.mrb[0].mxu0 %v7424
  %v7575 = vpop.f32.mrb[0].mxu0
  %v7576 = vadd.f32 0.0, %v7575
  %v7577 = vpop.f32.mrb[0].mxu0
  %v7578 = vadd.f32 0.0, %v7577
  %7579 = vdwg.mxu0
  %7580 = vmatprep.subr.mxu0 %v7385
  %7581 = vmatpush1.msra.mxu0 %v7402
  %7582 = vmatprep.subr.mxu0 %v7397
  %7583 = vmatpush1.msra.mxu0 %v7407
  %7584 = vmatprep.subr.mxu0 0.0
  %7585 = vmatpush1.msra.mxu0 0.0
  %7586 = vmatprep.subr.mxu0 0.0
  %7587 = vmatpush1.msra.mxu0 0.0
  %7588 = vmatprep.subr.mxu0 0.0
  %7589 = vmatpush1.msra.mxu0 0.0
  %7590 = vmatprep.subr.mxu0 0.0
  %7591 = vmatpush1.msra.mxu0 0.0
  %7592 = vmatprep.subr.mxu0 0.0
  %7593 = vmatpush1.msra.mxu0 0.0
  %7594 = vmatprep.subr.mxu0 0.0
  %7595 = vmatpush1.msra.mxu0 0.0
  %7596 = vmatprep.subr.mxu0 0.0
  %7597 = vmatpush1.msra.mxu0 0.0
  %7598 = vmatprep.subr.mxu0 0.0
  %7599 = vmatpush1.msra.mxu0 0.0
  %7600 = vmatprep.subr.mxu0 0.0
  %7601 = vmatpush1.msra.mxu0 0.0
  %7602 = vmatprep.subr.mxu0 0.0
  %7603 = vmatpush1.msra.mxu0 0.0
  %7604 = vmatprep.subr.mxu0 0.0
  %7605 = vmatpush1.msra.mxu0 0.0
  %7606 = vmatprep.subr.mxu0 0.0
  %7607 = vmatpush1.msra.mxu0 0.0
  %7608 = vmatprep.subr.mxu0 0.0
  %7609 = vmatpush1.msra.mxu0 0.0
  %7610 = vmatprep.subr.mxu0 0.0
  %7611 = vmatpush1.msra.mxu0 0.0
  %7612 = vmatprep.subr.mxu0 0.0
  %7613 = vmatpush1.msra.mxu0 0.0
  %7614 = vmatprep.subr.mxu0 0.0
  %7615 = vmatpush1.msra.mxu0 0.0
  %7616 = vmatprep.subr.mxu0 0.0
  %7617 = vmatpush1.msra.mxu0 0.0
  %7618 = vmatprep.subr.mxu0 0.0
  %7619 = vmatpush1.msra.mxu0 0.0
  %7620 = vmatprep.subr.mxu0 0.0
  %7621 = vmatpush1.msra.mxu0 0.0
  %7622 = vmatprep.subr.mxu0 0.0
  %7623 = vmatpush1.msra.mxu0 0.0
  %7624 = vmatprep.subr.mxu0 0.0
  %7625 = vmatpush1.msra.mxu0 0.0
  %7626 = vmatprep.subr.mxu0 0.0
  %7627 = vmatpush1.msra.mxu0 0.0
  %7628 = vmatprep.subr.mxu0 0.0
  %7629 = vmatpush1.msra.mxu0 0.0
  %7630 = vmatprep.subr.mxu0 0.0
  %7631 = vmatpush1.msra.mxu0 0.0
  %7632 = vmatprep.subr.mxu0 0.0
  %7633 = vmatpush1.msra.mxu0 0.0
  %7634 = vmatprep.subr.mxu0 0.0
  %7635 = vmatpush1.msra.mxu0 0.0
  %7636 = vmatprep.subr.mxu0 0.0
  %7637 = vmatpush1.msra.mxu0 0.0
  %7638 = vmatprep.subr.mxu0 0.0
  %7639 = vmatpush1.msra.mxu0 0.0
  %7640 = vmatprep.subr.mxu0 0.0
  %7641 = vmatpush1.msra.mxu0 0.0
  %7642 = vmatprep.subr.mxu0 0.0
  %7643 = vmatpush1.msra.mxu0 0.0
  %7644 = vmatprep.mubr.f32.mxu0 0.0
  %7645 = vmatmul.mubr.f32.gmra.mrb[0].mxu0 %v7421
  %v7646 = vpop.f32.mrb[0].mxu0
  %v7647 = vadd.f32 0.0, %v7646
  %v7648 = vpop.f32.mrb[0].mxu0
  %7649 = vmatprep.mubr.f32.mxu0 0.0
  %7650 = vmatmul.mubr.f32.gmra.mrb[0].mxu0 %v7424
  %v7651 = vpop.f32.mrb[0].mxu0
  %v7652 = vadd.f32 0.0, %v7651
  %v7653 = vpop.f32.mrb[0].mxu0
  %7654 = vdwg.mxu0
  %v7655 = vadd.f32 %v7361, %v7493
  %v7656 = vadd.f32 %v7362, %v7495
  %v7657 = vadd.f32 %v7363, %v7570
  %v7658 = vadd.f32 %v7364, %v7572
  %v7659 = vadd.f32 %v7365, %v7647
  %v7660 = vadd.f32 %v7366, %v7499
  %v7661 = vadd.f32 %v7367, %v7501
  %v7662 = vadd.f32 %v7368, %v7576
  %v7663 = vadd.f32 %v7369, %v7578
  %v7664 = vadd.f32 %v7370, %v7652
  %s7665 = scalar_lea.vmem %s3, 112
  %v7666 = vld [vmem:[%s7665] sm:$0xff]
  %v7667 = vld [vmem:[%s7665 + $0x8] sm:$0xff]
  %7668 = vrot.lane.b32.xlu0 %v5652, 91
  %v7669 = vpop.permute.xlu0 %7668
  %7670 = vrot.lane.b32.xlu0 %v5653, 91
  %v7671 = vpop.permute.xlu0 %7670
  %7672 = vrot.lane.b32.xlu0 %v5654, 91
  %v7673 = vpop.permute.xlu0 %7672
  %7674 = vrot.lane.b32.xlu0 %v5655, 91
  %v7675 = vpop.permute.xlu0 %7674
  %7676 = vrot.lane.b32.xlu0 %v5656, 91
  %v7677 = vpop.permute.xlu0 %7676
  %7678 = vrot.lane.b32.xlu0 %v5657, 91
  %v7679 = vpop.permute.xlu0 %7678
  %7680 = vrot.lane.b32.xlu0 %v5658, 91
  %v7681 = vpop.permute.xlu0 %7680
  %7682 = vrot.lane.b32.xlu0 %v5659, 91
  %v7683 = vpop.permute.xlu0 %7682
  %7684 = vrot.lane.b32.xlu0 %v5660, 91
  %v7685 = vpop.permute.xlu0 %7684
  %7686 = vrot.lane.b32.xlu0 %v5661, 91
  %v7687 = vpop.permute.xlu0 %7686
  %7688 = vrot.lane.b32.xlu0 %v5662, 91
  %v7689 = vpop.permute.xlu0 %7688
  %7690 = vrot.lane.b32.xlu0 %v5663, 91
  %v7691 = vpop.permute.xlu0 %7690
  %v7692 = vsel %vm2083, %v7669, %v7671
  %v7693 = vsel %vm2083, %v7671, %v7673
  %v7694 = vsel %vm2083, %v7673, %v7675
  %v7695 = vsel %vm2083, %v7675, %v7677
  %v7696 = vsel %vm2083, %v7677, %v7679
  %v7697 = vsel %vm2083, %v7681, %v7683
  %v7698 = vsel %vm2083, %v7683, %v7685
  %v7699 = vsel %vm2083, %v7685, %v7687
  %v7700 = vsel %vm2083, %v7687, %v7689
  %v7701 = vsel %vm2083, %v7689, %v7691
  %v7715 = vsel %vm110, %v7666, 0
  %v7718 = vsel %vm110, %v7667, 0
  %7720 = vmatprep.subr.mxu0 %v7693
  %7721 = vmatpush1.msra.mxu0 %v7692
  %7722 = vmatprep.subr.mxu0 %v7698
  %7723 = vmatpush1.msra.mxu0 %v7697
  %7724 = vmatprep.subr.mxu0 0.0
  %7725 = vmatpush1.msra.mxu0 0.0
  %7726 = vmatprep.subr.mxu0 0.0
  %7727 = vmatpush1.msra.mxu0 0.0
  %7728 = vmatprep.subr.mxu0 0.0
  %7729 = vmatpush1.msra.mxu0 0.0
  %7730 = vmatprep.subr.mxu0 0.0
  %7731 = vmatpush1.msra.mxu0 0.0
  %7732 = vmatprep.subr.mxu0 0.0
  %7733 = vmatpush1.msra.mxu0 0.0
  %7734 = vmatprep.subr.mxu0 0.0
  %7735 = vmatpush1.msra.mxu0 0.0
  %7736 = vmatprep.subr.mxu0 0.0
  %7737 = vmatpush1.msra.mxu0 0.0
  %7738 = vmatprep.subr.mxu0 0.0
  %7739 = vmatpush1.msra.mxu0 0.0
  %7740 = vmatprep.subr.mxu0 0.0
  %7741 = vmatpush1.msra.mxu0 0.0
  %7742 = vmatprep.subr.mxu0 0.0
  %7743 = vmatpush1.msra.mxu0 0.0
  %7744 = vmatprep.subr.mxu0 0.0
  %7745 = vmatpush1.msra.mxu0 0.0
  %7746 = vmatprep.subr.mxu0 0.0
  %7747 = vmatpush1.msra.mxu0 0.0
  %7748 = vmatprep.subr.mxu0 0.0
  %7749 = vmatpush1.msra.mxu0 0.0
  %7750 = vmatprep.subr.mxu0 0.0
  %7751 = vmatpush1.msra.mxu0 0.0
  %7752 = vmatprep.subr.mxu0 0.0
  %7753 = vmatpush1.msra.mxu0 0.0
  %7754 = vmatprep.subr.mxu0 0.0
  %7755 = vmatpush1.msra.mxu0 0.0
  %7756 = vmatprep.subr.mxu0 0.0
  %7757 = vmatpush1.msra.mxu0 0.0
  %7758 = vmatprep.subr.mxu0 0.0
  %7759 = vmatpush1.msra.mxu0 0.0
  %7760 = vmatprep.subr.mxu0 0.0
  %7761 = vmatpush1.msra.mxu0 0.0
  %7762 = vmatprep.subr.mxu0 0.0
  %7763 = vmatpush1.msra.mxu0 0.0
  %7764 = vmatprep.subr.mxu0 0.0
  %7765 = vmatpush1.msra.mxu0 0.0
  %7766 = vmatprep.subr.mxu0 0.0
  %7767 = vmatpush1.msra.mxu0 0.0
  %7768 = vmatprep.subr.mxu0 0.0
  %7769 = vmatpush1.msra.mxu0 0.0
  %7770 = vmatprep.subr.mxu0 0.0
  %7771 = vmatpush1.msra.mxu0 0.0
  %7772 = vmatprep.subr.mxu0 0.0
  %7773 = vmatpush1.msra.mxu0 0.0
  %7774 = vmatprep.subr.mxu0 0.0
  %7775 = vmatpush1.msra.mxu0 0.0
  %7776 = vmatprep.subr.mxu0 0.0
  %7777 = vmatpush1.msra.mxu0 0.0
  %7778 = vmatprep.subr.mxu0 0.0
  %7779 = vmatpush1.msra.mxu0 0.0
  %7780 = vmatprep.subr.mxu0 0.0
  %7781 = vmatpush1.msra.mxu0 0.0
  %7782 = vmatprep.subr.mxu0 0.0
  %7783 = vmatpush1.msra.mxu0 0.0
  %7784 = vmatprep.mubr.f32.mxu0 0.0
  %7785 = vmatmul.mubr.f32.gmra.mrb[0].mxu0 %v7715
  %v7786 = vpop.f32.mrb[0].mxu0
  %v7787 = vadd.f32 0.0, %v7786
  %v7788 = vpop.f32.mrb[0].mxu0
  %v7789 = vadd.f32 0.0, %v7788
  %7790 = vmatprep.mubr.f32.mxu0 0.0
  %7791 = vmatmul.mubr.f32.gmra.mrb[0].mxu0 %v7718
  %v7792 = vpop.f32.mrb[0].mxu0
  %v7793 = vadd.f32 0.0, %v7792
  %v7794 = vpop.f32.mrb[0].mxu0
  %v7795 = vadd.f32 0.0, %v7794
  %7796 = vdwg.mxu0
  %7797 = vmatprep.subr.mxu0 %v7695
  %7798 = vmatpush1.msra.mxu0 %v7694
  %7799 = vmatprep.subr.mxu0 %v7700
  %7800 = vmatpush1.msra.mxu0 %v7699
  %7801 = vmatprep.subr.mxu0 0.0
  %7802 = vmatpush1.msra.mxu0 0.0
  %7803 = vmatprep.subr.mxu0 0.0
  %7804 = vmatpush1.msra.mxu0 0.0
  %7805 = vmatprep.subr.mxu0 0.0
  %7806 = vmatpush1.msra.mxu0 0.0
  %7807 = vmatprep.subr.mxu0 0.0
  %7808 = vmatpush1.msra.mxu0 0.0
  %7809 = vmatprep.subr.mxu0 0.0
  %7810 = vmatpush1.msra.mxu0 0.0
  %7811 = vmatprep.subr.mxu0 0.0
  %7812 = vmatpush1.msra.mxu0 0.0
  %7813 = vmatprep.subr.mxu0 0.0
  %7814 = vmatpush1.msra.mxu0 0.0
  %7815 = vmatprep.subr.mxu0 0.0
  %7816 = vmatpush1.msra.mxu0 0.0
  %7817 = vmatprep.subr.mxu0 0.0
  %7818 = vmatpush1.msra.mxu0 0.0
  %7819 = vmatprep.subr.mxu0 0.0
  %7820 = vmatpush1.msra.mxu0 0.0
  %7821 = vmatprep.subr.mxu0 0.0
  %7822 = vmatpush1.msra.mxu0 0.0
  %7823 = vmatprep.subr.mxu0 0.0
  %7824 = vmatpush1.msra.mxu0 0.0
  %7825 = vmatprep.subr.mxu0 0.0
  %7826 = vmatpush1.msra.mxu0 0.0
  %7827 = vmatprep.subr.mxu0 0.0
  %7828 = vmatpush1.msra.mxu0 0.0
  %7829 = vmatprep.subr.mxu0 0.0
  %7830 = vmatpush1.msra.mxu0 0.0
  %7831 = vmatprep.subr.mxu0 0.0
  %7832 = vmatpush1.msra.mxu0 0.0
  %7833 = vmatprep.subr.mxu0 0.0
  %7834 = vmatpush1.msra.mxu0 0.0
  %7835 = vmatprep.subr.mxu0 0.0
  %7836 = vmatpush1.msra.mxu0 0.0
  %7837 = vmatprep.subr.mxu0 0.0
  %7838 = vmatpush1.msra.mxu0 0.0
  %7839 = vmatprep.subr.mxu0 0.0
  %7840 = vmatpush1.msra.mxu0 0.0
  %7841 = vmatprep.subr.mxu0 0.0
  %7842 = vmatpush1.msra.mxu0 0.0
  %7843 = vmatprep.subr.mxu0 0.0
  %7844 = vmatpush1.msra.mxu0 0.0
  %7845 = vmatprep.subr.mxu0 0.0
  %7846 = vmatpush1.msra.mxu0 0.0
  %7847 = vmatprep.subr.mxu0 0.0
  %7848 = vmatpush1.msra.mxu0 0.0
  %7849 = vmatprep.subr.mxu0 0.0
  %7850 = vmatpush1.msra.mxu0 0.0
  %7851 = vmatprep.subr.mxu0 0.0
  %7852 = vmatpush1.msra.mxu0 0.0
  %7853 = vmatprep.subr.mxu0 0.0
  %7854 = vmatpush1.msra.mxu0 0.0
  %7855 = vmatprep.subr.mxu0 0.0
  %7856 = vmatpush1.msra.mxu0 0.0
  %7857 = vmatprep.subr.mxu0 0.0
  %7858 = vmatpush1.msra.mxu0 0.0
  %7859 = vmatprep.subr.mxu0 0.0
  %7860 = vmatpush1.msra.mxu0 0.0
  %7861 = vmatprep.mubr.f32.mxu0 0.0
  %7862 = vmatmul.mubr.f32.gmra.mrb[0].mxu0 %v7715
  %v7863 = vpop.f32.mrb[0].mxu0
  %v7864 = vadd.f32 0.0, %v7863
  %v7865 = vpop.f32.mrb[0].mxu0
  %v7866 = vadd.f32 0.0, %v7865
  %7867 = vmatprep.mubr.f32.mxu0 0.0
  %7868 = vmatmul.mubr.f32.gmra.mrb[0].mxu0 %v7718
  %v7869 = vpop.f32.mrb[0].mxu0
  %v7870 = vadd.f32 0.0, %v7869
  %v7871 = vpop.f32.mrb[0].mxu0
  %v7872 = vadd.f32 0.0, %v7871
  %7873 = vdwg.mxu0
  %7874 = vmatprep.subr.mxu0 %v7679
  %7875 = vmatpush1.msra.mxu0 %v7696
  %7876 = vmatprep.subr.mxu0 %v7691
  %7877 = vmatpush1.msra.mxu0 %v7701
  %7878 = vmatprep.subr.mxu0 0.0
  %7879 = vmatpush1.msra.mxu0 0.0
  %7880 = vmatprep.subr.mxu0 0.0
  %7881 = vmatpush1.msra.mxu0 0.0
  %7882 = vmatprep.subr.mxu0 0.0
  %7883 = vmatpush1.msra.mxu0 0.0
  %7884 = vmatprep.subr.mxu0 0.0
  %7885 = vmatpush1.msra.mxu0 0.0
  %7886 = vmatprep.subr.mxu0 0.0
  %7887 = vmatpush1.msra.mxu0 0.0
  %7888 = vmatprep.subr.mxu0 0.0
  %7889 = vmatpush1.msra.mxu0 0.0
  %7890 = vmatprep.subr.mxu0 0.0
  %7891 = vmatpush1.msra.mxu0 0.0
  %7892 = vmatprep.subr.mxu0 0.0
  %7893 = vmatpush1.msra.mxu0 0.0
  %7894 = vmatprep.subr.mxu0 0.0
  %7895 = vmatpush1.msra.mxu0 0.0
  %7896 = vmatprep.subr.mxu0 0.0
  %7897 = vmatpush1.msra.mxu0 0.0
  %7898 = vmatprep.subr.mxu0 0.0
  %7899 = vmatpush1.msra.mxu0 0.0
  %7900 = vmatprep.subr.mxu0 0.0
  %7901 = vmatpush1.msra.mxu0 0.0
  %7902 = vmatprep.subr.mxu0 0.0
  %7903 = vmatpush1.msra.mxu0 0.0
  %7904 = vmatprep.subr.mxu0 0.0
  %7905 = vmatpush1.msra.mxu0 0.0
  %7906 = vmatprep.subr.mxu0 0.0
  %7907 = vmatpush1.msra.mxu0 0.0
  %7908 = vmatprep.subr.mxu0 0.0
  %7909 = vmatpush1.msra.mxu0 0.0
  %7910 = vmatprep.subr.mxu0 0.0
  %7911 = vmatpush1.msra.mxu0 0.0
  %7912 = vmatprep.subr.mxu0 0.0
  %7913 = vmatpush1.msra.mxu0 0.0
  %7914 = vmatprep.subr.mxu0 0.0
  %7915 = vmatpush1.msra.mxu0 0.0
  %7916 = vmatprep.subr.mxu0 0.0
  %7917 = vmatpush1.msra.mxu0 0.0
  %7918 = vmatprep.subr.mxu0 0.0
  %7919 = vmatpush1.msra.mxu0 0.0
  %7920 = vmatprep.subr.mxu0 0.0
  %7921 = vmatpush1.msra.mxu0 0.0
  %7922 = vmatprep.subr.mxu0 0.0
  %7923 = vmatpush1.msra.mxu0 0.0
  %7924 = vmatprep.subr.mxu0 0.0
  %7925 = vmatpush1.msra.mxu0 0.0
  %7926 = vmatprep.subr.mxu0 0.0
  %7927 = vmatpush1.msra.mxu0 0.0
  %7928 = vmatprep.subr.mxu0 0.0
  %7929 = vmatpush1.msra.mxu0 0.0
  %7930 = vmatprep.subr.mxu0 0.0
  %7931 = vmatpush1.msra.mxu0 0.0
  %7932 = vmatprep.subr.mxu0 0.0
  %7933 = vmatpush1.msra.mxu0 0.0
  %7934 = vmatprep.subr.mxu0 0.0
  %7935 = vmatpush1.msra.mxu0 0.0
  %7936 = vmatprep.subr.mxu0 0.0
  %7937 = vmatpush1.msra.mxu0 0.0
  %7938 = vmatprep.mubr.f32.mxu0 0.0
  %7939 = vmatmul.mubr.f32.gmra.mrb[0].mxu0 %v7715
  %v7940 = vpop.f32.mrb[0].mxu0
  %v7941 = vadd.f32 0.0, %v7940
  %v7942 = vpop.f32.mrb[0].mxu0
  %7943 = vmatprep.mubr.f32.mxu0 0.0
  %7944 = vmatmul.mubr.f32.gmra.mrb[0].mxu0 %v7718
  %v7945 = vpop.f32.mrb[0].mxu0
  %v7946 = vadd.f32 0.0, %v7945
  %v7947 = vpop.f32.mrb[0].mxu0
  %7948 = vdwg.mxu0
  %v7949 = vadd.f32 %v7655, %v7787
  %v7950 = vadd.f32 %v7656, %v7789
  %v7951 = vadd.f32 %v7657, %v7864
  %v7952 = vadd.f32 %v7658, %v7866
  %v7953 = vadd.f32 %v7659, %v7941
  %v7954 = vadd.f32 %v7660, %v7793
  %v7955 = vadd.f32 %v7661, %v7795
  %v7956 = vadd.f32 %v7662, %v7870
  %v7957 = vadd.f32 %v7663, %v7872
  %v7958 = vadd.f32 %v7664, %v7946
  %s7959 = scalar_lea.vmem %s3, 128
  %v7960 = vld [vmem:[%s7959] sm:$0xff]
  %v7961 = vld [vmem:[%s7959 + $0x8] sm:$0xff]
  %7962 = vrot.lane.b32.xlu0 %v5652, 90
  %v7963 = vpop.permute.xlu0 %7962
  %7964 = vrot.lane.b32.xlu0 %v5653, 90
  %v7965 = vpop.permute.xlu0 %7964
  %7966 = vrot.lane.b32.xlu0 %v5654, 90
  %v7967 = vpop.permute.xlu0 %7966
  %7968 = vrot.lane.b32.xlu0 %v5655, 90
  %v7969 = vpop.permute.xlu0 %7968
  %7970 = vrot.lane.b32.xlu0 %v5656, 90
  %v7971 = vpop.permute.xlu0 %7970
  %7972 = vrot.lane.b32.xlu0 %v5657, 90
  %v7973 = vpop.permute.xlu0 %7972
  %7974 = vrot.lane.b32.xlu0 %v5658, 90
  %v7975 = vpop.permute.xlu0 %7974
  %7976 = vrot.lane.b32.xlu0 %v5659, 90
  %v7977 = vpop.permute.xlu0 %7976
  %7978 = vrot.lane.b32.xlu0 %v5660, 90
  %v7979 = vpop.permute.xlu0 %7978
  %7980 = vrot.lane.b32.xlu0 %v5661, 90
  %v7981 = vpop.permute.xlu0 %7980
  %7982 = vrot.lane.b32.xlu0 %v5662, 90
  %v7983 = vpop.permute.xlu0 %7982
  %7984 = vrot.lane.b32.xlu0 %v5663, 90
  %v7985 = vpop.permute.xlu0 %7984
  %v7986 = vsel %vm2378, %v7963, %v7965
  %v7987 = vsel %vm2378, %v7965, %v7967
  %v7988 = vsel %vm2378, %v7967, %v7969
  %v7989 = vsel %vm2378, %v7969, %v7971
  %v7990 = vsel %vm2378, %v7971, %v7973
  %v7991 = vsel %vm2378, %v7975, %v7977
  %v7992 = vsel %vm2378, %v7977, %v7979
  %v7993 = vsel %vm2378, %v7979, %v7981
  %v7994 = vsel %vm2378, %v7981, %v7983
  %v7995 = vsel %vm2378, %v7983, %v7985
  %v8009 = vsel %vm110, %v7960, 0
  %v8012 = vsel %vm110, %v7961, 0
  %8014 = vmatprep.subr.mxu0 %v7987
  %8015 = vmatpush1.msra.mxu0 %v7986
  %8016 = vmatprep.subr.mxu0 %v7992
  %8017 = vmatpush1.msra.mxu0 %v7991
  %8018 = vmatprep.subr.mxu0 0.0
  %8019 = vmatpush1.msra.mxu0 0.0
  %8020 = vmatprep.subr.mxu0 0.0
  %8021 = vmatpush1.msra.mxu0 0.0
  %8022 = vmatprep.subr.mxu0 0.0
  %8023 = vmatpush1.msra.mxu0 0.0
  %8024 = vmatprep.subr.mxu0 0.0
  %8025 = vmatpush1.msra.mxu0 0.0
  %8026 = vmatprep.subr.mxu0 0.0
  %8027 = vmatpush1.msra.mxu0 0.0
  %8028 = vmatprep.subr.mxu0 0.0
  %8029 = vmatpush1.msra.mxu0 0.0
  %8030 = vmatprep.subr.mxu0 0.0
  %8031 = vmatpush1.msra.mxu0 0.0
  %8032 = vmatprep.subr.mxu0 0.0
  %8033 = vmatpush1.msra.mxu0 0.0
  %8034 = vmatprep.subr.mxu0 0.0
  %8035 = vmatpush1.msra.mxu0 0.0
  %8036 = vmatprep.subr.mxu0 0.0
  %8037 = vmatpush1.msra.mxu0 0.0
  %8038 = vmatprep.subr.mxu0 0.0
  %8039 = vmatpush1.msra.mxu0 0.0
  %8040 = vmatprep.subr.mxu0 0.0
  %8041 = vmatpush1.msra.mxu0 0.0
  %8042 = vmatprep.subr.mxu0 0.0
  %8043 = vmatpush1.msra.mxu0 0.0
  %8044 = vmatprep.subr.mxu0 0.0
  %8045 = vmatpush1.msra.mxu0 0.0
  %8046 = vmatprep.subr.mxu0 0.0
  %8047 = vmatpush1.msra.mxu0 0.0
  %8048 = vmatprep.subr.mxu0 0.0
  %8049 = vmatpush1.msra.mxu0 0.0
  %8050 = vmatprep.subr.mxu0 0.0
  %8051 = vmatpush1.msra.mxu0 0.0
  %8052 = vmatprep.subr.mxu0 0.0
  %8053 = vmatpush1.msra.mxu0 0.0
  %8054 = vmatprep.subr.mxu0 0.0
  %8055 = vmatpush1.msra.mxu0 0.0
  %8056 = vmatprep.subr.mxu0 0.0
  %8057 = vmatpush1.msra.mxu0 0.0
  %8058 = vmatprep.subr.mxu0 0.0
  %8059 = vmatpush1.msra.mxu0 0.0
  %8060 = vmatprep.subr.mxu0 0.0
  %8061 = vmatpush1.msra.mxu0 0.0
  %8062 = vmatprep.subr.mxu0 0.0
  %8063 = vmatpush1.msra.mxu0 0.0
  %8064 = vmatprep.subr.mxu0 0.0
  %8065 = vmatpush1.msra.mxu0 0.0
  %8066 = vmatprep.subr.mxu0 0.0
  %8067 = vmatpush1.msra.mxu0 0.0
  %8068 = vmatprep.subr.mxu0 0.0
  %8069 = vmatpush1.msra.mxu0 0.0
  %8070 = vmatprep.subr.mxu0 0.0
  %8071 = vmatpush1.msra.mxu0 0.0
  %8072 = vmatprep.subr.mxu0 0.0
  %8073 = vmatpush1.msra.mxu0 0.0
  %8074 = vmatprep.subr.mxu0 0.0
  %8075 = vmatpush1.msra.mxu0 0.0
  %8076 = vmatprep.subr.mxu0 0.0
  %8077 = vmatpush1.msra.mxu0 0.0
  %8078 = vmatprep.mubr.f32.mxu0 0.0
  %8079 = vmatmul.mubr.f32.gmra.mrb[0].mxu0 %v8009
  %v8080 = vpop.f32.mrb[0].mxu0
  %v8081 = vadd.f32 0.0, %v8080
  %v8082 = vpop.f32.mrb[0].mxu0
  %v8083 = vadd.f32 0.0, %v8082
  %8084 = vmatprep.mubr.f32.mxu0 0.0
  %8085 = vmatmul.mubr.f32.gmra.mrb[0].mxu0 %v8012
  %v8086 = vpop.f32.mrb[0].mxu0
  %v8087 = vadd.f32 0.0, %v8086
  %v8088 = vpop.f32.mrb[0].mxu0
  %v8089 = vadd.f32 0.0, %v8088
  %8090 = vdwg.mxu0
  %8091 = vmatprep.subr.mxu0 %v7989
  %8092 = vmatpush1.msra.mxu0 %v7988
  %8093 = vmatprep.subr.mxu0 %v7994
  %8094 = vmatpush1.msra.mxu0 %v7993
  %8095 = vmatprep.subr.mxu0 0.0
  %8096 = vmatpush1.msra.mxu0 0.0
  %8097 = vmatprep.subr.mxu0 0.0
  %8098 = vmatpush1.msra.mxu0 0.0
  %8099 = vmatprep.subr.mxu0 0.0
  %8100 = vmatpush1.msra.mxu0 0.0
  %8101 = vmatprep.subr.mxu0 0.0
  %8102 = vmatpush1.msra.mxu0 0.0
  %8103 = vmatprep.subr.mxu0 0.0
  %8104 = vmatpush1.msra.mxu0 0.0
  %8105 = vmatprep.subr.mxu0 0.0
  %8106 = vmatpush1.msra.mxu0 0.0
  %8107 = vmatprep.subr.mxu0 0.0
  %8108 = vmatpush1.msra.mxu0 0.0
  %8109 = vmatprep.subr.mxu0 0.0
  %8110 = vmatpush1.msra.mxu0 0.0
  %8111 = vmatprep.subr.mxu0 0.0
  %8112 = vmatpush1.msra.mxu0 0.0
  %8113 = vmatprep.subr.mxu0 0.0
  %8114 = vmatpush1.msra.mxu0 0.0
  %8115 = vmatprep.subr.mxu0 0.0
  %8116 = vmatpush1.msra.mxu0 0.0
  %8117 = vmatprep.subr.mxu0 0.0
  %8118 = vmatpush1.msra.mxu0 0.0
  %8119 = vmatprep.subr.mxu0 0.0
  %8120 = vmatpush1.msra.mxu0 0.0
  %8121 = vmatprep.subr.mxu0 0.0
  %8122 = vmatpush1.msra.mxu0 0.0
  %8123 = vmatprep.subr.mxu0 0.0
  %8124 = vmatpush1.msra.mxu0 0.0
  %8125 = vmatprep.subr.mxu0 0.0
  %8126 = vmatpush1.msra.mxu0 0.0
  %8127 = vmatprep.subr.mxu0 0.0
  %8128 = vmatpush1.msra.mxu0 0.0
  %8129 = vmatprep.subr.mxu0 0.0
  %8130 = vmatpush1.msra.mxu0 0.0
  %8131 = vmatprep.subr.mxu0 0.0
  %8132 = vmatpush1.msra.mxu0 0.0
  %8133 = vmatprep.subr.mxu0 0.0
  %8134 = vmatpush1.msra.mxu0 0.0
  %8135 = vmatprep.subr.mxu0 0.0
  %8136 = vmatpush1.msra.mxu0 0.0
  %8137 = vmatprep.subr.mxu0 0.0
  %8138 = vmatpush1.msra.mxu0 0.0
  %8139 = vmatprep.subr.mxu0 0.0
  %8140 = vmatpush1.msra.mxu0 0.0
  %8141 = vmatprep.subr.mxu0 0.0
  %8142 = vmatpush1.msra.mxu0 0.0
  %8143 = vmatprep.subr.mxu0 0.0
  %8144 = vmatpush1.msra.mxu0 0.0
  %8145 = vmatprep.subr.mxu0 0.0
  %8146 = vmatpush1.msra.mxu0 0.0
  %8147 = vmatprep.subr.mxu0 0.0
  %8148 = vmatpush1.msra.mxu0 0.0
  %8149 = vmatprep.subr.mxu0 0.0
  %8150 = vmatpush1.msra.mxu0 0.0
  %8151 = vmatprep.subr.mxu0 0.0
  %8152 = vmatpush1.msra.mxu0 0.0
  %8153 = vmatprep.subr.mxu0 0.0
  %8154 = vmatpush1.msra.mxu0 0.0
  %8155 = vmatprep.mubr.f32.mxu0 0.0
  %8156 = vmatmul.mubr.f32.gmra.mrb[0].mxu0 %v8009
  %v8157 = vpop.f32.mrb[0].mxu0
  %v8158 = vadd.f32 0.0, %v8157
  %v8159 = vpop.f32.mrb[0].mxu0
  %v8160 = vadd.f32 0.0, %v8159
  %8161 = vmatprep.mubr.f32.mxu0 0.0
  %8162 = vmatmul.mubr.f32.gmra.mrb[0].mxu0 %v8012
  %v8163 = vpop.f32.mrb[0].mxu0
  %v8164 = vadd.f32 0.0, %v8163
  %v8165 = vpop.f32.mrb[0].mxu0
  %v8166 = vadd.f32 0.0, %v8165
  %8167 = vdwg.mxu0
  %8168 = vmatprep.subr.mxu0 %v7973
  %8169 = vmatpush1.msra.mxu0 %v7990
  %8170 = vmatprep.subr.mxu0 %v7985
  %8171 = vmatpush1.msra.mxu0 %v7995
  %8172 = vmatprep.subr.mxu0 0.0
  %8173 = vmatpush1.msra.mxu0 0.0
  %8174 = vmatprep.subr.mxu0 0.0
  %8175 = vmatpush1.msra.mxu0 0.0
  %8176 = vmatprep.subr.mxu0 0.0
  %8177 = vmatpush1.msra.mxu0 0.0
  %8178 = vmatprep.subr.mxu0 0.0
  %8179 = vmatpush1.msra.mxu0 0.0
  %8180 = vmatprep.subr.mxu0 0.0
  %8181 = vmatpush1.msra.mxu0 0.0
  %8182 = vmatprep.subr.mxu0 0.0
  %8183 = vmatpush1.msra.mxu0 0.0
  %8184 = vmatprep.subr.mxu0 0.0
  %8185 = vmatpush1.msra.mxu0 0.0
  %8186 = vmatprep.subr.mxu0 0.0
  %8187 = vmatpush1.msra.mxu0 0.0
  %8188 = vmatprep.subr.mxu0 0.0
  %8189 = vmatpush1.msra.mxu0 0.0
  %8190 = vmatprep.subr.mxu0 0.0
  %8191 = vmatpush1.msra.mxu0 0.0
  %8192 = vmatprep.subr.mxu0 0.0
  %8193 = vmatpush1.msra.mxu0 0.0
  %8194 = vmatprep.subr.mxu0 0.0
  %8195 = vmatpush1.msra.mxu0 0.0
  %8196 = vmatprep.subr.mxu0 0.0
  %8197 = vmatpush1.msra.mxu0 0.0
  %8198 = vmatprep.subr.mxu0 0.0
  %8199 = vmatpush1.msra.mxu0 0.0
  %8200 = vmatprep.subr.mxu0 0.0
  %8201 = vmatpush1.msra.mxu0 0.0
  %8202 = vmatprep.subr.mxu0 0.0
  %8203 = vmatpush1.msra.mxu0 0.0
  %8204 = vmatprep.subr.mxu0 0.0
  %8205 = vmatpush1.msra.mxu0 0.0
  %8206 = vmatprep.subr.mxu0 0.0
  %8207 = vmatpush1.msra.mxu0 0.0
  %8208 = vmatprep.subr.mxu0 0.0
  %8209 = vmatpush1.msra.mxu0 0.0
  %8210 = vmatprep.subr.mxu0 0.0
  %8211 = vmatpush1.msra.mxu0 0.0
  %8212 = vmatprep.subr.mxu0 0.0
  %8213 = vmatpush1.msra.mxu0 0.0
  %8214 = vmatprep.subr.mxu0 0.0
  %8215 = vmatpush1.msra.mxu0 0.0
  %8216 = vmatprep.subr.mxu0 0.0
  %8217 = vmatpush1.msra.mxu0 0.0
  %8218 = vmatprep.subr.mxu0 0.0
  %8219 = vmatpush1.msra.mxu0 0.0
  %8220 = vmatprep.subr.mxu0 0.0
  %8221 = vmatpush1.msra.mxu0 0.0
  %8222 = vmatprep.subr.mxu0 0.0
  %8223 = vmatpush1.msra.mxu0 0.0
  %8224 = vmatprep.subr.mxu0 0.0
  %8225 = vmatpush1.msra.mxu0 0.0
  %8226 = vmatprep.subr.mxu0 0.0
  %8227 = vmatpush1.msra.mxu0 0.0
  %8228 = vmatprep.subr.mxu0 0.0
  %8229 = vmatpush1.msra.mxu0 0.0
  %8230 = vmatprep.subr.mxu0 0.0
  %8231 = vmatpush1.msra.mxu0 0.0
  %8232 = vmatprep.mubr.f32.mxu0 0.0
  %8233 = vmatmul.mubr.f32.gmra.mrb[0].mxu0 %v8009
  %v8234 = vpop.f32.mrb[0].mxu0
  %v8235 = vadd.f32 0.0, %v8234
  %v8236 = vpop.f32.mrb[0].mxu0
  %8237 = vmatprep.mubr.f32.mxu0 0.0
  %8238 = vmatmul.mubr.f32.gmra.mrb[0].mxu0 %v8012
  %v8239 = vpop.f32.mrb[0].mxu0
  %v8240 = vadd.f32 0.0, %v8239
  %v8241 = vpop.f32.mrb[0].mxu0
  %8242 = vdwg.mxu0
  %v8243 = vadd.f32 %v7949, %v8081
  %v8244 = vadd.f32 %v7950, %v8083
  %v8245 = vadd.f32 %v7951, %v8158
  %v8246 = vadd.f32 %v7952, %v8160
  %v8247 = vadd.f32 %v7953, %v8235
  %v8248 = vadd.f32 %v7954, %v8087
  %v8249 = vadd.f32 %v7955, %v8089
  %v8250 = vadd.f32 %v7956, %v8164
  %v8251 = vadd.f32 %v7957, %v8166
  %v8252 = vadd.f32 %v7958, %v8240
  %v8253 = vld [vmem:[%s6] sm:$0xff]
  %v8254 = vld [vmem:[%s6 + $0x8] sm:$0xff]
  %8256 = vset.pattern.permute.xlu0 0
  %8257 = vperm.xlu0 %8256, %v8253
  %v8258 = vpop.permute.xlu0 %8257
  %8261 = vset.pattern.permute.xlu0 0
  %8262 = vperm.xlu0 %8261, %v8254
  %v8263 = vpop.permute.xlu0 %8262
  %v8265 = vadd.f32 %v8243, %v8258
  %v8266 = vadd.f32 %v8244, %v8258
  %v8267 = vadd.f32 %v8245, %v8258
  %v8268 = vadd.f32 %v8246, %v8258
  %v8269 = vadd.f32 %v8247, %v8258
  %v8270 = vadd.f32 %v8248, %v8263
  %v8271 = vadd.f32 %v8249, %v8263
  %v8272 = vadd.f32 %v8250, %v8263
  %v8273 = vadd.f32 %v8251, %v8263
  %v8274 = vadd.f32 %v8252, %v8263
  %v8275 = vmul.f32 %v8265, 0.01
  %v8276 = vmul.f32 %v8266, 0.01
  %v8277 = vmul.f32 %v8267, 0.01
  %v8278 = vmul.f32 %v8268, 0.01
  %v8279 = vmul.f32 %v8269, 0.01
  %v8280 = vmul.f32 %v8270, 0.01
  %v8281 = vmul.f32 %v8271, 0.01
  %v8282 = vmul.f32 %v8272, 0.01
  %v8283 = vmul.f32 %v8273, 0.01
  %v8284 = vmul.f32 %v8274, 0.01
  %v8285 = vmax.f32 %v8265, %v8275
  %v8286 = vmax.f32 %v8266, %v8276
  %v8287 = vmax.f32 %v8267, %v8277
  %v8288 = vmax.f32 %v8268, %v8278
  %v8289 = vmax.f32 %v8269, %v8279
  %v8290 = vmax.f32 %v8270, %v8280
  %v8291 = vmax.f32 %v8271, %v8281
  %v8292 = vmax.f32 %v8272, %v8282
  %v8293 = vmax.f32 %v8273, %v8283
  %v8294 = vmax.f32 %v8274, %v8284
  %8295 = vst.msk [vmem:[%s7] sm:$0xff] %vm110, %v8285
  %8296 = vst.msk [vmem:[%s7 + $0x20] sm:$0xff] %vm110, %v8290
  %8299 = vrot.lane.b32.xlu0 %v8285, 126
  %v8300 = vpop.permute.xlu0 %8299
  %8301 = vrot.lane.b32.xlu0 %v8290, 126
  %v8302 = vpop.permute.xlu0 %8301
  %vm8305 = vcmask 261248
  %8306 = vst.msk [vmem:[%s7] sm:$0xff] %vm8305, %v8300
  %8307 = vst.msk [vmem:[%s7 + $0x20] sm:$0xff] %vm8305, %v8302
  %8308 = vrot.lane.b32.xlu0 %v8285, 124
  %v8309 = vpop.permute.xlu0 %8308
  %8310 = vrot.lane.b32.xlu0 %v8290, 124
  %v8311 = vpop.permute.xlu0 %8310
  %vm8314 = vcmask 392448
  %8315 = vst.msk [vmem:[%s7] sm:$0xff] %vm8314, %v8309
  %8316 = vst.msk [vmem:[%s7 + $0x20] sm:$0xff] %vm8314, %v8311
  %8317 = vrot.lane.b32.xlu0 %v8285, 122
  %v8318 = vpop.permute.xlu0 %8317
  %8319 = vrot.lane.b32.xlu0 %v8290, 122
  %v8320 = vpop.permute.xlu0 %8319
  %vm8323 = vcmask 523648
  %8324 = vst.msk [vmem:[%s7] sm:$0xff] %vm8323, %v8318
  %8325 = vst.msk [vmem:[%s7 + $0x20] sm:$0xff] %vm8323, %v8320
  %8326 = vrot.lane.b32.xlu0 %v8285, 120
  %v8327 = vpop.permute.xlu0 %8326
  %8328 = vrot.lane.b32.xlu0 %v8290, 120
  %v8329 = vpop.permute.xlu0 %8328
  %vm8332 = vcmask 654848
  %8333 = vst.msk [vmem:[%s7] sm:$0xff] %vm8332, %v8327
  %8334 = vst.msk [vmem:[%s7 + $0x20] sm:$0xff] %vm8332, %v8329
  %8335 = vrot.lane.b32.xlu0 %v8285, 118
  %v8336 = vpop.permute.xlu0 %8335
  %8337 = vrot.lane.b32.xlu0 %v8290, 118
  %v8338 = vpop.permute.xlu0 %8337
  %vm8341 = vcmask 786048
  %8342 = vst.msk [vmem:[%s7] sm:$0xff] %vm8341, %v8336
  %8343 = vst.msk [vmem:[%s7 + $0x20] sm:$0xff] %vm8341, %v8338
  %8344 = vrot.lane.b32.xlu0 %v8285, 116
  %v8345 = vpop.permute.xlu0 %8344
  %8346 = vrot.lane.b32.xlu0 %v8290, 116
  %v8347 = vpop.permute.xlu0 %8346
  %vm8350 = vcmask 917248
  %8351 = vst.msk [vmem:[%s7] sm:$0xff] %vm8350, %v8345
  %8352 = vst.msk [vmem:[%s7 + $0x20] sm:$0xff] %vm8350, %v8347
  %8355 = vrot.lane.b32.xlu0 %v8285, 114
  %v8356 = vpop.permute.xlu0 %8355
  %8357 = vrot.lane.b32.xlu0 %v8286, 114
  %v8358 = vpop.permute.xlu0 %8357
  %8359 = vrot.lane.b32.xlu0 %v8290, 114
  %v8360 = vpop.permute.xlu0 %8359
  %8361 = vrot.lane.b32.xlu0 %v8291, 114
  %v8362 = vpop.permute.xlu0 %8361
  %vm8363 = vcmask 932864
  %v8364 = vsel %vm8363, %v8356, %v8358
  %v8365 = vsel %vm8363, %v8360, %v8362
  %vm8368 = vcmask 1048448
  %8369 = vst.msk [vmem:[%s7] sm:$0xff] %vm8368, %v8364
  %8370 = vst.msk [vmem:[%s7 + $0x20] sm:$0xff] %vm8368, %v8365
  %8371 = vrot.lane.b32.xlu0 %v8286, 112
  %v8372 = vpop.permute.xlu0 %8371
  %8373 = vrot.lane.b32.xlu0 %v8291, 112
  %v8374 = vpop.permute.xlu0 %8373
  %8377 = vst.msk [vmem:[%s7 + $0x8] sm:$0xff] %vm110, %v8372
  %8378 = vst.msk [vmem:[%s7 + $0x28] sm:$0xff] %vm110, %v8374
  %8379 = vrot.lane.b32.xlu0 %v8286, 110
  %v8380 = vpop.permute.xlu0 %8379
  %8381 = vrot.lane.b32.xlu0 %v8291, 110
  %v8382 = vpop.permute.xlu0 %8381
  %8385 = vst.msk [vmem:[%s7 + $0x8] sm:$0xff] %vm8305, %v8380
  %8386 = vst.msk [vmem:[%s7 + $0x28] sm:$0xff] %vm8305, %v8382
  %8387 = vrot.lane.b32.xlu0 %v8286, 108
  %v8388 = vpop.permute.xlu0 %8387
  %8389 = vrot.lane.b32.xlu0 %v8291, 108
  %v8390 = vpop.permute.xlu0 %8389
  %8393 = vst.msk [vmem:[%s7 + $0x8] sm:$0xff] %vm8314, %v8388
  %8394 = vst.msk [vmem:[%s7 + $0x28] sm:$0xff] %vm8314, %v8390
  %8395 = vrot.lane.b32.xlu0 %v8286, 106
  %v8396 = vpop.permute.xlu0 %8395
  %8397 = vrot.lane.b32.xlu0 %v8291, 106
  %v8398 = vpop.permute.xlu0 %8397
  %8401 = vst.msk [vmem:[%s7 + $0x8] sm:$0xff] %vm8323, %v8396
  %8402 = vst.msk [vmem:[%s7 + $0x28] sm:$0xff] %vm8323, %v8398
  %8403 = vrot.lane.b32.xlu0 %v8286, 104
  %v8404 = vpop.permute.xlu0 %8403
  %8405 = vrot.lane.b32.xlu0 %v8291, 104
  %v8406 = vpop.permute.xlu0 %8405
  %8409 = vst.msk [vmem:[%s7 + $0x8] sm:$0xff] %vm8332, %v8404
  %8410 = vst.msk [vmem:[%s7 + $0x28] sm:$0xff] %vm8332, %v8406
  %8411 = vrot.lane.b32.xlu0 %v8286, 102
  %v8412 = vpop.permute.xlu0 %8411
  %8413 = vrot.lane.b32.xlu0 %v8291, 102
  %v8414 = vpop.permute.xlu0 %8413
  %8417 = vst.msk [vmem:[%s7 + $0x8] sm:$0xff] %vm8341, %v8412
  %8418 = vst.msk [vmem:[%s7 + $0x28] sm:$0xff] %vm8341, %v8414
  %8421 = vrot.lane.b32.xlu0 %v8286, 100
  %v8422 = vpop.permute.xlu0 %8421
  %8423 = vrot.lane.b32.xlu0 %v8287, 100
  %v8424 = vpop.permute.xlu0 %8423
  %8425 = vrot.lane.b32.xlu0 %v8291, 100
  %v8426 = vpop.permute.xlu0 %8425
  %8427 = vrot.lane.b32.xlu0 %v8292, 100
  %v8428 = vpop.permute.xlu0 %8427
  %vm8429 = vcmask 818176
  %v8430 = vsel %vm8429, %v8422, %v8424
  %v8431 = vsel %vm8429, %v8426, %v8428
  %8434 = vst.msk [vmem:[%s7 + $0x8] sm:$0xff] %vm8350, %v8430
  %8435 = vst.msk [vmem:[%s7 + $0x28] sm:$0xff] %vm8350, %v8431
  %8436 = vrot.lane.b32.xlu0 %v8287, 98
  %v8437 = vpop.permute.xlu0 %8436
  %8438 = vrot.lane.b32.xlu0 %v8292, 98
  %v8439 = vpop.permute.xlu0 %8438
  %8442 = vst.msk [vmem:[%s7 + $0x8] sm:$0xff] %vm8368, %v8437
  %8443 = vst.msk [vmem:[%s7 + $0x28] sm:$0xff] %vm8368, %v8439
  %8444 = vrot.lane.b32.xlu0 %v8287, 60
  %v8445 = vpop.permute.xlu0 %8444
  %8446 = vrot.lane.b32.xlu0 %v8292, 60
  %v8447 = vpop.permute.xlu0 %8446
  %8450 = vst.msk [vmem:[%s7 + $0x10] sm:$0xff] %vm110, %v8445
  %8451 = vst.msk [vmem:[%s7 + $0x30] sm:$0xff] %vm110, %v8447
  %8452 = vrot.lane.b32.xlu0 %v8287, 58
  %v8453 = vpop.permute.xlu0 %8452
  %8454 = vrot.lane.b32.xlu0 %v8292, 58
  %v8455 = vpop.permute.xlu0 %8454
  %8458 = vst.msk [vmem:[%s7 + $0x10] sm:$0xff] %vm8305, %v8453
  %8459 = vst.msk [vmem:[%s7 + $0x30] sm:$0xff] %vm8305, %v8455
  %8460 = vrot.lane.b32.xlu0 %v8287, 56
  %v8461 = vpop.permute.xlu0 %8460
  %8462 = vrot.lane.b32.xlu0 %v8292, 56
  %v8463 = vpop.permute.xlu0 %8462
  %8466 = vst.msk [vmem:[%s7 + $0x10] sm:$0xff] %vm8314, %v8461
  %8467 = vst.msk [vmem:[%s7 + $0x30] sm:$0xff] %vm8314, %v8463
  %8470 = vrot.lane.b32.xlu0 %v8287, 54
  %v8471 = vpop.permute.xlu0 %8470
  %8472 = vrot.lane.b32.xlu0 %v8288, 54
  %v8473 = vpop.permute.xlu0 %8472
  %8474 = vrot.lane.b32.xlu0 %v8292, 54
  %v8475 = vpop.permute.xlu0 %8474
  %8476 = vrot.lane.b32.xlu0 %v8293, 54
  %v8477 = vpop.permute.xlu0 %8476
  %vm8478 = vcmask 441344
  %v8479 = vsel %vm8478, %v8471, %v8473
  %v8480 = vsel %vm8478, %v8475, %v8477
  %8483 = vst.msk [vmem:[%s7 + $0x10] sm:$0xff] %vm8323, %v8479
  %8484 = vst.msk [vmem:[%s7 + $0x30] sm:$0xff] %vm8323, %v8480
  %8485 = vrot.lane.b32.xlu0 %v8288, 52
  %v8486 = vpop.permute.xlu0 %8485
  %8487 = vrot.lane.b32.xlu0 %v8293, 52
  %v8488 = vpop.permute.xlu0 %8487
  %8491 = vst.msk [vmem:[%s7 + $0x10] sm:$0xff] %vm8332, %v8486
  %8492 = vst.msk [vmem:[%s7 + $0x30] sm:$0xff] %vm8332, %v8488
  %8493 = vrot.lane.b32.xlu0 %v8288, 50
  %v8494 = vpop.permute.xlu0 %8493
  %8495 = vrot.lane.b32.xlu0 %v8293, 50
  %v8496 = vpop.permute.xlu0 %8495
  %8499 = vst.msk [vmem:[%s7 + $0x10] sm:$0xff] %vm8341, %v8494
  %8500 = vst.msk [vmem:[%s7 + $0x30] sm:$0xff] %vm8341, %v8496
  %8501 = vrot.lane.b32.xlu0 %v8288, 48
  %v8502 = vpop.permute.xlu0 %8501
  %8503 = vrot.lane.b32.xlu0 %v8293, 48
  %v8504 = vpop.permute.xlu0 %8503
  %8507 = vst.msk [vmem:[%s7 + $0x10] sm:$0xff] %vm8350, %v8502
  %8508 = vst.msk [vmem:[%s7 + $0x30] sm:$0xff] %vm8350, %v8504
  %8509 = vrot.lane.b32.xlu0 %v8288, 46
  %v8510 = vpop.permute.xlu0 %8509
  %8511 = vrot.lane.b32.xlu0 %v8293, 46
  %v8512 = vpop.permute.xlu0 %8511
  %8515 = vst.msk [vmem:[%s7 + $0x10] sm:$0xff] %vm8368, %v8510
  %8516 = vst.msk [vmem:[%s7 + $0x30] sm:$0xff] %vm8368, %v8512
  %8517 = vrot.lane.b32.xlu0 %v8288, 44
  %v8518 = vpop.permute.xlu0 %8517
  %8519 = vrot.lane.b32.xlu0 %v8293, 44
  %v8520 = vpop.permute.xlu0 %8519
  %8523 = vst.msk [vmem:[%s7 + $0x18] sm:$0xff] %vm110, %v8518
  %8524 = vst.msk [vmem:[%s7 + $0x38] sm:$0xff] %vm110, %v8520
  %8525 = vrot.lane.b32.xlu0 %v8288, 42
  %v8526 = vpop.permute.xlu0 %8525
  %8527 = vrot.lane.b32.xlu0 %v8293, 42
  %v8528 = vpop.permute.xlu0 %8527
  %8531 = vst.msk [vmem:[%s7 + $0x18] sm:$0xff] %vm8305, %v8526
  %8532 = vst.msk [vmem:[%s7 + $0x38] sm:$0xff] %vm8305, %v8528
  %8535 = vrot.lane.b32.xlu0 %v8288, 40
  %v8536 = vpop.permute.xlu0 %8535
  %8537 = vrot.lane.b32.xlu0 %v8289, 40
  %v8538 = vpop.permute.xlu0 %8537
  %8539 = vrot.lane.b32.xlu0 %v8293, 40
  %v8540 = vpop.permute.xlu0 %8539
  %8541 = vrot.lane.b32.xlu0 %v8294, 40
  %v8542 = vpop.permute.xlu0 %8541
  %vm8543 = vcmask 326656
  %v8544 = vsel %vm8543, %v8536, %v8538
  %v8545 = vsel %vm8543, %v8540, %v8542
  %8548 = vst.msk [vmem:[%s7 + $0x18] sm:$0xff] %vm8314, %v8544
  %8549 = vst.msk [vmem:[%s7 + $0x38] sm:$0xff] %vm8314, %v8545
  %8550 = vrot.lane.b32.xlu0 %v8289, 38
  %v8551 = vpop.permute.xlu0 %8550
  %8552 = vrot.lane.b32.xlu0 %v8294, 38
  %v8553 = vpop.permute.xlu0 %8552
  %8556 = vst.msk [vmem:[%s7 + $0x18] sm:$0xff] %vm8323, %v8551
  %8557 = vst.msk [vmem:[%s7 + $0x38] sm:$0xff] %vm8323, %v8553
  %8558 = vrot.lane.b32.xlu0 %v8289, 36
  %v8559 = vpop.permute.xlu0 %8558
  %8560 = vrot.lane.b32.xlu0 %v8294, 36
  %v8561 = vpop.permute.xlu0 %8560
  %8564 = vst.msk [vmem:[%s7 + $0x18] sm:$0xff] %vm8332, %v8559
  %8565 = vst.msk [vmem:[%s7 + $0x38] sm:$0xff] %vm8332, %v8561
  %8566 = vrot.lane.b32.xlu0 %v8289, 34
  %v8567 = vpop.permute.xlu0 %8566
  %8568 = vrot.lane.b32.xlu0 %v8294, 34
  %v8569 = vpop.permute.xlu0 %8568
  %8572 = vst.msk [vmem:[%s7 + $0x18] sm:$0xff] %vm8341, %v8567
  %8573 = vst.msk [vmem:[%s7 + $0x38] sm:$0xff] %vm8341, %v8569
  %8574 = vrot.lane.b32.xlu0 %v8289, 32
  %v8575 = vpop.permute.xlu0 %8574
  %8576 = vrot.lane.b32.xlu0 %v8294, 32
  %v8577 = vpop.permute.xlu0 %8576
  %8580 = vst.msk [vmem:[%s7 + $0x18] sm:$0xff] %vm8350, %v8575
  %8581 = vst.msk [vmem:[%s7 + $0x38] sm:$0xff] %vm8350, %v8577
  %8582 = vrot.lane.b32.xlu0 %v8289, 30
  %v8583 = vpop.permute.xlu0 %8582
  %8584 = vrot.lane.b32.xlu0 %v8294, 30
  %v8585 = vpop.permute.xlu0 %8584
  %8588 = vst.msk [vmem:[%s7 + $0x18] sm:$0xff] %vm8368, %v8583
  %8589 = vst.msk [vmem:[%s7 + $0x38] sm:$0xff] %vm8368, %v8585
  // Predicated region
  $region30: #{a_call__.1} parent=0 // pred_check
    _
  $region31: #{a_call__.1} parent=0 // pred_check_branch
    %8591 = sbr.rel (0) target = $region33
  $region32: #{a_call__.1} parent=0 // pred_region
    _
  $region33: #{a_call__.1} parent=0 // pred_fallthru
    _
  // Predicated region
  $region34: #{a_call__.1} parent=0 // pred_check
    _
  $region35: #{a_call__.1} parent=0 // pred_check_branch
    %8593 = sbr.rel (0) target = $region37
  $region36: #{a_call__.1} parent=0 // pred_region
    _
  $region37: #{a_call__.1} parent=0 // pred_fallthru
    _

</llo_original>
